<compile_context>
chip_gen: v6e
topology: v6e:2x2x1
jax: 0.10.0
libtpu: 0.0.40
codegen_flags: <defaults>
</compile_context>

<pallas_src>
import jax
import jax.numpy as jnp
from jax.experimental import pallas as pl
from jax.experimental.pallas import tpu as pltpu


def _round_up(n, m):
    return ((n + m - 1) // m) * m


def _tensorcores_per_chip():
    """>=2 only on chips where a single Pallas program spans two TensorCores
    (v4/v5p megacore, v7x).  v5e/v6e (and per-device v2/v3) are single-TC, so
    splitting the 'parallel' grid there is just a serial loop with extra
    per-step overhead."""
    try:
        dev = jax.devices()[0]
        if dev.platform != "tpu":
            return 1
        kind = dev.device_kind.lower()
    except Exception:
        return 1
    if ("lite" in kind or "v5e" in kind or "v6e" in kind
            or "v2" in kind or "v3" in kind):
        return 1
    if "v4" in kind or "v5" in kind or "v7" in kind or "7x" in kind:
        return 2
    return 1


def _vae_kernel(
    x_ref, eps_ref,
    w_in_ref, b_in_ref,          # encoder: input_to_hidden
    w_fe_ref, b_fe_ref,          # encoder: hiddens.fc1
    w_hd_ref, b_hd_ref,          # encoder: fused [mu | logvar] head (lane-padded)
    w_zh_ref, b_zh_ref,          # decoder: from_z_to_hidden (zero-padded K rows)
    w_fd_ref, b_fd_ref,          # decoder: hiddens.fc1
    w_hi_ref, b_hi_ref,          # decoder: hidden_to_input
    recon_ref, heads_ref,
):
    cdt = w_in_ref.dtype   # matmul operand dtype (f32 or bf16); accum stays f32

    # ---- Encoder MLP (x_ref fed straight into the dot; no extra live copy) ----
    h = jnp.dot(x_ref[...], w_in_ref[...], preferred_element_type=jnp.float32)
    h = jnp.maximum(h + b_in_ref[...], 0.0)                       # relu
    h = jnp.dot(h.astype(cdt), w_fe_ref[...], preferred_element_type=jnp.float32)
    h = jnp.maximum(h + b_fe_ref[...], 0.0)                       # FCLayer ReLU

    # ---- Fused mu/logvar head: one matmul, lane-dense (multiple-of-128) output ----
    heads_ref[...] = (
        jnp.dot(h.astype(cdt), w_hd_ref[...], preferred_element_type=jnp.float32)
        + b_hd_ref[...]
    )

    # Re-read mu/logvar as slices of the already-written output ref instead of
    # keeping the full `heads` value live (vreg-pressure relief at large tb).
    z_pad = heads_ref.shape[1] // 2
    mu = heads_ref[:, :z_pad]        # mu in lanes [0, z_dim); exact zeros after
    lv = heads_ref[:, z_pad:]        # logvar in lanes [0, z_dim); exact zeros after

    # ---- Reparameterize (training mode): z = eps * exp(0.5*logvar) + mu ----
    # z pad lanes may be nonzero (eps pad lanes are arbitrary) but they only
    # multiply the zero rows of w_zh, so downstream results are unchanged.
    z = eps_ref[...] * jnp.exp(0.5 * lv) + mu                     # (tb, z_pad) f32

    # ---- Decoder MLP (w_zh has zero rows over the padded K range) ----
    h = jnp.dot(z.astype(cdt), w_zh_ref[...], preferred_element_type=jnp.float32)
    h = jnp.maximum(h + b_zh_ref[...], 0.0)                       # relu
    h = jnp.dot(h.astype(cdt), w_fd_ref[...], preferred_element_type=jnp.float32)
    h = jnp.maximum(h + b_fd_ref[...], 0.0)                       # FCLayer ReLU

    logits = jnp.dot(h.astype(cdt), w_hi_ref[...], preferred_element_type=jnp.float32)
    recon_ref[...] = jax.nn.sigmoid(logits + b_hi_ref[...])


def prepare_params(params, compute_dtype=jnp.float32):
    """One-time packing, hoisted out of the per-call hot path:
      * mu/logvar heads fused into one lane-padded (hid, 2*z_pad) matrix,
      * decoder z->hidden weight zero-padded to z_pad contraction rows,
      * matmul operands cast to `compute_dtype` (bf16 = MXU-native, halves HBM
        weight traffic); biases stay f32 (added onto f32 accumulators)."""
    f32 = jnp.float32
    inp_dim = params["w_in"].shape[0]
    hid_dim = params["w_in"].shape[1]
    z_dim = params["w_mu"].shape[1]
    z_pad = _round_up(z_dim, 128)

    w_hd = jnp.zeros((hid_dim, 2 * z_pad), f32)
    w_hd = w_hd.at[:, :z_dim].set(params["w_mu"])
    w_hd = w_hd.at[:, z_pad:z_pad + z_dim].set(params["w_lv"])
    b_hd = jnp.zeros((1, 2 * z_pad), f32)
    b_hd = b_hd.at[:, :z_dim].set(params["b_mu"])
    b_hd = b_hd.at[:, z_pad:z_pad + z_dim].set(params["b_lv"])
    w_zh = jnp.zeros((z_pad, hid_dim), f32).at[:z_dim, :].set(params["w_zh"])

    cdt = jnp.dtype(compute_dtype)
    weights = [
        params["w_in"].astype(cdt), params["b_in"].astype(f32),
        params["w_fe"].astype(cdt), params["b_fe"].astype(f32),
        w_hd.astype(cdt), b_hd,
        w_zh.astype(cdt), params["b_zh"].astype(f32),
        params["w_fd"].astype(cdt), params["b_fd"].astype(f32),
        params["w_hi"].astype(cdt), params["b_hi"].astype(f32),
    ]
    jax.block_until_ready(weights)   # pay the packing cost here, not per call
    return {
        "weights": weights,
        "inp_dim": inp_dim, "hid_dim": hid_dim,
        "z_dim": z_dim, "z_pad": z_pad,
        "compute_dtype": cdt,
    }


def gaussian_graph_vae_forward(x, eps, packed, *, batch_tile=256):
    """x: (B, num_nodes, num_nodes); eps: (B, z_pad) f32 preferred (pad lanes
    may hold arbitrary noise -- they are annihilated by w_zh's zero rows), or
    (B, z_dim) which is padded here.  Returns (recon (B, inp_dim), mu, logvar)."""
    weights = packed["weights"]
    inp_dim, hid_dim = packed["inp_dim"], packed["hid_dim"]
    z_dim, z_pad = packed["z_dim"], packed["z_pad"]
    cdt = packed["compute_dtype"]
    f32 = jnp.float32

    B = x.shape[0]
    assert x.shape[1] * x.shape[2] == inp_dim

    x_flat = x.reshape(B, inp_dim).astype(cdt)      # x.view(-1, inp_dim)

    if eps.shape[1] == z_pad:
        eps_p = eps
    elif eps.shape[1] == z_dim:
        # Slow path: prefer sampling eps at (B, z_pad) to skip this per-call pad.
        eps_p = jnp.pad(eps, ((0, 0), (0, z_pad - z_dim)))
    else:
        raise ValueError("eps must have z_dim or z_pad columns")
    eps_p = eps_p.astype(f32)

    # --- batch tiling: fill MXU M-dim; split only for multi-TensorCore chips ---
    sub = 8 * (4 // jnp.dtype(cdt).itemsize)        # 8 for f32, 16 for bf16
    cores = _tensorcores_per_chip()
    tb = min(_round_up(batch_tile, sub), _round_up(B, sub))
    if cores >= 2:
        # Guarantee >=2 "parallel" grid steps so both TensorCores get work.
        tb = min(tb, _round_up(pl.cdiv(_round_up(B, sub), 2), sub))
    tb = max(tb, sub)
    B_pad = _round_up(B, tb)
    grid = (B_pad // tb,)

    if B_pad != B:
        x_flat = jnp.pad(x_flat, ((0, B_pad - B), (0, 0)))
        eps_p = jnp.pad(eps_p, ((0, B_pad - B), (0, 0)))

    def batch_spec(d):
        return pl.BlockSpec((tb, d), lambda i: (i, 0))

    def weight_spec(a, buffers):
        if buffers is None:
            return pl.BlockSpec(a.shape, lambda i: (0, 0))
        # Same block every grid step -> a single VMEM buffer is enough.
        return pl.BlockSpec(a.shape, lambda i: (0, 0),
                            pipeline_mode=pl.Buffered(buffers))

    # --- VMEM budget sized from actual need (no artificial floor) --------------
    csz = jnp.dtype(cdt).itemsize
    weight_bytes = sum(int(a.size) * a.dtype.itemsize for a in weights)
    io_bytes = 2 * tb * (inp_dim * csz + z_pad * 4 + inp_dim * 4 + 2 * z_pad * 4)
    inter_bytes = 4 * tb * (2 * hid_dim + 2 * z_pad + inp_dim)

    def vmem_limit(buffers):
        need = (buffers or 2) * weight_bytes + io_bytes + inter_bytes
        return int(min(48 << 20, max(4 << 20, 2 * need)))   # v7x-safe cap

    out_shape = (
        jax.ShapeDtypeStruct((B_pad, inp_dim), f32),      # recon
        jax.ShapeDtypeStruct((B_pad, 2 * z_pad), f32),    # [mu | logvar], lane-padded
    )

    def run(buffers):
        fn = pl.pallas_call(
            _vae_kernel,
            out_shape=out_shape,
            grid_spec=pltpu.PrefetchScalarGridSpec(
                num_scalar_prefetch=0,
                grid=grid,
                in_specs=[batch_spec(inp_dim), batch_spec(z_pad)]
                         + [weight_spec(a, buffers) for a in weights],
                out_specs=[batch_spec(inp_dim), batch_spec(2 * z_pad)],
            ),
            compiler_params=pltpu.CompilerParams(
                dimension_semantics=("parallel",),
                vmem_limit_bytes=vmem_limit(buffers),
            ),
        )
        return fn(x_flat, eps_p, *weights)

    try:
        recon, heads = run(1)        # single-buffered constant weight blocks
    except Exception:
        recon, heads = run(None)     # fallback: default double buffering

    if B_pad != B:
        recon = recon[:B]
        heads = heads[:B]
    mu = heads[:, :z_dim]
    logvar = heads[:, z_pad:z_pad + z_dim]
    return recon, mu, logvar


def init_params(key, inp_dim, hid_dim, z_dim):
    """Deterministic synthetic parameters.  Linear weights stored as (in, out);
    biases stored as (1, out) for clean 2-D VMEM layout."""
    def linear(k, fan_in, fan_out):
        kw, kb = jax.random.split(k)
        scale = 1.0 / jnp.sqrt(fan_in)
        w = jax.random.uniform(kw, (fan_in, fan_out), jnp.float32, -scale, scale)
        b = jax.random.uniform(kb, (1, fan_out), jnp.float32, -scale, scale)
        return w, b

    keys = jax.random.split(key, 7)
    p = {}
    p["w_in"], p["b_in"] = linear(keys[0], inp_dim, hid_dim)   # encoder.input_to_hidden
    p["w_fe"], p["b_fe"] = linear(keys[1], hid_dim, hid_dim)   # encoder.hiddens.fc1
    p["w_mu"], p["b_mu"] = linear(keys[2], hid_dim, z_dim)     # encoder.mu_encode
    p["w_lv"], p["b_lv"] = linear(keys[3], hid_dim, z_dim)     # encoder.logvar_encode
    p["w_zh"], p["b_zh"] = linear(keys[4], z_dim, hid_dim)     # decoder.from_z_to_hidden
    p["w_fd"], p["b_fd"] = linear(keys[5], hid_dim, hid_dim)   # decoder.hiddens.fc1
    p["w_hi"], p["b_hi"] = linear(keys[6], hid_dim, inp_dim)   # decoder.hidden_to_input
    return p


def reference_forward(x, eps, params):
    """Pure-JAX reference (mirrors PyTorch semantics)."""
    B = x.shape[0]
    inp_dim = x.shape[1] * x.shape[2]
    xf = x.reshape(B, inp_dim)
    h1 = jax.nn.relu(xf @ params["w_in"] + params["b_in"])
    h1 = jax.nn.relu(h1 @ params["w_fe"] + params["b_fe"])
    mu = h1 @ params["w_mu"] + params["b_mu"]
    logvar = h1 @ params["w_lv"] + params["b_lv"]
    z = eps * jnp.exp(0.5 * logvar) + mu
    h3 = jax.nn.relu(z @ params["w_zh"] + params["b_zh"])
    h3 = jax.nn.relu(h3 @ params["w_fd"] + params["b_fd"])
    recon = jax.nn.sigmoid(h3 @ params["w_hi"] + params["b_hi"])
    return recon, mu, logvar


if __name__ == "__main__":
    # Module-consistent shapes: num_nodes=16 -> inp_dim=256.
    batch = 256
    num_nodes = 16
    inp_dim = num_nodes * num_nodes
    hid_dim = 128
    z_dim = 32
    z_pad = _round_up(z_dim, 128)

    key = jax.random.PRNGKey(0)
    k_x, k_eps, k_params = jax.random.split(key, 3)

    # Adjacency-matrix-like input in [0, 1].
    x = jax.random.uniform(k_x, (batch, num_nodes, num_nodes), jnp.float32)

    # eps sampled directly at the lane-padded width so the forward never pads
    # it; only the first z_dim lanes affect the result.
    # TODO(synk): PyTorch draws eps inside the module via std.data.normal_();
    # here it is drawn outside with jax.random for determinism.
    eps_padded = jax.random.normal(k_eps, (batch, z_pad), jnp.float32)
    eps = eps_padded[:, :z_dim]

    params = init_params(k_params, inp_dim, hid_dim, z_dim)
    r_ref, mu_ref, lv_ref = reference_forward(x, eps, params)

    # --- exact f32 path -------------------------------------------------------
    packed_f32 = prepare_params(params, compute_dtype=jnp.float32)
    recon, mu, logvar = gaussian_graph_vae_forward(x, eps_padded, packed_f32)
    jax.block_until_ready((recon, mu, logvar))
    assert jnp.allclose(recon, r_ref, atol=1e-5, rtol=1e-5)
    assert jnp.allclose(mu, mu_ref, atol=1e-5, rtol=1e-5)
    assert jnp.allclose(logvar, lv_ref, atol=1e-5, rtol=1e-5)

    # --- bf16-MXU path (perf: halves HBM bytes for x + weights) ---------------
    # Accuracy/perf trade: bf16 operands, f32 accumulation -> loose tolerance.
    packed_bf16 = prepare_params(params, compute_dtype=jnp.bfloat16)
    recon_b, mu_b, logvar_b = gaussian_graph_vae_forward(x, eps_padded, packed_bf16)
    jax.block_until_ready((recon_b, mu_b, logvar_b))
    assert jnp.allclose(recon_b, r_ref, atol=2e-2, rtol=2e-2)
    assert jnp.allclose(mu_b, mu_ref, atol=2e-2, rtol=2e-2)
    assert jnp.allclose(logvar_b, lv_ref, atol=2e-2, rtol=2e-2)

    print("KERNEL_OK")
</pallas_src>

<mosaic_0001>
module attributes {stable_mosaic.version = 11 : i64} {
  func.func @_vae_kernel(%arg0: i32, %arg1: memref<256x256xf32, #tpu.memory_space<vmem>>, %arg2: memref<256x128xf32, #tpu.memory_space<vmem>>, %arg3: memref<256x128xf32, #tpu.memory_space<vmem>>, %arg4: memref<1x128xf32, #tpu.memory_space<vmem>>, %arg5: memref<128x128xf32, #tpu.memory_space<vmem>>, %arg6: memref<1x128xf32, #tpu.memory_space<vmem>>, %arg7: memref<128x256xf32, #tpu.memory_space<vmem>>, %arg8: memref<1x256xf32, #tpu.memory_space<vmem>>, %arg9: memref<128x128xf32, #tpu.memory_space<vmem>>, %arg10: memref<1x128xf32, #tpu.memory_space<vmem>>, %arg11: memref<128x128xf32, #tpu.memory_space<vmem>>, %arg12: memref<1x128xf32, #tpu.memory_space<vmem>>, %arg13: memref<128x256xf32, #tpu.memory_space<vmem>>, %arg14: memref<1x256xf32, #tpu.memory_space<vmem>>, %arg15: memref<256x256xf32, #tpu.memory_space<vmem>>, %arg16: memref<256x256xf32, #tpu.memory_space<vmem>>) attributes {dimension_semantics = [#tpu.dimension_semantics<parallel>], iteration_bounds = array<i64: 1>, scalar_prefetch = 0 : i64, scratch_operands = 0 : i64, tpu.core_type = #tpu.core_type<tc>, window_params = [{transform_indices = @transform_0, window_bounds = array<i64: 256, 256>}, {transform_indices = @transform_1, window_bounds = array<i64: 256, 128>}, {pipeline_mode = #tpu.pipeline_mode<synchronous>, transform_indices = @transform_2, window_bounds = array<i64: 256, 128>}, {pipeline_mode = #tpu.pipeline_mode<synchronous>, transform_indices = @transform_3, window_bounds = array<i64: 1, 128>}, {pipeline_mode = #tpu.pipeline_mode<synchronous>, transform_indices = @transform_4, window_bounds = array<i64: 128, 128>}, {pipeline_mode = #tpu.pipeline_mode<synchronous>, transform_indices = @transform_5, window_bounds = array<i64: 1, 128>}, {pipeline_mode = #tpu.pipeline_mode<synchronous>, transform_indices = @transform_6, window_bounds = array<i64: 128, 256>}, {pipeline_mode = #tpu.pipeline_mode<synchronous>, transform_indices = @transform_7, window_bounds = array<i64: 1, 256>}, {pipeline_mode = #tpu.pipeline_mode<synchronous>, transform_indices = @transform_8, window_bounds = array<i64: 128, 128>}, {pipeline_mode = #tpu.pipeline_mode<synchronous>, transform_indices = @transform_9, window_bounds = array<i64: 1, 128>}, {pipeline_mode = #tpu.pipeline_mode<synchronous>, transform_indices = @transform_10, window_bounds = array<i64: 128, 128>}, {pipeline_mode = #tpu.pipeline_mode<synchronous>, transform_indices = @transform_11, window_bounds = array<i64: 1, 128>}, {pipeline_mode = #tpu.pipeline_mode<synchronous>, transform_indices = @transform_12, window_bounds = array<i64: 128, 256>}, {pipeline_mode = #tpu.pipeline_mode<synchronous>, transform_indices = @transform_13, window_bounds = array<i64: 1, 256>}, {transform_indices = @transform_14, window_bounds = array<i64: 256, 256>}, {transform_indices = @transform_15, window_bounds = array<i64: 256, 256>}]} {
    %c0 = arith.constant 0 : index
    %c0_0 = arith.constant 0 : index
    %0 = vector.load %arg1[%c0, %c0_0] : memref<256x256xf32, #tpu.memory_space<vmem>>, vector<256x256xf32>
    %c0_1 = arith.constant 0 : index
    %c0_2 = arith.constant 0 : index
    %1 = vector.load %arg3[%c0_1, %c0_2] : memref<256x128xf32, #tpu.memory_space<vmem>>, vector<256x128xf32>
    %cst = arith.constant dense<0.000000e+00> : vector<256x128xf32>
    %2 = tpu.matmul %0, %1, %cst {dimension_numbers = #tpu.dot_dimension_numbers<[1], [0], [0], [1], [0, 0, 1, 1], [], []>} : vector<256x256xf32>, vector<256x128xf32>, vector<256x128xf32> -> vector<256x128xf32>
    %c0_3 = arith.constant 0 : index
    %c0_4 = arith.constant 0 : index
    %3 = vector.load %arg4[%c0_3, %c0_4] : memref<1x128xf32, #tpu.memory_space<vmem>>, vector<1x128xf32>
    %4 = vector.broadcast %3 : vector<1x128xf32> to vector<256x128xf32>
    %5 = arith.addf %2, %4 : vector<256x128xf32>
    %cst_5 = arith.constant 0.000000e+00 : f32
    %6 = vector.broadcast %cst_5 : f32 to vector<256x128xf32>
    %7 = arith.maximumf %5, %6 : vector<256x128xf32>
    %c0_6 = arith.constant 0 : index
    %c0_7 = arith.constant 0 : index
    %8 = vector.load %arg5[%c0_6, %c0_7] : memref<128x128xf32, #tpu.memory_space<vmem>>, vector<128x128xf32>
    %cst_8 = arith.constant dense<0.000000e+00> : vector<256x128xf32>
    %9 = tpu.matmul %7, %8, %cst_8 {dimension_numbers = #tpu.dot_dimension_numbers<[1], [0], [0], [1], [0, 0, 1, 1], [], []>} : vector<256x128xf32>, vector<128x128xf32>, vector<256x128xf32> -> vector<256x128xf32>
    %c0_9 = arith.constant 0 : index
    %c0_10 = arith.constant 0 : index
    %10 = vector.load %arg6[%c0_9, %c0_10] : memref<1x128xf32, #tpu.memory_space<vmem>>, vector<1x128xf32>
    %11 = vector.broadcast %10 : vector<1x128xf32> to vector<256x128xf32>
    %12 = arith.addf %9, %11 : vector<256x128xf32>
    %cst_11 = arith.constant 0.000000e+00 : f32
    %13 = vector.broadcast %cst_11 : f32 to vector<256x128xf32>
    %14 = arith.maximumf %12, %13 : vector<256x128xf32>
    %c0_12 = arith.constant 0 : index
    %c0_13 = arith.constant 0 : index
    %15 = vector.load %arg7[%c0_12, %c0_13] : memref<128x256xf32, #tpu.memory_space<vmem>>, vector<128x256xf32>
    %cst_14 = arith.constant dense<0.000000e+00> : vector<256x256xf32>
    %16 = tpu.matmul %14, %15, %cst_14 {dimension_numbers = #tpu.dot_dimension_numbers<[1], [0], [0], [1], [0, 0, 1, 1], [], []>} : vector<256x128xf32>, vector<128x256xf32>, vector<256x256xf32> -> vector<256x256xf32>
    %c0_15 = arith.constant 0 : index
    %c0_16 = arith.constant 0 : index
    %17 = vector.load %arg8[%c0_15, %c0_16] : memref<1x256xf32, #tpu.memory_space<vmem>>, vector<1x256xf32>
    %18 = vector.broadcast %17 : vector<1x256xf32> to vector<256x256xf32>
    %19 = arith.addf %16, %18 : vector<256x256xf32>
    %c0_17 = arith.constant 0 : index
    %c0_18 = arith.constant 0 : index
    %20 = vector.load %arg16[%c0_17, %c0_18] : memref<256x256xf32, #tpu.memory_space<vmem>>, vector<256x256xf32>
    tpu.vector_store %arg16[%c0_17, %c0_18], %19 {strides = array<i32>} : memref<256x256xf32, #tpu.memory_space<vmem>>, vector<256x256xf32>,
    %c0_19 = arith.constant 0 : index
    %c0_20 = arith.constant 0 : index
    %21 = vector.load %arg16[%c0_19, %c0_20] : memref<256x256xf32, #tpu.memory_space<vmem>>, vector<256x128xf32>
    %c0_21 = arith.constant 0 : index
    %c128 = arith.constant 128 : index
    %22 = vector.load %arg16[%c0_21, %c128] : memref<256x256xf32, #tpu.memory_space<vmem>>, vector<256x128xf32>
    %c0_22 = arith.constant 0 : index
    %c0_23 = arith.constant 0 : index
    %23 = vector.load %arg2[%c0_22, %c0_23] : memref<256x128xf32, #tpu.memory_space<vmem>>, vector<256x128xf32>
    %cst_24 = arith.constant 5.000000e-01 : f32
    %24 = vector.broadcast %cst_24 : f32 to vector<256x128xf32>
    %25 = arith.mulf %24, %22 : vector<256x128xf32>
    %26 = math.exp %25 : vector<256x128xf32>
    %27 = arith.mulf %23, %26 : vector<256x128xf32>
    %28 = arith.addf %27, %21 : vector<256x128xf32>
    %c0_25 = arith.constant 0 : index
    %c0_26 = arith.constant 0 : index
    %29 = vector.load %arg9[%c0_25, %c0_26] : memref<128x128xf32, #tpu.memory_space<vmem>>, vector<128x128xf32>
    %cst_27 = arith.constant dense<0.000000e+00> : vector<256x128xf32>
    %30 = tpu.matmul %28, %29, %cst_27 {dimension_numbers = #tpu.dot_dimension_numbers<[1], [0], [0], [1], [0, 0, 1, 1], [], []>} : vector<256x128xf32>, vector<128x128xf32>, vector<256x128xf32> -> vector<256x128xf32>
    %c0_28 = arith.constant 0 : index
    %c0_29 = arith.constant 0 : index
    %31 = vector.load %arg10[%c0_28, %c0_29] : memref<1x128xf32, #tpu.memory_space<vmem>>, vector<1x128xf32>
    %32 = vector.broadcast %31 : vector<1x128xf32> to vector<256x128xf32>
    %33 = arith.addf %30, %32 : vector<256x128xf32>
    %cst_30 = arith.constant 0.000000e+00 : f32
    %34 = vector.broadcast %cst_30 : f32 to vector<256x128xf32>
    %35 = arith.maximumf %33, %34 : vector<256x128xf32>
    %c0_31 = arith.constant 0 : index
    %c0_32 = arith.constant 0 : index
    %36 = vector.load %arg11[%c0_31, %c0_32] : memref<128x128xf32, #tpu.memory_space<vmem>>, vector<128x128xf32>
    %cst_33 = arith.constant dense<0.000000e+00> : vector<256x128xf32>
    %37 = tpu.matmul %35, %36, %cst_33 {dimension_numbers = #tpu.dot_dimension_numbers<[1], [0], [0], [1], [0, 0, 1, 1], [], []>} : vector<256x128xf32>, vector<128x128xf32>, vector<256x128xf32> -> vector<256x128xf32>
    %c0_34 = arith.constant 0 : index
    %c0_35 = arith.constant 0 : index
    %38 = vector.load %arg12[%c0_34, %c0_35] : memref<1x128xf32, #tpu.memory_space<vmem>>, vector<1x128xf32>
    %39 = vector.broadcast %38 : vector<1x128xf32> to vector<256x128xf32>
    %40 = arith.addf %37, %39 : vector<256x128xf32>
    %cst_36 = arith.constant 0.000000e+00 : f32
    %41 = vector.broadcast %cst_36 : f32 to vector<256x128xf32>
    %42 = arith.maximumf %40, %41 : vector<256x128xf32>
    %c0_37 = arith.constant 0 : index
    %c0_38 = arith.constant 0 : index
    %43 = vector.load %arg13[%c0_37, %c0_38] : memref<128x256xf32, #tpu.memory_space<vmem>>, vector<128x256xf32>
    %cst_39 = arith.constant dense<0.000000e+00> : vector<256x256xf32>
    %44 = tpu.matmul %42, %43, %cst_39 {dimension_numbers = #tpu.dot_dimension_numbers<[1], [0], [0], [1], [0, 0, 1, 1], [], []>} : vector<256x128xf32>, vector<128x256xf32>, vector<256x256xf32> -> vector<256x256xf32>
    %c0_40 = arith.constant 0 : index
    %c0_41 = arith.constant 0 : index
    %45 = vector.load %arg14[%c0_40, %c0_41] : memref<1x256xf32, #tpu.memory_space<vmem>>, vector<1x256xf32>
    %46 = vector.broadcast %45 : vector<1x256xf32> to vector<256x256xf32>
    %47 = arith.addf %44, %46 : vector<256x256xf32>
    %48 = arith.negf %47 : vector<256x256xf32>
    %49 = math.exp %48 : vector<256x256xf32>
    %cst_42 = arith.constant 1.000000e+00 : f32
    %50 = vector.broadcast %cst_42 : f32 to vector<256x256xf32>
    %51 = arith.addf %50, %49 : vector<256x256xf32>
    %52 = arith.divf %50, %51 : vector<256x256xf32>
    %c0_43 = arith.constant 0 : index
    %c0_44 = arith.constant 0 : index
    %53 = vector.load %arg15[%c0_43, %c0_44] : memref<256x256xf32, #tpu.memory_space<vmem>>, vector<256x256xf32>
    tpu.vector_store %arg15[%c0_43, %c0_44], %52 {strides = array<i32>} : memref<256x256xf32, #tpu.memory_space<vmem>>, vector<256x256xf32>,
    return
  }
  func.func @transform_0(%arg0: i32) -> (i32, i32) {
    %c0_i32 = arith.constant 0 : i32
    %c0_i32_0 = arith.constant 0 : i32
    return %arg0, %c0_i32 : i32, i32
  }
  func.func @transform_1(%arg0: i32) -> (i32, i32) {
    %c0_i32 = arith.constant 0 : i32
    %c0_i32_0 = arith.constant 0 : i32
    return %arg0, %c0_i32 : i32, i32
  }
  func.func @transform_2(%arg0: i32) -> (i32, i32) {
    %c0_i32 = arith.constant 0 : i32
    %c0_i32_0 = arith.constant 0 : i32
    %c0_i32_1 = arith.constant 0 : i32
    return %c0_i32, %c0_i32_0 : i32, i32
  }
  func.func @transform_3(%arg0: i32) -> (i32, i32) {
    %c0_i32 = arith.constant 0 : i32
    %c0_i32_0 = arith.constant 0 : i32
    %c0_i32_1 = arith.constant 0 : i32
    return %c0_i32, %c0_i32_0 : i32, i32
  }
  func.func @transform_4(%arg0: i32) -> (i32, i32) {
    %c0_i32 = arith.constant 0 : i32
    %c0_i32_0 = arith.constant 0 : i32
    %c0_i32_1 = arith.constant 0 : i32
    return %c0_i32, %c0_i32_0 : i32, i32
  }
  func.func @transform_5(%arg0: i32) -> (i32, i32) {
    %c0_i32 = arith.constant 0 : i32
    %c0_i32_0 = arith.constant 0 : i32
    %c0_i32_1 = arith.constant 0 : i32
    return %c0_i32, %c0_i32_0 : i32, i32
  }
  func.func @transform_6(%arg0: i32) -> (i32, i32) {
    %c0_i32 = arith.constant 0 : i32
    %c0_i32_0 = arith.constant 0 : i32
    %c0_i32_1 = arith.constant 0 : i32
    return %c0_i32, %c0_i32_0 : i32, i32
  }
  func.func @transform_7(%arg0: i32) -> (i32, i32) {
    %c0_i32 = arith.constant 0 : i32
    %c0_i32_0 = arith.constant 0 : i32
    %c0_i32_1 = arith.constant 0 : i32
    return %c0_i32, %c0_i32_0 : i32, i32
  }
  func.func @transform_8(%arg0: i32) -> (i32, i32) {
    %c0_i32 = arith.constant 0 : i32
    %c0_i32_0 = arith.constant 0 : i32
    %c0_i32_1 = arith.constant 0 : i32
    return %c0_i32, %c0_i32_0 : i32, i32
  }
  func.func @transform_9(%arg0: i32) -> (i32, i32) {
    %c0_i32 = arith.constant 0 : i32
    %c0_i32_0 = arith.constant 0 : i32
    %c0_i32_1 = arith.constant 0 : i32
    return %c0_i32, %c0_i32_0 : i32, i32
  }
  func.func @transform_10(%arg0: i32) -> (i32, i32) {
    %c0_i32 = arith.constant 0 : i32
    %c0_i32_0 = arith.constant 0 : i32
    %c0_i32_1 = arith.constant 0 : i32
    return %c0_i32, %c0_i32_0 : i32, i32
  }
  func.func @transform_11(%arg0: i32) -> (i32, i32) {
    %c0_i32 = arith.constant 0 : i32
    %c0_i32_0 = arith.constant 0 : i32
    %c0_i32_1 = arith.constant 0 : i32
    return %c0_i32, %c0_i32_0 : i32, i32
  }
  func.func @transform_12(%arg0: i32) -> (i32, i32) {
    %c0_i32 = arith.constant 0 : i32
    %c0_i32_0 = arith.constant 0 : i32
    %c0_i32_1 = arith.constant 0 : i32
    return %c0_i32, %c0_i32_0 : i32, i32
  }
  func.func @transform_13(%arg0: i32) -> (i32, i32) {
    %c0_i32 = arith.constant 0 : i32
    %c0_i32_0 = arith.constant 0 : i32
    %c0_i32_1 = arith.constant 0 : i32
    return %c0_i32, %c0_i32_0 : i32, i32
  }
  func.func @transform_14(%arg0: i32) -> (i32, i32) {
    %c0_i32 = arith.constant 0 : i32
    %c0_i32_0 = arith.constant 0 : i32
    return %arg0, %c0_i32 : i32, i32
  }
  func.func @transform_15(%arg0: i32) -> (i32, i32) {
    %c0_i32 = arith.constant 0 : i32
    %c0_i32_0 = arith.constant 0 : i32
    return %arg0, %c0_i32 : i32, i32
  }
}

module attributes {stable_mosaic.version = 11 : i64} {
  func.func @_vae_kernel(%arg0: i32, %arg1: memref<256x256xf32, #tpu.memory_space<vmem>>, %arg2: memref<256x128xf32, #tpu.memory_space<vmem>>, %arg3: memref<256x128xf32, #tpu.memory_space<vmem>>, %arg4: memref<1x128xf32, #tpu.memory_space<vmem>>, %arg5: memref<128x128xf32, #tpu.memory_space<vmem>>, %arg6: memref<1x128xf32, #tpu.memory_space<vmem>>, %arg7: memref<128x256xf32, #tpu.memory_space<vmem>>, %arg8: memref<1x256xf32, #tpu.memory_space<vmem>>, %arg9: memref<128x128xf32, #tpu.memory_space<vmem>>, %arg10: memref<1x128xf32, #tpu.memory_space<vmem>>, %arg11: memref<128x128xf32, #tpu.memory_space<vmem>>, %arg12: memref<1x128xf32, #tpu.memory_space<vmem>>, %arg13: memref<128x256xf32, #tpu.memory_space<vmem>>, %arg14: memref<1x256xf32, #tpu.memory_space<vmem>>, %arg15: memref<256x256xf32, #tpu.memory_space<vmem>>, %arg16: memref<256x256xf32, #tpu.memory_space<vmem>>) attributes {dimension_semantics = [#tpu.dimension_semantics<parallel>], iteration_bounds = array<i64: 1>, scalar_prefetch = 0 : i64, scratch_operands = 0 : i64, tpu.core_type = #tpu.core_type<tc>, window_params = [{transform_indices = @transform_0, window_bounds = array<i64: 256, 256>}, {transform_indices = @transform_1, window_bounds = array<i64: 256, 128>}, {pipeline_mode = #tpu.pipeline_mode<synchronous>, transform_indices = @transform_2, window_bounds = array<i64: 256, 128>}, {pipeline_mode = #tpu.pipeline_mode<synchronous>, transform_indices = @transform_3, window_bounds = array<i64: 1, 128>}, {pipeline_mode = #tpu.pipeline_mode<synchronous>, transform_indices = @transform_4, window_bounds = array<i64: 128, 128>}, {pipeline_mode = #tpu.pipeline_mode<synchronous>, transform_indices = @transform_5, window_bounds = array<i64: 1, 128>}, {pipeline_mode = #tpu.pipeline_mode<synchronous>, transform_indices = @transform_6, window_bounds = array<i64: 128, 256>}, {pipeline_mode = #tpu.pipeline_mode<synchronous>, transform_indices = @transform_7, window_bounds = array<i64: 1, 256>}, {pipeline_mode = #tpu.pipeline_mode<synchronous>, transform_indices = @transform_8, window_bounds = array<i64: 128, 128>}, {pipeline_mode = #tpu.pipeline_mode<synchronous>, transform_indices = @transform_9, window_bounds = array<i64: 1, 128>}, {pipeline_mode = #tpu.pipeline_mode<synchronous>, transform_indices = @transform_10, window_bounds = array<i64: 128, 128>}, {pipeline_mode = #tpu.pipeline_mode<synchronous>, transform_indices = @transform_11, window_bounds = array<i64: 1, 128>}, {pipeline_mode = #tpu.pipeline_mode<synchronous>, transform_indices = @transform_12, window_bounds = array<i64: 128, 256>}, {pipeline_mode = #tpu.pipeline_mode<synchronous>, transform_indices = @transform_13, window_bounds = array<i64: 1, 256>}, {transform_indices = @transform_14, window_bounds = array<i64: 256, 256>}, {transform_indices = @transform_15, window_bounds = array<i64: 256, 256>}]} {
    %c0 = arith.constant 0 : index
    %c0_0 = arith.constant 0 : index
    %0 = vector.load %arg1[%c0, %c0_0] : memref<256x256xf32, #tpu.memory_space<vmem>>, vector<256x256xf32>
    %c0_1 = arith.constant 0 : index
    %c0_2 = arith.constant 0 : index
    %1 = vector.load %arg3[%c0_1, %c0_2] : memref<256x128xf32, #tpu.memory_space<vmem>>, vector<256x128xf32>
    %cst = arith.constant dense<0.000000e+00> : vector<256x128xf32>
    %2 = tpu.matmul %0, %1, %cst {dimension_numbers = #tpu.dot_dimension_numbers<[1], [0], [0], [1], [0, 0, 1, 1], [], []>} : vector<256x256xf32>, vector<256x128xf32>, vector<256x128xf32> -> vector<256x128xf32>
    %c0_3 = arith.constant 0 : index
    %c0_4 = arith.constant 0 : index
    %3 = vector.load %arg4[%c0_3, %c0_4] : memref<1x128xf32, #tpu.memory_space<vmem>>, vector<1x128xf32>
    %4 = vector.broadcast %3 : vector<1x128xf32> to vector<256x128xf32>
    %5 = arith.addf %2, %4 : vector<256x128xf32>
    %cst_5 = arith.constant 0.000000e+00 : f32
    %6 = vector.broadcast %cst_5 : f32 to vector<256x128xf32>
    %7 = arith.maximumf %5, %6 : vector<256x128xf32>
    %c0_6 = arith.constant 0 : index
    %c0_7 = arith.constant 0 : index
    %8 = vector.load %arg5[%c0_6, %c0_7] : memref<128x128xf32, #tpu.memory_space<vmem>>, vector<128x128xf32>
    %cst_8 = arith.constant dense<0.000000e+00> : vector<256x128xf32>
    %9 = tpu.matmul %7, %8, %cst_8 {dimension_numbers = #tpu.dot_dimension_numbers<[1], [0], [0], [1], [0, 0, 1, 1], [], []>} : vector<256x128xf32>, vector<128x128xf32>, vector<256x128xf32> -> vector<256x128xf32>
    %c0_9 = arith.constant 0 : index
    %c0_10 = arith.constant 0 : index
    %10 = vector.load %arg6[%c0_9, %c0_10] : memref<1x128xf32, #tpu.memory_space<vmem>>, vector<1x128xf32>
    %11 = vector.broadcast %10 : vector<1x128xf32> to vector<256x128xf32>
    %12 = arith.addf %9, %11 : vector<256x128xf32>
    %cst_11 = arith.constant 0.000000e+00 : f32
    %13 = vector.broadcast %cst_11 : f32 to vector<256x128xf32>
    %14 = arith.maximumf %12, %13 : vector<256x128xf32>
    %c0_12 = arith.constant 0 : index
    %c0_13 = arith.constant 0 : index
    %15 = vector.load %arg7[%c0_12, %c0_13] : memref<128x256xf32, #tpu.memory_space<vmem>>, vector<128x256xf32>
    %cst_14 = arith.constant dense<0.000000e+00> : vector<256x256xf32>
    %16 = tpu.matmul %14, %15, %cst_14 {dimension_numbers = #tpu.dot_dimension_numbers<[1], [0], [0], [1], [0, 0, 1, 1], [], []>} : vector<256x128xf32>, vector<128x256xf32>, vector<256x256xf32> -> vector<256x256xf32>
    %c0_15 = arith.constant 0 : index
    %c0_16 = arith.constant 0 : index
    %17 = vector.load %arg8[%c0_15, %c0_16] : memref<1x256xf32, #tpu.memory_space<vmem>>, vector<1x256xf32>
    %18 = vector.broadcast %17 : vector<1x256xf32> to vector<256x256xf32>
    %19 = arith.addf %16, %18 : vector<256x256xf32>
    %c0_17 = arith.constant 0 : index
    %c0_18 = arith.constant 0 : index
    %20 = vector.load %arg16[%c0_17, %c0_18] : memref<256x256xf32, #tpu.memory_space<vmem>>, vector<256x256xf32>
    tpu.vector_store %arg16[%c0_17, %c0_18], %19 {strides = array<i32>} : memref<256x256xf32, #tpu.memory_space<vmem>>, vector<256x256xf32>,
    %c0_19 = arith.constant 0 : index
    %c0_20 = arith.constant 0 : index
    %21 = vector.load %arg16[%c0_19, %c0_20] : memref<256x256xf32, #tpu.memory_space<vmem>>, vector<256x128xf32>
    %c0_21 = arith.constant 0 : index
    %c128 = arith.constant 128 : index
    %22 = vector.load %arg16[%c0_21, %c128] : memref<256x256xf32, #tpu.memory_space<vmem>>, vector<256x128xf32>
    %c0_22 = arith.constant 0 : index
    %c0_23 = arith.constant 0 : index
    %23 = vector.load %arg2[%c0_22, %c0_23] : memref<256x128xf32, #tpu.memory_space<vmem>>, vector<256x128xf32>
    %cst_24 = arith.constant 5.000000e-01 : f32
    %24 = vector.broadcast %cst_24 : f32 to vector<256x128xf32>
    %25 = arith.mulf %24, %22 : vector<256x128xf32>
    %26 = math.exp %25 : vector<256x128xf32>
    %27 = arith.mulf %23, %26 : vector<256x128xf32>
    %28 = arith.addf %27, %21 : vector<256x128xf32>
    %c0_25 = arith.constant 0 : index
    %c0_26 = arith.constant 0 : index
    %29 = vector.load %arg9[%c0_25, %c0_26] : memref<128x128xf32, #tpu.memory_space<vmem>>, vector<128x128xf32>
    %cst_27 = arith.constant dense<0.000000e+00> : vector<256x128xf32>
    %30 = tpu.matmul %28, %29, %cst_27 {dimension_numbers = #tpu.dot_dimension_numbers<[1], [0], [0], [1], [0, 0, 1, 1], [], []>} : vector<256x128xf32>, vector<128x128xf32>, vector<256x128xf32> -> vector<256x128xf32>
    %c0_28 = arith.constant 0 : index
    %c0_29 = arith.constant 0 : index
    %31 = vector.load %arg10[%c0_28, %c0_29] : memref<1x128xf32, #tpu.memory_space<vmem>>, vector<1x128xf32>
    %32 = vector.broadcast %31 : vector<1x128xf32> to vector<256x128xf32>
    %33 = arith.addf %30, %32 : vector<256x128xf32>
    %cst_30 = arith.constant 0.000000e+00 : f32
    %34 = vector.broadcast %cst_30 : f32 to vector<256x128xf32>
    %35 = arith.maximumf %33, %34 : vector<256x128xf32>
    %c0_31 = arith.constant 0 : index
    %c0_32 = arith.constant 0 : index
    %36 = vector.load %arg11[%c0_31, %c0_32] : memref<128x128xf32, #tpu.memory_space<vmem>>, vector<128x128xf32>
    %cst_33 = arith.constant dense<0.000000e+00> : vector<256x128xf32>
    %37 = tpu.matmul %35, %36, %cst_33 {dimension_numbers = #tpu.dot_dimension_numbers<[1], [0], [0], [1], [0, 0, 1, 1], [], []>} : vector<256x128xf32>, vector<128x128xf32>, vector<256x128xf32> -> vector<256x128xf32>
    %c0_34 = arith.constant 0 : index
    %c0_35 = arith.constant 0 : index
    %38 = vector.load %arg12[%c0_34, %c0_35] : memref<1x128xf32, #tpu.memory_space<vmem>>, vector<1x128xf32>
    %39 = vector.broadcast %38 : vector<1x128xf32> to vector<256x128xf32>
    %40 = arith.addf %37, %39 : vector<256x128xf32>
    %cst_36 = arith.constant 0.000000e+00 : f32
    %41 = vector.broadcast %cst_36 : f32 to vector<256x128xf32>
    %42 = arith.maximumf %40, %41 : vector<256x128xf32>
    %c0_37 = arith.constant 0 : index
    %c0_38 = arith.constant 0 : index
    %43 = vector.load %arg13[%c0_37, %c0_38] : memref<128x256xf32, #tpu.memory_space<vmem>>, vector<128x256xf32>
    %cst_39 = arith.constant dense<0.000000e+00> : vector<256x256xf32>
    %44 = tpu.matmul %42, %43, %cst_39 {dimension_numbers = #tpu.dot_dimension_numbers<[1], [0], [0], [1], [0, 0, 1, 1], [], []>} : vector<256x128xf32>, vector<128x256xf32>, vector<256x256xf32> -> vector<256x256xf32>
    %c0_40 = arith.constant 0 : index
    %c0_41 = arith.constant 0 : index
    %45 = vector.load %arg14[%c0_40, %c0_41] : memref<1x256xf32, #tpu.memory_space<vmem>>, vector<1x256xf32>
    %46 = vector.broadcast %45 : vector<1x256xf32> to vector<256x256xf32>
    %47 = arith.addf %44, %46 : vector<256x256xf32>
    %48 = arith.negf %47 : vector<256x256xf32>
    %49 = math.exp %48 : vector<256x256xf32>
    %cst_42 = arith.constant 1.000000e+00 : f32
    %50 = vector.broadcast %cst_42 : f32 to vector<256x256xf32>
    %51 = arith.addf %50, %49 : vector<256x256xf32>
    %52 = arith.divf %50, %51 : vector<256x256xf32>
    %c0_43 = arith.constant 0 : index
    %c0_44 = arith.constant 0 : index
    %53 = vector.load %arg15[%c0_43, %c0_44] : memref<256x256xf32, #tpu.memory_space<vmem>>, vector<256x256xf32>
    tpu.vector_store %arg15[%c0_43, %c0_44], %52 {strides = array<i32>} : memref<256x256xf32, #tpu.memory_space<vmem>>, vector<256x256xf32>,
    return
  }
  func.func @transform_0(%arg0: i32) -> (i32, i32) {
    %c0_i32 = arith.constant 0 : i32
    %c0_i32_0 = arith.constant 0 : i32
    return %arg0, %c0_i32 : i32, i32
  }
  func.func @transform_1(%arg0: i32) -> (i32, i32) {
    %c0_i32 = arith.constant 0 : i32
    %c0_i32_0 = arith.constant 0 : i32
    return %arg0, %c0_i32 : i32, i32
  }
  func.func @transform_2(%arg0: i32) -> (i32, i32) {
    %c0_i32 = arith.constant 0 : i32
    %c0_i32_0 = arith.constant 0 : i32
    %c0_i32_1 = arith.constant 0 : i32
    return %c0_i32, %c0_i32_0 : i32, i32
  }
  func.func @transform_3(%arg0: i32) -> (i32, i32) {
    %c0_i32 = arith.constant 0 : i32
    %c0_i32_0 = arith.constant 0 : i32
    %c0_i32_1 = arith.constant 0 : i32
    return %c0_i32, %c0_i32_0 : i32, i32
  }
  func.func @transform_4(%arg0: i32) -> (i32, i32) {
    %c0_i32 = arith.constant 0 : i32
    %c0_i32_0 = arith.constant 0 : i32
    %c0_i32_1 = arith.constant 0 : i32
    return %c0_i32, %c0_i32_0 : i32, i32
  }
  func.func @transform_5(%arg0: i32) -> (i32, i32) {
    %c0_i32 = arith.constant 0 : i32
    %c0_i32_0 = arith.constant 0 : i32
    %c0_i32_1 = arith.constant 0 : i32
    return %c0_i32, %c0_i32_0 : i32, i32
  }
  func.func @transform_6(%arg0: i32) -> (i32, i32) {
    %c0_i32 = arith.constant 0 : i32
    %c0_i32_0 = arith.constant 0 : i32
    %c0_i32_1 = arith.constant 0 : i32
    return %c0_i32, %c0_i32_0 : i32, i32
  }
  func.func @transform_7(%arg0: i32) -> (i32, i32) {
    %c0_i32 = arith.constant 0 : i32
    %c0_i32_0 = arith.constant 0 : i32
    %c0_i32_1 = arith.constant 0 : i32
    return %c0_i32, %c0_i32_0 : i32, i32
  }
  func.func @transform_8(%arg0: i32) -> (i32, i32) {
    %c0_i32 = arith.constant 0 : i32
    %c0_i32_0 = arith.constant 0 : i32
    %c0_i32_1 = arith.constant 0 : i32
    return %c0_i32, %c0_i32_0 : i32, i32
  }
  func.func @transform_9(%arg0: i32) -> (i32, i32) {
    %c0_i32 = arith.constant 0 : i32
    %c0_i32_0 = arith.constant 0 : i32
    %c0_i32_1 = arith.constant 0 : i32
    return %c0_i32, %c0_i32_0 : i32, i32
  }
  func.func @transform_10(%arg0: i32) -> (i32, i32) {
    %c0_i32 = arith.constant 0 : i32
    %c0_i32_0 = arith.constant 0 : i32
    %c0_i32_1 = arith.constant 0 : i32
    return %c0_i32, %c0_i32_0 : i32, i32
  }
  func.func @transform_11(%arg0: i32) -> (i32, i32) {
    %c0_i32 = arith.constant 0 : i32
    %c0_i32_0 = arith.constant 0 : i32
    %c0_i32_1 = arith.constant 0 : i32
    return %c0_i32, %c0_i32_0 : i32, i32
  }
  func.func @transform_12(%arg0: i32) -> (i32, i32) {
    %c0_i32 = arith.constant 0 : i32
    %c0_i32_0 = arith.constant 0 : i32
    %c0_i32_1 = arith.constant 0 : i32
    return %c0_i32, %c0_i32_0 : i32, i32
  }
  func.func @transform_13(%arg0: i32) -> (i32, i32) {
    %c0_i32 = arith.constant 0 : i32
    %c0_i32_0 = arith.constant 0 : i32
    %c0_i32_1 = arith.constant 0 : i32
    return %c0_i32, %c0_i32_0 : i32, i32
  }
  func.func @transform_14(%arg0: i32) -> (i32, i32) {
    %c0_i32 = arith.constant 0 : i32
    %c0_i32_0 = arith.constant 0 : i32
    return %arg0, %c0_i32 : i32, i32
  }
  func.func @transform_15(%arg0: i32) -> (i32, i32) {
    %c0_i32 = arith.constant 0 : i32
    %c0_i32_0 = arith.constant 0 : i32
    return %arg0, %c0_i32 : i32, i32
  }
}

</mosaic_0001>

<llo_original>
// kernel: tpu_custom_call.1
$region0: #{tpu_custom_call.1}
  #allocation0 [shape = 'u32[]', space=smem, size = 0x4, offset = 0x4, fixed_abs, tag = 'smem constant byte address 0x4 - core index']
  #allocation1 [shape = 'u32[144,128]{1,0:T(1,128)}', space=vmem, size = 0x12000, scoped, tag = 'internal scratch']
  %s0 = inlined_call_operand.hbm [shape: f32[256,256], index: 0, kind: input, shape index: {}]
  %s1 = inlined_call_operand.hbm [shape: f32[256,128], index: 1, kind: input, shape index: {}]
  %s2 = inlined_call_operand.hbm [shape: f32[256,128], index: 2, kind: input, shape index: {}]
  %s3 = inlined_call_operand.vmem [shape: f32[1,128], index: 3, kind: input, shape index: {}]
  %s4 = inlined_call_operand.hbm [shape: f32[128,128], index: 4, kind: input, shape index: {}]
  %s5 = inlined_call_operand.vmem [shape: f32[1,128], index: 5, kind: input, shape index: {}]
  %s6 = inlined_call_operand.hbm [shape: f32[128,256], index: 6, kind: input, shape index: {}]
  %s7 = inlined_call_operand.vmem [shape: f32[1,256], index: 7, kind: input, shape index: {}]
  %s8 = inlined_call_operand.hbm [shape: f32[128,128], index: 8, kind: input, shape index: {}]
  %s9 = inlined_call_operand.vmem [shape: f32[1,128], index: 9, kind: input, shape index: {}]
  %s10 = inlined_call_operand.hbm [shape: f32[128,128], index: 10, kind: input, shape index: {}]
  %s11 = inlined_call_operand.vmem [shape: f32[1,128], index: 11, kind: input, shape index: {}]
  %s12 = inlined_call_operand.hbm [shape: f32[128,256], index: 12, kind: input, shape index: {}]
  %s13 = inlined_call_operand.vmem [shape: f32[1,256], index: 13, kind: input, shape index: {}]
  %s14 = inlined_call_operand.hbm [shape: f32[256,256], index: 14, kind: output, shape index: {0}]
  %s15 = inlined_call_operand.hbm [shape: f32[256,256], index: 15, kind: output, shape index: {1}]
  %16 = xla_tuple %s14, %s15
  %s17 = sld [smem:[#allocation0]]
  $region106: #{tpu_custom_call.1} parent=0
    _
  %s19 = ssub.s32 1, %s17
  %s20 = scalar_select 0, %s19, %s17
  $region1: #{tpu_custom_call.1} parent=0
    #allocation2 [shape = 'u8[262144]{0}', space=vmem, size = 0x40000, scoped, tag = 'input window, operand 0, single buffered']
    #allocation3 [shape = 's32[1]{0}', space=sflag, size = 0x4, scoped, tag = 'scoped memory for tpu_custom_call.1']
    #allocation4 [shape = 's32[1]{0}', space=sflag, size = 0x4, scoped, tag = 'scoped memory for tpu_custom_call.1']
    #allocation5 [shape = 'u8[131072]{0}', space=vmem, size = 0x20000, scoped, tag = 'input window, operand 1, single buffered']
    #allocation6 [shape = 's32[1]{0}', space=sflag, size = 0x4, scoped, tag = 'scoped memory for tpu_custom_call.1']
    #allocation7 [shape = 'u8[131072]{0}', space=vmem, size = 0x20000, scoped, tag = 'input window, operand 2, single buffered']
    #allocation8 [shape = 'u8[65536]{0}', space=vmem, size = 0x10000, scoped, tag = 'input window, operand 4, single buffered']
    #allocation9 [shape = 's32[1]{0}', space=sflag, size = 0x4, scoped, tag = 'scoped memory for tpu_custom_call.1']
    #allocation10 [shape = 'u8[131072]{0}', space=vmem, size = 0x20000, scoped, tag = 'input window, operand 6, single buffered']
    #allocation11 [shape = 'u8[65536]{0}', space=vmem, size = 0x10000, scoped, tag = 'input window, operand 8, single buffered']
    #allocation12 [shape = 's32[1]{0}', space=sflag, size = 0x4, scoped, tag = 'scoped memory for tpu_custom_call.1']
    #allocation13 [shape = 'u8[65536]{0}', space=vmem, size = 0x10000, scoped, tag = 'input window, operand 10, single buffered']
    #allocation14 [shape = 'u8[131072]{0}', space=vmem, size = 0x20000, scoped, tag = 'input window, operand 12, single buffered']
    #allocation15 [shape = 's32[1]{0}', space=sflag, size = 0x4, scoped, tag = 'scoped memory for tpu_custom_call.1']
    #allocation16 [shape = 'u8[262144]{0}', space=vmem, size = 0x40000, scoped, tag = 'output window, operand 0, single buffered']
    #allocation17 [shape = 'u8[262144]{0}', space=vmem, size = 0x40000, scoped, tag = 'output window, operand 1, single buffered']
    #allocation18 [shape = 's32[1]{0}', space=sflag, size = 0x4, scoped, tag = 'scoped memory for tpu_custom_call.1']
    %21 = vsyncpa [#allocation3], 0
    %22 = vsyncpa [#allocation6], 0
    %23 = vsyncpa [#allocation9], 0
    %24 = vsyncpa [#allocation12], 0
    %25 = vsyncpa [#allocation15], 0
    %26 = vsyncpa [#allocation4], 0
    %27 = vsyncpa [#allocation18], 0
    // Predicated region
    $region2: #{tpu_custom_call.1} parent=1 // pred_check
      _
    $region3: #{tpu_custom_call.1} parent=1 // pred_check_branch
      %29 = sbr.rel (0) target = $region5
    $region4: #{tpu_custom_call.1} parent=1 // pred_region
      %s31 = ssub.s32 8192, 8192
      %32 = vsyncadd [#allocation3], %s31
      %s33 = sshll.u32 [#allocation2], 4
      %s34 = int_to_ptr.vmem [resolvable:$true] %s33
      %39 = dma.hbm_to_vmem [thread:$0]  %s0, 8192, %s34, [#allocation3], 256, 256, 16
    $region5: #{tpu_custom_call.1} parent=1 // pred_fallthru
      _
    // Predicated region
    $region6: #{tpu_custom_call.1} parent=1 // pred_check
      _
    $region7: #{tpu_custom_call.1} parent=1 // pred_check_branch
      %41 = sbr.rel (0) target = $region9
    $region8: #{tpu_custom_call.1} parent=1 // pred_region
      %s43 = ssub.s32 4096, 4096
      %44 = vsyncadd [#allocation6], %s43
      %s45 = sshll.u32 [#allocation5], 4
      %s46 = int_to_ptr.vmem [resolvable:$true] %s45
      %51 = dma.hbm_to_vmem [thread:$0]  %s1, 4096, %s46, [#allocation6], 128, 128, 8
    $region9: #{tpu_custom_call.1} parent=1 // pred_fallthru
      _
    // Predicated region
    $region10: #{tpu_custom_call.1} parent=1 // pred_check
      _
    $region11: #{tpu_custom_call.1} parent=1 // pred_check_branch
      %53 = sbr.rel (0) target = $region13
    $region12: #{tpu_custom_call.1} parent=1 // pred_region
      %s55 = ssub.s32 4096, 4096
      %56 = vsyncadd [#allocation6], %s55
      %s57 = sshll.u32 [#allocation7], 4
      %s58 = int_to_ptr.vmem [resolvable:$true] %s57
      %63 = dma.hbm_to_vmem [thread:$0]  %s2, 4096, %s58, [#allocation6], 128, 128, 8
    $region13: #{tpu_custom_call.1} parent=1 // pred_fallthru
      _
    // Predicated region
    $region14: #{tpu_custom_call.1} parent=1 // pred_check
      _
    $region15: #{tpu_custom_call.1} parent=1 // pred_check_branch
      %65 = sbr.rel (0) target = $region17
    $region16: #{tpu_custom_call.1} parent=1 // pred_region
      _
    $region17: #{tpu_custom_call.1} parent=1 // pred_fallthru
      _
    // Predicated region
    $region18: #{tpu_custom_call.1} parent=1 // pred_check
      _
    $region19: #{tpu_custom_call.1} parent=1 // pred_check_branch
      %67 = sbr.rel (0) target = $region21
    $region20: #{tpu_custom_call.1} parent=1 // pred_region
      %s69 = ssub.s32 2048, 2048
      %70 = vsyncadd [#allocation9], %s69
      %s71 = sshll.u32 [#allocation8], 4
      %s72 = int_to_ptr.vmem [resolvable:$true] %s71
      %77 = dma.hbm_to_vmem [thread:$0]  %s4, 2048, %s72, [#allocation9], 128, 128, 8
    $region21: #{tpu_custom_call.1} parent=1 // pred_fallthru
      _
    // Predicated region
    $region22: #{tpu_custom_call.1} parent=1 // pred_check
      _
    $region23: #{tpu_custom_call.1} parent=1 // pred_check_branch
      %79 = sbr.rel (0) target = $region25
    $region24: #{tpu_custom_call.1} parent=1 // pred_region
      _
    $region25: #{tpu_custom_call.1} parent=1 // pred_fallthru
      _
    // Predicated region
    $region26: #{tpu_custom_call.1} parent=1 // pred_check
      _
    $region27: #{tpu_custom_call.1} parent=1 // pred_check_branch
      %81 = sbr.rel (0) target = $region29
    $region28: #{tpu_custom_call.1} parent=1 // pred_region
      %s83 = ssub.s32 4096, 4096
      %84 = vsyncadd [#allocation9], %s83
      %s85 = sshll.u32 [#allocation10], 4
      %s86 = int_to_ptr.vmem [resolvable:$true] %s85
      %91 = dma.hbm_to_vmem [thread:$0]  %s6, 4096, %s86, [#allocation9], 256, 256, 16
    $region29: #{tpu_custom_call.1} parent=1 // pred_fallthru
      _
    // Predicated region
    $region30: #{tpu_custom_call.1} parent=1 // pred_check
      _
    $region31: #{tpu_custom_call.1} parent=1 // pred_check_branch
      %93 = sbr.rel (0) target = $region33
    $region32: #{tpu_custom_call.1} parent=1 // pred_region
      _
    $region33: #{tpu_custom_call.1} parent=1 // pred_fallthru
      _
    // Predicated region
    $region34: #{tpu_custom_call.1} parent=1 // pred_check
      _
    $region35: #{tpu_custom_call.1} parent=1 // pred_check_branch
      %95 = sbr.rel (0) target = $region37
    $region36: #{tpu_custom_call.1} parent=1 // pred_region
      %s97 = ssub.s32 2048, 2048
      %98 = vsyncadd [#allocation12], %s97
      %s99 = sshll.u32 [#allocation11], 4
      %s100 = int_to_ptr.vmem [resolvable:$true] %s99
      %105 = dma.hbm_to_vmem [thread:$0]  %s8, 2048, %s100, [#allocation12], 128, 128, 8
    $region37: #{tpu_custom_call.1} parent=1 // pred_fallthru
      _
    // Predicated region
    $region38: #{tpu_custom_call.1} parent=1 // pred_check
      _
    $region39: #{tpu_custom_call.1} parent=1 // pred_check_branch
      %107 = sbr.rel (0) target = $region41
    $region40: #{tpu_custom_call.1} parent=1 // pred_region
      _
    $region41: #{tpu_custom_call.1} parent=1 // pred_fallthru
      _
    // Predicated region
    $region42: #{tpu_custom_call.1} parent=1 // pred_check
      _
    $region43: #{tpu_custom_call.1} parent=1 // pred_check_branch
      %109 = sbr.rel (0) target = $region45
    $region44: #{tpu_custom_call.1} parent=1 // pred_region
      %s111 = ssub.s32 2048, 2048
      %112 = vsyncadd [#allocation12], %s111
      %s113 = sshll.u32 [#allocation13], 4
      %s114 = int_to_ptr.vmem [resolvable:$true] %s113
      %119 = dma.hbm_to_vmem [thread:$0]  %s10, 2048, %s114, [#allocation12], 128, 128, 8
    $region45: #{tpu_custom_call.1} parent=1 // pred_fallthru
      _
    // Predicated region
    $region46: #{tpu_custom_call.1} parent=1 // pred_check
      _
    $region47: #{tpu_custom_call.1} parent=1 // pred_check_branch
      %121 = sbr.rel (0) target = $region49
    $region48: #{tpu_custom_call.1} parent=1 // pred_region
      _
    $region49: #{tpu_custom_call.1} parent=1 // pred_fallthru
      _
    // Predicated region
    $region50: #{tpu_custom_call.1} parent=1 // pred_check
      _
    $region51: #{tpu_custom_call.1} parent=1 // pred_check_branch
      %123 = sbr.rel (0) target = $region53
    $region52: #{tpu_custom_call.1} parent=1 // pred_region
      %s125 = ssub.s32 4096, 4096
      %126 = vsyncadd [#allocation15], %s125
      %s127 = sshll.u32 [#allocation14], 4
      %s128 = int_to_ptr.vmem [resolvable:$true] %s127
      %133 = dma.hbm_to_vmem [thread:$0]  %s12, 4096, %s128, [#allocation15], 256, 256, 16
    $region53: #{tpu_custom_call.1} parent=1 // pred_fallthru
      _
    // Predicated region
    $region54: #{tpu_custom_call.1} parent=1 // pred_check
      _
    $region55: #{tpu_custom_call.1} parent=1 // pred_check_branch
      %135 = sbr.rel (0) target = $region57
    $region56: #{tpu_custom_call.1} parent=1 // pred_region
      _
    $region57: #{tpu_custom_call.1} parent=1 // pred_fallthru
      _
    // Predicated region
    $region58: #{tpu_custom_call.1} parent=1 // pred_check
      _
    $region59: #{tpu_custom_call.1} parent=1 // pred_check_branch
      %137 = sbr.rel (0) target = $region61
    $region60: #{tpu_custom_call.1} parent=1 // pred_region
      %138 = dma.done [#allocation3], 8192
    $region61: #{tpu_custom_call.1} parent=1 // pred_fallthru
      _
    // Predicated region
    $region62: #{tpu_custom_call.1} parent=1 // pred_check
      _
    $region63: #{tpu_custom_call.1} parent=1 // pred_check_branch
      %140 = sbr.rel (0) target = $region65
    $region64: #{tpu_custom_call.1} parent=1 // pred_region
      %141 = dma.done [#allocation6], 4096
    $region65: #{tpu_custom_call.1} parent=1 // pred_fallthru
      _
    // Predicated region
    $region66: #{tpu_custom_call.1} parent=1 // pred_check
      _
    $region67: #{tpu_custom_call.1} parent=1 // pred_check_branch
      %143 = sbr.rel (0) target = $region69
    $region68: #{tpu_custom_call.1} parent=1 // pred_region
      %144 = dma.done [#allocation6], 4096
    $region69: #{tpu_custom_call.1} parent=1 // pred_fallthru
      _
    // Predicated region
    $region70: #{tpu_custom_call.1} parent=1 // pred_check
      _
    $region71: #{tpu_custom_call.1} parent=1 // pred_check_branch
      %146 = sbr.rel (0) target = $region73
    $region72: #{tpu_custom_call.1} parent=1 // pred_region
      %147 = dma.done [#allocation9], 2048
    $region73: #{tpu_custom_call.1} parent=1 // pred_fallthru
      _
    // Predicated region
    $region74: #{tpu_custom_call.1} parent=1 // pred_check
      _
    $region75: #{tpu_custom_call.1} parent=1 // pred_check_branch
      %149 = sbr.rel (0) target = $region77
    $region76: #{tpu_custom_call.1} parent=1 // pred_region
      %150 = dma.done [#allocation9], 4096
    $region77: #{tpu_custom_call.1} parent=1 // pred_fallthru
      _
    // Predicated region
    $region78: #{tpu_custom_call.1} parent=1 // pred_check
      _
    $region79: #{tpu_custom_call.1} parent=1 // pred_check_branch
      %152 = sbr.rel (0) target = $region81
    $region80: #{tpu_custom_call.1} parent=1 // pred_region
      %153 = dma.done [#allocation12], 2048
    $region81: #{tpu_custom_call.1} parent=1 // pred_fallthru
      _
    // Predicated region
    $region82: #{tpu_custom_call.1} parent=1 // pred_check
      _
    $region83: #{tpu_custom_call.1} parent=1 // pred_check_branch
      %155 = sbr.rel (0) target = $region85
    $region84: #{tpu_custom_call.1} parent=1 // pred_region
      %156 = dma.done [#allocation12], 2048
    $region85: #{tpu_custom_call.1} parent=1 // pred_fallthru
      _
    // Predicated region
    $region86: #{tpu_custom_call.1} parent=1 // pred_check
      _
    $region87: #{tpu_custom_call.1} parent=1 // pred_check_branch
      %158 = sbr.rel (0) target = $region89
    $region88: #{tpu_custom_call.1} parent=1 // pred_region
      %159 = dma.done [#allocation15], 4096
    $region89: #{tpu_custom_call.1} parent=1 // pred_fallthru
      _
    %v160 = vld [vmem:[#allocation2] sm:$0xff]
    %v161 = vld [vmem:[#allocation2 + $0x8] sm:$0xff]
    %v162 = vld [vmem:[#allocation2 + $0x10] sm:$0xff]
    %v163 = vld [vmem:[#allocation2 + $0x18] sm:$0xff]
    %v164 = vld [vmem:[#allocation2 + $0x20] sm:$0xff]
    %v165 = vld [vmem:[#allocation2 + $0x28] sm:$0xff]
    %v166 = vld [vmem:[#allocation2 + $0x30] sm:$0xff]
    %v167 = vld [vmem:[#allocation2 + $0x38] sm:$0xff]
    %v168 = vld [vmem:[#allocation2 + $0x40] sm:$0xff]
    %v169 = vld [vmem:[#allocation2 + $0x48] sm:$0xff]
    %v170 = vld [vmem:[#allocation2 + $0x50] sm:$0xff]
    %v171 = vld [vmem:[#allocation2 + $0x58] sm:$0xff]
    %v172 = vld [vmem:[#allocation2 + $0x60] sm:$0xff]
    %v173 = vld [vmem:[#allocation2 + $0x68] sm:$0xff]
    %v174 = vld [vmem:[#allocation2 + $0x70] sm:$0xff]
    %v175 = vld [vmem:[#allocation2 + $0x78] sm:$0xff]
    %v176 = vld [vmem:[#allocation2 + $0x80] sm:$0xff]
    %v177 = vld [vmem:[#allocation2 + $0x88] sm:$0xff]
    %v178 = vld [vmem:[#allocation2 + $0x90] sm:$0xff]
    %v179 = vld [vmem:[#allocation2 + $0x98] sm:$0xff]
    %v180 = vld [vmem:[#allocation2 + $0xa0] sm:$0xff]
    %v181 = vld [vmem:[#allocation2 + $0xa8] sm:$0xff]
    %v182 = vld [vmem:[#allocation2 + $0xb0] sm:$0xff]
    %v183 = vld [vmem:[#allocation2 + $0xb8] sm:$0xff]
    %v184 = vld [vmem:[#allocation2 + $0xc0] sm:$0xff]
    %v185 = vld [vmem:[#allocation2 + $0xc8] sm:$0xff]
    %v186 = vld [vmem:[#allocation2 + $0xd0] sm:$0xff]
    %v187 = vld [vmem:[#allocation2 + $0xd8] sm:$0xff]
    %v188 = vld [vmem:[#allocation2 + $0xe0] sm:$0xff]
    %v189 = vld [vmem:[#allocation2 + $0xe8] sm:$0xff]
    %v190 = vld [vmem:[#allocation2 + $0xf0] sm:$0xff]
    %v191 = vld [vmem:[#allocation2 + $0xf8] sm:$0xff]
    %v192 = vld [vmem:[#allocation2 + $0x100] sm:$0xff]
    %v193 = vld [vmem:[#allocation2 + $0x108] sm:$0xff]
    %v194 = vld [vmem:[#allocation2 + $0x110] sm:$0xff]
    %v195 = vld [vmem:[#allocation2 + $0x118] sm:$0xff]
    %v196 = vld [vmem:[#allocation2 + $0x120] sm:$0xff]
    %v197 = vld [vmem:[#allocation2 + $0x128] sm:$0xff]
    %v198 = vld [vmem:[#allocation2 + $0x130] sm:$0xff]
    %v199 = vld [vmem:[#allocation2 + $0x138] sm:$0xff]
    %v200 = vld [vmem:[#allocation2 + $0x140] sm:$0xff]
    %v201 = vld [vmem:[#allocation2 + $0x148] sm:$0xff]
    %v202 = vld [vmem:[#allocation2 + $0x150] sm:$0xff]
    %v203 = vld [vmem:[#allocation2 + $0x158] sm:$0xff]
    %v204 = vld [vmem:[#allocation2 + $0x160] sm:$0xff]
    %v205 = vld [vmem:[#allocation2 + $0x168] sm:$0xff]
    %v206 = vld [vmem:[#allocation2 + $0x170] sm:$0xff]
    %v207 = vld [vmem:[#allocation2 + $0x178] sm:$0xff]
    %v208 = vld [vmem:[#allocation2 + $0x180] sm:$0xff]
    %v209 = vld [vmem:[#allocation2 + $0x188] sm:$0xff]
    %v210 = vld [vmem:[#allocation2 + $0x190] sm:$0xff]
    %v211 = vld [vmem:[#allocation2 + $0x198] sm:$0xff]
    %v212 = vld [vmem:[#allocation2 + $0x1a0] sm:$0xff]
    %v213 = vld [vmem:[#allocation2 + $0x1a8] sm:$0xff]
    %v214 = vld [vmem:[#allocation2 + $0x1b0] sm:$0xff]
    %v215 = vld [vmem:[#allocation2 + $0x1b8] sm:$0xff]
    %v216 = vld [vmem:[#allocation2 + $0x1c0] sm:$0xff]
    %v217 = vld [vmem:[#allocation2 + $0x1c8] sm:$0xff]
    %v218 = vld [vmem:[#allocation2 + $0x1d0] sm:$0xff]
    %v219 = vld [vmem:[#allocation2 + $0x1d8] sm:$0xff]
    %v220 = vld [vmem:[#allocation2 + $0x1e0] sm:$0xff]
    %v221 = vld [vmem:[#allocation2 + $0x1e8] sm:$0xff]
    %v222 = vld [vmem:[#allocation2 + $0x1f0] sm:$0xff]
    %v223 = vld [vmem:[#allocation2 + $0x1f8] sm:$0xff]
    %v224 = vld [vmem:[#allocation7] sm:$0xff]
    %v225 = vld [vmem:[#allocation7 + $0x8] sm:$0xff]
    %v226 = vld [vmem:[#allocation7 + $0x10] sm:$0xff]
    %v227 = vld [vmem:[#allocation7 + $0x18] sm:$0xff]
    %v228 = vld [vmem:[#allocation7 + $0x20] sm:$0xff]
    %v229 = vld [vmem:[#allocation7 + $0x28] sm:$0xff]
    %v230 = vld [vmem:[#allocation7 + $0x30] sm:$0xff]
    %v231 = vld [vmem:[#allocation7 + $0x38] sm:$0xff]
    %v232 = vld [vmem:[#allocation7 + $0x40] sm:$0xff]
    %v233 = vld [vmem:[#allocation7 + $0x48] sm:$0xff]
    %v234 = vld [vmem:[#allocation7 + $0x50] sm:$0xff]
    %v235 = vld [vmem:[#allocation7 + $0x58] sm:$0xff]
    %v236 = vld [vmem:[#allocation7 + $0x60] sm:$0xff]
    %v237 = vld [vmem:[#allocation7 + $0x68] sm:$0xff]
    %v238 = vld [vmem:[#allocation7 + $0x70] sm:$0xff]
    %v239 = vld [vmem:[#allocation7 + $0x78] sm:$0xff]
    %v240 = vld [vmem:[#allocation7 + $0x80] sm:$0xff]
    %v241 = vld [vmem:[#allocation7 + $0x88] sm:$0xff]
    %v242 = vld [vmem:[#allocation7 + $0x90] sm:$0xff]
    %v243 = vld [vmem:[#allocation7 + $0x98] sm:$0xff]
    %v244 = vld [vmem:[#allocation7 + $0xa0] sm:$0xff]
    %v245 = vld [vmem:[#allocation7 + $0xa8] sm:$0xff]
    %v246 = vld [vmem:[#allocation7 + $0xb0] sm:$0xff]
    %v247 = vld [vmem:[#allocation7 + $0xb8] sm:$0xff]
    %v248 = vld [vmem:[#allocation7 + $0xc0] sm:$0xff]
    %v249 = vld [vmem:[#allocation7 + $0xc8] sm:$0xff]
    %v250 = vld [vmem:[#allocation7 + $0xd0] sm:$0xff]
    %v251 = vld [vmem:[#allocation7 + $0xd8] sm:$0xff]
    %v252 = vld [vmem:[#allocation7 + $0xe0] sm:$0xff]
    %v253 = vld [vmem:[#allocation7 + $0xe8] sm:$0xff]
    %v254 = vld [vmem:[#allocation7 + $0xf0] sm:$0xff]
    %v255 = vld [vmem:[#allocation7 + $0xf8] sm:$0xff]
    %v256 = vld [vmem:[%s3] sm:$0x1]
    %v258 = vlaneseq
    %v259 = vshrl.u32 %v258, 7
    %v260 = vsub.s32 0, %v259
    %v261 = vrot.slane %v256, %v260
    %263 = vmatprep.subr.mxu0 0.0
    %264 = vmatpush1.msra.mxu0 %v239
    %265 = vmatprep.subr.mxu0 0.0
    %266 = vmatpush1.msra.mxu0 %v238
    %267 = vmatprep.subr.mxu0 0.0
    %268 = vmatpush1.msra.mxu0 %v237
    %269 = vmatprep.subr.mxu0 0.0
    %270 = vmatpush1.msra.mxu0 %v236
    %271 = vmatprep.subr.mxu0 0.0
    %272 = vmatpush1.msra.mxu0 %v235
    %273 = vmatprep.subr.mxu0 0.0
    %274 = vmatpush1.msra.mxu0 %v234
    %275 = vmatprep.subr.mxu0 0.0
    %276 = vmatpush1.msra.mxu0 %v233
    %277 = vmatprep.subr.mxu0 0.0
    %278 = vmatpush1.msra.mxu0 %v232
    %279 = vmatprep.subr.mxu0 0.0
    %280 = vmatpush1.msra.mxu0 %v231
    %281 = vmatprep.subr.mxu0 0.0
    %282 = vmatpush1.msra.mxu0 %v230
    %283 = vmatprep.subr.mxu0 0.0
    %284 = vmatpush1.msra.mxu0 %v229
    %285 = vmatprep.subr.mxu0 0.0
    %286 = vmatpush1.msra.mxu0 %v228
    %287 = vmatprep.subr.mxu0 0.0
    %288 = vmatpush1.msra.mxu0 %v227
    %289 = vmatprep.subr.mxu0 0.0
    %290 = vmatpush1.msra.mxu0 %v226
    %291 = vmatprep.subr.mxu0 0.0
    %292 = vmatpush1.msra.mxu0 %v225
    %293 = vmatprep.subr.mxu0 0.0
    %294 = vmatpush1.msra.mxu0 %v224
    %295 = vmatprep.subr.mxu0 0.0
    %296 = vmatpush2.msra.mxu0 %v255
    %297 = vmatprep.subr.mxu0 0.0
    %298 = vmatpush2.msra.mxu0 %v254
    %299 = vmatprep.subr.mxu0 0.0
    %300 = vmatpush2.msra.mxu0 %v253
    %301 = vmatprep.subr.mxu0 0.0
    %302 = vmatpush2.msra.mxu0 %v252
    %303 = vmatprep.subr.mxu0 0.0
    %304 = vmatpush2.msra.mxu0 %v251
    %305 = vmatprep.subr.mxu0 0.0
    %306 = vmatpush2.msra.mxu0 %v250
    %307 = vmatprep.subr.mxu0 0.0
    %308 = vmatpush2.msra.mxu0 %v249
    %309 = vmatprep.subr.mxu0 0.0
    %310 = vmatpush2.msra.mxu0 %v248
    %311 = vmatprep.subr.mxu0 0.0
    %312 = vmatpush2.msra.mxu0 %v247
    %313 = vmatprep.subr.mxu0 0.0
    %314 = vmatpush2.msra.mxu0 %v246
    %315 = vmatprep.subr.mxu0 0.0
    %316 = vmatpush2.msra.mxu0 %v245
    %317 = vmatprep.subr.mxu0 0.0
    %318 = vmatpush2.msra.mxu0 %v244
    %319 = vmatprep.subr.mxu0 0.0
    %320 = vmatpush2.msra.mxu0 %v243
    %321 = vmatprep.subr.mxu0 0.0
    %322 = vmatpush2.msra.mxu0 %v242
    %323 = vmatprep.subr.mxu0 0.0
    %324 = vmatpush2.msra.mxu0 %v241
    %325 = vmatprep.subr.mxu0 0.0
    %326 = vmatpush2.msra.mxu0 %v240
    %327 = vmatprep.mubr.f32.mxu0 %v161
    %328 = vmatmul.mubr.f32.gmra.mxu0 %v160
    %v329 = vpop.f32.mrf.mxu0
    %v330 = vadd.f32 %v261, %v329
    %v331 = vpop.f32.mrf.mxu0
    %332 = vmatprep.mubr.f32.mxu0 %v163
    %333 = vmatmul.mubr.f32.gmra.mxu0 %v162
    %v334 = vpop.f32.mrf.mxu0
    %v335 = vadd.f32 %v261, %v334
    %v336 = vpop.f32.mrf.mxu0
    %337 = vmatprep.mubr.f32.mxu0 %v165
    %338 = vmatmul.mubr.f32.gmra.mxu0 %v164
    %v339 = vpop.f32.mrf.mxu0
    %v340 = vadd.f32 %v261, %v339
    %v341 = vpop.f32.mrf.mxu0
    %342 = vmatprep.mubr.f32.mxu0 %v167
    %343 = vmatmul.mubr.f32.gmra.mxu0 %v166
    %v344 = vpop.f32.mrf.mxu0
    %v345 = vadd.f32 %v261, %v344
    %v346 = vpop.f32.mrf.mxu0
    %347 = vmatprep.mubr.f32.mxu0 %v169
    %348 = vmatmul.mubr.f32.gmra.mxu0 %v168
    %v349 = vpop.f32.mrf.mxu0
    %v350 = vadd.f32 %v261, %v349
    %v351 = vpop.f32.mrf.mxu0
    %352 = vmatprep.mubr.f32.mxu0 %v171
    %353 = vmatmul.mubr.f32.gmra.mxu0 %v170
    %v354 = vpop.f32.mrf.mxu0
    %v355 = vadd.f32 %v261, %v354
    %v356 = vpop.f32.mrf.mxu0
    %357 = vmatprep.mubr.f32.mxu0 %v173
    %358 = vmatmul.mubr.f32.gmra.mxu0 %v172
    %v359 = vpop.f32.mrf.mxu0
    %v360 = vadd.f32 %v261, %v359
    %v361 = vpop.f32.mrf.mxu0
    %362 = vmatprep.mubr.f32.mxu0 %v175
    %363 = vmatmul.mubr.f32.gmra.mxu0 %v174
    %v364 = vpop.f32.mrf.mxu0
    %v365 = vadd.f32 %v261, %v364
    %v366 = vpop.f32.mrf.mxu0
    %367 = vmatprep.mubr.f32.mxu0 %v177
    %368 = vmatmul.mubr.f32.gmra.mxu0 %v176
    %v369 = vpop.f32.mrf.mxu0
    %v370 = vadd.f32 %v261, %v369
    %v371 = vpop.f32.mrf.mxu0
    %372 = vmatprep.mubr.f32.mxu0 %v179
    %373 = vmatmul.mubr.f32.gmra.mxu0 %v178
    %v374 = vpop.f32.mrf.mxu0
    %v375 = vadd.f32 %v261, %v374
    %v376 = vpop.f32.mrf.mxu0
    %377 = vmatprep.mubr.f32.mxu0 %v181
    %378 = vmatmul.mubr.f32.gmra.mxu0 %v180
    %v379 = vpop.f32.mrf.mxu0
    %v380 = vadd.f32 %v261, %v379
    %v381 = vpop.f32.mrf.mxu0
    %382 = vmatprep.mubr.f32.mxu0 %v183
    %383 = vmatmul.mubr.f32.gmra.mxu0 %v182
    %v384 = vpop.f32.mrf.mxu0
    %v385 = vadd.f32 %v261, %v384
    %v386 = vpop.f32.mrf.mxu0
    %387 = vmatprep.mubr.f32.mxu0 %v185
    %388 = vmatmul.mubr.f32.gmra.mxu0 %v184
    %v389 = vpop.f32.mrf.mxu0
    %v390 = vadd.f32 %v261, %v389
    %v391 = vpop.f32.mrf.mxu0
    %392 = vmatprep.mubr.f32.mxu0 %v187
    %393 = vmatmul.mubr.f32.gmra.mxu0 %v186
    %v394 = vpop.f32.mrf.mxu0
    %v395 = vadd.f32 %v261, %v394
    %v396 = vpop.f32.mrf.mxu0
    %397 = vmatprep.mubr.f32.mxu0 %v189
    %398 = vmatmul.mubr.f32.gmra.mxu0 %v188
    %v399 = vpop.f32.mrf.mxu0
    %v400 = vadd.f32 %v261, %v399
    %v401 = vpop.f32.mrf.mxu0
    %402 = vmatprep.mubr.f32.mxu0 %v191
    %403 = vmatmul.mubr.f32.gmra.mxu0 %v190
    %v404 = vpop.f32.mrf.mxu0
    %v405 = vadd.f32 %v261, %v404
    %v406 = vpop.f32.mrf.mxu0
    %407 = vmatprep.mubr.f32.mxu0 %v193
    %408 = vmatmul.mubr.f32.gmra.mxu0 %v192
    %v409 = vpop.f32.mrf.mxu0
    %v410 = vadd.f32 %v261, %v409
    %v411 = vpop.f32.mrf.mxu0
    %412 = vmatprep.mubr.f32.mxu0 %v195
    %413 = vmatmul.mubr.f32.gmra.mxu0 %v194
    %v414 = vpop.f32.mrf.mxu0
    %v415 = vadd.f32 %v261, %v414
    %v416 = vpop.f32.mrf.mxu0
    %417 = vmatprep.mubr.f32.mxu0 %v197
    %418 = vmatmul.mubr.f32.gmra.mxu0 %v196
    %v419 = vpop.f32.mrf.mxu0
    %v420 = vadd.f32 %v261, %v419
    %v421 = vpop.f32.mrf.mxu0
    %422 = vmatprep.mubr.f32.mxu0 %v199
    %423 = vmatmul.mubr.f32.gmra.mxu0 %v198
    %v424 = vpop.f32.mrf.mxu0
    %v425 = vadd.f32 %v261, %v424
    %v426 = vpop.f32.mrf.mxu0
    %427 = vmatprep.mubr.f32.mxu0 %v201
    %428 = vmatmul.mubr.f32.gmra.mxu0 %v200
    %v429 = vpop.f32.mrf.mxu0
    %v430 = vadd.f32 %v261, %v429
    %v431 = vpop.f32.mrf.mxu0
    %432 = vmatprep.mubr.f32.mxu0 %v203
    %433 = vmatmul.mubr.f32.gmra.mxu0 %v202
    %v434 = vpop.f32.mrf.mxu0
    %v435 = vadd.f32 %v261, %v434
    %v436 = vpop.f32.mrf.mxu0
    %437 = vmatprep.mubr.f32.mxu0 %v205
    %438 = vmatmul.mubr.f32.gmra.mxu0 %v204
    %v439 = vpop.f32.mrf.mxu0
    %v440 = vadd.f32 %v261, %v439
    %v441 = vpop.f32.mrf.mxu0
    %442 = vmatprep.mubr.f32.mxu0 %v207
    %443 = vmatmul.mubr.f32.gmra.mxu0 %v206
    %v444 = vpop.f32.mrf.mxu0
    %v445 = vadd.f32 %v261, %v444
    %v446 = vpop.f32.mrf.mxu0
    %447 = vmatprep.mubr.f32.mxu0 %v209
    %448 = vmatmul.mubr.f32.gmra.mxu0 %v208
    %v449 = vpop.f32.mrf.mxu0
    %v450 = vadd.f32 %v261, %v449
    %v451 = vpop.f32.mrf.mxu0
    %452 = vmatprep.mubr.f32.mxu0 %v211
    %453 = vmatmul.mubr.f32.gmra.mxu0 %v210
    %v454 = vpop.f32.mrf.mxu0
    %v455 = vadd.f32 %v261, %v454
    %v456 = vpop.f32.mrf.mxu0
    %457 = vmatprep.mubr.f32.mxu0 %v213
    %458 = vmatmul.mubr.f32.gmra.mxu0 %v212
    %v459 = vpop.f32.mrf.mxu0
    %v460 = vadd.f32 %v261, %v459
    %v461 = vpop.f32.mrf.mxu0
    %462 = vmatprep.mubr.f32.mxu0 %v215
    %463 = vmatmul.mubr.f32.gmra.mxu0 %v214
    %v464 = vpop.f32.mrf.mxu0
    %v465 = vadd.f32 %v261, %v464
    %v466 = vpop.f32.mrf.mxu0
    %467 = vmatprep.mubr.f32.mxu0 %v217
    %468 = vmatmul.mubr.f32.gmra.mxu0 %v216
    %v469 = vpop.f32.mrf.mxu0
    %v470 = vadd.f32 %v261, %v469
    %v471 = vpop.f32.mrf.mxu0
    %472 = vmatprep.mubr.f32.mxu0 %v219
    %473 = vmatmul.mubr.f32.gmra.mxu0 %v218
    %v474 = vpop.f32.mrf.mxu0
    %v475 = vadd.f32 %v261, %v474
    %v476 = vpop.f32.mrf.mxu0
    %477 = vmatprep.mubr.f32.mxu0 %v221
    %478 = vmatmul.mubr.f32.gmra.mxu0 %v220
    %v479 = vpop.f32.mrf.mxu0
    %v480 = vadd.f32 %v261, %v479
    %v481 = vpop.f32.mrf.mxu0
    %482 = vmatprep.mubr.f32.mxu0 %v223
    %483 = vmatmul.mubr.f32.gmra.mxu0 %v222
    %v484 = vpop.f32.mrf.mxu0
    %v485 = vadd.f32 %v261, %v484
    %v486 = vpop.f32.mrf.mxu0
    %487 = vdwg.mxu0
    %v488 = vmax.f32 %v330, 0.0
    %v489 = vmax.f32 %v335, 0.0
    %v490 = vmax.f32 %v340, 0.0
    %v491 = vmax.f32 %v345, 0.0
    %v492 = vmax.f32 %v350, 0.0
    %v493 = vmax.f32 %v355, 0.0
    %v494 = vmax.f32 %v360, 0.0
    %v495 = vmax.f32 %v365, 0.0
    %v496 = vmax.f32 %v370, 0.0
    %v497 = vmax.f32 %v375, 0.0
    %v498 = vmax.f32 %v380, 0.0
    %v499 = vmax.f32 %v385, 0.0
    %v500 = vmax.f32 %v390, 0.0
    %v501 = vmax.f32 %v395, 0.0
    %v502 = vmax.f32 %v400, 0.0
    %v503 = vmax.f32 %v405, 0.0
    %v504 = vmax.f32 %v410, 0.0
    %v505 = vmax.f32 %v415, 0.0
    %v506 = vmax.f32 %v420, 0.0
    %v507 = vmax.f32 %v425, 0.0
    %v508 = vmax.f32 %v430, 0.0
    %v509 = vmax.f32 %v435, 0.0
    %v510 = vmax.f32 %v440, 0.0
    %v511 = vmax.f32 %v445, 0.0
    %v512 = vmax.f32 %v450, 0.0
    %v513 = vmax.f32 %v455, 0.0
    %v514 = vmax.f32 %v460, 0.0
    %v515 = vmax.f32 %v465, 0.0
    %v516 = vmax.f32 %v470, 0.0
    %v517 = vmax.f32 %v475, 0.0
    %v518 = vmax.f32 %v480, 0.0
    %v519 = vmax.f32 %v485, 0.0
    %v520 = vld [vmem:[#allocation8] sm:$0xff]
    %v521 = vld [vmem:[#allocation8 + $0x8] sm:$0xff]
    %v522 = vld [vmem:[#allocation8 + $0x10] sm:$0xff]
    %v523 = vld [vmem:[#allocation8 + $0x18] sm:$0xff]
    %v524 = vld [vmem:[#allocation8 + $0x20] sm:$0xff]
    %v525 = vld [vmem:[#allocation8 + $0x28] sm:$0xff]
    %v526 = vld [vmem:[#allocation8 + $0x30] sm:$0xff]
    %v527 = vld [vmem:[#allocation8 + $0x38] sm:$0xff]
    %v528 = vld [vmem:[#allocation8 + $0x40] sm:$0xff]
    %v529 = vld [vmem:[#allocation8 + $0x48] sm:$0xff]
    %v530 = vld [vmem:[#allocation8 + $0x50] sm:$0xff]
    %v531 = vld [vmem:[#allocation8 + $0x58] sm:$0xff]
    %v532 = vld [vmem:[#allocation8 + $0x60] sm:$0xff]
    %v533 = vld [vmem:[#allocation8 + $0x68] sm:$0xff]
    %v534 = vld [vmem:[#allocation8 + $0x70] sm:$0xff]
    %v535 = vld [vmem:[#allocation8 + $0x78] sm:$0xff]
    %v536 = vld [vmem:[%s5] sm:$0x1]
    %v538 = vlaneseq
    %v539 = vshrl.u32 %v538, 7
    %v540 = vsub.s32 0, %v539
    %v541 = vrot.slane %v536, %v540
    %543 = vmatprep.subr.mxu0 0.0
    %544 = vmatpush1.msra.mxu0 %v535
    %545 = vmatprep.subr.mxu0 0.0
    %546 = vmatpush1.msra.mxu0 %v534
    %547 = vmatprep.subr.mxu0 0.0
    %548 = vmatpush1.msra.mxu0 %v533
    %549 = vmatprep.subr.mxu0 0.0
    %550 = vmatpush1.msra.mxu0 %v532
    %551 = vmatprep.subr.mxu0 0.0
    %552 = vmatpush1.msra.mxu0 %v531
    %553 = vmatprep.subr.mxu0 0.0
    %554 = vmatpush1.msra.mxu0 %v530
    %555 = vmatprep.subr.mxu0 0.0
    %556 = vmatpush1.msra.mxu0 %v529
    %557 = vmatprep.subr.mxu0 0.0
    %558 = vmatpush1.msra.mxu0 %v528
    %559 = vmatprep.subr.mxu0 0.0
    %560 = vmatpush1.msra.mxu0 %v527
    %561 = vmatprep.subr.mxu0 0.0
    %562 = vmatpush1.msra.mxu0 %v526
    %563 = vmatprep.subr.mxu0 0.0
    %564 = vmatpush1.msra.mxu0 %v525
    %565 = vmatprep.subr.mxu0 0.0
    %566 = vmatpush1.msra.mxu0 %v524
    %567 = vmatprep.subr.mxu0 0.0
    %568 = vmatpush1.msra.mxu0 %v523
    %569 = vmatprep.subr.mxu0 0.0
    %570 = vmatpush1.msra.mxu0 %v522
    %571 = vmatprep.subr.mxu0 0.0
    %572 = vmatpush1.msra.mxu0 %v521
    %573 = vmatprep.subr.mxu0 0.0
    %574 = vmatpush1.msra.mxu0 %v520
    %575 = vmatprep.subr.mxu0 0.0
    %576 = vmatpush2.msra.mxu0 0.0
    %577 = vmatprep.subr.mxu0 0.0
    %578 = vmatpush2.msra.mxu0 0.0
    %579 = vmatprep.subr.mxu0 0.0
    %580 = vmatpush2.msra.mxu0 0.0
    %581 = vmatprep.subr.mxu0 0.0
    %582 = vmatpush2.msra.mxu0 0.0
    %583 = vmatprep.subr.mxu0 0.0
    %584 = vmatpush2.msra.mxu0 0.0
    %585 = vmatprep.subr.mxu0 0.0
    %586 = vmatpush2.msra.mxu0 0.0
    %587 = vmatprep.subr.mxu0 0.0
    %588 = vmatpush2.msra.mxu0 0.0
    %589 = vmatprep.subr.mxu0 0.0
    %590 = vmatpush2.msra.mxu0 0.0
    %591 = vmatprep.subr.mxu0 0.0
    %592 = vmatpush2.msra.mxu0 0.0
    %593 = vmatprep.subr.mxu0 0.0
    %594 = vmatpush2.msra.mxu0 0.0
    %595 = vmatprep.subr.mxu0 0.0
    %596 = vmatpush2.msra.mxu0 0.0
    %597 = vmatprep.subr.mxu0 0.0
    %598 = vmatpush2.msra.mxu0 0.0
    %599 = vmatprep.subr.mxu0 0.0
    %600 = vmatpush2.msra.mxu0 0.0
    %601 = vmatprep.subr.mxu0 0.0
    %602 = vmatpush2.msra.mxu0 0.0
    %603 = vmatprep.subr.mxu0 0.0
    %604 = vmatpush2.msra.mxu0 0.0
    %605 = vmatprep.subr.mxu0 0.0
    %606 = vmatpush2.msra.mxu0 0.0
    %607 = vmatprep.mubr.f32.mxu0 0.0
    %608 = vmatmul.mubr.f32.gmra.mxu0 %v488
    %v609 = vpop.f32.mrf.mxu0
    %v610 = vadd.f32 %v541, %v609
    %v611 = vpop.f32.mrf.mxu0
    %612 = vmatprep.mubr.f32.mxu0 0.0
    %613 = vmatmul.mubr.f32.gmra.mxu0 %v489
    %v614 = vpop.f32.mrf.mxu0
    %v615 = vadd.f32 %v541, %v614
    %v616 = vpop.f32.mrf.mxu0
    %617 = vmatprep.mubr.f32.mxu0 0.0
    %618 = vmatmul.mubr.f32.gmra.mxu0 %v490
    %v619 = vpop.f32.mrf.mxu0
    %v620 = vadd.f32 %v541, %v619
    %v621 = vpop.f32.mrf.mxu0
    %622 = vmatprep.mubr.f32.mxu0 0.0
    %623 = vmatmul.mubr.f32.gmra.mxu0 %v491
    %v624 = vpop.f32.mrf.mxu0
    %v625 = vadd.f32 %v541, %v624
    %v626 = vpop.f32.mrf.mxu0
    %627 = vmatprep.mubr.f32.mxu0 0.0
    %628 = vmatmul.mubr.f32.gmra.mxu0 %v492
    %v629 = vpop.f32.mrf.mxu0
    %v630 = vadd.f32 %v541, %v629
    %v631 = vpop.f32.mrf.mxu0
    %632 = vmatprep.mubr.f32.mxu0 0.0
    %633 = vmatmul.mubr.f32.gmra.mxu0 %v493
    %v634 = vpop.f32.mrf.mxu0
    %v635 = vadd.f32 %v541, %v634
    %v636 = vpop.f32.mrf.mxu0
    %637 = vmatprep.mubr.f32.mxu0 0.0
    %638 = vmatmul.mubr.f32.gmra.mxu0 %v494
    %v639 = vpop.f32.mrf.mxu0
    %v640 = vadd.f32 %v541, %v639
    %v641 = vpop.f32.mrf.mxu0
    %642 = vmatprep.mubr.f32.mxu0 0.0
    %643 = vmatmul.mubr.f32.gmra.mxu0 %v495
    %v644 = vpop.f32.mrf.mxu0
    %v645 = vadd.f32 %v541, %v644
    %v646 = vpop.f32.mrf.mxu0
    %647 = vmatprep.mubr.f32.mxu0 0.0
    %648 = vmatmul.mubr.f32.gmra.mxu0 %v496
    %v649 = vpop.f32.mrf.mxu0
    %v650 = vadd.f32 %v541, %v649
    %v651 = vpop.f32.mrf.mxu0
    %652 = vmatprep.mubr.f32.mxu0 0.0
    %653 = vmatmul.mubr.f32.gmra.mxu0 %v497
    %v654 = vpop.f32.mrf.mxu0
    %v655 = vadd.f32 %v541, %v654
    %v656 = vpop.f32.mrf.mxu0
    %657 = vmatprep.mubr.f32.mxu0 0.0
    %658 = vmatmul.mubr.f32.gmra.mxu0 %v498
    %v659 = vpop.f32.mrf.mxu0
    %v660 = vadd.f32 %v541, %v659
    %v661 = vpop.f32.mrf.mxu0
    %662 = vmatprep.mubr.f32.mxu0 0.0
    %663 = vmatmul.mubr.f32.gmra.mxu0 %v499
    %v664 = vpop.f32.mrf.mxu0
    %v665 = vadd.f32 %v541, %v664
    %v666 = vpop.f32.mrf.mxu0
    %667 = vmatprep.mubr.f32.mxu0 0.0
    %668 = vmatmul.mubr.f32.gmra.mxu0 %v500
    %v669 = vpop.f32.mrf.mxu0
    %v670 = vadd.f32 %v541, %v669
    %v671 = vpop.f32.mrf.mxu0
    %672 = vmatprep.mubr.f32.mxu0 0.0
    %673 = vmatmul.mubr.f32.gmra.mxu0 %v501
    %v674 = vpop.f32.mrf.mxu0
    %v675 = vadd.f32 %v541, %v674
    %v676 = vpop.f32.mrf.mxu0
    %677 = vmatprep.mubr.f32.mxu0 0.0
    %678 = vmatmul.mubr.f32.gmra.mxu0 %v502
    %v679 = vpop.f32.mrf.mxu0
    %v680 = vadd.f32 %v541, %v679
    %v681 = vpop.f32.mrf.mxu0
    %682 = vmatprep.mubr.f32.mxu0 0.0
    %683 = vmatmul.mubr.f32.gmra.mxu0 %v503
    %v684 = vpop.f32.mrf.mxu0
    %v685 = vadd.f32 %v541, %v684
    %v686 = vpop.f32.mrf.mxu0
    %687 = vmatprep.mubr.f32.mxu0 0.0
    %688 = vmatmul.mubr.f32.gmra.mxu0 %v504
    %v689 = vpop.f32.mrf.mxu0
    %v690 = vadd.f32 %v541, %v689
    %v691 = vpop.f32.mrf.mxu0
    %692 = vmatprep.mubr.f32.mxu0 0.0
    %693 = vmatmul.mubr.f32.gmra.mxu0 %v505
    %v694 = vpop.f32.mrf.mxu0
    %v695 = vadd.f32 %v541, %v694
    %v696 = vpop.f32.mrf.mxu0
    %697 = vmatprep.mubr.f32.mxu0 0.0
    %698 = vmatmul.mubr.f32.gmra.mxu0 %v506
    %v699 = vpop.f32.mrf.mxu0
    %v700 = vadd.f32 %v541, %v699
    %v701 = vpop.f32.mrf.mxu0
    %702 = vmatprep.mubr.f32.mxu0 0.0
    %703 = vmatmul.mubr.f32.gmra.mxu0 %v507
    %v704 = vpop.f32.mrf.mxu0
    %v705 = vadd.f32 %v541, %v704
    %v706 = vpop.f32.mrf.mxu0
    %707 = vmatprep.mubr.f32.mxu0 0.0
    %708 = vmatmul.mubr.f32.gmra.mxu0 %v508
    %v709 = vpop.f32.mrf.mxu0
    %v710 = vadd.f32 %v541, %v709
    %v711 = vpop.f32.mrf.mxu0
    %712 = vmatprep.mubr.f32.mxu0 0.0
    %713 = vmatmul.mubr.f32.gmra.mxu0 %v509
    %v714 = vpop.f32.mrf.mxu0
    %v715 = vadd.f32 %v541, %v714
    %v716 = vpop.f32.mrf.mxu0
    %717 = vmatprep.mubr.f32.mxu0 0.0
    %718 = vmatmul.mubr.f32.gmra.mxu0 %v510
    %v719 = vpop.f32.mrf.mxu0
    %v720 = vadd.f32 %v541, %v719
    %v721 = vpop.f32.mrf.mxu0
    %722 = vmatprep.mubr.f32.mxu0 0.0
    %723 = vmatmul.mubr.f32.gmra.mxu0 %v511
    %v724 = vpop.f32.mrf.mxu0
    %v725 = vadd.f32 %v541, %v724
    %v726 = vpop.f32.mrf.mxu0
    %727 = vmatprep.mubr.f32.mxu0 0.0
    %728 = vmatmul.mubr.f32.gmra.mxu0 %v512
    %v729 = vpop.f32.mrf.mxu0
    %v730 = vadd.f32 %v541, %v729
    %v731 = vpop.f32.mrf.mxu0
    %732 = vmatprep.mubr.f32.mxu0 0.0
    %733 = vmatmul.mubr.f32.gmra.mxu0 %v513
    %v734 = vpop.f32.mrf.mxu0
    %v735 = vadd.f32 %v541, %v734
    %v736 = vpop.f32.mrf.mxu0
    %737 = vmatprep.mubr.f32.mxu0 0.0
    %738 = vmatmul.mubr.f32.gmra.mxu0 %v514
    %v739 = vpop.f32.mrf.mxu0
    %v740 = vadd.f32 %v541, %v739
    %v741 = vpop.f32.mrf.mxu0
    %742 = vmatprep.mubr.f32.mxu0 0.0
    %743 = vmatmul.mubr.f32.gmra.mxu0 %v515
    %v744 = vpop.f32.mrf.mxu0
    %v745 = vadd.f32 %v541, %v744
    %v746 = vpop.f32.mrf.mxu0
    %747 = vmatprep.mubr.f32.mxu0 0.0
    %748 = vmatmul.mubr.f32.gmra.mxu0 %v516
    %v749 = vpop.f32.mrf.mxu0
    %v750 = vadd.f32 %v541, %v749
    %v751 = vpop.f32.mrf.mxu0
    %752 = vmatprep.mubr.f32.mxu0 0.0
    %753 = vmatmul.mubr.f32.gmra.mxu0 %v517
    %v754 = vpop.f32.mrf.mxu0
    %v755 = vadd.f32 %v541, %v754
    %v756 = vpop.f32.mrf.mxu0
    %757 = vmatprep.mubr.f32.mxu0 0.0
    %758 = vmatmul.mubr.f32.gmra.mxu0 %v518
    %v759 = vpop.f32.mrf.mxu0
    %v760 = vadd.f32 %v541, %v759
    %v761 = vpop.f32.mrf.mxu0
    %762 = vmatprep.mubr.f32.mxu0 0.0
    %763 = vmatmul.mubr.f32.gmra.mxu0 %v519
    %v764 = vpop.f32.mrf.mxu0
    %v765 = vadd.f32 %v541, %v764
    %v766 = vpop.f32.mrf.mxu0
    %767 = vdwg.mxu0
    %v768 = vmax.f32 %v610, 0.0
    %v769 = vmax.f32 %v615, 0.0
    %v770 = vmax.f32 %v620, 0.0
    %v771 = vmax.f32 %v625, 0.0
    %v772 = vmax.f32 %v630, 0.0
    %v773 = vmax.f32 %v635, 0.0
    %v774 = vmax.f32 %v640, 0.0
    %v775 = vmax.f32 %v645, 0.0
    %v776 = vmax.f32 %v650, 0.0
    %v777 = vmax.f32 %v655, 0.0
    %v778 = vmax.f32 %v660, 0.0
    %v779 = vmax.f32 %v665, 0.0
    %v780 = vmax.f32 %v670, 0.0
    %v781 = vmax.f32 %v675, 0.0
    %v782 = vmax.f32 %v680, 0.0
    %v783 = vmax.f32 %v685, 0.0
    %v784 = vmax.f32 %v690, 0.0
    %v785 = vmax.f32 %v695, 0.0
    %v786 = vmax.f32 %v700, 0.0
    %v787 = vmax.f32 %v705, 0.0
    %v788 = vmax.f32 %v710, 0.0
    %v789 = vmax.f32 %v715, 0.0
    %v790 = vmax.f32 %v720, 0.0
    %v791 = vmax.f32 %v725, 0.0
    %v792 = vmax.f32 %v730, 0.0
    %v793 = vmax.f32 %v735, 0.0
    %v794 = vmax.f32 %v740, 0.0
    %v795 = vmax.f32 %v745, 0.0
    %v796 = vmax.f32 %v750, 0.0
    %v797 = vmax.f32 %v755, 0.0
    %v798 = vmax.f32 %v760, 0.0
    %v799 = vmax.f32 %v765, 0.0
    %v800 = vld [vmem:[#allocation10] sm:$0xff]
    %v801 = vld [vmem:[#allocation10 + $0x8] sm:$0xff]
    %v802 = vld [vmem:[#allocation10 + $0x10] sm:$0xff]
    %v803 = vld [vmem:[#allocation10 + $0x18] sm:$0xff]
    %v804 = vld [vmem:[#allocation10 + $0x20] sm:$0xff]
    %v805 = vld [vmem:[#allocation10 + $0x28] sm:$0xff]
    %v806 = vld [vmem:[#allocation10 + $0x30] sm:$0xff]
    %v807 = vld [vmem:[#allocation10 + $0x38] sm:$0xff]
    %v808 = vld [vmem:[#allocation10 + $0x40] sm:$0xff]
    %v809 = vld [vmem:[#allocation10 + $0x48] sm:$0xff]
    %v810 = vld [vmem:[#allocation10 + $0x50] sm:$0xff]
    %v811 = vld [vmem:[#allocation10 + $0x58] sm:$0xff]
    %v812 = vld [vmem:[#allocation10 + $0x60] sm:$0xff]
    %v813 = vld [vmem:[#allocation10 + $0x68] sm:$0xff]
    %v814 = vld [vmem:[#allocation10 + $0x70] sm:$0xff]
    %v815 = vld [vmem:[#allocation10 + $0x78] sm:$0xff]
    %v816 = vld [vmem:[#allocation10 + $0x80] sm:$0xff]
    %v817 = vld [vmem:[#allocation10 + $0x88] sm:$0xff]
    %v818 = vld [vmem:[#allocation10 + $0x90] sm:$0xff]
    %v819 = vld [vmem:[#allocation10 + $0x98] sm:$0xff]
    %v820 = vld [vmem:[#allocation10 + $0xa0] sm:$0xff]
    %v821 = vld [vmem:[#allocation10 + $0xa8] sm:$0xff]
    %v822 = vld [vmem:[#allocation10 + $0xb0] sm:$0xff]
    %v823 = vld [vmem:[#allocation10 + $0xb8] sm:$0xff]
    %v824 = vld [vmem:[#allocation10 + $0xc0] sm:$0xff]
    %v825 = vld [vmem:[#allocation10 + $0xc8] sm:$0xff]
    %v826 = vld [vmem:[#allocation10 + $0xd0] sm:$0xff]
    %v827 = vld [vmem:[#allocation10 + $0xd8] sm:$0xff]
    %v828 = vld [vmem:[#allocation10 + $0xe0] sm:$0xff]
    %v829 = vld [vmem:[#allocation10 + $0xe8] sm:$0xff]
    %v830 = vld [vmem:[#allocation10 + $0xf0] sm:$0xff]
    %v831 = vld [vmem:[#allocation10 + $0xf8] sm:$0xff]
    %v832 = vld [vmem:[%s7] sm:$0x3]
    %v834 = vlaneseq
    %v835 = vshrl.u32 %v834, 7
    %v836 = vsub.s32 0, %v835
    %v837 = vrot.slane %v832, %v836
    %v838 = vlaneseq
    %v839 = vshrl.u32 %v838, 7
    %v840 = vsub.s32 1, %v839
    %v841 = vrot.slane %v832, %v840
    %844 = vmatprep.subr.mxu0 %v831
    %845 = vmatpush1.msra.mxu0 %v830
    %846 = vmatprep.subr.mxu0 %v829
    %847 = vmatpush1.msra.mxu0 %v828
    %848 = vmatprep.subr.mxu0 %v827
    %849 = vmatpush1.msra.mxu0 %v826
    %850 = vmatprep.subr.mxu0 %v825
    %851 = vmatpush1.msra.mxu0 %v824
    %852 = vmatprep.subr.mxu0 %v823
    %853 = vmatpush1.msra.mxu0 %v822
    %854 = vmatprep.subr.mxu0 %v821
    %855 = vmatpush1.msra.mxu0 %v820
    %856 = vmatprep.subr.mxu0 %v819
    %857 = vmatpush1.msra.mxu0 %v818
    %858 = vmatprep.subr.mxu0 %v817
    %859 = vmatpush1.msra.mxu0 %v816
    %860 = vmatprep.subr.mxu0 %v815
    %861 = vmatpush1.msra.mxu0 %v814
    %862 = vmatprep.subr.mxu0 %v813
    %863 = vmatpush1.msra.mxu0 %v812
    %864 = vmatprep.subr.mxu0 %v811
    %865 = vmatpush1.msra.mxu0 %v810
    %866 = vmatprep.subr.mxu0 %v809
    %867 = vmatpush1.msra.mxu0 %v808
    %868 = vmatprep.subr.mxu0 %v807
    %869 = vmatpush1.msra.mxu0 %v806
    %870 = vmatprep.subr.mxu0 %v805
    %871 = vmatpush1.msra.mxu0 %v804
    %872 = vmatprep.subr.mxu0 %v803
    %873 = vmatpush1.msra.mxu0 %v802
    %874 = vmatprep.subr.mxu0 %v801
    %875 = vmatpush1.msra.mxu0 %v800
    %876 = vmatprep.subr.mxu0 0.0
    %877 = vmatpush2.msra.mxu0 0.0
    %878 = vmatprep.subr.mxu0 0.0
    %879 = vmatpush2.msra.mxu0 0.0
    %880 = vmatprep.subr.mxu0 0.0
    %881 = vmatpush2.msra.mxu0 0.0
    %882 = vmatprep.subr.mxu0 0.0
    %883 = vmatpush2.msra.mxu0 0.0
    %884 = vmatprep.subr.mxu0 0.0
    %885 = vmatpush2.msra.mxu0 0.0
    %886 = vmatprep.subr.mxu0 0.0
    %887 = vmatpush2.msra.mxu0 0.0
    %888 = vmatprep.subr.mxu0 0.0
    %889 = vmatpush2.msra.mxu0 0.0
    %890 = vmatprep.subr.mxu0 0.0
    %891 = vmatpush2.msra.mxu0 0.0
    %892 = vmatprep.subr.mxu0 0.0
    %893 = vmatpush2.msra.mxu0 0.0
    %894 = vmatprep.subr.mxu0 0.0
    %895 = vmatpush2.msra.mxu0 0.0
    %896 = vmatprep.subr.mxu0 0.0
    %897 = vmatpush2.msra.mxu0 0.0
    %898 = vmatprep.subr.mxu0 0.0
    %899 = vmatpush2.msra.mxu0 0.0
    %900 = vmatprep.subr.mxu0 0.0
    %901 = vmatpush2.msra.mxu0 0.0
    %902 = vmatprep.subr.mxu0 0.0
    %903 = vmatpush2.msra.mxu0 0.0
    %904 = vmatprep.subr.mxu0 0.0
    %905 = vmatpush2.msra.mxu0 0.0
    %906 = vmatprep.subr.mxu0 0.0
    %907 = vmatpush2.msra.mxu0 0.0
    %908 = vmatprep.mubr.f32.mxu0 0.0
    %909 = vmatmul.mubr.f32.gmra.mxu0 %v768
    %v910 = vpop.f32.mrf.mxu0
    %v911 = vadd.f32 %v837, %v910
    %v912 = vpop.f32.mrf.mxu0
    %v913 = vadd.f32 %v841, %v912
    %914 = vmatprep.mubr.f32.mxu0 0.0
    %915 = vmatmul.mubr.f32.gmra.mxu0 %v769
    %v916 = vpop.f32.mrf.mxu0
    %v917 = vadd.f32 %v837, %v916
    %v918 = vpop.f32.mrf.mxu0
    %v919 = vadd.f32 %v841, %v918
    %920 = vmatprep.mubr.f32.mxu0 0.0
    %921 = vmatmul.mubr.f32.gmra.mxu0 %v770
    %v922 = vpop.f32.mrf.mxu0
    %v923 = vadd.f32 %v837, %v922
    %v924 = vpop.f32.mrf.mxu0
    %v925 = vadd.f32 %v841, %v924
    %926 = vmatprep.mubr.f32.mxu0 0.0
    %927 = vmatmul.mubr.f32.gmra.mxu0 %v771
    %v928 = vpop.f32.mrf.mxu0
    %v929 = vadd.f32 %v837, %v928
    %v930 = vpop.f32.mrf.mxu0
    %v931 = vadd.f32 %v841, %v930
    %932 = vmatprep.mubr.f32.mxu0 0.0
    %933 = vmatmul.mubr.f32.gmra.mxu0 %v772
    %v934 = vpop.f32.mrf.mxu0
    %v935 = vadd.f32 %v837, %v934
    %v936 = vpop.f32.mrf.mxu0
    %v937 = vadd.f32 %v841, %v936
    %938 = vmatprep.mubr.f32.mxu0 0.0
    %939 = vmatmul.mubr.f32.gmra.mxu0 %v773
    %v940 = vpop.f32.mrf.mxu0
    %v941 = vadd.f32 %v837, %v940
    %v942 = vpop.f32.mrf.mxu0
    %v943 = vadd.f32 %v841, %v942
    %944 = vmatprep.mubr.f32.mxu0 0.0
    %945 = vmatmul.mubr.f32.gmra.mxu0 %v774
    %v946 = vpop.f32.mrf.mxu0
    %v947 = vadd.f32 %v837, %v946
    %v948 = vpop.f32.mrf.mxu0
    %v949 = vadd.f32 %v841, %v948
    %950 = vmatprep.mubr.f32.mxu0 0.0
    %951 = vmatmul.mubr.f32.gmra.mxu0 %v775
    %v952 = vpop.f32.mrf.mxu0
    %v953 = vadd.f32 %v837, %v952
    %v954 = vpop.f32.mrf.mxu0
    %v955 = vadd.f32 %v841, %v954
    %956 = vmatprep.mubr.f32.mxu0 0.0
    %957 = vmatmul.mubr.f32.gmra.mxu0 %v776
    %v958 = vpop.f32.mrf.mxu0
    %v959 = vadd.f32 %v837, %v958
    %v960 = vpop.f32.mrf.mxu0
    %v961 = vadd.f32 %v841, %v960
    %962 = vmatprep.mubr.f32.mxu0 0.0
    %963 = vmatmul.mubr.f32.gmra.mxu0 %v777
    %v964 = vpop.f32.mrf.mxu0
    %v965 = vadd.f32 %v837, %v964
    %v966 = vpop.f32.mrf.mxu0
    %v967 = vadd.f32 %v841, %v966
    %968 = vmatprep.mubr.f32.mxu0 0.0
    %969 = vmatmul.mubr.f32.gmra.mxu0 %v778
    %v970 = vpop.f32.mrf.mxu0
    %v971 = vadd.f32 %v837, %v970
    %v972 = vpop.f32.mrf.mxu0
    %v973 = vadd.f32 %v841, %v972
    %974 = vmatprep.mubr.f32.mxu0 0.0
    %975 = vmatmul.mubr.f32.gmra.mxu0 %v779
    %v976 = vpop.f32.mrf.mxu0
    %v977 = vadd.f32 %v837, %v976
    %v978 = vpop.f32.mrf.mxu0
    %v979 = vadd.f32 %v841, %v978
    %980 = vmatprep.mubr.f32.mxu0 0.0
    %981 = vmatmul.mubr.f32.gmra.mxu0 %v780
    %v982 = vpop.f32.mrf.mxu0
    %v983 = vadd.f32 %v837, %v982
    %v984 = vpop.f32.mrf.mxu0
    %v985 = vadd.f32 %v841, %v984
    %986 = vmatprep.mubr.f32.mxu0 0.0
    %987 = vmatmul.mubr.f32.gmra.mxu0 %v781
    %v988 = vpop.f32.mrf.mxu0
    %v989 = vadd.f32 %v837, %v988
    %v990 = vpop.f32.mrf.mxu0
    %v991 = vadd.f32 %v841, %v990
    %992 = vmatprep.mubr.f32.mxu0 0.0
    %993 = vmatmul.mubr.f32.gmra.mxu0 %v782
    %v994 = vpop.f32.mrf.mxu0
    %v995 = vadd.f32 %v837, %v994
    %v996 = vpop.f32.mrf.mxu0
    %v997 = vadd.f32 %v841, %v996
    %998 = vmatprep.mubr.f32.mxu0 0.0
    %999 = vmatmul.mubr.f32.gmra.mxu0 %v783
    %v1000 = vpop.f32.mrf.mxu0
    %v1001 = vadd.f32 %v837, %v1000
    %v1002 = vpop.f32.mrf.mxu0
    %v1003 = vadd.f32 %v841, %v1002
    %1004 = vmatprep.mubr.f32.mxu0 0.0
    %1005 = vmatmul.mubr.f32.gmra.mxu0 %v784
    %v1006 = vpop.f32.mrf.mxu0
    %v1007 = vadd.f32 %v837, %v1006
    %v1008 = vpop.f32.mrf.mxu0
    %v1009 = vadd.f32 %v841, %v1008
    %1010 = vmatprep.mubr.f32.mxu0 0.0
    %1011 = vmatmul.mubr.f32.gmra.mxu0 %v785
    %v1012 = vpop.f32.mrf.mxu0
    %v1013 = vadd.f32 %v837, %v1012
    %v1014 = vpop.f32.mrf.mxu0
    %v1015 = vadd.f32 %v841, %v1014
    %1016 = vmatprep.mubr.f32.mxu0 0.0
    %1017 = vmatmul.mubr.f32.gmra.mxu0 %v786
    %v1018 = vpop.f32.mrf.mxu0
    %v1019 = vadd.f32 %v837, %v1018
    %v1020 = vpop.f32.mrf.mxu0
    %v1021 = vadd.f32 %v841, %v1020
    %1022 = vmatprep.mubr.f32.mxu0 0.0
    %1023 = vmatmul.mubr.f32.gmra.mxu0 %v787
    %v1024 = vpop.f32.mrf.mxu0
    %v1025 = vadd.f32 %v837, %v1024
    %v1026 = vpop.f32.mrf.mxu0
    %v1027 = vadd.f32 %v841, %v1026
    %1028 = vmatprep.mubr.f32.mxu0 0.0
    %1029 = vmatmul.mubr.f32.gmra.mxu0 %v788
    %v1030 = vpop.f32.mrf.mxu0
    %v1031 = vadd.f32 %v837, %v1030
    %v1032 = vpop.f32.mrf.mxu0
    %v1033 = vadd.f32 %v841, %v1032
    %1034 = vmatprep.mubr.f32.mxu0 0.0
    %1035 = vmatmul.mubr.f32.gmra.mxu0 %v789
    %v1036 = vpop.f32.mrf.mxu0
    %v1037 = vadd.f32 %v837, %v1036
    %v1038 = vpop.f32.mrf.mxu0
    %v1039 = vadd.f32 %v841, %v1038
    %1040 = vmatprep.mubr.f32.mxu0 0.0
    %1041 = vmatmul.mubr.f32.gmra.mxu0 %v790
    %v1042 = vpop.f32.mrf.mxu0
    %v1043 = vadd.f32 %v837, %v1042
    %v1044 = vpop.f32.mrf.mxu0
    %v1045 = vadd.f32 %v841, %v1044
    %1046 = vmatprep.mubr.f32.mxu0 0.0
    %1047 = vmatmul.mubr.f32.gmra.mxu0 %v791
    %v1048 = vpop.f32.mrf.mxu0
    %v1049 = vadd.f32 %v837, %v1048
    %v1050 = vpop.f32.mrf.mxu0
    %v1051 = vadd.f32 %v841, %v1050
    %1052 = vmatprep.mubr.f32.mxu0 0.0
    %1053 = vmatmul.mubr.f32.gmra.mxu0 %v792
    %v1054 = vpop.f32.mrf.mxu0
    %v1055 = vadd.f32 %v837, %v1054
    %v1056 = vpop.f32.mrf.mxu0
    %v1057 = vadd.f32 %v841, %v1056
    %1058 = vmatprep.mubr.f32.mxu0 0.0
    %1059 = vmatmul.mubr.f32.gmra.mxu0 %v793
    %v1060 = vpop.f32.mrf.mxu0
    %v1061 = vadd.f32 %v837, %v1060
    %v1062 = vpop.f32.mrf.mxu0
    %v1063 = vadd.f32 %v841, %v1062
    %1064 = vmatprep.mubr.f32.mxu0 0.0
    %1065 = vmatmul.mubr.f32.gmra.mxu0 %v794
    %v1066 = vpop.f32.mrf.mxu0
    %v1067 = vadd.f32 %v837, %v1066
    %v1068 = vpop.f32.mrf.mxu0
    %v1069 = vadd.f32 %v841, %v1068
    %1070 = vmatprep.mubr.f32.mxu0 0.0
    %1071 = vmatmul.mubr.f32.gmra.mxu0 %v795
    %v1072 = vpop.f32.mrf.mxu0
    %v1073 = vadd.f32 %v837, %v1072
    %v1074 = vpop.f32.mrf.mxu0
    %v1075 = vadd.f32 %v841, %v1074
    %1076 = vmatprep.mubr.f32.mxu0 0.0
    %1077 = vmatmul.mubr.f32.gmra.mxu0 %v796
    %v1078 = vpop.f32.mrf.mxu0
    %v1079 = vadd.f32 %v837, %v1078
    %v1080 = vpop.f32.mrf.mxu0
    %v1081 = vadd.f32 %v841, %v1080
    %1082 = vmatprep.mubr.f32.mxu0 0.0
    %1083 = vmatmul.mubr.f32.gmra.mxu0 %v797
    %v1084 = vpop.f32.mrf.mxu0
    %v1085 = vadd.f32 %v837, %v1084
    %v1086 = vpop.f32.mrf.mxu0
    %v1087 = vadd.f32 %v841, %v1086
    %1088 = vmatprep.mubr.f32.mxu0 0.0
    %1089 = vmatmul.mubr.f32.gmra.mxu0 %v798
    %v1090 = vpop.f32.mrf.mxu0
    %v1091 = vadd.f32 %v837, %v1090
    %v1092 = vpop.f32.mrf.mxu0
    %v1093 = vadd.f32 %v841, %v1092
    %1094 = vmatprep.mubr.f32.mxu0 0.0
    %1095 = vmatmul.mubr.f32.gmra.mxu0 %v799
    %v1096 = vpop.f32.mrf.mxu0
    %v1097 = vadd.f32 %v837, %v1096
    %v1098 = vpop.f32.mrf.mxu0
    %v1099 = vadd.f32 %v841, %v1098
    %1100 = vdwg.mxu0
    %1101 = vst [vmem:[#allocation17] sm:$0xff] %v911
    %1102 = vst [vmem:[#allocation17 + $0x8] sm:$0xff] %v913
    %1103 = vst [vmem:[#allocation17 + $0x10] sm:$0xff] %v917
    %1104 = vst [vmem:[#allocation17 + $0x18] sm:$0xff] %v919
    %1105 = vst [vmem:[#allocation17 + $0x20] sm:$0xff] %v923
    %1106 = vst [vmem:[#allocation17 + $0x28] sm:$0xff] %v925
    %1107 = vst [vmem:[#allocation17 + $0x30] sm:$0xff] %v929
    %1108 = vst [vmem:[#allocation17 + $0x38] sm:$0xff] %v931
    %1109 = vst [vmem:[#allocation17 + $0x40] sm:$0xff] %v935
    %1110 = vst [vmem:[#allocation17 + $0x48] sm:$0xff] %v937
    %1111 = vst [vmem:[#allocation17 + $0x50] sm:$0xff] %v941
    %1112 = vst [vmem:[#allocation17 + $0x58] sm:$0xff] %v943
    %1113 = vst [vmem:[#allocation17 + $0x60] sm:$0xff] %v947
    %1114 = vst [vmem:[#allocation17 + $0x68] sm:$0xff] %v949
    %1115 = vst [vmem:[#allocation17 + $0x70] sm:$0xff] %v953
    %1116 = vst [vmem:[#allocation17 + $0x78] sm:$0xff] %v955
    %1117 = vst [vmem:[#allocation17 + $0x80] sm:$0xff] %v959
    %1118 = vst [vmem:[#allocation17 + $0x88] sm:$0xff] %v961
    %1119 = vst [vmem:[#allocation17 + $0x90] sm:$0xff] %v965
    %1120 = vst [vmem:[#allocation17 + $0x98] sm:$0xff] %v967
    %1121 = vst [vmem:[#allocation17 + $0xa0] sm:$0xff] %v971
    %1122 = vst [vmem:[#allocation17 + $0xa8] sm:$0xff] %v973
    %1123 = vst [vmem:[#allocation17 + $0xb0] sm:$0xff] %v977
    %1124 = vst [vmem:[#allocation17 + $0xb8] sm:$0xff] %v979
    %1125 = vst [vmem:[#allocation17 + $0xc0] sm:$0xff] %v983
    %1126 = vst [vmem:[#allocation17 + $0xc8] sm:$0xff] %v985
    %1127 = vst [vmem:[#allocation17 + $0xd0] sm:$0xff] %v989
    %1128 = vst [vmem:[#allocation17 + $0xd8] sm:$0xff] %v991
    %1129 = vst [vmem:[#allocation17 + $0xe0] sm:$0xff] %v995
    %1130 = vst [vmem:[#allocation17 + $0xe8] sm:$0xff] %v997
    %1131 = vst [vmem:[#allocation17 + $0xf0] sm:$0xff] %v1001
    %1132 = vst [vmem:[#allocation17 + $0xf8] sm:$0xff] %v1003
    %1133 = vst [vmem:[#allocation17 + $0x100] sm:$0xff] %v1007
    %1134 = vst [vmem:[#allocation17 + $0x108] sm:$0xff] %v1009
    %1135 = vst [vmem:[#allocation17 + $0x110] sm:$0xff] %v1013
    %1136 = vst [vmem:[#allocation17 + $0x118] sm:$0xff] %v1015
    %1137 = vst [vmem:[#allocation17 + $0x120] sm:$0xff] %v1019
    %1138 = vst [vmem:[#allocation17 + $0x128] sm:$0xff] %v1021
    %1139 = vst [vmem:[#allocation17 + $0x130] sm:$0xff] %v1025
    %1140 = vst [vmem:[#allocation17 + $0x138] sm:$0xff] %v1027
    %1141 = vst [vmem:[#allocation17 + $0x140] sm:$0xff] %v1031
    %1142 = vst [vmem:[#allocation17 + $0x148] sm:$0xff] %v1033
    %1143 = vst [vmem:[#allocation17 + $0x150] sm:$0xff] %v1037
    %1144 = vst [vmem:[#allocation17 + $0x158] sm:$0xff] %v1039
    %1145 = vst [vmem:[#allocation17 + $0x160] sm:$0xff] %v1043
    %1146 = vst [vmem:[#allocation17 + $0x168] sm:$0xff] %v1045
    %1147 = vst [vmem:[#allocation17 + $0x170] sm:$0xff] %v1049
    %1148 = vst [vmem:[#allocation17 + $0x178] sm:$0xff] %v1051
    %1149 = vst [vmem:[#allocation17 + $0x180] sm:$0xff] %v1055
    %1150 = vst [vmem:[#allocation17 + $0x188] sm:$0xff] %v1057
    %1151 = vst [vmem:[#allocation17 + $0x190] sm:$0xff] %v1061
    %1152 = vst [vmem:[#allocation17 + $0x198] sm:$0xff] %v1063
    %1153 = vst [vmem:[#allocation17 + $0x1a0] sm:$0xff] %v1067
    %1154 = vst [vmem:[#allocation17 + $0x1a8] sm:$0xff] %v1069
    %1155 = vst [vmem:[#allocation17 + $0x1b0] sm:$0xff] %v1073
    %1156 = vst [vmem:[#allocation17 + $0x1b8] sm:$0xff] %v1075
    %1157 = vst [vmem:[#allocation17 + $0x1c0] sm:$0xff] %v1079
    %1158 = vst [vmem:[#allocation17 + $0x1c8] sm:$0xff] %v1081
    %1159 = vst [vmem:[#allocation17 + $0x1d0] sm:$0xff] %v1085
    %1160 = vst [vmem:[#allocation17 + $0x1d8] sm:$0xff] %v1087
    %1161 = vst [vmem:[#allocation17 + $0x1e0] sm:$0xff] %v1091
    %1162 = vst [vmem:[#allocation17 + $0x1e8] sm:$0xff] %v1093
    %1163 = vst [vmem:[#allocation17 + $0x1f0] sm:$0xff] %v1097
    %1164 = vst [vmem:[#allocation17 + $0x1f8] sm:$0xff] %v1099
    %v1165 = vld [vmem:[#allocation17] sm:$0xff]
    %v1166 = vld [vmem:[#allocation17 + $0x10] sm:$0xff]
    %v1167 = vld [vmem:[#allocation17 + $0x20] sm:$0xff]
    %v1168 = vld [vmem:[#allocation17 + $0x30] sm:$0xff]
    %v1169 = vld [vmem:[#allocation17 + $0x40] sm:$0xff]
    %v1170 = vld [vmem:[#allocation17 + $0x50] sm:$0xff]
    %v1171 = vld [vmem:[#allocation17 + $0x60] sm:$0xff]
    %v1172 = vld [vmem:[#allocation17 + $0x70] sm:$0xff]
    %v1173 = vld [vmem:[#allocation17 + $0x80] sm:$0xff]
    %v1174 = vld [vmem:[#allocation17 + $0x90] sm:$0xff]
    %v1175 = vld [vmem:[#allocation17 + $0xa0] sm:$0xff]
    %v1176 = vld [vmem:[#allocation17 + $0xb0] sm:$0xff]
    %v1177 = vld [vmem:[#allocation17 + $0xc0] sm:$0xff]
    %v1178 = vld [vmem:[#allocation17 + $0xd0] sm:$0xff]
    %v1179 = vld [vmem:[#allocation17 + $0xe0] sm:$0xff]
    %v1180 = vld [vmem:[#allocation17 + $0xf0] sm:$0xff]
    %v1181 = vld [vmem:[#allocation17 + $0x100] sm:$0xff]
    %v1182 = vld [vmem:[#allocation17 + $0x110] sm:$0xff]
    %v1183 = vld [vmem:[#allocation17 + $0x120] sm:$0xff]
    %v1184 = vld [vmem:[#allocation17 + $0x130] sm:$0xff]
    %v1185 = vld [vmem:[#allocation17 + $0x140] sm:$0xff]
    %v1186 = vld [vmem:[#allocation17 + $0x150] sm:$0xff]
    %v1187 = vld [vmem:[#allocation17 + $0x160] sm:$0xff]
    %v1188 = vld [vmem:[#allocation17 + $0x170] sm:$0xff]
    %v1189 = vld [vmem:[#allocation17 + $0x180] sm:$0xff]
    %v1190 = vld [vmem:[#allocation17 + $0x190] sm:$0xff]
    %v1191 = vld [vmem:[#allocation17 + $0x1a0] sm:$0xff]
    %v1192 = vld [vmem:[#allocation17 + $0x1b0] sm:$0xff]
    %v1193 = vld [vmem:[#allocation17 + $0x1c0] sm:$0xff]
    %v1194 = vld [vmem:[#allocation17 + $0x1d0] sm:$0xff]
    %v1195 = vld [vmem:[#allocation17 + $0x1e0] sm:$0xff]
    %v1196 = vld [vmem:[#allocation17 + $0x1f0] sm:$0xff]
    %v1197 = vld [vmem:[#allocation17 + $0x8] sm:$0xff]
    %v1198 = vld [vmem:[#allocation17 + $0x18] sm:$0xff]
    %v1199 = vld [vmem:[#allocation17 + $0x28] sm:$0xff]
    %v1200 = vld [vmem:[#allocation17 + $0x38] sm:$0xff]
    %v1201 = vld [vmem:[#allocation17 + $0x48] sm:$0xff]
    %v1202 = vld [vmem:[#allocation17 + $0x58] sm:$0xff]
    %v1203 = vld [vmem:[#allocation17 + $0x68] sm:$0xff]
    %v1204 = vld [vmem:[#allocation17 + $0x78] sm:$0xff]
    %v1205 = vld [vmem:[#allocation17 + $0x88] sm:$0xff]
    %v1206 = vld [vmem:[#allocation17 + $0x98] sm:$0xff]
    %v1207 = vld [vmem:[#allocation17 + $0xa8] sm:$0xff]
    %v1208 = vld [vmem:[#allocation17 + $0xb8] sm:$0xff]
    %v1209 = vld [vmem:[#allocation17 + $0xc8] sm:$0xff]
    %v1210 = vld [vmem:[#allocation17 + $0xd8] sm:$0xff]
    %v1211 = vld [vmem:[#allocation17 + $0xe8] sm:$0xff]
    %v1212 = vld [vmem:[#allocation17 + $0xf8] sm:$0xff]
    %v1213 = vld [vmem:[#allocation17 + $0x108] sm:$0xff]
    %v1214 = vld [vmem:[#allocation17 + $0x118] sm:$0xff]
    %v1215 = vld [vmem:[#allocation17 + $0x128] sm:$0xff]
    %v1216 = vld [vmem:[#allocation17 + $0x138] sm:$0xff]
    %v1217 = vld [vmem:[#allocation17 + $0x148] sm:$0xff]
    %v1218 = vld [vmem:[#allocation17 + $0x158] sm:$0xff]
    %v1219 = vld [vmem:[#allocation17 + $0x168] sm:$0xff]
    %v1220 = vld [vmem:[#allocation17 + $0x178] sm:$0xff]
    %v1221 = vld [vmem:[#allocation17 + $0x188] sm:$0xff]
    %v1222 = vld [vmem:[#allocation17 + $0x198] sm:$0xff]
    %v1223 = vld [vmem:[#allocation17 + $0x1a8] sm:$0xff]
    %v1224 = vld [vmem:[#allocation17 + $0x1b8] sm:$0xff]
    %v1225 = vld [vmem:[#allocation17 + $0x1c8] sm:$0xff]
    %v1226 = vld [vmem:[#allocation17 + $0x1d8] sm:$0xff]
    %v1227 = vld [vmem:[#allocation17 + $0x1e8] sm:$0xff]
    %v1228 = vld [vmem:[#allocation17 + $0x1f8] sm:$0xff]
    %v1229 = vld [vmem:[#allocation5] sm:$0xff]
    %v1230 = vld [vmem:[#allocation5 + $0x8] sm:$0xff]
    %v1231 = vld [vmem:[#allocation5 + $0x10] sm:$0xff]
    %v1232 = vld [vmem:[#allocation5 + $0x18] sm:$0xff]
    %v1233 = vld [vmem:[#allocation5 + $0x20] sm:$0xff]
    %v1234 = vld [vmem:[#allocation5 + $0x28] sm:$0xff]
    %v1235 = vld [vmem:[#allocation5 + $0x30] sm:$0xff]
    %v1236 = vld [vmem:[#allocation5 + $0x38] sm:$0xff]
    %v1237 = vld [vmem:[#allocation5 + $0x40] sm:$0xff]
    %v1238 = vld [vmem:[#allocation5 + $0x48] sm:$0xff]
    %v1239 = vld [vmem:[#allocation5 + $0x50] sm:$0xff]
    %v1240 = vld [vmem:[#allocation5 + $0x58] sm:$0xff]
    %v1241 = vld [vmem:[#allocation5 + $0x60] sm:$0xff]
    %v1242 = vld [vmem:[#allocation5 + $0x68] sm:$0xff]
    %v1243 = vld [vmem:[#allocation5 + $0x70] sm:$0xff]
    %v1244 = vld [vmem:[#allocation5 + $0x78] sm:$0xff]
    %v1245 = vld [vmem:[#allocation5 + $0x80] sm:$0xff]
    %v1246 = vld [vmem:[#allocation5 + $0x88] sm:$0xff]
    %v1247 = vld [vmem:[#allocation5 + $0x90] sm:$0xff]
    %v1248 = vld [vmem:[#allocation5 + $0x98] sm:$0xff]
    %v1249 = vld [vmem:[#allocation5 + $0xa0] sm:$0xff]
    %v1250 = vld [vmem:[#allocation5 + $0xa8] sm:$0xff]
    %v1251 = vld [vmem:[#allocation5 + $0xb0] sm:$0xff]
    %v1252 = vld [vmem:[#allocation5 + $0xb8] sm:$0xff]
    %v1253 = vld [vmem:[#allocation5 + $0xc0] sm:$0xff]
    %v1254 = vld [vmem:[#allocation5 + $0xc8] sm:$0xff]
    %v1255 = vld [vmem:[#allocation5 + $0xd0] sm:$0xff]
    %v1256 = vld [vmem:[#allocation5 + $0xd8] sm:$0xff]
    %v1257 = vld [vmem:[#allocation5 + $0xe0] sm:$0xff]
    %v1258 = vld [vmem:[#allocation5 + $0xe8] sm:$0xff]
    %v1259 = vld [vmem:[#allocation5 + $0xf0] sm:$0xff]
    %v1260 = vld [vmem:[#allocation5 + $0xf8] sm:$0xff]
    %v1261 = vmul.f32 %v1197, 0.5
    %v1262 = vmul.f32 %v1198, 0.5
    %v1263 = vmul.f32 %v1199, 0.5
    %v1264 = vmul.f32 %v1200, 0.5
    %v1265 = vmul.f32 %v1201, 0.5
    %v1266 = vmul.f32 %v1202, 0.5
    %v1267 = vmul.f32 %v1203, 0.5
    %v1268 = vmul.f32 %v1204, 0.5
    %v1269 = vmul.f32 %v1205, 0.5
    %v1270 = vmul.f32 %v1206, 0.5
    %v1271 = vmul.f32 %v1207, 0.5
    %v1272 = vmul.f32 %v1208, 0.5
    %v1273 = vmul.f32 %v1209, 0.5
    %v1274 = vmul.f32 %v1210, 0.5
    %v1275 = vmul.f32 %v1211, 0.5
    %v1276 = vmul.f32 %v1212, 0.5
    %v1277 = vmul.f32 %v1213, 0.5
    %v1278 = vmul.f32 %v1214, 0.5
    %v1279 = vmul.f32 %v1215, 0.5
    %v1280 = vmul.f32 %v1216, 0.5
    %v1281 = vmul.f32 %v1217, 0.5
    %v1282 = vmul.f32 %v1218, 0.5
    %v1283 = vmul.f32 %v1219, 0.5
    %v1284 = vmul.f32 %v1220, 0.5
    %v1285 = vmul.f32 %v1221, 0.5
    %v1286 = vmul.f32 %v1222, 0.5
    %v1287 = vmul.f32 %v1223, 0.5
    %v1288 = vmul.f32 %v1224, 0.5
    %v1289 = vmul.f32 %v1225, 0.5
    %v1290 = vmul.f32 %v1226, 0.5
    %v1291 = vmul.f32 %v1227, 0.5
    %v1292 = vmul.f32 %v1228, 0.5
    %v1293 = vmul.f32 %v1261, 1.442695
    %v1294 = vpow.pop %v1293
    %v1295 = vmul.f32 %v1262, 1.442695
    %v1296 = vpow.pop %v1295
    %v1297 = vmul.f32 %v1263, 1.442695
    %v1298 = vpow.pop %v1297
    %v1299 = vmul.f32 %v1264, 1.442695
    %v1300 = vpow.pop %v1299
    %v1301 = vmul.f32 %v1265, 1.442695
    %v1302 = vpow.pop %v1301
    %v1303 = vmul.f32 %v1266, 1.442695
    %v1304 = vpow.pop %v1303
    %v1305 = vmul.f32 %v1267, 1.442695
    %v1306 = vpow.pop %v1305
    %v1307 = vmul.f32 %v1268, 1.442695
    %v1308 = vpow.pop %v1307
    %v1309 = vmul.f32 %v1269, 1.442695
    %v1310 = vpow.pop %v1309
    %v1311 = vmul.f32 %v1270, 1.442695
    %v1312 = vpow.pop %v1311
    %v1313 = vmul.f32 %v1271, 1.442695
    %v1314 = vpow.pop %v1313
    %v1315 = vmul.f32 %v1272, 1.442695
    %v1316 = vpow.pop %v1315
    %v1317 = vmul.f32 %v1273, 1.442695
    %v1318 = vpow.pop %v1317
    %v1319 = vmul.f32 %v1274, 1.442695
    %v1320 = vpow.pop %v1319
    %v1321 = vmul.f32 %v1275, 1.442695
    %v1322 = vpow.pop %v1321
    %v1323 = vmul.f32 %v1276, 1.442695
    %v1324 = vpow.pop %v1323
    %v1325 = vmul.f32 %v1277, 1.442695
    %v1326 = vpow.pop %v1325
    %v1327 = vmul.f32 %v1278, 1.442695
    %v1328 = vpow.pop %v1327
    %v1329 = vmul.f32 %v1279, 1.442695
    %v1330 = vpow.pop %v1329
    %v1331 = vmul.f32 %v1280, 1.442695
    %v1332 = vpow.pop %v1331
    %v1333 = vmul.f32 %v1281, 1.442695
    %v1334 = vpow.pop %v1333
    %v1335 = vmul.f32 %v1282, 1.442695
    %v1336 = vpow.pop %v1335
    %v1337 = vmul.f32 %v1283, 1.442695
    %v1338 = vpow.pop %v1337
    %v1339 = vmul.f32 %v1284, 1.442695
    %v1340 = vpow.pop %v1339
    %v1341 = vmul.f32 %v1285, 1.442695
    %v1342 = vpow.pop %v1341
    %v1343 = vmul.f32 %v1286, 1.442695
    %v1344 = vpow.pop %v1343
    %v1345 = vmul.f32 %v1287, 1.442695
    %v1346 = vpow.pop %v1345
    %v1347 = vmul.f32 %v1288, 1.442695
    %v1348 = vpow.pop %v1347
    %v1349 = vmul.f32 %v1289, 1.442695
    %v1350 = vpow.pop %v1349
    %v1351 = vmul.f32 %v1290, 1.442695
    %v1352 = vpow.pop %v1351
    %v1353 = vmul.f32 %v1291, 1.442695
    %v1354 = vpow.pop %v1353
    %v1355 = vmul.f32 %v1292, 1.442695
    %v1356 = vpow.pop %v1355
    %v1357 = vmul.f32 %v1229, %v1294
    %v1358 = vmul.f32 %v1230, %v1296
    %v1359 = vmul.f32 %v1231, %v1298
    %v1360 = vmul.f32 %v1232, %v1300
    %v1361 = vmul.f32 %v1233, %v1302
    %v1362 = vmul.f32 %v1234, %v1304
    %v1363 = vmul.f32 %v1235, %v1306
    %v1364 = vmul.f32 %v1236, %v1308
    %v1365 = vmul.f32 %v1237, %v1310
    %v1366 = vmul.f32 %v1238, %v1312
    %v1367 = vmul.f32 %v1239, %v1314
    %v1368 = vmul.f32 %v1240, %v1316
    %v1369 = vmul.f32 %v1241, %v1318
    %v1370 = vmul.f32 %v1242, %v1320
    %v1371 = vmul.f32 %v1243, %v1322
    %v1372 = vmul.f32 %v1244, %v1324
    %v1373 = vmul.f32 %v1245, %v1326
    %v1374 = vmul.f32 %v1246, %v1328
    %v1375 = vmul.f32 %v1247, %v1330
    %v1376 = vmul.f32 %v1248, %v1332
    %v1377 = vmul.f32 %v1249, %v1334
    %v1378 = vmul.f32 %v1250, %v1336
    %v1379 = vmul.f32 %v1251, %v1338
    %v1380 = vmul.f32 %v1252, %v1340
    %v1381 = vmul.f32 %v1253, %v1342
    %v1382 = vmul.f32 %v1254, %v1344
    %v1383 = vmul.f32 %v1255, %v1346
    %v1384 = vmul.f32 %v1256, %v1348
    %v1385 = vmul.f32 %v1257, %v1350
    %v1386 = vmul.f32 %v1258, %v1352
    %v1387 = vmul.f32 %v1259, %v1354
    %v1388 = vmul.f32 %v1260, %v1356
    %v1389 = vadd.f32 %v1357, %v1165
    %v1390 = vadd.f32 %v1358, %v1166
    %v1391 = vadd.f32 %v1359, %v1167
    %v1392 = vadd.f32 %v1360, %v1168
    %v1393 = vadd.f32 %v1361, %v1169
    %v1394 = vadd.f32 %v1362, %v1170
    %v1395 = vadd.f32 %v1363, %v1171
    %v1396 = vadd.f32 %v1364, %v1172
    %v1397 = vadd.f32 %v1365, %v1173
    %v1398 = vadd.f32 %v1366, %v1174
    %v1399 = vadd.f32 %v1367, %v1175
    %v1400 = vadd.f32 %v1368, %v1176
    %v1401 = vadd.f32 %v1369, %v1177
    %v1402 = vadd.f32 %v1370, %v1178
    %v1403 = vadd.f32 %v1371, %v1179
    %v1404 = vadd.f32 %v1372, %v1180
    %v1405 = vadd.f32 %v1373, %v1181
    %v1406 = vadd.f32 %v1374, %v1182
    %v1407 = vadd.f32 %v1375, %v1183
    %v1408 = vadd.f32 %v1376, %v1184
    %v1409 = vadd.f32 %v1377, %v1185
    %v1410 = vadd.f32 %v1378, %v1186
    %v1411 = vadd.f32 %v1379, %v1187
    %v1412 = vadd.f32 %v1380, %v1188
    %v1413 = vadd.f32 %v1381, %v1189
    %v1414 = vadd.f32 %v1382, %v1190
    %v1415 = vadd.f32 %v1383, %v1191
    %v1416 = vadd.f32 %v1384, %v1192
    %v1417 = vadd.f32 %v1385, %v1193
    %v1418 = vadd.f32 %v1386, %v1194
    %v1419 = vadd.f32 %v1387, %v1195
    %v1420 = vadd.f32 %v1388, %v1196
    %v1421 = vld [vmem:[#allocation11] sm:$0xff]
    %v1422 = vld [vmem:[#allocation11 + $0x8] sm:$0xff]
    %v1423 = vld [vmem:[#allocation11 + $0x10] sm:$0xff]
    %v1424 = vld [vmem:[#allocation11 + $0x18] sm:$0xff]
    %v1425 = vld [vmem:[#allocation11 + $0x20] sm:$0xff]
    %v1426 = vld [vmem:[#allocation11 + $0x28] sm:$0xff]
    %v1427 = vld [vmem:[#allocation11 + $0x30] sm:$0xff]
    %v1428 = vld [vmem:[#allocation11 + $0x38] sm:$0xff]
    %v1429 = vld [vmem:[#allocation11 + $0x40] sm:$0xff]
    %v1430 = vld [vmem:[#allocation11 + $0x48] sm:$0xff]
    %v1431 = vld [vmem:[#allocation11 + $0x50] sm:$0xff]
    %v1432 = vld [vmem:[#allocation11 + $0x58] sm:$0xff]
    %v1433 = vld [vmem:[#allocation11 + $0x60] sm:$0xff]
    %v1434 = vld [vmem:[#allocation11 + $0x68] sm:$0xff]
    %v1435 = vld [vmem:[#allocation11 + $0x70] sm:$0xff]
    %v1436 = vld [vmem:[#allocation11 + $0x78] sm:$0xff]
    %v1437 = vld [vmem:[%s9] sm:$0x1]
    %v1439 = vlaneseq
    %v1440 = vshrl.u32 %v1439, 7
    %v1441 = vsub.s32 0, %v1440
    %v1442 = vrot.slane %v1437, %v1441
    %1444 = vmatprep.subr.mxu0 0.0
    %1445 = vmatpush1.msra.mxu0 %v1436
    %1446 = vmatprep.subr.mxu0 0.0
    %1447 = vmatpush1.msra.mxu0 %v1435
    %1448 = vmatprep.subr.mxu0 0.0
    %1449 = vmatpush1.msra.mxu0 %v1434
    %1450 = vmatprep.subr.mxu0 0.0
    %1451 = vmatpush1.msra.mxu0 %v1433
    %1452 = vmatprep.subr.mxu0 0.0
    %1453 = vmatpush1.msra.mxu0 %v1432
    %1454 = vmatprep.subr.mxu0 0.0
    %1455 = vmatpush1.msra.mxu0 %v1431
    %1456 = vmatprep.subr.mxu0 0.0
    %1457 = vmatpush1.msra.mxu0 %v1430
    %1458 = vmatprep.subr.mxu0 0.0
    %1459 = vmatpush1.msra.mxu0 %v1429
    %1460 = vmatprep.subr.mxu0 0.0
    %1461 = vmatpush1.msra.mxu0 %v1428
    %1462 = vmatprep.subr.mxu0 0.0
    %1463 = vmatpush1.msra.mxu0 %v1427
    %1464 = vmatprep.subr.mxu0 0.0
    %1465 = vmatpush1.msra.mxu0 %v1426
    %1466 = vmatprep.subr.mxu0 0.0
    %1467 = vmatpush1.msra.mxu0 %v1425
    %1468 = vmatprep.subr.mxu0 0.0
    %1469 = vmatpush1.msra.mxu0 %v1424
    %1470 = vmatprep.subr.mxu0 0.0
    %1471 = vmatpush1.msra.mxu0 %v1423
    %1472 = vmatprep.subr.mxu0 0.0
    %1473 = vmatpush1.msra.mxu0 %v1422
    %1474 = vmatprep.subr.mxu0 0.0
    %1475 = vmatpush1.msra.mxu0 %v1421
    %1476 = vmatprep.subr.mxu0 0.0
    %1477 = vmatpush2.msra.mxu0 0.0
    %1478 = vmatprep.subr.mxu0 0.0
    %1479 = vmatpush2.msra.mxu0 0.0
    %1480 = vmatprep.subr.mxu0 0.0
    %1481 = vmatpush2.msra.mxu0 0.0
    %1482 = vmatprep.subr.mxu0 0.0
    %1483 = vmatpush2.msra.mxu0 0.0
    %1484 = vmatprep.subr.mxu0 0.0
    %1485 = vmatpush2.msra.mxu0 0.0
    %1486 = vmatprep.subr.mxu0 0.0
    %1487 = vmatpush2.msra.mxu0 0.0
    %1488 = vmatprep.subr.mxu0 0.0
    %1489 = vmatpush2.msra.mxu0 0.0
    %1490 = vmatprep.subr.mxu0 0.0
    %1491 = vmatpush2.msra.mxu0 0.0
    %1492 = vmatprep.subr.mxu0 0.0
    %1493 = vmatpush2.msra.mxu0 0.0
    %1494 = vmatprep.subr.mxu0 0.0
    %1495 = vmatpush2.msra.mxu0 0.0
    %1496 = vmatprep.subr.mxu0 0.0
    %1497 = vmatpush2.msra.mxu0 0.0
    %1498 = vmatprep.subr.mxu0 0.0
    %1499 = vmatpush2.msra.mxu0 0.0
    %1500 = vmatprep.subr.mxu0 0.0
    %1501 = vmatpush2.msra.mxu0 0.0
    %1502 = vmatprep.subr.mxu0 0.0
    %1503 = vmatpush2.msra.mxu0 0.0
    %1504 = vmatprep.subr.mxu0 0.0
    %1505 = vmatpush2.msra.mxu0 0.0
    %1506 = vmatprep.subr.mxu0 0.0
    %1507 = vmatpush2.msra.mxu0 0.0
    %1508 = vmatprep.mubr.f32.mxu0 0.0
    %1509 = vmatmul.mubr.f32.gmra.mxu0 %v1389
    %v1510 = vpop.f32.mrf.mxu0
    %v1511 = vadd.f32 %v1442, %v1510
    %v1512 = vpop.f32.mrf.mxu0
    %1513 = vmatprep.mubr.f32.mxu0 0.0
    %1514 = vmatmul.mubr.f32.gmra.mxu0 %v1390
    %v1515 = vpop.f32.mrf.mxu0
    %v1516 = vadd.f32 %v1442, %v1515
    %v1517 = vpop.f32.mrf.mxu0
    %1518 = vmatprep.mubr.f32.mxu0 0.0
    %1519 = vmatmul.mubr.f32.gmra.mxu0 %v1391
    %v1520 = vpop.f32.mrf.mxu0
    %v1521 = vadd.f32 %v1442, %v1520
    %v1522 = vpop.f32.mrf.mxu0
    %1523 = vmatprep.mubr.f32.mxu0 0.0
    %1524 = vmatmul.mubr.f32.gmra.mxu0 %v1392
    %v1525 = vpop.f32.mrf.mxu0
    %v1526 = vadd.f32 %v1442, %v1525
    %v1527 = vpop.f32.mrf.mxu0
    %1528 = vmatprep.mubr.f32.mxu0 0.0
    %1529 = vmatmul.mubr.f32.gmra.mxu0 %v1393
    %v1530 = vpop.f32.mrf.mxu0
    %v1531 = vadd.f32 %v1442, %v1530
    %v1532 = vpop.f32.mrf.mxu0
    %1533 = vmatprep.mubr.f32.mxu0 0.0
    %1534 = vmatmul.mubr.f32.gmra.mxu0 %v1394
    %v1535 = vpop.f32.mrf.mxu0
    %v1536 = vadd.f32 %v1442, %v1535
    %v1537 = vpop.f32.mrf.mxu0
    %1538 = vmatprep.mubr.f32.mxu0 0.0
    %1539 = vmatmul.mubr.f32.gmra.mxu0 %v1395
    %v1540 = vpop.f32.mrf.mxu0
    %v1541 = vadd.f32 %v1442, %v1540
    %v1542 = vpop.f32.mrf.mxu0
    %1543 = vmatprep.mubr.f32.mxu0 0.0
    %1544 = vmatmul.mubr.f32.gmra.mxu0 %v1396
    %v1545 = vpop.f32.mrf.mxu0
    %v1546 = vadd.f32 %v1442, %v1545
    %v1547 = vpop.f32.mrf.mxu0
    %1548 = vmatprep.mubr.f32.mxu0 0.0
    %1549 = vmatmul.mubr.f32.gmra.mxu0 %v1397
    %v1550 = vpop.f32.mrf.mxu0
    %v1551 = vadd.f32 %v1442, %v1550
    %v1552 = vpop.f32.mrf.mxu0
    %1553 = vmatprep.mubr.f32.mxu0 0.0
    %1554 = vmatmul.mubr.f32.gmra.mxu0 %v1398
    %v1555 = vpop.f32.mrf.mxu0
    %v1556 = vadd.f32 %v1442, %v1555
    %v1557 = vpop.f32.mrf.mxu0
    %1558 = vmatprep.mubr.f32.mxu0 0.0
    %1559 = vmatmul.mubr.f32.gmra.mxu0 %v1399
    %v1560 = vpop.f32.mrf.mxu0
    %v1561 = vadd.f32 %v1442, %v1560
    %v1562 = vpop.f32.mrf.mxu0
    %1563 = vmatprep.mubr.f32.mxu0 0.0
    %1564 = vmatmul.mubr.f32.gmra.mxu0 %v1400
    %v1565 = vpop.f32.mrf.mxu0
    %v1566 = vadd.f32 %v1442, %v1565
    %v1567 = vpop.f32.mrf.mxu0
    %1568 = vmatprep.mubr.f32.mxu0 0.0
    %1569 = vmatmul.mubr.f32.gmra.mxu0 %v1401
    %v1570 = vpop.f32.mrf.mxu0
    %v1571 = vadd.f32 %v1442, %v1570
    %v1572 = vpop.f32.mrf.mxu0
    %1573 = vmatprep.mubr.f32.mxu0 0.0
    %1574 = vmatmul.mubr.f32.gmra.mxu0 %v1402
    %v1575 = vpop.f32.mrf.mxu0
    %v1576 = vadd.f32 %v1442, %v1575
    %v1577 = vpop.f32.mrf.mxu0
    %1578 = vmatprep.mubr.f32.mxu0 0.0
    %1579 = vmatmul.mubr.f32.gmra.mxu0 %v1403
    %v1580 = vpop.f32.mrf.mxu0
    %v1581 = vadd.f32 %v1442, %v1580
    %v1582 = vpop.f32.mrf.mxu0
    %1583 = vmatprep.mubr.f32.mxu0 0.0
    %1584 = vmatmul.mubr.f32.gmra.mxu0 %v1404
    %v1585 = vpop.f32.mrf.mxu0
    %v1586 = vadd.f32 %v1442, %v1585
    %v1587 = vpop.f32.mrf.mxu0
    %1588 = vmatprep.mubr.f32.mxu0 0.0
    %1589 = vmatmul.mubr.f32.gmra.mxu0 %v1405
    %v1590 = vpop.f32.mrf.mxu0
    %v1591 = vadd.f32 %v1442, %v1590
    %v1592 = vpop.f32.mrf.mxu0
    %1593 = vmatprep.mubr.f32.mxu0 0.0
    %1594 = vmatmul.mubr.f32.gmra.mxu0 %v1406
    %v1595 = vpop.f32.mrf.mxu0
    %v1596 = vadd.f32 %v1442, %v1595
    %v1597 = vpop.f32.mrf.mxu0
    %1598 = vmatprep.mubr.f32.mxu0 0.0
    %1599 = vmatmul.mubr.f32.gmra.mxu0 %v1407
    %v1600 = vpop.f32.mrf.mxu0
    %v1601 = vadd.f32 %v1442, %v1600
    %v1602 = vpop.f32.mrf.mxu0
    %1603 = vmatprep.mubr.f32.mxu0 0.0
    %1604 = vmatmul.mubr.f32.gmra.mxu0 %v1408
    %v1605 = vpop.f32.mrf.mxu0
    %v1606 = vadd.f32 %v1442, %v1605
    %v1607 = vpop.f32.mrf.mxu0
    %1608 = vmatprep.mubr.f32.mxu0 0.0
    %1609 = vmatmul.mubr.f32.gmra.mxu0 %v1409
    %v1610 = vpop.f32.mrf.mxu0
    %v1611 = vadd.f32 %v1442, %v1610
    %v1612 = vpop.f32.mrf.mxu0
    %1613 = vmatprep.mubr.f32.mxu0 0.0
    %1614 = vmatmul.mubr.f32.gmra.mxu0 %v1410
    %v1615 = vpop.f32.mrf.mxu0
    %v1616 = vadd.f32 %v1442, %v1615
    %v1617 = vpop.f32.mrf.mxu0
    %1618 = vmatprep.mubr.f32.mxu0 0.0
    %1619 = vmatmul.mubr.f32.gmra.mxu0 %v1411
    %v1620 = vpop.f32.mrf.mxu0
    %v1621 = vadd.f32 %v1442, %v1620
    %v1622 = vpop.f32.mrf.mxu0
    %1623 = vmatprep.mubr.f32.mxu0 0.0
    %1624 = vmatmul.mubr.f32.gmra.mxu0 %v1412
    %v1625 = vpop.f32.mrf.mxu0
    %v1626 = vadd.f32 %v1442, %v1625
    %v1627 = vpop.f32.mrf.mxu0
    %1628 = vmatprep.mubr.f32.mxu0 0.0
    %1629 = vmatmul.mubr.f32.gmra.mxu0 %v1413
    %v1630 = vpop.f32.mrf.mxu0
    %v1631 = vadd.f32 %v1442, %v1630
    %v1632 = vpop.f32.mrf.mxu0
    %1633 = vmatprep.mubr.f32.mxu0 0.0
    %1634 = vmatmul.mubr.f32.gmra.mxu0 %v1414
    %v1635 = vpop.f32.mrf.mxu0
    %v1636 = vadd.f32 %v1442, %v1635
    %v1637 = vpop.f32.mrf.mxu0
    %1638 = vmatprep.mubr.f32.mxu0 0.0
    %1639 = vmatmul.mubr.f32.gmra.mxu0 %v1415
    %v1640 = vpop.f32.mrf.mxu0
    %v1641 = vadd.f32 %v1442, %v1640
    %v1642 = vpop.f32.mrf.mxu0
    %1643 = vmatprep.mubr.f32.mxu0 0.0
    %1644 = vmatmul.mubr.f32.gmra.mxu0 %v1416
    %v1645 = vpop.f32.mrf.mxu0
    %v1646 = vadd.f32 %v1442, %v1645
    %v1647 = vpop.f32.mrf.mxu0
    %1648 = vmatprep.mubr.f32.mxu0 0.0
    %1649 = vmatmul.mubr.f32.gmra.mxu0 %v1417
    %v1650 = vpop.f32.mrf.mxu0
    %v1651 = vadd.f32 %v1442, %v1650
    %v1652 = vpop.f32.mrf.mxu0
    %1653 = vmatprep.mubr.f32.mxu0 0.0
    %1654 = vmatmul.mubr.f32.gmra.mxu0 %v1418
    %v1655 = vpop.f32.mrf.mxu0
    %v1656 = vadd.f32 %v1442, %v1655
    %v1657 = vpop.f32.mrf.mxu0
    %1658 = vmatprep.mubr.f32.mxu0 0.0
    %1659 = vmatmul.mubr.f32.gmra.mxu0 %v1419
    %v1660 = vpop.f32.mrf.mxu0
    %v1661 = vadd.f32 %v1442, %v1660
    %v1662 = vpop.f32.mrf.mxu0
    %1663 = vmatprep.mubr.f32.mxu0 0.0
    %1664 = vmatmul.mubr.f32.gmra.mxu0 %v1420
    %v1665 = vpop.f32.mrf.mxu0
    %v1666 = vadd.f32 %v1442, %v1665
    %v1667 = vpop.f32.mrf.mxu0
    %1668 = vdwg.mxu0
    %v1669 = vmax.f32 %v1511, 0.0
    %v1670 = vmax.f32 %v1516, 0.0
    %v1671 = vmax.f32 %v1521, 0.0
    %v1672 = vmax.f32 %v1526, 0.0
    %v1673 = vmax.f32 %v1531, 0.0
    %v1674 = vmax.f32 %v1536, 0.0
    %v1675 = vmax.f32 %v1541, 0.0
    %v1676 = vmax.f32 %v1546, 0.0
    %v1677 = vmax.f32 %v1551, 0.0
    %v1678 = vmax.f32 %v1556, 0.0
    %v1679 = vmax.f32 %v1561, 0.0
    %v1680 = vmax.f32 %v1566, 0.0
    %v1681 = vmax.f32 %v1571, 0.0
    %v1682 = vmax.f32 %v1576, 0.0
    %v1683 = vmax.f32 %v1581, 0.0
    %v1684 = vmax.f32 %v1586, 0.0
    %v1685 = vmax.f32 %v1591, 0.0
    %v1686 = vmax.f32 %v1596, 0.0
    %v1687 = vmax.f32 %v1601, 0.0
    %v1688 = vmax.f32 %v1606, 0.0
    %v1689 = vmax.f32 %v1611, 0.0
    %v1690 = vmax.f32 %v1616, 0.0
    %v1691 = vmax.f32 %v1621, 0.0
    %v1692 = vmax.f32 %v1626, 0.0
    %v1693 = vmax.f32 %v1631, 0.0
    %v1694 = vmax.f32 %v1636, 0.0
    %v1695 = vmax.f32 %v1641, 0.0
    %v1696 = vmax.f32 %v1646, 0.0
    %v1697 = vmax.f32 %v1651, 0.0
    %v1698 = vmax.f32 %v1656, 0.0
    %v1699 = vmax.f32 %v1661, 0.0
    %v1700 = vmax.f32 %v1666, 0.0
    %v1701 = vld [vmem:[#allocation13] sm:$0xff]
    %v1702 = vld [vmem:[#allocation13 + $0x8] sm:$0xff]
    %v1703 = vld [vmem:[#allocation13 + $0x10] sm:$0xff]
    %v1704 = vld [vmem:[#allocation13 + $0x18] sm:$0xff]
    %v1705 = vld [vmem:[#allocation13 + $0x20] sm:$0xff]
    %v1706 = vld [vmem:[#allocation13 + $0x28] sm:$0xff]
    %v1707 = vld [vmem:[#allocation13 + $0x30] sm:$0xff]
    %v1708 = vld [vmem:[#allocation13 + $0x38] sm:$0xff]
    %v1709 = vld [vmem:[#allocation13 + $0x40] sm:$0xff]
    %v1710 = vld [vmem:[#allocation13 + $0x48] sm:$0xff]
    %v1711 = vld [vmem:[#allocation13 + $0x50] sm:$0xff]
    %v1712 = vld [vmem:[#allocation13 + $0x58] sm:$0xff]
    %v1713 = vld [vmem:[#allocation13 + $0x60] sm:$0xff]
    %v1714 = vld [vmem:[#allocation13 + $0x68] sm:$0xff]
    %v1715 = vld [vmem:[#allocation13 + $0x70] sm:$0xff]
    %v1716 = vld [vmem:[#allocation13 + $0x78] sm:$0xff]
    %v1717 = vld [vmem:[%s11] sm:$0x1]
    %v1719 = vlaneseq
    %v1720 = vshrl.u32 %v1719, 7
    %v1721 = vsub.s32 0, %v1720
    %v1722 = vrot.slane %v1717, %v1721
    %1724 = vmatprep.subr.mxu0 0.0
    %1725 = vmatpush1.msra.mxu0 %v1716
    %1726 = vmatprep.subr.mxu0 0.0
    %1727 = vmatpush1.msra.mxu0 %v1715
    %1728 = vmatprep.subr.mxu0 0.0
    %1729 = vmatpush1.msra.mxu0 %v1714
    %1730 = vmatprep.subr.mxu0 0.0
    %1731 = vmatpush1.msra.mxu0 %v1713
    %1732 = vmatprep.subr.mxu0 0.0
    %1733 = vmatpush1.msra.mxu0 %v1712
    %1734 = vmatprep.subr.mxu0 0.0
    %1735 = vmatpush1.msra.mxu0 %v1711
    %1736 = vmatprep.subr.mxu0 0.0
    %1737 = vmatpush1.msra.mxu0 %v1710
    %1738 = vmatprep.subr.mxu0 0.0
    %1739 = vmatpush1.msra.mxu0 %v1709
    %1740 = vmatprep.subr.mxu0 0.0
    %1741 = vmatpush1.msra.mxu0 %v1708
    %1742 = vmatprep.subr.mxu0 0.0
    %1743 = vmatpush1.msra.mxu0 %v1707
    %1744 = vmatprep.subr.mxu0 0.0
    %1745 = vmatpush1.msra.mxu0 %v1706
    %1746 = vmatprep.subr.mxu0 0.0
    %1747 = vmatpush1.msra.mxu0 %v1705
    %1748 = vmatprep.subr.mxu0 0.0
    %1749 = vmatpush1.msra.mxu0 %v1704
    %1750 = vmatprep.subr.mxu0 0.0
    %1751 = vmatpush1.msra.mxu0 %v1703
    %1752 = vmatprep.subr.mxu0 0.0
    %1753 = vmatpush1.msra.mxu0 %v1702
    %1754 = vmatprep.subr.mxu0 0.0
    %1755 = vmatpush1.msra.mxu0 %v1701
    %1756 = vmatprep.subr.mxu0 0.0
    %1757 = vmatpush2.msra.mxu0 0.0
    %1758 = vmatprep.subr.mxu0 0.0
    %1759 = vmatpush2.msra.mxu0 0.0
    %1760 = vmatprep.subr.mxu0 0.0
    %1761 = vmatpush2.msra.mxu0 0.0
    %1762 = vmatprep.subr.mxu0 0.0
    %1763 = vmatpush2.msra.mxu0 0.0
    %1764 = vmatprep.subr.mxu0 0.0
    %1765 = vmatpush2.msra.mxu0 0.0
    %1766 = vmatprep.subr.mxu0 0.0
    %1767 = vmatpush2.msra.mxu0 0.0
    %1768 = vmatprep.subr.mxu0 0.0
    %1769 = vmatpush2.msra.mxu0 0.0
    %1770 = vmatprep.subr.mxu0 0.0
    %1771 = vmatpush2.msra.mxu0 0.0
    %1772 = vmatprep.subr.mxu0 0.0
    %1773 = vmatpush2.msra.mxu0 0.0
    %1774 = vmatprep.subr.mxu0 0.0
    %1775 = vmatpush2.msra.mxu0 0.0
    %1776 = vmatprep.subr.mxu0 0.0
    %1777 = vmatpush2.msra.mxu0 0.0
    %1778 = vmatprep.subr.mxu0 0.0
    %1779 = vmatpush2.msra.mxu0 0.0
    %1780 = vmatprep.subr.mxu0 0.0
    %1781 = vmatpush2.msra.mxu0 0.0
    %1782 = vmatprep.subr.mxu0 0.0
    %1783 = vmatpush2.msra.mxu0 0.0
    %1784 = vmatprep.subr.mxu0 0.0
    %1785 = vmatpush2.msra.mxu0 0.0
    %1786 = vmatprep.subr.mxu0 0.0
    %1787 = vmatpush2.msra.mxu0 0.0
    %1788 = vmatprep.mubr.f32.mxu0 0.0
    %1789 = vmatmul.mubr.f32.gmra.mxu0 %v1669
    %v1790 = vpop.f32.mrf.mxu0
    %v1791 = vadd.f32 %v1722, %v1790
    %v1792 = vpop.f32.mrf.mxu0
    %1793 = vmatprep.mubr.f32.mxu0 0.0
    %1794 = vmatmul.mubr.f32.gmra.mxu0 %v1670
    %v1795 = vpop.f32.mrf.mxu0
    %v1796 = vadd.f32 %v1722, %v1795
    %v1797 = vpop.f32.mrf.mxu0
    %1798 = vmatprep.mubr.f32.mxu0 0.0
    %1799 = vmatmul.mubr.f32.gmra.mxu0 %v1671
    %v1800 = vpop.f32.mrf.mxu0
    %v1801 = vadd.f32 %v1722, %v1800
    %v1802 = vpop.f32.mrf.mxu0
    %1803 = vmatprep.mubr.f32.mxu0 0.0
    %1804 = vmatmul.mubr.f32.gmra.mxu0 %v1672
    %v1805 = vpop.f32.mrf.mxu0
    %v1806 = vadd.f32 %v1722, %v1805
    %v1807 = vpop.f32.mrf.mxu0
    %1808 = vmatprep.mubr.f32.mxu0 0.0
    %1809 = vmatmul.mubr.f32.gmra.mxu0 %v1673
    %v1810 = vpop.f32.mrf.mxu0
    %v1811 = vadd.f32 %v1722, %v1810
    %v1812 = vpop.f32.mrf.mxu0
    %1813 = vmatprep.mubr.f32.mxu0 0.0
    %1814 = vmatmul.mubr.f32.gmra.mxu0 %v1674
    %v1815 = vpop.f32.mrf.mxu0
    %v1816 = vadd.f32 %v1722, %v1815
    %v1817 = vpop.f32.mrf.mxu0
    %1818 = vmatprep.mubr.f32.mxu0 0.0
    %1819 = vmatmul.mubr.f32.gmra.mxu0 %v1675
    %v1820 = vpop.f32.mrf.mxu0
    %v1821 = vadd.f32 %v1722, %v1820
    %v1822 = vpop.f32.mrf.mxu0
    %1823 = vmatprep.mubr.f32.mxu0 0.0
    %1824 = vmatmul.mubr.f32.gmra.mxu0 %v1676
    %v1825 = vpop.f32.mrf.mxu0
    %v1826 = vadd.f32 %v1722, %v1825
    %v1827 = vpop.f32.mrf.mxu0
    %1828 = vmatprep.mubr.f32.mxu0 0.0
    %1829 = vmatmul.mubr.f32.gmra.mxu0 %v1677
    %v1830 = vpop.f32.mrf.mxu0
    %v1831 = vadd.f32 %v1722, %v1830
    %v1832 = vpop.f32.mrf.mxu0
    %1833 = vmatprep.mubr.f32.mxu0 0.0
    %1834 = vmatmul.mubr.f32.gmra.mxu0 %v1678
    %v1835 = vpop.f32.mrf.mxu0
    %v1836 = vadd.f32 %v1722, %v1835
    %v1837 = vpop.f32.mrf.mxu0
    %1838 = vmatprep.mubr.f32.mxu0 0.0
    %1839 = vmatmul.mubr.f32.gmra.mxu0 %v1679
    %v1840 = vpop.f32.mrf.mxu0
    %v1841 = vadd.f32 %v1722, %v1840
    %v1842 = vpop.f32.mrf.mxu0
    %1843 = vmatprep.mubr.f32.mxu0 0.0
    %1844 = vmatmul.mubr.f32.gmra.mxu0 %v1680
    %v1845 = vpop.f32.mrf.mxu0
    %v1846 = vadd.f32 %v1722, %v1845
    %v1847 = vpop.f32.mrf.mxu0
    %1848 = vmatprep.mubr.f32.mxu0 0.0
    %1849 = vmatmul.mubr.f32.gmra.mxu0 %v1681
    %v1850 = vpop.f32.mrf.mxu0
    %v1851 = vadd.f32 %v1722, %v1850
    %v1852 = vpop.f32.mrf.mxu0
    %1853 = vmatprep.mubr.f32.mxu0 0.0
    %1854 = vmatmul.mubr.f32.gmra.mxu0 %v1682
    %v1855 = vpop.f32.mrf.mxu0
    %v1856 = vadd.f32 %v1722, %v1855
    %v1857 = vpop.f32.mrf.mxu0
    %1858 = vmatprep.mubr.f32.mxu0 0.0
    %1859 = vmatmul.mubr.f32.gmra.mxu0 %v1683
    %v1860 = vpop.f32.mrf.mxu0
    %v1861 = vadd.f32 %v1722, %v1860
    %v1862 = vpop.f32.mrf.mxu0
    %1863 = vmatprep.mubr.f32.mxu0 0.0
    %1864 = vmatmul.mubr.f32.gmra.mxu0 %v1684
    %v1865 = vpop.f32.mrf.mxu0
    %v1866 = vadd.f32 %v1722, %v1865
    %v1867 = vpop.f32.mrf.mxu0
    %1868 = vmatprep.mubr.f32.mxu0 0.0
    %1869 = vmatmul.mubr.f32.gmra.mxu0 %v1685
    %v1870 = vpop.f32.mrf.mxu0
    %v1871 = vadd.f32 %v1722, %v1870
    %v1872 = vpop.f32.mrf.mxu0
    %1873 = vmatprep.mubr.f32.mxu0 0.0
    %1874 = vmatmul.mubr.f32.gmra.mxu0 %v1686
    %v1875 = vpop.f32.mrf.mxu0
    %v1876 = vadd.f32 %v1722, %v1875
    %v1877 = vpop.f32.mrf.mxu0
    %1878 = vmatprep.mubr.f32.mxu0 0.0
    %1879 = vmatmul.mubr.f32.gmra.mxu0 %v1687
    %v1880 = vpop.f32.mrf.mxu0
    %v1881 = vadd.f32 %v1722, %v1880
    %v1882 = vpop.f32.mrf.mxu0
    %1883 = vmatprep.mubr.f32.mxu0 0.0
    %1884 = vmatmul.mubr.f32.gmra.mxu0 %v1688
    %v1885 = vpop.f32.mrf.mxu0
    %v1886 = vadd.f32 %v1722, %v1885
    %v1887 = vpop.f32.mrf.mxu0
    %1888 = vmatprep.mubr.f32.mxu0 0.0
    %1889 = vmatmul.mubr.f32.gmra.mxu0 %v1689
    %v1890 = vpop.f32.mrf.mxu0
    %v1891 = vadd.f32 %v1722, %v1890
    %v1892 = vpop.f32.mrf.mxu0
    %1893 = vmatprep.mubr.f32.mxu0 0.0
    %1894 = vmatmul.mubr.f32.gmra.mxu0 %v1690
    %v1895 = vpop.f32.mrf.mxu0
    %v1896 = vadd.f32 %v1722, %v1895
    %v1897 = vpop.f32.mrf.mxu0
    %1898 = vmatprep.mubr.f32.mxu0 0.0
    %1899 = vmatmul.mubr.f32.gmra.mxu0 %v1691
    %v1900 = vpop.f32.mrf.mxu0
    %v1901 = vadd.f32 %v1722, %v1900
    %v1902 = vpop.f32.mrf.mxu0
    %1903 = vmatprep.mubr.f32.mxu0 0.0
    %1904 = vmatmul.mubr.f32.gmra.mxu0 %v1692
    %v1905 = vpop.f32.mrf.mxu0
    %v1906 = vadd.f32 %v1722, %v1905
    %v1907 = vpop.f32.mrf.mxu0
    %1908 = vmatprep.mubr.f32.mxu0 0.0
    %1909 = vmatmul.mubr.f32.gmra.mxu0 %v1693
    %v1910 = vpop.f32.mrf.mxu0
    %v1911 = vadd.f32 %v1722, %v1910
    %v1912 = vpop.f32.mrf.mxu0
    %1913 = vmatprep.mubr.f32.mxu0 0.0
    %1914 = vmatmul.mubr.f32.gmra.mxu0 %v1694
    %v1915 = vpop.f32.mrf.mxu0
    %v1916 = vadd.f32 %v1722, %v1915
    %v1917 = vpop.f32.mrf.mxu0
    %1918 = vmatprep.mubr.f32.mxu0 0.0
    %1919 = vmatmul.mubr.f32.gmra.mxu0 %v1695
    %v1920 = vpop.f32.mrf.mxu0
    %v1921 = vadd.f32 %v1722, %v1920
    %v1922 = vpop.f32.mrf.mxu0
    %1923 = vmatprep.mubr.f32.mxu0 0.0
    %1924 = vmatmul.mubr.f32.gmra.mxu0 %v1696
    %v1925 = vpop.f32.mrf.mxu0
    %v1926 = vadd.f32 %v1722, %v1925
    %v1927 = vpop.f32.mrf.mxu0
    %1928 = vmatprep.mubr.f32.mxu0 0.0
    %1929 = vmatmul.mubr.f32.gmra.mxu0 %v1697
    %v1930 = vpop.f32.mrf.mxu0
    %v1931 = vadd.f32 %v1722, %v1930
    %v1932 = vpop.f32.mrf.mxu0
    %1933 = vmatprep.mubr.f32.mxu0 0.0
    %1934 = vmatmul.mubr.f32.gmra.mxu0 %v1698
    %v1935 = vpop.f32.mrf.mxu0
    %v1936 = vadd.f32 %v1722, %v1935
    %v1937 = vpop.f32.mrf.mxu0
    %1938 = vmatprep.mubr.f32.mxu0 0.0
    %1939 = vmatmul.mubr.f32.gmra.mxu0 %v1699
    %v1940 = vpop.f32.mrf.mxu0
    %v1941 = vadd.f32 %v1722, %v1940
    %v1942 = vpop.f32.mrf.mxu0
    %1943 = vmatprep.mubr.f32.mxu0 0.0
    %1944 = vmatmul.mubr.f32.gmra.mxu0 %v1700
    %v1945 = vpop.f32.mrf.mxu0
    %v1946 = vadd.f32 %v1722, %v1945
    %v1947 = vpop.f32.mrf.mxu0
    %1948 = vdwg.mxu0
    %v1949 = vmax.f32 %v1791, 0.0
    %v1950 = vmax.f32 %v1796, 0.0
    %v1951 = vmax.f32 %v1801, 0.0
    %v1952 = vmax.f32 %v1806, 0.0
    %v1953 = vmax.f32 %v1811, 0.0
    %v1954 = vmax.f32 %v1816, 0.0
    %v1955 = vmax.f32 %v1821, 0.0
    %v1956 = vmax.f32 %v1826, 0.0
    %v1957 = vmax.f32 %v1831, 0.0
    %v1958 = vmax.f32 %v1836, 0.0
    %v1959 = vmax.f32 %v1841, 0.0
    %v1960 = vmax.f32 %v1846, 0.0
    %v1961 = vmax.f32 %v1851, 0.0
    %v1962 = vmax.f32 %v1856, 0.0
    %v1963 = vmax.f32 %v1861, 0.0
    %v1964 = vmax.f32 %v1866, 0.0
    %v1965 = vmax.f32 %v1871, 0.0
    %v1966 = vmax.f32 %v1876, 0.0
    %v1967 = vmax.f32 %v1881, 0.0
    %v1968 = vmax.f32 %v1886, 0.0
    %v1969 = vmax.f32 %v1891, 0.0
    %v1970 = vmax.f32 %v1896, 0.0
    %v1971 = vmax.f32 %v1901, 0.0
    %v1972 = vmax.f32 %v1906, 0.0
    %v1973 = vmax.f32 %v1911, 0.0
    %v1974 = vmax.f32 %v1916, 0.0
    %v1975 = vmax.f32 %v1921, 0.0
    %v1976 = vmax.f32 %v1926, 0.0
    %v1977 = vmax.f32 %v1931, 0.0
    %v1978 = vmax.f32 %v1936, 0.0
    %v1979 = vmax.f32 %v1941, 0.0
    %v1980 = vmax.f32 %v1946, 0.0
    %v1981 = vld [vmem:[#allocation14] sm:$0xff]
    %v1982 = vld [vmem:[#allocation14 + $0x8] sm:$0xff]
    %v1983 = vld [vmem:[#allocation14 + $0x10] sm:$0xff]
    %v1984 = vld [vmem:[#allocation14 + $0x18] sm:$0xff]
    %v1985 = vld [vmem:[#allocation14 + $0x20] sm:$0xff]
    %v1986 = vld [vmem:[#allocation14 + $0x28] sm:$0xff]
    %v1987 = vld [vmem:[#allocation14 + $0x30] sm:$0xff]
    %v1988 = vld [vmem:[#allocation14 + $0x38] sm:$0xff]
    %v1989 = vld [vmem:[#allocation14 + $0x40] sm:$0xff]
    %v1990 = vld [vmem:[#allocation14 + $0x48] sm:$0xff]
    %v1991 = vld [vmem:[#allocation14 + $0x50] sm:$0xff]
    %v1992 = vld [vmem:[#allocation14 + $0x58] sm:$0xff]
    %v1993 = vld [vmem:[#allocation14 + $0x60] sm:$0xff]
    %v1994 = vld [vmem:[#allocation14 + $0x68] sm:$0xff]
    %v1995 = vld [vmem:[#allocation14 + $0x70] sm:$0xff]
    %v1996 = vld [vmem:[#allocation14 + $0x78] sm:$0xff]
    %v1997 = vld [vmem:[#allocation14 + $0x80] sm:$0xff]
    %v1998 = vld [vmem:[#allocation14 + $0x88] sm:$0xff]
    %v1999 = vld [vmem:[#allocation14 + $0x90] sm:$0xff]
    %v2000 = vld [vmem:[#allocation14 + $0x98] sm:$0xff]
    %v2001 = vld [vmem:[#allocation14 + $0xa0] sm:$0xff]
    %v2002 = vld [vmem:[#allocation14 + $0xa8] sm:$0xff]
    %v2003 = vld [vmem:[#allocation14 + $0xb0] sm:$0xff]
    %v2004 = vld [vmem:[#allocation14 + $0xb8] sm:$0xff]
    %v2005 = vld [vmem:[#allocation14 + $0xc0] sm:$0xff]
    %v2006 = vld [vmem:[#allocation14 + $0xc8] sm:$0xff]
    %v2007 = vld [vmem:[#allocation14 + $0xd0] sm:$0xff]
    %v2008 = vld [vmem:[#allocation14 + $0xd8] sm:$0xff]
    %v2009 = vld [vmem:[#allocation14 + $0xe0] sm:$0xff]
    %v2010 = vld [vmem:[#allocation14 + $0xe8] sm:$0xff]
    %v2011 = vld [vmem:[#allocation14 + $0xf0] sm:$0xff]
    %v2012 = vld [vmem:[#allocation14 + $0xf8] sm:$0xff]
    %v2013 = vld [vmem:[%s13] sm:$0x3]
    %v2015 = vlaneseq
    %v2016 = vshrl.u32 %v2015, 7
    %v2017 = vsub.s32 0, %v2016
    %v2018 = vrot.slane %v2013, %v2017
    %v2019 = vlaneseq
    %v2020 = vshrl.u32 %v2019, 7
    %v2021 = vsub.s32 1, %v2020
    %v2022 = vrot.slane %v2013, %v2021
    %2025 = vmatprep.subr.mxu0 %v2012
    %2026 = vmatpush1.msra.mxu0 %v2011
    %2027 = vmatprep.subr.mxu0 %v2010
    %2028 = vmatpush1.msra.mxu0 %v2009
    %2029 = vmatprep.subr.mxu0 %v2008
    %2030 = vmatpush1.msra.mxu0 %v2007
    %2031 = vmatprep.subr.mxu0 %v2006
    %2032 = vmatpush1.msra.mxu0 %v2005
    %2033 = vmatprep.subr.mxu0 %v2004
    %2034 = vmatpush1.msra.mxu0 %v2003
    %2035 = vmatprep.subr.mxu0 %v2002
    %2036 = vmatpush1.msra.mxu0 %v2001
    %2037 = vmatprep.subr.mxu0 %v2000
    %2038 = vmatpush1.msra.mxu0 %v1999
    %2039 = vmatprep.subr.mxu0 %v1998
    %2040 = vmatpush1.msra.mxu0 %v1997
    %2041 = vmatprep.subr.mxu0 %v1996
    %2042 = vmatpush1.msra.mxu0 %v1995
    %2043 = vmatprep.subr.mxu0 %v1994
    %2044 = vmatpush1.msra.mxu0 %v1993
    %2045 = vmatprep.subr.mxu0 %v1992
    %2046 = vmatpush1.msra.mxu0 %v1991
    %2047 = vmatprep.subr.mxu0 %v1990
    %2048 = vmatpush1.msra.mxu0 %v1989
    %2049 = vmatprep.subr.mxu0 %v1988
    %2050 = vmatpush1.msra.mxu0 %v1987
    %2051 = vmatprep.subr.mxu0 %v1986
    %2052 = vmatpush1.msra.mxu0 %v1985
    %2053 = vmatprep.subr.mxu0 %v1984
    %2054 = vmatpush1.msra.mxu0 %v1983
    %2055 = vmatprep.subr.mxu0 %v1982
    %2056 = vmatpush1.msra.mxu0 %v1981
    %2057 = vmatprep.subr.mxu0 0.0
    %2058 = vmatpush2.msra.mxu0 0.0
    %2059 = vmatprep.subr.mxu0 0.0
    %2060 = vmatpush2.msra.mxu0 0.0
    %2061 = vmatprep.subr.mxu0 0.0
    %2062 = vmatpush2.msra.mxu0 0.0
    %2063 = vmatprep.subr.mxu0 0.0
    %2064 = vmatpush2.msra.mxu0 0.0
    %2065 = vmatprep.subr.mxu0 0.0
    %2066 = vmatpush2.msra.mxu0 0.0
    %2067 = vmatprep.subr.mxu0 0.0
    %2068 = vmatpush2.msra.mxu0 0.0
    %2069 = vmatprep.subr.mxu0 0.0
    %2070 = vmatpush2.msra.mxu0 0.0
    %2071 = vmatprep.subr.mxu0 0.0
    %2072 = vmatpush2.msra.mxu0 0.0
    %2073 = vmatprep.subr.mxu0 0.0
    %2074 = vmatpush2.msra.mxu0 0.0
    %2075 = vmatprep.subr.mxu0 0.0
    %2076 = vmatpush2.msra.mxu0 0.0
    %2077 = vmatprep.subr.mxu0 0.0
    %2078 = vmatpush2.msra.mxu0 0.0
    %2079 = vmatprep.subr.mxu0 0.0
    %2080 = vmatpush2.msra.mxu0 0.0
    %2081 = vmatprep.subr.mxu0 0.0
    %2082 = vmatpush2.msra.mxu0 0.0
    %2083 = vmatprep.subr.mxu0 0.0
    %2084 = vmatpush2.msra.mxu0 0.0
    %2085 = vmatprep.subr.mxu0 0.0
    %2086 = vmatpush2.msra.mxu0 0.0
    %2087 = vmatprep.subr.mxu0 0.0
    %2088 = vmatpush2.msra.mxu0 0.0
    %2089 = vmatprep.mubr.f32.mxu0 0.0
    %2090 = vmatmul.mubr.f32.gmra.mxu0 %v1949
    %v2091 = vpop.f32.mrf.mxu0
    %v2092 = vadd.f32 %v2018, %v2091
    %v2093 = vpop.f32.mrf.mxu0
    %v2094 = vadd.f32 %v2022, %v2093
    %2095 = vmatprep.mubr.f32.mxu0 0.0
    %2096 = vmatmul.mubr.f32.gmra.mxu0 %v1950
    %v2097 = vpop.f32.mrf.mxu0
    %v2098 = vadd.f32 %v2018, %v2097
    %v2099 = vpop.f32.mrf.mxu0
    %v2100 = vadd.f32 %v2022, %v2099
    %2101 = vmatprep.mubr.f32.mxu0 0.0
    %2102 = vmatmul.mubr.f32.gmra.mxu0 %v1951
    %v2103 = vpop.f32.mrf.mxu0
    %v2104 = vadd.f32 %v2018, %v2103
    %v2105 = vpop.f32.mrf.mxu0
    %v2106 = vadd.f32 %v2022, %v2105
    %2107 = vmatprep.mubr.f32.mxu0 0.0
    %2108 = vmatmul.mubr.f32.gmra.mxu0 %v1952
    %v2109 = vpop.f32.mrf.mxu0
    %v2110 = vadd.f32 %v2018, %v2109
    %v2111 = vpop.f32.mrf.mxu0
    %v2112 = vadd.f32 %v2022, %v2111
    %2113 = vmatprep.mubr.f32.mxu0 0.0
    %2114 = vmatmul.mubr.f32.gmra.mxu0 %v1953
    %v2115 = vpop.f32.mrf.mxu0
    %v2116 = vadd.f32 %v2018, %v2115
    %v2117 = vpop.f32.mrf.mxu0
    %v2118 = vadd.f32 %v2022, %v2117
    %2119 = vmatprep.mubr.f32.mxu0 0.0
    %2120 = vmatmul.mubr.f32.gmra.mxu0 %v1954
    %v2121 = vpop.f32.mrf.mxu0
    %v2122 = vadd.f32 %v2018, %v2121
    %v2123 = vpop.f32.mrf.mxu0
    %v2124 = vadd.f32 %v2022, %v2123
    %2125 = vmatprep.mubr.f32.mxu0 0.0
    %2126 = vmatmul.mubr.f32.gmra.mxu0 %v1955
    %v2127 = vpop.f32.mrf.mxu0
    %v2128 = vadd.f32 %v2018, %v2127
    %v2129 = vpop.f32.mrf.mxu0
    %v2130 = vadd.f32 %v2022, %v2129
    %2131 = vmatprep.mubr.f32.mxu0 0.0
    %2132 = vmatmul.mubr.f32.gmra.mxu0 %v1956
    %v2133 = vpop.f32.mrf.mxu0
    %v2134 = vadd.f32 %v2018, %v2133
    %v2135 = vpop.f32.mrf.mxu0
    %v2136 = vadd.f32 %v2022, %v2135
    %2137 = vmatprep.mubr.f32.mxu0 0.0
    %2138 = vmatmul.mubr.f32.gmra.mxu0 %v1957
    %v2139 = vpop.f32.mrf.mxu0
    %v2140 = vadd.f32 %v2018, %v2139
    %v2141 = vpop.f32.mrf.mxu0
    %v2142 = vadd.f32 %v2022, %v2141
    %2143 = vmatprep.mubr.f32.mxu0 0.0
    %2144 = vmatmul.mubr.f32.gmra.mxu0 %v1958
    %v2145 = vpop.f32.mrf.mxu0
    %v2146 = vadd.f32 %v2018, %v2145
    %v2147 = vpop.f32.mrf.mxu0
    %v2148 = vadd.f32 %v2022, %v2147
    %2149 = vmatprep.mubr.f32.mxu0 0.0
    %2150 = vmatmul.mubr.f32.gmra.mxu0 %v1959
    %v2151 = vpop.f32.mrf.mxu0
    %v2152 = vadd.f32 %v2018, %v2151
    %v2153 = vpop.f32.mrf.mxu0
    %v2154 = vadd.f32 %v2022, %v2153
    %2155 = vmatprep.mubr.f32.mxu0 0.0
    %2156 = vmatmul.mubr.f32.gmra.mxu0 %v1960
    %v2157 = vpop.f32.mrf.mxu0
    %v2158 = vadd.f32 %v2018, %v2157
    %v2159 = vpop.f32.mrf.mxu0
    %v2160 = vadd.f32 %v2022, %v2159
    %2161 = vmatprep.mubr.f32.mxu0 0.0
    %2162 = vmatmul.mubr.f32.gmra.mxu0 %v1961
    %v2163 = vpop.f32.mrf.mxu0
    %v2164 = vadd.f32 %v2018, %v2163
    %v2165 = vpop.f32.mrf.mxu0
    %v2166 = vadd.f32 %v2022, %v2165
    %2167 = vmatprep.mubr.f32.mxu0 0.0
    %2168 = vmatmul.mubr.f32.gmra.mxu0 %v1962
    %v2169 = vpop.f32.mrf.mxu0
    %v2170 = vadd.f32 %v2018, %v2169
    %v2171 = vpop.f32.mrf.mxu0
    %v2172 = vadd.f32 %v2022, %v2171
    %2173 = vmatprep.mubr.f32.mxu0 0.0
    %2174 = vmatmul.mubr.f32.gmra.mxu0 %v1963
    %v2175 = vpop.f32.mrf.mxu0
    %v2176 = vadd.f32 %v2018, %v2175
    %v2177 = vpop.f32.mrf.mxu0
    %v2178 = vadd.f32 %v2022, %v2177
    %2179 = vmatprep.mubr.f32.mxu0 0.0
    %2180 = vmatmul.mubr.f32.gmra.mxu0 %v1964
    %v2181 = vpop.f32.mrf.mxu0
    %v2182 = vadd.f32 %v2018, %v2181
    %v2183 = vpop.f32.mrf.mxu0
    %v2184 = vadd.f32 %v2022, %v2183
    %2185 = vmatprep.mubr.f32.mxu0 0.0
    %2186 = vmatmul.mubr.f32.gmra.mxu0 %v1965
    %v2187 = vpop.f32.mrf.mxu0
    %v2188 = vadd.f32 %v2018, %v2187
    %v2189 = vpop.f32.mrf.mxu0
    %v2190 = vadd.f32 %v2022, %v2189
    %2191 = vmatprep.mubr.f32.mxu0 0.0
    %2192 = vmatmul.mubr.f32.gmra.mxu0 %v1966
    %v2193 = vpop.f32.mrf.mxu0
    %v2194 = vadd.f32 %v2018, %v2193
    %v2195 = vpop.f32.mrf.mxu0
    %v2196 = vadd.f32 %v2022, %v2195
    %2197 = vmatprep.mubr.f32.mxu0 0.0
    %2198 = vmatmul.mubr.f32.gmra.mxu0 %v1967
    %v2199 = vpop.f32.mrf.mxu0
    %v2200 = vadd.f32 %v2018, %v2199
    %v2201 = vpop.f32.mrf.mxu0
    %v2202 = vadd.f32 %v2022, %v2201
    %2203 = vmatprep.mubr.f32.mxu0 0.0
    %2204 = vmatmul.mubr.f32.gmra.mxu0 %v1968
    %v2205 = vpop.f32.mrf.mxu0
    %v2206 = vadd.f32 %v2018, %v2205
    %v2207 = vpop.f32.mrf.mxu0
    %v2208 = vadd.f32 %v2022, %v2207
    %2209 = vmatprep.mubr.f32.mxu0 0.0
    %2210 = vmatmul.mubr.f32.gmra.mxu0 %v1969
    %v2211 = vpop.f32.mrf.mxu0
    %v2212 = vadd.f32 %v2018, %v2211
    %v2213 = vpop.f32.mrf.mxu0
    %v2214 = vadd.f32 %v2022, %v2213
    %2215 = vmatprep.mubr.f32.mxu0 0.0
    %2216 = vmatmul.mubr.f32.gmra.mxu0 %v1970
    %v2217 = vpop.f32.mrf.mxu0
    %v2218 = vadd.f32 %v2018, %v2217
    %v2219 = vpop.f32.mrf.mxu0
    %v2220 = vadd.f32 %v2022, %v2219
    %2221 = vmatprep.mubr.f32.mxu0 0.0
    %2222 = vmatmul.mubr.f32.gmra.mxu0 %v1971
    %v2223 = vpop.f32.mrf.mxu0
    %v2224 = vadd.f32 %v2018, %v2223
    %v2225 = vpop.f32.mrf.mxu0
    %v2226 = vadd.f32 %v2022, %v2225
    %2227 = vmatprep.mubr.f32.mxu0 0.0
    %2228 = vmatmul.mubr.f32.gmra.mxu0 %v1972
    %v2229 = vpop.f32.mrf.mxu0
    %v2230 = vadd.f32 %v2018, %v2229
    %v2231 = vpop.f32.mrf.mxu0
    %v2232 = vadd.f32 %v2022, %v2231
    %2233 = vmatprep.mubr.f32.mxu0 0.0
    %2234 = vmatmul.mubr.f32.gmra.mxu0 %v1973
    %v2235 = vpop.f32.mrf.mxu0
    %v2236 = vadd.f32 %v2018, %v2235
    %v2237 = vpop.f32.mrf.mxu0
    %v2238 = vadd.f32 %v2022, %v2237
    %2239 = vmatprep.mubr.f32.mxu0 0.0
    %2240 = vmatmul.mubr.f32.gmra.mxu0 %v1974
    %v2241 = vpop.f32.mrf.mxu0
    %v2242 = vadd.f32 %v2018, %v2241
    %v2243 = vpop.f32.mrf.mxu0
    %v2244 = vadd.f32 %v2022, %v2243
    %2245 = vmatprep.mubr.f32.mxu0 0.0
    %2246 = vmatmul.mubr.f32.gmra.mxu0 %v1975
    %v2247 = vpop.f32.mrf.mxu0
    %v2248 = vadd.f32 %v2018, %v2247
    %v2249 = vpop.f32.mrf.mxu0
    %v2250 = vadd.f32 %v2022, %v2249
    %2251 = vmatprep.mubr.f32.mxu0 0.0
    %2252 = vmatmul.mubr.f32.gmra.mxu0 %v1976
    %v2253 = vpop.f32.mrf.mxu0
    %v2254 = vadd.f32 %v2018, %v2253
    %v2255 = vpop.f32.mrf.mxu0
    %v2256 = vadd.f32 %v2022, %v2255
    %2257 = vmatprep.mubr.f32.mxu0 0.0
    %2258 = vmatmul.mubr.f32.gmra.mxu0 %v1977
    %v2259 = vpop.f32.mrf.mxu0
    %v2260 = vadd.f32 %v2018, %v2259
    %v2261 = vpop.f32.mrf.mxu0
    %v2262 = vadd.f32 %v2022, %v2261
    %2263 = vmatprep.mubr.f32.mxu0 0.0
    %2264 = vmatmul.mubr.f32.gmra.mxu0 %v1978
    %v2265 = vpop.f32.mrf.mxu0
    %v2266 = vadd.f32 %v2018, %v2265
    %v2267 = vpop.f32.mrf.mxu0
    %v2268 = vadd.f32 %v2022, %v2267
    %2269 = vmatprep.mubr.f32.mxu0 0.0
    %2270 = vmatmul.mubr.f32.gmra.mxu0 %v1979
    %v2271 = vpop.f32.mrf.mxu0
    %v2272 = vadd.f32 %v2018, %v2271
    %v2273 = vpop.f32.mrf.mxu0
    %v2274 = vadd.f32 %v2022, %v2273
    %2275 = vmatprep.mubr.f32.mxu0 0.0
    %2276 = vmatmul.mubr.f32.gmra.mxu0 %v1980
    %v2277 = vpop.f32.mrf.mxu0
    %v2278 = vadd.f32 %v2018, %v2277
    %v2279 = vpop.f32.mrf.mxu0
    %v2280 = vadd.f32 %v2022, %v2279
    %2281 = vdwg.mxu0
    %v2282 = vxor.u32 %v2092, 2147483648
    %v2283 = vxor.u32 %v2094, 2147483648
    %v2284 = vxor.u32 %v2098, 2147483648
    %v2285 = vxor.u32 %v2100, 2147483648
    %v2286 = vxor.u32 %v2104, 2147483648
    %v2287 = vxor.u32 %v2106, 2147483648
    %v2288 = vxor.u32 %v2110, 2147483648
    %v2289 = vxor.u32 %v2112, 2147483648
    %v2290 = vxor.u32 %v2116, 2147483648
    %v2291 = vxor.u32 %v2118, 2147483648
    %v2292 = vxor.u32 %v2122, 2147483648
    %v2293 = vxor.u32 %v2124, 2147483648
    %v2294 = vxor.u32 %v2128, 2147483648
    %v2295 = vxor.u32 %v2130, 2147483648
    %v2296 = vxor.u32 %v2134, 2147483648
    %v2297 = vxor.u32 %v2136, 2147483648
    %v2298 = vxor.u32 %v2140, 2147483648
    %v2299 = vxor.u32 %v2142, 2147483648
    %v2300 = vxor.u32 %v2146, 2147483648
    %v2301 = vxor.u32 %v2148, 2147483648
    %v2302 = vxor.u32 %v2152, 2147483648
    %v2303 = vxor.u32 %v2154, 2147483648
    %v2304 = vxor.u32 %v2158, 2147483648
    %v2305 = vxor.u32 %v2160, 2147483648
    %v2306 = vxor.u32 %v2164, 2147483648
    %v2307 = vxor.u32 %v2166, 2147483648
    %v2308 = vxor.u32 %v2170, 2147483648
    %v2309 = vxor.u32 %v2172, 2147483648
    %v2310 = vxor.u32 %v2176, 2147483648
    %v2311 = vxor.u32 %v2178, 2147483648
    %v2312 = vxor.u32 %v2182, 2147483648
    %v2313 = vxor.u32 %v2184, 2147483648
    %v2314 = vxor.u32 %v2188, 2147483648
    %v2315 = vxor.u32 %v2190, 2147483648
    %v2316 = vxor.u32 %v2194, 2147483648
    %v2317 = vxor.u32 %v2196, 2147483648
    %v2318 = vxor.u32 %v2200, 2147483648
    %v2319 = vxor.u32 %v2202, 2147483648
    %v2320 = vxor.u32 %v2206, 2147483648
    %v2321 = vxor.u32 %v2208, 2147483648
    %v2322 = vxor.u32 %v2212, 2147483648
    %v2323 = vxor.u32 %v2214, 2147483648
    %v2324 = vxor.u32 %v2218, 2147483648
    %v2325 = vxor.u32 %v2220, 2147483648
    %v2326 = vxor.u32 %v2224, 2147483648
    %v2327 = vxor.u32 %v2226, 2147483648
    %v2328 = vxor.u32 %v2230, 2147483648
    %v2329 = vxor.u32 %v2232, 2147483648
    %v2330 = vxor.u32 %v2236, 2147483648
    %v2331 = vxor.u32 %v2238, 2147483648
    %v2332 = vxor.u32 %v2242, 2147483648
    %v2333 = vxor.u32 %v2244, 2147483648
    %v2334 = vxor.u32 %v2248, 2147483648
    %v2335 = vxor.u32 %v2250, 2147483648
    %v2336 = vxor.u32 %v2254, 2147483648
    %v2337 = vxor.u32 %v2256, 2147483648
    %v2338 = vxor.u32 %v2260, 2147483648
    %v2339 = vxor.u32 %v2262, 2147483648
    %v2340 = vxor.u32 %v2266, 2147483648
    %v2341 = vxor.u32 %v2268, 2147483648
    %v2342 = vxor.u32 %v2272, 2147483648
    %v2343 = vxor.u32 %v2274, 2147483648
    %v2344 = vxor.u32 %v2278, 2147483648
    %v2345 = vxor.u32 %v2280, 2147483648
    %v2346 = vmul.f32 %v2282, 1.442695
    %v2347 = vpow.pop %v2346
    %v2348 = vmul.f32 %v2283, 1.442695
    %v2349 = vpow.pop %v2348
    %v2350 = vmul.f32 %v2284, 1.442695
    %v2351 = vpow.pop %v2350
    %v2352 = vmul.f32 %v2285, 1.442695
    %v2353 = vpow.pop %v2352
    %v2354 = vmul.f32 %v2286, 1.442695
    %v2355 = vpow.pop %v2354
    %v2356 = vmul.f32 %v2287, 1.442695
    %v2357 = vpow.pop %v2356
    %v2358 = vmul.f32 %v2288, 1.442695
    %v2359 = vpow.pop %v2358
    %v2360 = vmul.f32 %v2289, 1.442695
    %v2361 = vpow.pop %v2360
    %v2362 = vmul.f32 %v2290, 1.442695
    %v2363 = vpow.pop %v2362
    %v2364 = vmul.f32 %v2291, 1.442695
    %v2365 = vpow.pop %v2364
    %v2366 = vmul.f32 %v2292, 1.442695
    %v2367 = vpow.pop %v2366
    %v2368 = vmul.f32 %v2293, 1.442695
    %v2369 = vpow.pop %v2368
    %v2370 = vmul.f32 %v2294, 1.442695
    %v2371 = vpow.pop %v2370
    %v2372 = vmul.f32 %v2295, 1.442695
    %v2373 = vpow.pop %v2372
    %v2374 = vmul.f32 %v2296, 1.442695
    %v2375 = vpow.pop %v2374
    %v2376 = vmul.f32 %v2297, 1.442695
    %v2377 = vpow.pop %v2376
    %v2378 = vmul.f32 %v2298, 1.442695
    %v2379 = vpow.pop %v2378
    %v2380 = vmul.f32 %v2299, 1.442695
    %v2381 = vpow.pop %v2380
    %v2382 = vmul.f32 %v2300, 1.442695
    %v2383 = vpow.pop %v2382
    %v2384 = vmul.f32 %v2301, 1.442695
    %v2385 = vpow.pop %v2384
    %v2386 = vmul.f32 %v2302, 1.442695
    %v2387 = vpow.pop %v2386
    %v2388 = vmul.f32 %v2303, 1.442695
    %v2389 = vpow.pop %v2388
    %v2390 = vmul.f32 %v2304, 1.442695
    %v2391 = vpow.pop %v2390
    %v2392 = vmul.f32 %v2305, 1.442695
    %v2393 = vpow.pop %v2392
    %v2394 = vmul.f32 %v2306, 1.442695
    %v2395 = vpow.pop %v2394
    %v2396 = vmul.f32 %v2307, 1.442695
    %v2397 = vpow.pop %v2396
    %v2398 = vmul.f32 %v2308, 1.442695
    %v2399 = vpow.pop %v2398
    %v2400 = vmul.f32 %v2309, 1.442695
    %v2401 = vpow.pop %v2400
    %v2402 = vmul.f32 %v2310, 1.442695
    %v2403 = vpow.pop %v2402
    %v2404 = vmul.f32 %v2311, 1.442695
    %v2405 = vpow.pop %v2404
    %v2406 = vmul.f32 %v2312, 1.442695
    %v2407 = vpow.pop %v2406
    %v2408 = vmul.f32 %v2313, 1.442695
    %v2409 = vpow.pop %v2408
    %v2410 = vmul.f32 %v2314, 1.442695
    %v2411 = vpow.pop %v2410
    %v2412 = vmul.f32 %v2315, 1.442695
    %v2413 = vpow.pop %v2412
    %v2414 = vmul.f32 %v2316, 1.442695
    %v2415 = vpow.pop %v2414
    %v2416 = vmul.f32 %v2317, 1.442695
    %v2417 = vpow.pop %v2416
    %v2418 = vmul.f32 %v2318, 1.442695
    %v2419 = vpow.pop %v2418
    %v2420 = vmul.f32 %v2319, 1.442695
    %v2421 = vpow.pop %v2420
    %v2422 = vmul.f32 %v2320, 1.442695
    %v2423 = vpow.pop %v2422
    %v2424 = vmul.f32 %v2321, 1.442695
    %v2425 = vpow.pop %v2424
    %v2426 = vmul.f32 %v2322, 1.442695
    %v2427 = vpow.pop %v2426
    %v2428 = vmul.f32 %v2323, 1.442695
    %v2429 = vpow.pop %v2428
    %v2430 = vmul.f32 %v2324, 1.442695
    %v2431 = vpow.pop %v2430
    %v2432 = vmul.f32 %v2325, 1.442695
    %v2433 = vpow.pop %v2432
    %v2434 = vmul.f32 %v2326, 1.442695
    %v2435 = vpow.pop %v2434
    %v2436 = vmul.f32 %v2327, 1.442695
    %v2437 = vpow.pop %v2436
    %v2438 = vmul.f32 %v2328, 1.442695
    %v2439 = vpow.pop %v2438
    %v2440 = vmul.f32 %v2329, 1.442695
    %v2441 = vpow.pop %v2440
    %v2442 = vmul.f32 %v2330, 1.442695
    %v2443 = vpow.pop %v2442
    %v2444 = vmul.f32 %v2331, 1.442695
    %v2445 = vpow.pop %v2444
    %v2446 = vmul.f32 %v2332, 1.442695
    %v2447 = vpow.pop %v2446
    %v2448 = vmul.f32 %v2333, 1.442695
    %v2449 = vpow.pop %v2448
    %v2450 = vmul.f32 %v2334, 1.442695
    %v2451 = vpow.pop %v2450
    %v2452 = vmul.f32 %v2335, 1.442695
    %v2453 = vpow.pop %v2452
    %v2454 = vmul.f32 %v2336, 1.442695
    %v2455 = vpow.pop %v2454
    %v2456 = vmul.f32 %v2337, 1.442695
    %v2457 = vpow.pop %v2456
    %v2458 = vmul.f32 %v2338, 1.442695
    %v2459 = vpow.pop %v2458
    %v2460 = vmul.f32 %v2339, 1.442695
    %v2461 = vpow.pop %v2460
    %v2462 = vmul.f32 %v2340, 1.442695
    %v2463 = vpow.pop %v2462
    %v2464 = vmul.f32 %v2341, 1.442695
    %v2465 = vpow.pop %v2464
    %v2466 = vmul.f32 %v2342, 1.442695
    %v2467 = vpow.pop %v2466
    %v2468 = vmul.f32 %v2343, 1.442695
    %v2469 = vpow.pop %v2468
    %v2470 = vmul.f32 %v2344, 1.442695
    %v2471 = vpow.pop %v2470
    %v2472 = vmul.f32 %v2345, 1.442695
    %v2473 = vpow.pop %v2472
    %v2474 = vadd.f32 %v2347, 1.0
    %v2475 = vadd.f32 %v2349, 1.0
    %v2476 = vadd.f32 %v2351, 1.0
    %v2477 = vadd.f32 %v2353, 1.0
    %v2478 = vadd.f32 %v2355, 1.0
    %v2479 = vadd.f32 %v2357, 1.0
    %v2480 = vadd.f32 %v2359, 1.0
    %v2481 = vadd.f32 %v2361, 1.0
    %v2482 = vadd.f32 %v2363, 1.0
    %v2483 = vadd.f32 %v2365, 1.0
    %v2484 = vadd.f32 %v2367, 1.0
    %v2485 = vadd.f32 %v2369, 1.0
    %v2486 = vadd.f32 %v2371, 1.0
    %v2487 = vadd.f32 %v2373, 1.0
    %v2488 = vadd.f32 %v2375, 1.0
    %v2489 = vadd.f32 %v2377, 1.0
    %v2490 = vadd.f32 %v2379, 1.0
    %v2491 = vadd.f32 %v2381, 1.0
    %v2492 = vadd.f32 %v2383, 1.0
    %v2493 = vadd.f32 %v2385, 1.0
    %v2494 = vadd.f32 %v2387, 1.0
    %v2495 = vadd.f32 %v2389, 1.0
    %v2496 = vadd.f32 %v2391, 1.0
    %v2497 = vadd.f32 %v2393, 1.0
    %v2498 = vadd.f32 %v2395, 1.0
    %v2499 = vadd.f32 %v2397, 1.0
    %v2500 = vadd.f32 %v2399, 1.0
    %v2501 = vadd.f32 %v2401, 1.0
    %v2502 = vadd.f32 %v2403, 1.0
    %v2503 = vadd.f32 %v2405, 1.0
    %v2504 = vadd.f32 %v2407, 1.0
    %v2505 = vadd.f32 %v2409, 1.0
    %v2506 = vadd.f32 %v2411, 1.0
    %v2507 = vadd.f32 %v2413, 1.0
    %v2508 = vadd.f32 %v2415, 1.0
    %v2509 = vadd.f32 %v2417, 1.0
    %v2510 = vadd.f32 %v2419, 1.0
    %v2511 = vadd.f32 %v2421, 1.0
    %v2512 = vadd.f32 %v2423, 1.0
    %v2513 = vadd.f32 %v2425, 1.0
    %v2514 = vadd.f32 %v2427, 1.0
    %v2515 = vadd.f32 %v2429, 1.0
    %v2516 = vadd.f32 %v2431, 1.0
    %v2517 = vadd.f32 %v2433, 1.0
    %v2518 = vadd.f32 %v2435, 1.0
    %v2519 = vadd.f32 %v2437, 1.0
    %v2520 = vadd.f32 %v2439, 1.0
    %v2521 = vadd.f32 %v2441, 1.0
    %v2522 = vadd.f32 %v2443, 1.0
    %v2523 = vadd.f32 %v2445, 1.0
    %v2524 = vadd.f32 %v2447, 1.0
    %v2525 = vadd.f32 %v2449, 1.0
    %v2526 = vadd.f32 %v2451, 1.0
    %v2527 = vadd.f32 %v2453, 1.0
    %v2528 = vadd.f32 %v2455, 1.0
    %v2529 = vadd.f32 %v2457, 1.0
    %v2530 = vadd.f32 %v2459, 1.0
    %v2531 = vadd.f32 %v2461, 1.0
    %v2532 = vadd.f32 %v2463, 1.0
    %v2533 = vadd.f32 %v2465, 1.0
    %v2534 = vadd.f32 %v2467, 1.0
    %v2535 = vadd.f32 %v2469, 1.0
    %v2536 = vadd.f32 %v2471, 1.0
    %v2537 = vadd.f32 %v2473, 1.0
    %v2538 = vrcp.pop %v2474
    %v2539 = vmul.f32 1.0, %v2538
    %v2540 = vrcp.pop %v2475
    %v2541 = vmul.f32 1.0, %v2540
    %v2542 = vrcp.pop %v2476
    %v2543 = vmul.f32 1.0, %v2542
    %v2544 = vrcp.pop %v2477
    %v2545 = vmul.f32 1.0, %v2544
    %v2546 = vrcp.pop %v2478
    %v2547 = vmul.f32 1.0, %v2546
    %v2548 = vrcp.pop %v2479
    %v2549 = vmul.f32 1.0, %v2548
    %v2550 = vrcp.pop %v2480
    %v2551 = vmul.f32 1.0, %v2550
    %v2552 = vrcp.pop %v2481
    %v2553 = vmul.f32 1.0, %v2552
    %v2554 = vrcp.pop %v2482
    %v2555 = vmul.f32 1.0, %v2554
    %v2556 = vrcp.pop %v2483
    %v2557 = vmul.f32 1.0, %v2556
    %v2558 = vrcp.pop %v2484
    %v2559 = vmul.f32 1.0, %v2558
    %v2560 = vrcp.pop %v2485
    %v2561 = vmul.f32 1.0, %v2560
    %v2562 = vrcp.pop %v2486
    %v2563 = vmul.f32 1.0, %v2562
    %v2564 = vrcp.pop %v2487
    %v2565 = vmul.f32 1.0, %v2564
    %v2566 = vrcp.pop %v2488
    %v2567 = vmul.f32 1.0, %v2566
    %v2568 = vrcp.pop %v2489
    %v2569 = vmul.f32 1.0, %v2568
    %v2570 = vrcp.pop %v2490
    %v2571 = vmul.f32 1.0, %v2570
    %v2572 = vrcp.pop %v2491
    %v2573 = vmul.f32 1.0, %v2572
    %v2574 = vrcp.pop %v2492
    %v2575 = vmul.f32 1.0, %v2574
    %v2576 = vrcp.pop %v2493
    %v2577 = vmul.f32 1.0, %v2576
    %v2578 = vrcp.pop %v2494
    %v2579 = vmul.f32 1.0, %v2578
    %v2580 = vrcp.pop %v2495
    %v2581 = vmul.f32 1.0, %v2580
    %v2582 = vrcp.pop %v2496
    %v2583 = vmul.f32 1.0, %v2582
    %v2584 = vrcp.pop %v2497
    %v2585 = vmul.f32 1.0, %v2584
    %v2586 = vrcp.pop %v2498
    %v2587 = vmul.f32 1.0, %v2586
    %v2588 = vrcp.pop %v2499
    %v2589 = vmul.f32 1.0, %v2588
    %v2590 = vrcp.pop %v2500
    %v2591 = vmul.f32 1.0, %v2590
    %v2592 = vrcp.pop %v2501
    %v2593 = vmul.f32 1.0, %v2592
    %v2594 = vrcp.pop %v2502
    %v2595 = vmul.f32 1.0, %v2594
    %v2596 = vrcp.pop %v2503
    %v2597 = vmul.f32 1.0, %v2596
    %v2598 = vrcp.pop %v2504
    %v2599 = vmul.f32 1.0, %v2598
    %v2600 = vrcp.pop %v2505
    %v2601 = vmul.f32 1.0, %v2600
    %v2602 = vrcp.pop %v2506
    %v2603 = vmul.f32 1.0, %v2602
    %v2604 = vrcp.pop %v2507
    %v2605 = vmul.f32 1.0, %v2604
    %v2606 = vrcp.pop %v2508
    %v2607 = vmul.f32 1.0, %v2606
    %v2608 = vrcp.pop %v2509
    %v2609 = vmul.f32 1.0, %v2608
    %v2610 = vrcp.pop %v2510
    %v2611 = vmul.f32 1.0, %v2610
    %v2612 = vrcp.pop %v2511
    %v2613 = vmul.f32 1.0, %v2612
    %v2614 = vrcp.pop %v2512
    %v2615 = vmul.f32 1.0, %v2614
    %v2616 = vrcp.pop %v2513
    %v2617 = vmul.f32 1.0, %v2616
    %v2618 = vrcp.pop %v2514
    %v2619 = vmul.f32 1.0, %v2618
    %v2620 = vrcp.pop %v2515
    %v2621 = vmul.f32 1.0, %v2620
    %v2622 = vrcp.pop %v2516
    %v2623 = vmul.f32 1.0, %v2622
    %v2624 = vrcp.pop %v2517
    %v2625 = vmul.f32 1.0, %v2624
    %v2626 = vrcp.pop %v2518
    %v2627 = vmul.f32 1.0, %v2626
    %v2628 = vrcp.pop %v2519
    %v2629 = vmul.f32 1.0, %v2628
    %v2630 = vrcp.pop %v2520
    %v2631 = vmul.f32 1.0, %v2630
    %v2632 = vrcp.pop %v2521
    %v2633 = vmul.f32 1.0, %v2632
    %v2634 = vrcp.pop %v2522
    %v2635 = vmul.f32 1.0, %v2634
    %v2636 = vrcp.pop %v2523
    %v2637 = vmul.f32 1.0, %v2636
    %v2638 = vrcp.pop %v2524
    %v2639 = vmul.f32 1.0, %v2638
    %v2640 = vrcp.pop %v2525
    %v2641 = vmul.f32 1.0, %v2640
    %v2642 = vrcp.pop %v2526
    %v2643 = vmul.f32 1.0, %v2642
    %v2644 = vrcp.pop %v2527
    %v2645 = vmul.f32 1.0, %v2644
    %v2646 = vrcp.pop %v2528
    %v2647 = vmul.f32 1.0, %v2646
    %v2648 = vrcp.pop %v2529
    %v2649 = vmul.f32 1.0, %v2648
    %v2650 = vrcp.pop %v2530
    %v2651 = vmul.f32 1.0, %v2650
    %v2652 = vrcp.pop %v2531
    %v2653 = vmul.f32 1.0, %v2652
    %v2654 = vrcp.pop %v2532
    %v2655 = vmul.f32 1.0, %v2654
    %v2656 = vrcp.pop %v2533
    %v2657 = vmul.f32 1.0, %v2656
    %v2658 = vrcp.pop %v2534
    %v2659 = vmul.f32 1.0, %v2658
    %v2660 = vrcp.pop %v2535
    %v2661 = vmul.f32 1.0, %v2660
    %v2662 = vrcp.pop %v2536
    %v2663 = vmul.f32 1.0, %v2662
    %v2664 = vrcp.pop %v2537
    %v2665 = vmul.f32 1.0, %v2664
    %2666 = vst [vmem:[#allocation16] sm:$0xff] %v2539
    %2667 = vst [vmem:[#allocation16 + $0x8] sm:$0xff] %v2541
    %2668 = vst [vmem:[#allocation16 + $0x10] sm:$0xff] %v2543
    %2669 = vst [vmem:[#allocation16 + $0x18] sm:$0xff] %v2545
    %2670 = vst [vmem:[#allocation16 + $0x20] sm:$0xff] %v2547
    %2671 = vst [vmem:[#allocation16 + $0x28] sm:$0xff] %v2549
    %2672 = vst [vmem:[#allocation16 + $0x30] sm:$0xff] %v2551
    %2673 = vst [vmem:[#allocation16 + $0x38] sm:$0xff] %v2553
    %2674 = vst [vmem:[#allocation16 + $0x40] sm:$0xff] %v2555
    %2675 = vst [vmem:[#allocation16 + $0x48] sm:$0xff] %v2557
    %2676 = vst [vmem:[#allocation16 + $0x50] sm:$0xff] %v2559
    %2677 = vst [vmem:[#allocation16 + $0x58] sm:$0xff] %v2561
    %2678 = vst [vmem:[#allocation16 + $0x60] sm:$0xff] %v2563
    %2679 = vst [vmem:[#allocation16 + $0x68] sm:$0xff] %v2565
    %2680 = vst [vmem:[#allocation16 + $0x70] sm:$0xff] %v2567
    %2681 = vst [vmem:[#allocation16 + $0x78] sm:$0xff] %v2569
    %2682 = vst [vmem:[#allocation16 + $0x80] sm:$0xff] %v2571
    %2683 = vst [vmem:[#allocation16 + $0x88] sm:$0xff] %v2573
    %2684 = vst [vmem:[#allocation16 + $0x90] sm:$0xff] %v2575
    %2685 = vst [vmem:[#allocation16 + $0x98] sm:$0xff] %v2577
    %2686 = vst [vmem:[#allocation16 + $0xa0] sm:$0xff] %v2579
    %2687 = vst [vmem:[#allocation16 + $0xa8] sm:$0xff] %v2581
    %2688 = vst [vmem:[#allocation16 + $0xb0] sm:$0xff] %v2583
    %2689 = vst [vmem:[#allocation16 + $0xb8] sm:$0xff] %v2585
    %2690 = vst [vmem:[#allocation16 + $0xc0] sm:$0xff] %v2587
    %2691 = vst [vmem:[#allocation16 + $0xc8] sm:$0xff] %v2589
    %2692 = vst [vmem:[#allocation16 + $0xd0] sm:$0xff] %v2591
    %2693 = vst [vmem:[#allocation16 + $0xd8] sm:$0xff] %v2593
    %2694 = vst [vmem:[#allocation16 + $0xe0] sm:$0xff] %v2595
    %2695 = vst [vmem:[#allocation16 + $0xe8] sm:$0xff] %v2597
    %2696 = vst [vmem:[#allocation16 + $0xf0] sm:$0xff] %v2599
    %2697 = vst [vmem:[#allocation16 + $0xf8] sm:$0xff] %v2601
    %2698 = vst [vmem:[#allocation16 + $0x100] sm:$0xff] %v2603
    %2699 = vst [vmem:[#allocation16 + $0x108] sm:$0xff] %v2605
    %2700 = vst [vmem:[#allocation16 + $0x110] sm:$0xff] %v2607
    %2701 = vst [vmem:[#allocation16 + $0x118] sm:$0xff] %v2609
    %2702 = vst [vmem:[#allocation16 + $0x120] sm:$0xff] %v2611
    %2703 = vst [vmem:[#allocation16 + $0x128] sm:$0xff] %v2613
    %2704 = vst [vmem:[#allocation16 + $0x130] sm:$0xff] %v2615
    %2705 = vst [vmem:[#allocation16 + $0x138] sm:$0xff] %v2617
    %2706 = vst [vmem:[#allocation16 + $0x140] sm:$0xff] %v2619
    %2707 = vst [vmem:[#allocation16 + $0x148] sm:$0xff] %v2621
    %2708 = vst [vmem:[#allocation16 + $0x150] sm:$0xff] %v2623
    %2709 = vst [vmem:[#allocation16 + $0x158] sm:$0xff] %v2625
    %2710 = vst [vmem:[#allocation16 + $0x160] sm:$0xff] %v2627
    %2711 = vst [vmem:[#allocation16 + $0x168] sm:$0xff] %v2629
    %2712 = vst [vmem:[#allocation16 + $0x170] sm:$0xff] %v2631
    %2713 = vst [vmem:[#allocation16 + $0x178] sm:$0xff] %v2633
    %2714 = vst [vmem:[#allocation16 + $0x180] sm:$0xff] %v2635
    %2715 = vst [vmem:[#allocation16 + $0x188] sm:$0xff] %v2637
    %2716 = vst [vmem:[#allocation16 + $0x190] sm:$0xff] %v2639
    %2717 = vst [vmem:[#allocation16 + $0x198] sm:$0xff] %v2641
    %2718 = vst [vmem:[#allocation16 + $0x1a0] sm:$0xff] %v2643
    %2719 = vst [vmem:[#allocation16 + $0x1a8] sm:$0xff] %v2645
    %2720 = vst [vmem:[#allocation16 + $0x1b0] sm:$0xff] %v2647
    %2721 = vst [vmem:[#allocation16 + $0x1b8] sm:$0xff] %v2649
    %2722 = vst [vmem:[#allocation16 + $0x1c0] sm:$0xff] %v2651
    %2723 = vst [vmem:[#allocation16 + $0x1c8] sm:$0xff] %v2653
    %2724 = vst [vmem:[#allocation16 + $0x1d0] sm:$0xff] %v2655
    %2725 = vst [vmem:[#allocation16 + $0x1d8] sm:$0xff] %v2657
    %2726 = vst [vmem:[#allocation16 + $0x1e0] sm:$0xff] %v2659
    %2727 = vst [vmem:[#allocation16 + $0x1e8] sm:$0xff] %v2661
    %2728 = vst [vmem:[#allocation16 + $0x1f0] sm:$0xff] %v2663
    %2729 = vst [vmem:[#allocation16 + $0x1f8] sm:$0xff] %v2665
    // Predicated region
    $region90: #{tpu_custom_call.1} parent=1 // pred_check
      _
    $region91: #{tpu_custom_call.1} parent=1 // pred_check_branch
      %2731 = sbr.rel (0) target = $region93
    $region92: #{tpu_custom_call.1} parent=1 // pred_region
      %s2733 = ssub.s32 8192, 8192
      %2734 = vsyncadd [#allocation4], %s2733
      %s2735 = sshll.u32 [#allocation16], 4
      %s2736 = int_to_ptr.vmem [resolvable:$true] %s2735
      %2741 = dma.vmem_to_hbm [thread:$0]  %s2736, 8192, %s14, [#allocation4], 256, 256, 16
    $region93: #{tpu_custom_call.1} parent=1 // pred_fallthru
      _
    // Predicated region
    $region94: #{tpu_custom_call.1} parent=1 // pred_check
      _
    $region95: #{tpu_custom_call.1} parent=1 // pred_check_branch
      %2743 = sbr.rel (0) target = $region97
    $region96: #{tpu_custom_call.1} parent=1 // pred_region
      %s2745 = ssub.s32 8192, 8192
      %2746 = vsyncadd [#allocation18], %s2745
      %s2747 = sshll.u32 [#allocation17], 4
      %s2748 = int_to_ptr.vmem [resolvable:$true] %s2747
      %2753 = dma.vmem_to_hbm [thread:$0]  %s2748, 8192, %s15, [#allocation18], 256, 256, 16
    $region97: #{tpu_custom_call.1} parent=1 // pred_fallthru
      _
    // Predicated region
    $region98: #{tpu_custom_call.1} parent=1 // pred_check
      _
    $region99: #{tpu_custom_call.1} parent=1 // pred_check_branch
      %2755 = sbr.rel (0) target = $region101
    $region100: #{tpu_custom_call.1} parent=1 // pred_region
      %2756 = dma.done [#allocation4], 8192
    $region101: #{tpu_custom_call.1} parent=1 // pred_fallthru
      _
    // Predicated region
    $region102: #{tpu_custom_call.1} parent=1 // pred_check
      _
    $region103: #{tpu_custom_call.1} parent=1 // pred_check_branch
      %2758 = sbr.rel (0) target = $region105
    $region104: #{tpu_custom_call.1} parent=1 // pred_region
      %2759 = dma.done [#allocation18], 8192
    $region105: #{tpu_custom_call.1} parent=1 // pred_fallthru
      _
    %2760 = vsyncpa [#allocation3], 1
    %2761 = vsyncpa [#allocation6], 1
    %2762 = vsyncpa [#allocation9], 1
    %2763 = vsyncpa [#allocation12], 1
    %2764 = vsyncpa [#allocation15], 1
    %2765 = vsyncpa [#allocation4], 1
    %2766 = vsyncpa [#allocation18], 1

// kernel: tpu_custom_call.1
$region0: #{tpu_custom_call.1}
  #allocation0 [shape = 'u32[]', space=smem, size = 0x4, offset = 0x4, fixed_abs, tag = 'smem constant byte address 0x4 - core index']
  #allocation1 [shape = 'u32[144,128]{1,0:T(1,128)}', space=vmem, size = 0x12000, scoped, tag = 'internal scratch']
  %s0 = inlined_call_operand.hbm [shape: f32[256,256], index: 0, kind: input, shape index: {}]
  %s1 = inlined_call_operand.hbm [shape: f32[256,128], index: 1, kind: input, shape index: {}]
  %s2 = inlined_call_operand.hbm [shape: f32[256,128], index: 2, kind: input, shape index: {}]
  %s3 = inlined_call_operand.vmem [shape: f32[1,128], index: 3, kind: input, shape index: {}]
  %s4 = inlined_call_operand.hbm [shape: f32[128,128], index: 4, kind: input, shape index: {}]
  %s5 = inlined_call_operand.vmem [shape: f32[1,128], index: 5, kind: input, shape index: {}]
  %s6 = inlined_call_operand.hbm [shape: f32[128,256], index: 6, kind: input, shape index: {}]
  %s7 = inlined_call_operand.vmem [shape: f32[1,256], index: 7, kind: input, shape index: {}]
  %s8 = inlined_call_operand.hbm [shape: f32[128,128], index: 8, kind: input, shape index: {}]
  %s9 = inlined_call_operand.vmem [shape: f32[1,128], index: 9, kind: input, shape index: {}]
  %s10 = inlined_call_operand.hbm [shape: f32[128,128], index: 10, kind: input, shape index: {}]
  %s11 = inlined_call_operand.vmem [shape: f32[1,128], index: 11, kind: input, shape index: {}]
  %s12 = inlined_call_operand.hbm [shape: f32[128,256], index: 12, kind: input, shape index: {}]
  %s13 = inlined_call_operand.vmem [shape: f32[1,256], index: 13, kind: input, shape index: {}]
  %s14 = inlined_call_operand.hbm [shape: f32[256,256], index: 14, kind: output, shape index: {0}]
  %s15 = inlined_call_operand.hbm [shape: f32[256,256], index: 15, kind: output, shape index: {1}]
  %16 = xla_tuple %s14, %s15
  %s17 = sld [smem:[#allocation0]]
  $region106: #{tpu_custom_call.1} parent=0
    _
  %s19 = ssub.s32 1, %s17
  %s20 = scalar_select 0, %s19, %s17
  $region1: #{tpu_custom_call.1} parent=0
    #allocation2 [shape = 'u8[262144]{0}', space=vmem, size = 0x40000, scoped, tag = 'input window, operand 0, single buffered']
    #allocation3 [shape = 's32[1]{0}', space=sflag, size = 0x4, scoped, tag = 'scoped memory for tpu_custom_call.1']
    #allocation4 [shape = 's32[1]{0}', space=sflag, size = 0x4, scoped, tag = 'scoped memory for tpu_custom_call.1']
    #allocation5 [shape = 'u8[131072]{0}', space=vmem, size = 0x20000, scoped, tag = 'input window, operand 1, single buffered']
    #allocation6 [shape = 's32[1]{0}', space=sflag, size = 0x4, scoped, tag = 'scoped memory for tpu_custom_call.1']
    #allocation7 [shape = 'u8[131072]{0}', space=vmem, size = 0x20000, scoped, tag = 'input window, operand 2, single buffered']
    #allocation8 [shape = 'u8[65536]{0}', space=vmem, size = 0x10000, scoped, tag = 'input window, operand 4, single buffered']
    #allocation9 [shape = 's32[1]{0}', space=sflag, size = 0x4, scoped, tag = 'scoped memory for tpu_custom_call.1']
    #allocation10 [shape = 'u8[131072]{0}', space=vmem, size = 0x20000, scoped, tag = 'input window, operand 6, single buffered']
    #allocation11 [shape = 'u8[65536]{0}', space=vmem, size = 0x10000, scoped, tag = 'input window, operand 8, single buffered']
    #allocation12 [shape = 's32[1]{0}', space=sflag, size = 0x4, scoped, tag = 'scoped memory for tpu_custom_call.1']
    #allocation13 [shape = 'u8[65536]{0}', space=vmem, size = 0x10000, scoped, tag = 'input window, operand 10, single buffered']
    #allocation14 [shape = 'u8[131072]{0}', space=vmem, size = 0x20000, scoped, tag = 'input window, operand 12, single buffered']
    #allocation15 [shape = 's32[1]{0}', space=sflag, size = 0x4, scoped, tag = 'scoped memory for tpu_custom_call.1']
    #allocation16 [shape = 'u8[262144]{0}', space=vmem, size = 0x40000, scoped, tag = 'output window, operand 0, single buffered']
    #allocation17 [shape = 'u8[262144]{0}', space=vmem, size = 0x40000, scoped, tag = 'output window, operand 1, single buffered']
    #allocation18 [shape = 's32[1]{0}', space=sflag, size = 0x4, scoped, tag = 'scoped memory for tpu_custom_call.1']
    %21 = vsyncpa [#allocation3], 0
    %22 = vsyncpa [#allocation6], 0
    %23 = vsyncpa [#allocation9], 0
    %24 = vsyncpa [#allocation12], 0
    %25 = vsyncpa [#allocation15], 0
    %26 = vsyncpa [#allocation4], 0
    %27 = vsyncpa [#allocation18], 0
    // Predicated region
    $region2: #{tpu_custom_call.1} parent=1 // pred_check
      _
    $region3: #{tpu_custom_call.1} parent=1 // pred_check_branch
      %29 = sbr.rel (0) target = $region5
    $region4: #{tpu_custom_call.1} parent=1 // pred_region
      %s31 = ssub.s32 8192, 8192
      %32 = vsyncadd [#allocation3], %s31
      %s33 = sshll.u32 [#allocation2], 4
      %s34 = int_to_ptr.vmem [resolvable:$true] %s33
      %39 = dma.hbm_to_vmem [thread:$0]  %s0, 8192, %s34, [#allocation3], 256, 256, 16
    $region5: #{tpu_custom_call.1} parent=1 // pred_fallthru
      _
    // Predicated region
    $region6: #{tpu_custom_call.1} parent=1 // pred_check
      _
    $region7: #{tpu_custom_call.1} parent=1 // pred_check_branch
      %41 = sbr.rel (0) target = $region9
    $region8: #{tpu_custom_call.1} parent=1 // pred_region
      %s43 = ssub.s32 4096, 4096
      %44 = vsyncadd [#allocation6], %s43
      %s45 = sshll.u32 [#allocation5], 4
      %s46 = int_to_ptr.vmem [resolvable:$true] %s45
      %51 = dma.hbm_to_vmem [thread:$0]  %s1, 4096, %s46, [#allocation6], 128, 128, 8
    $region9: #{tpu_custom_call.1} parent=1 // pred_fallthru
      _
    // Predicated region
    $region10: #{tpu_custom_call.1} parent=1 // pred_check
      _
    $region11: #{tpu_custom_call.1} parent=1 // pred_check_branch
      %53 = sbr.rel (0) target = $region13
    $region12: #{tpu_custom_call.1} parent=1 // pred_region
      %s55 = ssub.s32 4096, 4096
      %56 = vsyncadd [#allocation6], %s55
      %s57 = sshll.u32 [#allocation7], 4
      %s58 = int_to_ptr.vmem [resolvable:$true] %s57
      %63 = dma.hbm_to_vmem [thread:$0]  %s2, 4096, %s58, [#allocation6], 128, 128, 8
    $region13: #{tpu_custom_call.1} parent=1 // pred_fallthru
      _
    // Predicated region
    $region14: #{tpu_custom_call.1} parent=1 // pred_check
      _
    $region15: #{tpu_custom_call.1} parent=1 // pred_check_branch
      %65 = sbr.rel (0) target = $region17
    $region16: #{tpu_custom_call.1} parent=1 // pred_region
      _
    $region17: #{tpu_custom_call.1} parent=1 // pred_fallthru
      _
    // Predicated region
    $region18: #{tpu_custom_call.1} parent=1 // pred_check
      _
    $region19: #{tpu_custom_call.1} parent=1 // pred_check_branch
      %67 = sbr.rel (0) target = $region21
    $region20: #{tpu_custom_call.1} parent=1 // pred_region
      %s69 = ssub.s32 2048, 2048
      %70 = vsyncadd [#allocation9], %s69
      %s71 = sshll.u32 [#allocation8], 4
      %s72 = int_to_ptr.vmem [resolvable:$true] %s71
      %77 = dma.hbm_to_vmem [thread:$0]  %s4, 2048, %s72, [#allocation9], 128, 128, 8
    $region21: #{tpu_custom_call.1} parent=1 // pred_fallthru
      _
    // Predicated region
    $region22: #{tpu_custom_call.1} parent=1 // pred_check
      _
    $region23: #{tpu_custom_call.1} parent=1 // pred_check_branch
      %79 = sbr.rel (0) target = $region25
    $region24: #{tpu_custom_call.1} parent=1 // pred_region
      _
    $region25: #{tpu_custom_call.1} parent=1 // pred_fallthru
      _
    // Predicated region
    $region26: #{tpu_custom_call.1} parent=1 // pred_check
      _
    $region27: #{tpu_custom_call.1} parent=1 // pred_check_branch
      %81 = sbr.rel (0) target = $region29
    $region28: #{tpu_custom_call.1} parent=1 // pred_region
      %s83 = ssub.s32 4096, 4096
      %84 = vsyncadd [#allocation9], %s83
      %s85 = sshll.u32 [#allocation10], 4
      %s86 = int_to_ptr.vmem [resolvable:$true] %s85
      %91 = dma.hbm_to_vmem [thread:$0]  %s6, 4096, %s86, [#allocation9], 256, 256, 16
    $region29: #{tpu_custom_call.1} parent=1 // pred_fallthru
      _
    // Predicated region
    $region30: #{tpu_custom_call.1} parent=1 // pred_check
      _
    $region31: #{tpu_custom_call.1} parent=1 // pred_check_branch
      %93 = sbr.rel (0) target = $region33
    $region32: #{tpu_custom_call.1} parent=1 // pred_region
      _
    $region33: #{tpu_custom_call.1} parent=1 // pred_fallthru
      _
    // Predicated region
    $region34: #{tpu_custom_call.1} parent=1 // pred_check
      _
    $region35: #{tpu_custom_call.1} parent=1 // pred_check_branch
      %95 = sbr.rel (0) target = $region37
    $region36: #{tpu_custom_call.1} parent=1 // pred_region
      %s97 = ssub.s32 2048, 2048
      %98 = vsyncadd [#allocation12], %s97
      %s99 = sshll.u32 [#allocation11], 4
      %s100 = int_to_ptr.vmem [resolvable:$true] %s99
      %105 = dma.hbm_to_vmem [thread:$0]  %s8, 2048, %s100, [#allocation12], 128, 128, 8
    $region37: #{tpu_custom_call.1} parent=1 // pred_fallthru
      _
    // Predicated region
    $region38: #{tpu_custom_call.1} parent=1 // pred_check
      _
    $region39: #{tpu_custom_call.1} parent=1 // pred_check_branch
      %107 = sbr.rel (0) target = $region41
    $region40: #{tpu_custom_call.1} parent=1 // pred_region
      _
    $region41: #{tpu_custom_call.1} parent=1 // pred_fallthru
      _
    // Predicated region
    $region42: #{tpu_custom_call.1} parent=1 // pred_check
      _
    $region43: #{tpu_custom_call.1} parent=1 // pred_check_branch
      %109 = sbr.rel (0) target = $region45
    $region44: #{tpu_custom_call.1} parent=1 // pred_region
      %s111 = ssub.s32 2048, 2048
      %112 = vsyncadd [#allocation12], %s111
      %s113 = sshll.u32 [#allocation13], 4
      %s114 = int_to_ptr.vmem [resolvable:$true] %s113
      %119 = dma.hbm_to_vmem [thread:$0]  %s10, 2048, %s114, [#allocation12], 128, 128, 8
    $region45: #{tpu_custom_call.1} parent=1 // pred_fallthru
      _
    // Predicated region
    $region46: #{tpu_custom_call.1} parent=1 // pred_check
      _
    $region47: #{tpu_custom_call.1} parent=1 // pred_check_branch
      %121 = sbr.rel (0) target = $region49
    $region48: #{tpu_custom_call.1} parent=1 // pred_region
      _
    $region49: #{tpu_custom_call.1} parent=1 // pred_fallthru
      _
    // Predicated region
    $region50: #{tpu_custom_call.1} parent=1 // pred_check
      _
    $region51: #{tpu_custom_call.1} parent=1 // pred_check_branch
      %123 = sbr.rel (0) target = $region53
    $region52: #{tpu_custom_call.1} parent=1 // pred_region
      %s125 = ssub.s32 4096, 4096
      %126 = vsyncadd [#allocation15], %s125
      %s127 = sshll.u32 [#allocation14], 4
      %s128 = int_to_ptr.vmem [resolvable:$true] %s127
      %133 = dma.hbm_to_vmem [thread:$0]  %s12, 4096, %s128, [#allocation15], 256, 256, 16
    $region53: #{tpu_custom_call.1} parent=1 // pred_fallthru
      _
    // Predicated region
    $region54: #{tpu_custom_call.1} parent=1 // pred_check
      _
    $region55: #{tpu_custom_call.1} parent=1 // pred_check_branch
      %135 = sbr.rel (0) target = $region57
    $region56: #{tpu_custom_call.1} parent=1 // pred_region
      _
    $region57: #{tpu_custom_call.1} parent=1 // pred_fallthru
      _
    // Predicated region
    $region58: #{tpu_custom_call.1} parent=1 // pred_check
      _
    $region59: #{tpu_custom_call.1} parent=1 // pred_check_branch
      %137 = sbr.rel (0) target = $region61
    $region60: #{tpu_custom_call.1} parent=1 // pred_region
      %138 = dma.done [#allocation3], 8192
    $region61: #{tpu_custom_call.1} parent=1 // pred_fallthru
      _
    // Predicated region
    $region62: #{tpu_custom_call.1} parent=1 // pred_check
      _
    $region63: #{tpu_custom_call.1} parent=1 // pred_check_branch
      %140 = sbr.rel (0) target = $region65
    $region64: #{tpu_custom_call.1} parent=1 // pred_region
      %141 = dma.done [#allocation6], 4096
    $region65: #{tpu_custom_call.1} parent=1 // pred_fallthru
      _
    // Predicated region
    $region66: #{tpu_custom_call.1} parent=1 // pred_check
      _
    $region67: #{tpu_custom_call.1} parent=1 // pred_check_branch
      %143 = sbr.rel (0) target = $region69
    $region68: #{tpu_custom_call.1} parent=1 // pred_region
      %144 = dma.done [#allocation6], 4096
    $region69: #{tpu_custom_call.1} parent=1 // pred_fallthru
      _
    // Predicated region
    $region70: #{tpu_custom_call.1} parent=1 // pred_check
      _
    $region71: #{tpu_custom_call.1} parent=1 // pred_check_branch
      %146 = sbr.rel (0) target = $region73
    $region72: #{tpu_custom_call.1} parent=1 // pred_region
      %147 = dma.done [#allocation9], 2048
    $region73: #{tpu_custom_call.1} parent=1 // pred_fallthru
      _
    // Predicated region
    $region74: #{tpu_custom_call.1} parent=1 // pred_check
      _
    $region75: #{tpu_custom_call.1} parent=1 // pred_check_branch
      %149 = sbr.rel (0) target = $region77
    $region76: #{tpu_custom_call.1} parent=1 // pred_region
      %150 = dma.done [#allocation9], 4096
    $region77: #{tpu_custom_call.1} parent=1 // pred_fallthru
      _
    // Predicated region
    $region78: #{tpu_custom_call.1} parent=1 // pred_check
      _
    $region79: #{tpu_custom_call.1} parent=1 // pred_check_branch
      %152 = sbr.rel (0) target = $region81
    $region80: #{tpu_custom_call.1} parent=1 // pred_region
      %153 = dma.done [#allocation12], 2048
    $region81: #{tpu_custom_call.1} parent=1 // pred_fallthru
      _
    // Predicated region
    $region82: #{tpu_custom_call.1} parent=1 // pred_check
      _
    $region83: #{tpu_custom_call.1} parent=1 // pred_check_branch
      %155 = sbr.rel (0) target = $region85
    $region84: #{tpu_custom_call.1} parent=1 // pred_region
      %156 = dma.done [#allocation12], 2048
    $region85: #{tpu_custom_call.1} parent=1 // pred_fallthru
      _
    // Predicated region
    $region86: #{tpu_custom_call.1} parent=1 // pred_check
      _
    $region87: #{tpu_custom_call.1} parent=1 // pred_check_branch
      %158 = sbr.rel (0) target = $region89
    $region88: #{tpu_custom_call.1} parent=1 // pred_region
      %159 = dma.done [#allocation15], 4096
    $region89: #{tpu_custom_call.1} parent=1 // pred_fallthru
      _
    %v160 = vld [vmem:[#allocation2] sm:$0xff]
    %v161 = vld [vmem:[#allocation2 + $0x8] sm:$0xff]
    %v162 = vld [vmem:[#allocation2 + $0x10] sm:$0xff]
    %v163 = vld [vmem:[#allocation2 + $0x18] sm:$0xff]
    %v164 = vld [vmem:[#allocation2 + $0x20] sm:$0xff]
    %v165 = vld [vmem:[#allocation2 + $0x28] sm:$0xff]
    %v166 = vld [vmem:[#allocation2 + $0x30] sm:$0xff]
    %v167 = vld [vmem:[#allocation2 + $0x38] sm:$0xff]
    %v168 = vld [vmem:[#allocation2 + $0x40] sm:$0xff]
    %v169 = vld [vmem:[#allocation2 + $0x48] sm:$0xff]
    %v170 = vld [vmem:[#allocation2 + $0x50] sm:$0xff]
    %v171 = vld [vmem:[#allocation2 + $0x58] sm:$0xff]
    %v172 = vld [vmem:[#allocation2 + $0x60] sm:$0xff]
    %v173 = vld [vmem:[#allocation2 + $0x68] sm:$0xff]
    %v174 = vld [vmem:[#allocation2 + $0x70] sm:$0xff]
    %v175 = vld [vmem:[#allocation2 + $0x78] sm:$0xff]
    %v176 = vld [vmem:[#allocation2 + $0x80] sm:$0xff]
    %v177 = vld [vmem:[#allocation2 + $0x88] sm:$0xff]
    %v178 = vld [vmem:[#allocation2 + $0x90] sm:$0xff]
    %v179 = vld [vmem:[#allocation2 + $0x98] sm:$0xff]
    %v180 = vld [vmem:[#allocation2 + $0xa0] sm:$0xff]
    %v181 = vld [vmem:[#allocation2 + $0xa8] sm:$0xff]
    %v182 = vld [vmem:[#allocation2 + $0xb0] sm:$0xff]
    %v183 = vld [vmem:[#allocation2 + $0xb8] sm:$0xff]
    %v184 = vld [vmem:[#allocation2 + $0xc0] sm:$0xff]
    %v185 = vld [vmem:[#allocation2 + $0xc8] sm:$0xff]
    %v186 = vld [vmem:[#allocation2 + $0xd0] sm:$0xff]
    %v187 = vld [vmem:[#allocation2 + $0xd8] sm:$0xff]
    %v188 = vld [vmem:[#allocation2 + $0xe0] sm:$0xff]
    %v189 = vld [vmem:[#allocation2 + $0xe8] sm:$0xff]
    %v190 = vld [vmem:[#allocation2 + $0xf0] sm:$0xff]
    %v191 = vld [vmem:[#allocation2 + $0xf8] sm:$0xff]
    %v192 = vld [vmem:[#allocation2 + $0x100] sm:$0xff]
    %v193 = vld [vmem:[#allocation2 + $0x108] sm:$0xff]
    %v194 = vld [vmem:[#allocation2 + $0x110] sm:$0xff]
    %v195 = vld [vmem:[#allocation2 + $0x118] sm:$0xff]
    %v196 = vld [vmem:[#allocation2 + $0x120] sm:$0xff]
    %v197 = vld [vmem:[#allocation2 + $0x128] sm:$0xff]
    %v198 = vld [vmem:[#allocation2 + $0x130] sm:$0xff]
    %v199 = vld [vmem:[#allocation2 + $0x138] sm:$0xff]
    %v200 = vld [vmem:[#allocation2 + $0x140] sm:$0xff]
    %v201 = vld [vmem:[#allocation2 + $0x148] sm:$0xff]
    %v202 = vld [vmem:[#allocation2 + $0x150] sm:$0xff]
    %v203 = vld [vmem:[#allocation2 + $0x158] sm:$0xff]
    %v204 = vld [vmem:[#allocation2 + $0x160] sm:$0xff]
    %v205 = vld [vmem:[#allocation2 + $0x168] sm:$0xff]
    %v206 = vld [vmem:[#allocation2 + $0x170] sm:$0xff]
    %v207 = vld [vmem:[#allocation2 + $0x178] sm:$0xff]
    %v208 = vld [vmem:[#allocation2 + $0x180] sm:$0xff]
    %v209 = vld [vmem:[#allocation2 + $0x188] sm:$0xff]
    %v210 = vld [vmem:[#allocation2 + $0x190] sm:$0xff]
    %v211 = vld [vmem:[#allocation2 + $0x198] sm:$0xff]
    %v212 = vld [vmem:[#allocation2 + $0x1a0] sm:$0xff]
    %v213 = vld [vmem:[#allocation2 + $0x1a8] sm:$0xff]
    %v214 = vld [vmem:[#allocation2 + $0x1b0] sm:$0xff]
    %v215 = vld [vmem:[#allocation2 + $0x1b8] sm:$0xff]
    %v216 = vld [vmem:[#allocation2 + $0x1c0] sm:$0xff]
    %v217 = vld [vmem:[#allocation2 + $0x1c8] sm:$0xff]
    %v218 = vld [vmem:[#allocation2 + $0x1d0] sm:$0xff]
    %v219 = vld [vmem:[#allocation2 + $0x1d8] sm:$0xff]
    %v220 = vld [vmem:[#allocation2 + $0x1e0] sm:$0xff]
    %v221 = vld [vmem:[#allocation2 + $0x1e8] sm:$0xff]
    %v222 = vld [vmem:[#allocation2 + $0x1f0] sm:$0xff]
    %v223 = vld [vmem:[#allocation2 + $0x1f8] sm:$0xff]
    %v224 = vld [vmem:[#allocation7] sm:$0xff]
    %v225 = vld [vmem:[#allocation7 + $0x8] sm:$0xff]
    %v226 = vld [vmem:[#allocation7 + $0x10] sm:$0xff]
    %v227 = vld [vmem:[#allocation7 + $0x18] sm:$0xff]
    %v228 = vld [vmem:[#allocation7 + $0x20] sm:$0xff]
    %v229 = vld [vmem:[#allocation7 + $0x28] sm:$0xff]
    %v230 = vld [vmem:[#allocation7 + $0x30] sm:$0xff]
    %v231 = vld [vmem:[#allocation7 + $0x38] sm:$0xff]
    %v232 = vld [vmem:[#allocation7 + $0x40] sm:$0xff]
    %v233 = vld [vmem:[#allocation7 + $0x48] sm:$0xff]
    %v234 = vld [vmem:[#allocation7 + $0x50] sm:$0xff]
    %v235 = vld [vmem:[#allocation7 + $0x58] sm:$0xff]
    %v236 = vld [vmem:[#allocation7 + $0x60] sm:$0xff]
    %v237 = vld [vmem:[#allocation7 + $0x68] sm:$0xff]
    %v238 = vld [vmem:[#allocation7 + $0x70] sm:$0xff]
    %v239 = vld [vmem:[#allocation7 + $0x78] sm:$0xff]
    %v240 = vld [vmem:[#allocation7 + $0x80] sm:$0xff]
    %v241 = vld [vmem:[#allocation7 + $0x88] sm:$0xff]
    %v242 = vld [vmem:[#allocation7 + $0x90] sm:$0xff]
    %v243 = vld [vmem:[#allocation7 + $0x98] sm:$0xff]
    %v244 = vld [vmem:[#allocation7 + $0xa0] sm:$0xff]
    %v245 = vld [vmem:[#allocation7 + $0xa8] sm:$0xff]
    %v246 = vld [vmem:[#allocation7 + $0xb0] sm:$0xff]
    %v247 = vld [vmem:[#allocation7 + $0xb8] sm:$0xff]
    %v248 = vld [vmem:[#allocation7 + $0xc0] sm:$0xff]
    %v249 = vld [vmem:[#allocation7 + $0xc8] sm:$0xff]
    %v250 = vld [vmem:[#allocation7 + $0xd0] sm:$0xff]
    %v251 = vld [vmem:[#allocation7 + $0xd8] sm:$0xff]
    %v252 = vld [vmem:[#allocation7 + $0xe0] sm:$0xff]
    %v253 = vld [vmem:[#allocation7 + $0xe8] sm:$0xff]
    %v254 = vld [vmem:[#allocation7 + $0xf0] sm:$0xff]
    %v255 = vld [vmem:[#allocation7 + $0xf8] sm:$0xff]
    %v256 = vld [vmem:[%s3] sm:$0x1]
    %v258 = vlaneseq
    %v259 = vshrl.u32 %v258, 7
    %v260 = vsub.s32 0, %v259
    %v261 = vrot.slane %v256, %v260
    %263 = vmatprep.subr.mxu0 0.0
    %264 = vmatpush1.msra.mxu0 %v239
    %265 = vmatprep.subr.mxu0 0.0
    %266 = vmatpush1.msra.mxu0 %v238
    %267 = vmatprep.subr.mxu0 0.0
    %268 = vmatpush1.msra.mxu0 %v237
    %269 = vmatprep.subr.mxu0 0.0
    %270 = vmatpush1.msra.mxu0 %v236
    %271 = vmatprep.subr.mxu0 0.0
    %272 = vmatpush1.msra.mxu0 %v235
    %273 = vmatprep.subr.mxu0 0.0
    %274 = vmatpush1.msra.mxu0 %v234
    %275 = vmatprep.subr.mxu0 0.0
    %276 = vmatpush1.msra.mxu0 %v233
    %277 = vmatprep.subr.mxu0 0.0
    %278 = vmatpush1.msra.mxu0 %v232
    %279 = vmatprep.subr.mxu0 0.0
    %280 = vmatpush1.msra.mxu0 %v231
    %281 = vmatprep.subr.mxu0 0.0
    %282 = vmatpush1.msra.mxu0 %v230
    %283 = vmatprep.subr.mxu0 0.0
    %284 = vmatpush1.msra.mxu0 %v229
    %285 = vmatprep.subr.mxu0 0.0
    %286 = vmatpush1.msra.mxu0 %v228
    %287 = vmatprep.subr.mxu0 0.0
    %288 = vmatpush1.msra.mxu0 %v227
    %289 = vmatprep.subr.mxu0 0.0
    %290 = vmatpush1.msra.mxu0 %v226
    %291 = vmatprep.subr.mxu0 0.0
    %292 = vmatpush1.msra.mxu0 %v225
    %293 = vmatprep.subr.mxu0 0.0
    %294 = vmatpush1.msra.mxu0 %v224
    %295 = vmatprep.subr.mxu0 0.0
    %296 = vmatpush2.msra.mxu0 %v255
    %297 = vmatprep.subr.mxu0 0.0
    %298 = vmatpush2.msra.mxu0 %v254
    %299 = vmatprep.subr.mxu0 0.0
    %300 = vmatpush2.msra.mxu0 %v253
    %301 = vmatprep.subr.mxu0 0.0
    %302 = vmatpush2.msra.mxu0 %v252
    %303 = vmatprep.subr.mxu0 0.0
    %304 = vmatpush2.msra.mxu0 %v251
    %305 = vmatprep.subr.mxu0 0.0
    %306 = vmatpush2.msra.mxu0 %v250
    %307 = vmatprep.subr.mxu0 0.0
    %308 = vmatpush2.msra.mxu0 %v249
    %309 = vmatprep.subr.mxu0 0.0
    %310 = vmatpush2.msra.mxu0 %v248
    %311 = vmatprep.subr.mxu0 0.0
    %312 = vmatpush2.msra.mxu0 %v247
    %313 = vmatprep.subr.mxu0 0.0
    %314 = vmatpush2.msra.mxu0 %v246
    %315 = vmatprep.subr.mxu0 0.0
    %316 = vmatpush2.msra.mxu0 %v245
    %317 = vmatprep.subr.mxu0 0.0
    %318 = vmatpush2.msra.mxu0 %v244
    %319 = vmatprep.subr.mxu0 0.0
    %320 = vmatpush2.msra.mxu0 %v243
    %321 = vmatprep.subr.mxu0 0.0
    %322 = vmatpush2.msra.mxu0 %v242
    %323 = vmatprep.subr.mxu0 0.0
    %324 = vmatpush2.msra.mxu0 %v241
    %325 = vmatprep.subr.mxu0 0.0
    %326 = vmatpush2.msra.mxu0 %v240
    %327 = vmatprep.mubr.f32.mxu0 %v161
    %328 = vmatmul.mubr.f32.gmra.mxu0 %v160
    %v329 = vpop.f32.mrf.mxu0
    %v330 = vadd.f32 %v261, %v329
    %v331 = vpop.f32.mrf.mxu0
    %332 = vmatprep.mubr.f32.mxu0 %v163
    %333 = vmatmul.mubr.f32.gmra.mxu0 %v162
    %v334 = vpop.f32.mrf.mxu0
    %v335 = vadd.f32 %v261, %v334
    %v336 = vpop.f32.mrf.mxu0
    %337 = vmatprep.mubr.f32.mxu0 %v165
    %338 = vmatmul.mubr.f32.gmra.mxu0 %v164
    %v339 = vpop.f32.mrf.mxu0
    %v340 = vadd.f32 %v261, %v339
    %v341 = vpop.f32.mrf.mxu0
    %342 = vmatprep.mubr.f32.mxu0 %v167
    %343 = vmatmul.mubr.f32.gmra.mxu0 %v166
    %v344 = vpop.f32.mrf.mxu0
    %v345 = vadd.f32 %v261, %v344
    %v346 = vpop.f32.mrf.mxu0
    %347 = vmatprep.mubr.f32.mxu0 %v169
    %348 = vmatmul.mubr.f32.gmra.mxu0 %v168
    %v349 = vpop.f32.mrf.mxu0
    %v350 = vadd.f32 %v261, %v349
    %v351 = vpop.f32.mrf.mxu0
    %352 = vmatprep.mubr.f32.mxu0 %v171
    %353 = vmatmul.mubr.f32.gmra.mxu0 %v170
    %v354 = vpop.f32.mrf.mxu0
    %v355 = vadd.f32 %v261, %v354
    %v356 = vpop.f32.mrf.mxu0
    %357 = vmatprep.mubr.f32.mxu0 %v173
    %358 = vmatmul.mubr.f32.gmra.mxu0 %v172
    %v359 = vpop.f32.mrf.mxu0
    %v360 = vadd.f32 %v261, %v359
    %v361 = vpop.f32.mrf.mxu0
    %362 = vmatprep.mubr.f32.mxu0 %v175
    %363 = vmatmul.mubr.f32.gmra.mxu0 %v174
    %v364 = vpop.f32.mrf.mxu0
    %v365 = vadd.f32 %v261, %v364
    %v366 = vpop.f32.mrf.mxu0
    %367 = vmatprep.mubr.f32.mxu0 %v177
    %368 = vmatmul.mubr.f32.gmra.mxu0 %v176
    %v369 = vpop.f32.mrf.mxu0
    %v370 = vadd.f32 %v261, %v369
    %v371 = vpop.f32.mrf.mxu0
    %372 = vmatprep.mubr.f32.mxu0 %v179
    %373 = vmatmul.mubr.f32.gmra.mxu0 %v178
    %v374 = vpop.f32.mrf.mxu0
    %v375 = vadd.f32 %v261, %v374
    %v376 = vpop.f32.mrf.mxu0
    %377 = vmatprep.mubr.f32.mxu0 %v181
    %378 = vmatmul.mubr.f32.gmra.mxu0 %v180
    %v379 = vpop.f32.mrf.mxu0
    %v380 = vadd.f32 %v261, %v379
    %v381 = vpop.f32.mrf.mxu0
    %382 = vmatprep.mubr.f32.mxu0 %v183
    %383 = vmatmul.mubr.f32.gmra.mxu0 %v182
    %v384 = vpop.f32.mrf.mxu0
    %v385 = vadd.f32 %v261, %v384
    %v386 = vpop.f32.mrf.mxu0
    %387 = vmatprep.mubr.f32.mxu0 %v185
    %388 = vmatmul.mubr.f32.gmra.mxu0 %v184
    %v389 = vpop.f32.mrf.mxu0
    %v390 = vadd.f32 %v261, %v389
    %v391 = vpop.f32.mrf.mxu0
    %392 = vmatprep.mubr.f32.mxu0 %v187
    %393 = vmatmul.mubr.f32.gmra.mxu0 %v186
    %v394 = vpop.f32.mrf.mxu0
    %v395 = vadd.f32 %v261, %v394
    %v396 = vpop.f32.mrf.mxu0
    %397 = vmatprep.mubr.f32.mxu0 %v189
    %398 = vmatmul.mubr.f32.gmra.mxu0 %v188
    %v399 = vpop.f32.mrf.mxu0
    %v400 = vadd.f32 %v261, %v399
    %v401 = vpop.f32.mrf.mxu0
    %402 = vmatprep.mubr.f32.mxu0 %v191
    %403 = vmatmul.mubr.f32.gmra.mxu0 %v190
    %v404 = vpop.f32.mrf.mxu0
    %v405 = vadd.f32 %v261, %v404
    %v406 = vpop.f32.mrf.mxu0
    %407 = vmatprep.mubr.f32.mxu0 %v193
    %408 = vmatmul.mubr.f32.gmra.mxu0 %v192
    %v409 = vpop.f32.mrf.mxu0
    %v410 = vadd.f32 %v261, %v409
    %v411 = vpop.f32.mrf.mxu0
    %412 = vmatprep.mubr.f32.mxu0 %v195
    %413 = vmatmul.mubr.f32.gmra.mxu0 %v194
    %v414 = vpop.f32.mrf.mxu0
    %v415 = vadd.f32 %v261, %v414
    %v416 = vpop.f32.mrf.mxu0
    %417 = vmatprep.mubr.f32.mxu0 %v197
    %418 = vmatmul.mubr.f32.gmra.mxu0 %v196
    %v419 = vpop.f32.mrf.mxu0
    %v420 = vadd.f32 %v261, %v419
    %v421 = vpop.f32.mrf.mxu0
    %422 = vmatprep.mubr.f32.mxu0 %v199
    %423 = vmatmul.mubr.f32.gmra.mxu0 %v198
    %v424 = vpop.f32.mrf.mxu0
    %v425 = vadd.f32 %v261, %v424
    %v426 = vpop.f32.mrf.mxu0
    %427 = vmatprep.mubr.f32.mxu0 %v201
    %428 = vmatmul.mubr.f32.gmra.mxu0 %v200
    %v429 = vpop.f32.mrf.mxu0
    %v430 = vadd.f32 %v261, %v429
    %v431 = vpop.f32.mrf.mxu0
    %432 = vmatprep.mubr.f32.mxu0 %v203
    %433 = vmatmul.mubr.f32.gmra.mxu0 %v202
    %v434 = vpop.f32.mrf.mxu0
    %v435 = vadd.f32 %v261, %v434
    %v436 = vpop.f32.mrf.mxu0
    %437 = vmatprep.mubr.f32.mxu0 %v205
    %438 = vmatmul.mubr.f32.gmra.mxu0 %v204
    %v439 = vpop.f32.mrf.mxu0
    %v440 = vadd.f32 %v261, %v439
    %v441 = vpop.f32.mrf.mxu0
    %442 = vmatprep.mubr.f32.mxu0 %v207
    %443 = vmatmul.mubr.f32.gmra.mxu0 %v206
    %v444 = vpop.f32.mrf.mxu0
    %v445 = vadd.f32 %v261, %v444
    %v446 = vpop.f32.mrf.mxu0
    %447 = vmatprep.mubr.f32.mxu0 %v209
    %448 = vmatmul.mubr.f32.gmra.mxu0 %v208
    %v449 = vpop.f32.mrf.mxu0
    %v450 = vadd.f32 %v261, %v449
    %v451 = vpop.f32.mrf.mxu0
    %452 = vmatprep.mubr.f32.mxu0 %v211
    %453 = vmatmul.mubr.f32.gmra.mxu0 %v210
    %v454 = vpop.f32.mrf.mxu0
    %v455 = vadd.f32 %v261, %v454
    %v456 = vpop.f32.mrf.mxu0
    %457 = vmatprep.mubr.f32.mxu0 %v213
    %458 = vmatmul.mubr.f32.gmra.mxu0 %v212
    %v459 = vpop.f32.mrf.mxu0
    %v460 = vadd.f32 %v261, %v459
    %v461 = vpop.f32.mrf.mxu0
    %462 = vmatprep.mubr.f32.mxu0 %v215
    %463 = vmatmul.mubr.f32.gmra.mxu0 %v214
    %v464 = vpop.f32.mrf.mxu0
    %v465 = vadd.f32 %v261, %v464
    %v466 = vpop.f32.mrf.mxu0
    %467 = vmatprep.mubr.f32.mxu0 %v217
    %468 = vmatmul.mubr.f32.gmra.mxu0 %v216
    %v469 = vpop.f32.mrf.mxu0
    %v470 = vadd.f32 %v261, %v469
    %v471 = vpop.f32.mrf.mxu0
    %472 = vmatprep.mubr.f32.mxu0 %v219
    %473 = vmatmul.mubr.f32.gmra.mxu0 %v218
    %v474 = vpop.f32.mrf.mxu0
    %v475 = vadd.f32 %v261, %v474
    %v476 = vpop.f32.mrf.mxu0
    %477 = vmatprep.mubr.f32.mxu0 %v221
    %478 = vmatmul.mubr.f32.gmra.mxu0 %v220
    %v479 = vpop.f32.mrf.mxu0
    %v480 = vadd.f32 %v261, %v479
    %v481 = vpop.f32.mrf.mxu0
    %482 = vmatprep.mubr.f32.mxu0 %v223
    %483 = vmatmul.mubr.f32.gmra.mxu0 %v222
    %v484 = vpop.f32.mrf.mxu0
    %v485 = vadd.f32 %v261, %v484
    %v486 = vpop.f32.mrf.mxu0
    %487 = vdwg.mxu0
    %v488 = vmax.f32 %v330, 0.0
    %v489 = vmax.f32 %v335, 0.0
    %v490 = vmax.f32 %v340, 0.0
    %v491 = vmax.f32 %v345, 0.0
    %v492 = vmax.f32 %v350, 0.0
    %v493 = vmax.f32 %v355, 0.0
    %v494 = vmax.f32 %v360, 0.0
    %v495 = vmax.f32 %v365, 0.0
    %v496 = vmax.f32 %v370, 0.0
    %v497 = vmax.f32 %v375, 0.0
    %v498 = vmax.f32 %v380, 0.0
    %v499 = vmax.f32 %v385, 0.0
    %v500 = vmax.f32 %v390, 0.0
    %v501 = vmax.f32 %v395, 0.0
    %v502 = vmax.f32 %v400, 0.0
    %v503 = vmax.f32 %v405, 0.0
    %v504 = vmax.f32 %v410, 0.0
    %v505 = vmax.f32 %v415, 0.0
    %v506 = vmax.f32 %v420, 0.0
    %v507 = vmax.f32 %v425, 0.0
    %v508 = vmax.f32 %v430, 0.0
    %v509 = vmax.f32 %v435, 0.0
    %v510 = vmax.f32 %v440, 0.0
    %v511 = vmax.f32 %v445, 0.0
    %v512 = vmax.f32 %v450, 0.0
    %v513 = vmax.f32 %v455, 0.0
    %v514 = vmax.f32 %v460, 0.0
    %v515 = vmax.f32 %v465, 0.0
    %v516 = vmax.f32 %v470, 0.0
    %v517 = vmax.f32 %v475, 0.0
    %v518 = vmax.f32 %v480, 0.0
    %v519 = vmax.f32 %v485, 0.0
    %v520 = vld [vmem:[#allocation8] sm:$0xff]
    %v521 = vld [vmem:[#allocation8 + $0x8] sm:$0xff]
    %v522 = vld [vmem:[#allocation8 + $0x10] sm:$0xff]
    %v523 = vld [vmem:[#allocation8 + $0x18] sm:$0xff]
    %v524 = vld [vmem:[#allocation8 + $0x20] sm:$0xff]
    %v525 = vld [vmem:[#allocation8 + $0x28] sm:$0xff]
    %v526 = vld [vmem:[#allocation8 + $0x30] sm:$0xff]
    %v527 = vld [vmem:[#allocation8 + $0x38] sm:$0xff]
    %v528 = vld [vmem:[#allocation8 + $0x40] sm:$0xff]
    %v529 = vld [vmem:[#allocation8 + $0x48] sm:$0xff]
    %v530 = vld [vmem:[#allocation8 + $0x50] sm:$0xff]
    %v531 = vld [vmem:[#allocation8 + $0x58] sm:$0xff]
    %v532 = vld [vmem:[#allocation8 + $0x60] sm:$0xff]
    %v533 = vld [vmem:[#allocation8 + $0x68] sm:$0xff]
    %v534 = vld [vmem:[#allocation8 + $0x70] sm:$0xff]
    %v535 = vld [vmem:[#allocation8 + $0x78] sm:$0xff]
    %v536 = vld [vmem:[%s5] sm:$0x1]
    %v538 = vlaneseq
    %v539 = vshrl.u32 %v538, 7
    %v540 = vsub.s32 0, %v539
    %v541 = vrot.slane %v536, %v540
    %543 = vmatprep.subr.mxu0 0.0
    %544 = vmatpush1.msra.mxu0 %v535
    %545 = vmatprep.subr.mxu0 0.0
    %546 = vmatpush1.msra.mxu0 %v534
    %547 = vmatprep.subr.mxu0 0.0
    %548 = vmatpush1.msra.mxu0 %v533
    %549 = vmatprep.subr.mxu0 0.0
    %550 = vmatpush1.msra.mxu0 %v532
    %551 = vmatprep.subr.mxu0 0.0
    %552 = vmatpush1.msra.mxu0 %v531
    %553 = vmatprep.subr.mxu0 0.0
    %554 = vmatpush1.msra.mxu0 %v530
    %555 = vmatprep.subr.mxu0 0.0
    %556 = vmatpush1.msra.mxu0 %v529
    %557 = vmatprep.subr.mxu0 0.0
    %558 = vmatpush1.msra.mxu0 %v528
    %559 = vmatprep.subr.mxu0 0.0
    %560 = vmatpush1.msra.mxu0 %v527
    %561 = vmatprep.subr.mxu0 0.0
    %562 = vmatpush1.msra.mxu0 %v526
    %563 = vmatprep.subr.mxu0 0.0
    %564 = vmatpush1.msra.mxu0 %v525
    %565 = vmatprep.subr.mxu0 0.0
    %566 = vmatpush1.msra.mxu0 %v524
    %567 = vmatprep.subr.mxu0 0.0
    %568 = vmatpush1.msra.mxu0 %v523
    %569 = vmatprep.subr.mxu0 0.0
    %570 = vmatpush1.msra.mxu0 %v522
    %571 = vmatprep.subr.mxu0 0.0
    %572 = vmatpush1.msra.mxu0 %v521
    %573 = vmatprep.subr.mxu0 0.0
    %574 = vmatpush1.msra.mxu0 %v520
    %575 = vmatprep.subr.mxu0 0.0
    %576 = vmatpush2.msra.mxu0 0.0
    %577 = vmatprep.subr.mxu0 0.0
    %578 = vmatpush2.msra.mxu0 0.0
    %579 = vmatprep.subr.mxu0 0.0
    %580 = vmatpush2.msra.mxu0 0.0
    %581 = vmatprep.subr.mxu0 0.0
    %582 = vmatpush2.msra.mxu0 0.0
    %583 = vmatprep.subr.mxu0 0.0
    %584 = vmatpush2.msra.mxu0 0.0
    %585 = vmatprep.subr.mxu0 0.0
    %586 = vmatpush2.msra.mxu0 0.0
    %587 = vmatprep.subr.mxu0 0.0
    %588 = vmatpush2.msra.mxu0 0.0
    %589 = vmatprep.subr.mxu0 0.0
    %590 = vmatpush2.msra.mxu0 0.0
    %591 = vmatprep.subr.mxu0 0.0
    %592 = vmatpush2.msra.mxu0 0.0
    %593 = vmatprep.subr.mxu0 0.0
    %594 = vmatpush2.msra.mxu0 0.0
    %595 = vmatprep.subr.mxu0 0.0
    %596 = vmatpush2.msra.mxu0 0.0
    %597 = vmatprep.subr.mxu0 0.0
    %598 = vmatpush2.msra.mxu0 0.0
    %599 = vmatprep.subr.mxu0 0.0
    %600 = vmatpush2.msra.mxu0 0.0
    %601 = vmatprep.subr.mxu0 0.0
    %602 = vmatpush2.msra.mxu0 0.0
    %603 = vmatprep.subr.mxu0 0.0
    %604 = vmatpush2.msra.mxu0 0.0
    %605 = vmatprep.subr.mxu0 0.0
    %606 = vmatpush2.msra.mxu0 0.0
    %607 = vmatprep.mubr.f32.mxu0 0.0
    %608 = vmatmul.mubr.f32.gmra.mxu0 %v488
    %v609 = vpop.f32.mrf.mxu0
    %v610 = vadd.f32 %v541, %v609
    %v611 = vpop.f32.mrf.mxu0
    %612 = vmatprep.mubr.f32.mxu0 0.0
    %613 = vmatmul.mubr.f32.gmra.mxu0 %v489
    %v614 = vpop.f32.mrf.mxu0
    %v615 = vadd.f32 %v541, %v614
    %v616 = vpop.f32.mrf.mxu0
    %617 = vmatprep.mubr.f32.mxu0 0.0
    %618 = vmatmul.mubr.f32.gmra.mxu0 %v490
    %v619 = vpop.f32.mrf.mxu0
    %v620 = vadd.f32 %v541, %v619
    %v621 = vpop.f32.mrf.mxu0
    %622 = vmatprep.mubr.f32.mxu0 0.0
    %623 = vmatmul.mubr.f32.gmra.mxu0 %v491
    %v624 = vpop.f32.mrf.mxu0
    %v625 = vadd.f32 %v541, %v624
    %v626 = vpop.f32.mrf.mxu0
    %627 = vmatprep.mubr.f32.mxu0 0.0
    %628 = vmatmul.mubr.f32.gmra.mxu0 %v492
    %v629 = vpop.f32.mrf.mxu0
    %v630 = vadd.f32 %v541, %v629
    %v631 = vpop.f32.mrf.mxu0
    %632 = vmatprep.mubr.f32.mxu0 0.0
    %633 = vmatmul.mubr.f32.gmra.mxu0 %v493
    %v634 = vpop.f32.mrf.mxu0
    %v635 = vadd.f32 %v541, %v634
    %v636 = vpop.f32.mrf.mxu0
    %637 = vmatprep.mubr.f32.mxu0 0.0
    %638 = vmatmul.mubr.f32.gmra.mxu0 %v494
    %v639 = vpop.f32.mrf.mxu0
    %v640 = vadd.f32 %v541, %v639
    %v641 = vpop.f32.mrf.mxu0
    %642 = vmatprep.mubr.f32.mxu0 0.0
    %643 = vmatmul.mubr.f32.gmra.mxu0 %v495
    %v644 = vpop.f32.mrf.mxu0
    %v645 = vadd.f32 %v541, %v644
    %v646 = vpop.f32.mrf.mxu0
    %647 = vmatprep.mubr.f32.mxu0 0.0
    %648 = vmatmul.mubr.f32.gmra.mxu0 %v496
    %v649 = vpop.f32.mrf.mxu0
    %v650 = vadd.f32 %v541, %v649
    %v651 = vpop.f32.mrf.mxu0
    %652 = vmatprep.mubr.f32.mxu0 0.0
    %653 = vmatmul.mubr.f32.gmra.mxu0 %v497
    %v654 = vpop.f32.mrf.mxu0
    %v655 = vadd.f32 %v541, %v654
    %v656 = vpop.f32.mrf.mxu0
    %657 = vmatprep.mubr.f32.mxu0 0.0
    %658 = vmatmul.mubr.f32.gmra.mxu0 %v498
    %v659 = vpop.f32.mrf.mxu0
    %v660 = vadd.f32 %v541, %v659
    %v661 = vpop.f32.mrf.mxu0
    %662 = vmatprep.mubr.f32.mxu0 0.0
    %663 = vmatmul.mubr.f32.gmra.mxu0 %v499
    %v664 = vpop.f32.mrf.mxu0
    %v665 = vadd.f32 %v541, %v664
    %v666 = vpop.f32.mrf.mxu0
    %667 = vmatprep.mubr.f32.mxu0 0.0
    %668 = vmatmul.mubr.f32.gmra.mxu0 %v500
    %v669 = vpop.f32.mrf.mxu0
    %v670 = vadd.f32 %v541, %v669
    %v671 = vpop.f32.mrf.mxu0
    %672 = vmatprep.mubr.f32.mxu0 0.0
    %673 = vmatmul.mubr.f32.gmra.mxu0 %v501
    %v674 = vpop.f32.mrf.mxu0
    %v675 = vadd.f32 %v541, %v674
    %v676 = vpop.f32.mrf.mxu0
    %677 = vmatprep.mubr.f32.mxu0 0.0
    %678 = vmatmul.mubr.f32.gmra.mxu0 %v502
    %v679 = vpop.f32.mrf.mxu0
    %v680 = vadd.f32 %v541, %v679
    %v681 = vpop.f32.mrf.mxu0
    %682 = vmatprep.mubr.f32.mxu0 0.0
    %683 = vmatmul.mubr.f32.gmra.mxu0 %v503
    %v684 = vpop.f32.mrf.mxu0
    %v685 = vadd.f32 %v541, %v684
    %v686 = vpop.f32.mrf.mxu0
    %687 = vmatprep.mubr.f32.mxu0 0.0
    %688 = vmatmul.mubr.f32.gmra.mxu0 %v504
    %v689 = vpop.f32.mrf.mxu0
    %v690 = vadd.f32 %v541, %v689
    %v691 = vpop.f32.mrf.mxu0
    %692 = vmatprep.mubr.f32.mxu0 0.0
    %693 = vmatmul.mubr.f32.gmra.mxu0 %v505
    %v694 = vpop.f32.mrf.mxu0
    %v695 = vadd.f32 %v541, %v694
    %v696 = vpop.f32.mrf.mxu0
    %697 = vmatprep.mubr.f32.mxu0 0.0
    %698 = vmatmul.mubr.f32.gmra.mxu0 %v506
    %v699 = vpop.f32.mrf.mxu0
    %v700 = vadd.f32 %v541, %v699
    %v701 = vpop.f32.mrf.mxu0
    %702 = vmatprep.mubr.f32.mxu0 0.0
    %703 = vmatmul.mubr.f32.gmra.mxu0 %v507
    %v704 = vpop.f32.mrf.mxu0
    %v705 = vadd.f32 %v541, %v704
    %v706 = vpop.f32.mrf.mxu0
    %707 = vmatprep.mubr.f32.mxu0 0.0
    %708 = vmatmul.mubr.f32.gmra.mxu0 %v508
    %v709 = vpop.f32.mrf.mxu0
    %v710 = vadd.f32 %v541, %v709
    %v711 = vpop.f32.mrf.mxu0
    %712 = vmatprep.mubr.f32.mxu0 0.0
    %713 = vmatmul.mubr.f32.gmra.mxu0 %v509
    %v714 = vpop.f32.mrf.mxu0
    %v715 = vadd.f32 %v541, %v714
    %v716 = vpop.f32.mrf.mxu0
    %717 = vmatprep.mubr.f32.mxu0 0.0
    %718 = vmatmul.mubr.f32.gmra.mxu0 %v510
    %v719 = vpop.f32.mrf.mxu0
    %v720 = vadd.f32 %v541, %v719
    %v721 = vpop.f32.mrf.mxu0
    %722 = vmatprep.mubr.f32.mxu0 0.0
    %723 = vmatmul.mubr.f32.gmra.mxu0 %v511
    %v724 = vpop.f32.mrf.mxu0
    %v725 = vadd.f32 %v541, %v724
    %v726 = vpop.f32.mrf.mxu0
    %727 = vmatprep.mubr.f32.mxu0 0.0
    %728 = vmatmul.mubr.f32.gmra.mxu0 %v512
    %v729 = vpop.f32.mrf.mxu0
    %v730 = vadd.f32 %v541, %v729
    %v731 = vpop.f32.mrf.mxu0
    %732 = vmatprep.mubr.f32.mxu0 0.0
    %733 = vmatmul.mubr.f32.gmra.mxu0 %v513
    %v734 = vpop.f32.mrf.mxu0
    %v735 = vadd.f32 %v541, %v734
    %v736 = vpop.f32.mrf.mxu0
    %737 = vmatprep.mubr.f32.mxu0 0.0
    %738 = vmatmul.mubr.f32.gmra.mxu0 %v514
    %v739 = vpop.f32.mrf.mxu0
    %v740 = vadd.f32 %v541, %v739
    %v741 = vpop.f32.mrf.mxu0
    %742 = vmatprep.mubr.f32.mxu0 0.0
    %743 = vmatmul.mubr.f32.gmra.mxu0 %v515
    %v744 = vpop.f32.mrf.mxu0
    %v745 = vadd.f32 %v541, %v744
    %v746 = vpop.f32.mrf.mxu0
    %747 = vmatprep.mubr.f32.mxu0 0.0
    %748 = vmatmul.mubr.f32.gmra.mxu0 %v516
    %v749 = vpop.f32.mrf.mxu0
    %v750 = vadd.f32 %v541, %v749
    %v751 = vpop.f32.mrf.mxu0
    %752 = vmatprep.mubr.f32.mxu0 0.0
    %753 = vmatmul.mubr.f32.gmra.mxu0 %v517
    %v754 = vpop.f32.mrf.mxu0
    %v755 = vadd.f32 %v541, %v754
    %v756 = vpop.f32.mrf.mxu0
    %757 = vmatprep.mubr.f32.mxu0 0.0
    %758 = vmatmul.mubr.f32.gmra.mxu0 %v518
    %v759 = vpop.f32.mrf.mxu0
    %v760 = vadd.f32 %v541, %v759
    %v761 = vpop.f32.mrf.mxu0
    %762 = vmatprep.mubr.f32.mxu0 0.0
    %763 = vmatmul.mubr.f32.gmra.mxu0 %v519
    %v764 = vpop.f32.mrf.mxu0
    %v765 = vadd.f32 %v541, %v764
    %v766 = vpop.f32.mrf.mxu0
    %767 = vdwg.mxu0
    %v768 = vmax.f32 %v610, 0.0
    %v769 = vmax.f32 %v615, 0.0
    %v770 = vmax.f32 %v620, 0.0
    %v771 = vmax.f32 %v625, 0.0
    %v772 = vmax.f32 %v630, 0.0
    %v773 = vmax.f32 %v635, 0.0
    %v774 = vmax.f32 %v640, 0.0
    %v775 = vmax.f32 %v645, 0.0
    %v776 = vmax.f32 %v650, 0.0
    %v777 = vmax.f32 %v655, 0.0
    %v778 = vmax.f32 %v660, 0.0
    %v779 = vmax.f32 %v665, 0.0
    %v780 = vmax.f32 %v670, 0.0
    %v781 = vmax.f32 %v675, 0.0
    %v782 = vmax.f32 %v680, 0.0
    %v783 = vmax.f32 %v685, 0.0
    %v784 = vmax.f32 %v690, 0.0
    %v785 = vmax.f32 %v695, 0.0
    %v786 = vmax.f32 %v700, 0.0
    %v787 = vmax.f32 %v705, 0.0
    %v788 = vmax.f32 %v710, 0.0
    %v789 = vmax.f32 %v715, 0.0
    %v790 = vmax.f32 %v720, 0.0
    %v791 = vmax.f32 %v725, 0.0
    %v792 = vmax.f32 %v730, 0.0
    %v793 = vmax.f32 %v735, 0.0
    %v794 = vmax.f32 %v740, 0.0
    %v795 = vmax.f32 %v745, 0.0
    %v796 = vmax.f32 %v750, 0.0
    %v797 = vmax.f32 %v755, 0.0
    %v798 = vmax.f32 %v760, 0.0
    %v799 = vmax.f32 %v765, 0.0
    %v800 = vld [vmem:[#allocation10] sm:$0xff]
    %v801 = vld [vmem:[#allocation10 + $0x8] sm:$0xff]
    %v802 = vld [vmem:[#allocation10 + $0x10] sm:$0xff]
    %v803 = vld [vmem:[#allocation10 + $0x18] sm:$0xff]
    %v804 = vld [vmem:[#allocation10 + $0x20] sm:$0xff]
    %v805 = vld [vmem:[#allocation10 + $0x28] sm:$0xff]
    %v806 = vld [vmem:[#allocation10 + $0x30] sm:$0xff]
    %v807 = vld [vmem:[#allocation10 + $0x38] sm:$0xff]
    %v808 = vld [vmem:[#allocation10 + $0x40] sm:$0xff]
    %v809 = vld [vmem:[#allocation10 + $0x48] sm:$0xff]
    %v810 = vld [vmem:[#allocation10 + $0x50] sm:$0xff]
    %v811 = vld [vmem:[#allocation10 + $0x58] sm:$0xff]
    %v812 = vld [vmem:[#allocation10 + $0x60] sm:$0xff]
    %v813 = vld [vmem:[#allocation10 + $0x68] sm:$0xff]
    %v814 = vld [vmem:[#allocation10 + $0x70] sm:$0xff]
    %v815 = vld [vmem:[#allocation10 + $0x78] sm:$0xff]
    %v816 = vld [vmem:[#allocation10 + $0x80] sm:$0xff]
    %v817 = vld [vmem:[#allocation10 + $0x88] sm:$0xff]
    %v818 = vld [vmem:[#allocation10 + $0x90] sm:$0xff]
    %v819 = vld [vmem:[#allocation10 + $0x98] sm:$0xff]
    %v820 = vld [vmem:[#allocation10 + $0xa0] sm:$0xff]
    %v821 = vld [vmem:[#allocation10 + $0xa8] sm:$0xff]
    %v822 = vld [vmem:[#allocation10 + $0xb0] sm:$0xff]
    %v823 = vld [vmem:[#allocation10 + $0xb8] sm:$0xff]
    %v824 = vld [vmem:[#allocation10 + $0xc0] sm:$0xff]
    %v825 = vld [vmem:[#allocation10 + $0xc8] sm:$0xff]
    %v826 = vld [vmem:[#allocation10 + $0xd0] sm:$0xff]
    %v827 = vld [vmem:[#allocation10 + $0xd8] sm:$0xff]
    %v828 = vld [vmem:[#allocation10 + $0xe0] sm:$0xff]
    %v829 = vld [vmem:[#allocation10 + $0xe8] sm:$0xff]
    %v830 = vld [vmem:[#allocation10 + $0xf0] sm:$0xff]
    %v831 = vld [vmem:[#allocation10 + $0xf8] sm:$0xff]
    %v832 = vld [vmem:[%s7] sm:$0x3]
    %v834 = vlaneseq
    %v835 = vshrl.u32 %v834, 7
    %v836 = vsub.s32 0, %v835
    %v837 = vrot.slane %v832, %v836
    %v838 = vlaneseq
    %v839 = vshrl.u32 %v838, 7
    %v840 = vsub.s32 1, %v839
    %v841 = vrot.slane %v832, %v840
    %844 = vmatprep.subr.mxu0 %v831
    %845 = vmatpush1.msra.mxu0 %v830
    %846 = vmatprep.subr.mxu0 %v829
    %847 = vmatpush1.msra.mxu0 %v828
    %848 = vmatprep.subr.mxu0 %v827
    %849 = vmatpush1.msra.mxu0 %v826
    %850 = vmatprep.subr.mxu0 %v825
    %851 = vmatpush1.msra.mxu0 %v824
    %852 = vmatprep.subr.mxu0 %v823
    %853 = vmatpush1.msra.mxu0 %v822
    %854 = vmatprep.subr.mxu0 %v821
    %855 = vmatpush1.msra.mxu0 %v820
    %856 = vmatprep.subr.mxu0 %v819
    %857 = vmatpush1.msra.mxu0 %v818
    %858 = vmatprep.subr.mxu0 %v817
    %859 = vmatpush1.msra.mxu0 %v816
    %860 = vmatprep.subr.mxu0 %v815
    %861 = vmatpush1.msra.mxu0 %v814
    %862 = vmatprep.subr.mxu0 %v813
    %863 = vmatpush1.msra.mxu0 %v812
    %864 = vmatprep.subr.mxu0 %v811
    %865 = vmatpush1.msra.mxu0 %v810
    %866 = vmatprep.subr.mxu0 %v809
    %867 = vmatpush1.msra.mxu0 %v808
    %868 = vmatprep.subr.mxu0 %v807
    %869 = vmatpush1.msra.mxu0 %v806
    %870 = vmatprep.subr.mxu0 %v805
    %871 = vmatpush1.msra.mxu0 %v804
    %872 = vmatprep.subr.mxu0 %v803
    %873 = vmatpush1.msra.mxu0 %v802
    %874 = vmatprep.subr.mxu0 %v801
    %875 = vmatpush1.msra.mxu0 %v800
    %876 = vmatprep.subr.mxu0 0.0
    %877 = vmatpush2.msra.mxu0 0.0
    %878 = vmatprep.subr.mxu0 0.0
    %879 = vmatpush2.msra.mxu0 0.0
    %880 = vmatprep.subr.mxu0 0.0
    %881 = vmatpush2.msra.mxu0 0.0
    %882 = vmatprep.subr.mxu0 0.0
    %883 = vmatpush2.msra.mxu0 0.0
    %884 = vmatprep.subr.mxu0 0.0
    %885 = vmatpush2.msra.mxu0 0.0
    %886 = vmatprep.subr.mxu0 0.0
    %887 = vmatpush2.msra.mxu0 0.0
    %888 = vmatprep.subr.mxu0 0.0
    %889 = vmatpush2.msra.mxu0 0.0
    %890 = vmatprep.subr.mxu0 0.0
    %891 = vmatpush2.msra.mxu0 0.0
    %892 = vmatprep.subr.mxu0 0.0
    %893 = vmatpush2.msra.mxu0 0.0
    %894 = vmatprep.subr.mxu0 0.0
    %895 = vmatpush2.msra.mxu0 0.0
    %896 = vmatprep.subr.mxu0 0.0
    %897 = vmatpush2.msra.mxu0 0.0
    %898 = vmatprep.subr.mxu0 0.0
    %899 = vmatpush2.msra.mxu0 0.0
    %900 = vmatprep.subr.mxu0 0.0
    %901 = vmatpush2.msra.mxu0 0.0
    %902 = vmatprep.subr.mxu0 0.0
    %903 = vmatpush2.msra.mxu0 0.0
    %904 = vmatprep.subr.mxu0 0.0
    %905 = vmatpush2.msra.mxu0 0.0
    %906 = vmatprep.subr.mxu0 0.0
    %907 = vmatpush2.msra.mxu0 0.0
    %908 = vmatprep.mubr.f32.mxu0 0.0
    %909 = vmatmul.mubr.f32.gmra.mxu0 %v768
    %v910 = vpop.f32.mrf.mxu0
    %v911 = vadd.f32 %v837, %v910
    %v912 = vpop.f32.mrf.mxu0
    %v913 = vadd.f32 %v841, %v912
    %914 = vmatprep.mubr.f32.mxu0 0.0
    %915 = vmatmul.mubr.f32.gmra.mxu0 %v769
    %v916 = vpop.f32.mrf.mxu0
    %v917 = vadd.f32 %v837, %v916
    %v918 = vpop.f32.mrf.mxu0
    %v919 = vadd.f32 %v841, %v918
    %920 = vmatprep.mubr.f32.mxu0 0.0
    %921 = vmatmul.mubr.f32.gmra.mxu0 %v770
    %v922 = vpop.f32.mrf.mxu0
    %v923 = vadd.f32 %v837, %v922
    %v924 = vpop.f32.mrf.mxu0
    %v925 = vadd.f32 %v841, %v924
    %926 = vmatprep.mubr.f32.mxu0 0.0
    %927 = vmatmul.mubr.f32.gmra.mxu0 %v771
    %v928 = vpop.f32.mrf.mxu0
    %v929 = vadd.f32 %v837, %v928
    %v930 = vpop.f32.mrf.mxu0
    %v931 = vadd.f32 %v841, %v930
    %932 = vmatprep.mubr.f32.mxu0 0.0
    %933 = vmatmul.mubr.f32.gmra.mxu0 %v772
    %v934 = vpop.f32.mrf.mxu0
    %v935 = vadd.f32 %v837, %v934
    %v936 = vpop.f32.mrf.mxu0
    %v937 = vadd.f32 %v841, %v936
    %938 = vmatprep.mubr.f32.mxu0 0.0
    %939 = vmatmul.mubr.f32.gmra.mxu0 %v773
    %v940 = vpop.f32.mrf.mxu0
    %v941 = vadd.f32 %v837, %v940
    %v942 = vpop.f32.mrf.mxu0
    %v943 = vadd.f32 %v841, %v942
    %944 = vmatprep.mubr.f32.mxu0 0.0
    %945 = vmatmul.mubr.f32.gmra.mxu0 %v774
    %v946 = vpop.f32.mrf.mxu0
    %v947 = vadd.f32 %v837, %v946
    %v948 = vpop.f32.mrf.mxu0
    %v949 = vadd.f32 %v841, %v948
    %950 = vmatprep.mubr.f32.mxu0 0.0
    %951 = vmatmul.mubr.f32.gmra.mxu0 %v775
    %v952 = vpop.f32.mrf.mxu0
    %v953 = vadd.f32 %v837, %v952
    %v954 = vpop.f32.mrf.mxu0
    %v955 = vadd.f32 %v841, %v954
    %956 = vmatprep.mubr.f32.mxu0 0.0
    %957 = vmatmul.mubr.f32.gmra.mxu0 %v776
    %v958 = vpop.f32.mrf.mxu0
    %v959 = vadd.f32 %v837, %v958
    %v960 = vpop.f32.mrf.mxu0
    %v961 = vadd.f32 %v841, %v960
    %962 = vmatprep.mubr.f32.mxu0 0.0
    %963 = vmatmul.mubr.f32.gmra.mxu0 %v777
    %v964 = vpop.f32.mrf.mxu0
    %v965 = vadd.f32 %v837, %v964
    %v966 = vpop.f32.mrf.mxu0
    %v967 = vadd.f32 %v841, %v966
    %968 = vmatprep.mubr.f32.mxu0 0.0
    %969 = vmatmul.mubr.f32.gmra.mxu0 %v778
    %v970 = vpop.f32.mrf.mxu0
    %v971 = vadd.f32 %v837, %v970
    %v972 = vpop.f32.mrf.mxu0
    %v973 = vadd.f32 %v841, %v972
    %974 = vmatprep.mubr.f32.mxu0 0.0
    %975 = vmatmul.mubr.f32.gmra.mxu0 %v779
    %v976 = vpop.f32.mrf.mxu0
    %v977 = vadd.f32 %v837, %v976
    %v978 = vpop.f32.mrf.mxu0
    %v979 = vadd.f32 %v841, %v978
    %980 = vmatprep.mubr.f32.mxu0 0.0
    %981 = vmatmul.mubr.f32.gmra.mxu0 %v780
    %v982 = vpop.f32.mrf.mxu0
    %v983 = vadd.f32 %v837, %v982
    %v984 = vpop.f32.mrf.mxu0
    %v985 = vadd.f32 %v841, %v984
    %986 = vmatprep.mubr.f32.mxu0 0.0
    %987 = vmatmul.mubr.f32.gmra.mxu0 %v781
    %v988 = vpop.f32.mrf.mxu0
    %v989 = vadd.f32 %v837, %v988
    %v990 = vpop.f32.mrf.mxu0
    %v991 = vadd.f32 %v841, %v990
    %992 = vmatprep.mubr.f32.mxu0 0.0
    %993 = vmatmul.mubr.f32.gmra.mxu0 %v782
    %v994 = vpop.f32.mrf.mxu0
    %v995 = vadd.f32 %v837, %v994
    %v996 = vpop.f32.mrf.mxu0
    %v997 = vadd.f32 %v841, %v996
    %998 = vmatprep.mubr.f32.mxu0 0.0
    %999 = vmatmul.mubr.f32.gmra.mxu0 %v783
    %v1000 = vpop.f32.mrf.mxu0
    %v1001 = vadd.f32 %v837, %v1000
    %v1002 = vpop.f32.mrf.mxu0
    %v1003 = vadd.f32 %v841, %v1002
    %1004 = vmatprep.mubr.f32.mxu0 0.0
    %1005 = vmatmul.mubr.f32.gmra.mxu0 %v784
    %v1006 = vpop.f32.mrf.mxu0
    %v1007 = vadd.f32 %v837, %v1006
    %v1008 = vpop.f32.mrf.mxu0
    %v1009 = vadd.f32 %v841, %v1008
    %1010 = vmatprep.mubr.f32.mxu0 0.0
    %1011 = vmatmul.mubr.f32.gmra.mxu0 %v785
    %v1012 = vpop.f32.mrf.mxu0
    %v1013 = vadd.f32 %v837, %v1012
    %v1014 = vpop.f32.mrf.mxu0
    %v1015 = vadd.f32 %v841, %v1014
    %1016 = vmatprep.mubr.f32.mxu0 0.0
    %1017 = vmatmul.mubr.f32.gmra.mxu0 %v786
    %v1018 = vpop.f32.mrf.mxu0
    %v1019 = vadd.f32 %v837, %v1018
    %v1020 = vpop.f32.mrf.mxu0
    %v1021 = vadd.f32 %v841, %v1020
    %1022 = vmatprep.mubr.f32.mxu0 0.0
    %1023 = vmatmul.mubr.f32.gmra.mxu0 %v787
    %v1024 = vpop.f32.mrf.mxu0
    %v1025 = vadd.f32 %v837, %v1024
    %v1026 = vpop.f32.mrf.mxu0
    %v1027 = vadd.f32 %v841, %v1026
    %1028 = vmatprep.mubr.f32.mxu0 0.0
    %1029 = vmatmul.mubr.f32.gmra.mxu0 %v788
    %v1030 = vpop.f32.mrf.mxu0
    %v1031 = vadd.f32 %v837, %v1030
    %v1032 = vpop.f32.mrf.mxu0
    %v1033 = vadd.f32 %v841, %v1032
    %1034 = vmatprep.mubr.f32.mxu0 0.0
    %1035 = vmatmul.mubr.f32.gmra.mxu0 %v789
    %v1036 = vpop.f32.mrf.mxu0
    %v1037 = vadd.f32 %v837, %v1036
    %v1038 = vpop.f32.mrf.mxu0
    %v1039 = vadd.f32 %v841, %v1038
    %1040 = vmatprep.mubr.f32.mxu0 0.0
    %1041 = vmatmul.mubr.f32.gmra.mxu0 %v790
    %v1042 = vpop.f32.mrf.mxu0
    %v1043 = vadd.f32 %v837, %v1042
    %v1044 = vpop.f32.mrf.mxu0
    %v1045 = vadd.f32 %v841, %v1044
    %1046 = vmatprep.mubr.f32.mxu0 0.0
    %1047 = vmatmul.mubr.f32.gmra.mxu0 %v791
    %v1048 = vpop.f32.mrf.mxu0
    %v1049 = vadd.f32 %v837, %v1048
    %v1050 = vpop.f32.mrf.mxu0
    %v1051 = vadd.f32 %v841, %v1050
    %1052 = vmatprep.mubr.f32.mxu0 0.0
    %1053 = vmatmul.mubr.f32.gmra.mxu0 %v792
    %v1054 = vpop.f32.mrf.mxu0
    %v1055 = vadd.f32 %v837, %v1054
    %v1056 = vpop.f32.mrf.mxu0
    %v1057 = vadd.f32 %v841, %v1056
    %1058 = vmatprep.mubr.f32.mxu0 0.0
    %1059 = vmatmul.mubr.f32.gmra.mxu0 %v793
    %v1060 = vpop.f32.mrf.mxu0
    %v1061 = vadd.f32 %v837, %v1060
    %v1062 = vpop.f32.mrf.mxu0
    %v1063 = vadd.f32 %v841, %v1062
    %1064 = vmatprep.mubr.f32.mxu0 0.0
    %1065 = vmatmul.mubr.f32.gmra.mxu0 %v794
    %v1066 = vpop.f32.mrf.mxu0
    %v1067 = vadd.f32 %v837, %v1066
    %v1068 = vpop.f32.mrf.mxu0
    %v1069 = vadd.f32 %v841, %v1068
    %1070 = vmatprep.mubr.f32.mxu0 0.0
    %1071 = vmatmul.mubr.f32.gmra.mxu0 %v795
    %v1072 = vpop.f32.mrf.mxu0
    %v1073 = vadd.f32 %v837, %v1072
    %v1074 = vpop.f32.mrf.mxu0
    %v1075 = vadd.f32 %v841, %v1074
    %1076 = vmatprep.mubr.f32.mxu0 0.0
    %1077 = vmatmul.mubr.f32.gmra.mxu0 %v796
    %v1078 = vpop.f32.mrf.mxu0
    %v1079 = vadd.f32 %v837, %v1078
    %v1080 = vpop.f32.mrf.mxu0
    %v1081 = vadd.f32 %v841, %v1080
    %1082 = vmatprep.mubr.f32.mxu0 0.0
    %1083 = vmatmul.mubr.f32.gmra.mxu0 %v797
    %v1084 = vpop.f32.mrf.mxu0
    %v1085 = vadd.f32 %v837, %v1084
    %v1086 = vpop.f32.mrf.mxu0
    %v1087 = vadd.f32 %v841, %v1086
    %1088 = vmatprep.mubr.f32.mxu0 0.0
    %1089 = vmatmul.mubr.f32.gmra.mxu0 %v798
    %v1090 = vpop.f32.mrf.mxu0
    %v1091 = vadd.f32 %v837, %v1090
    %v1092 = vpop.f32.mrf.mxu0
    %v1093 = vadd.f32 %v841, %v1092
    %1094 = vmatprep.mubr.f32.mxu0 0.0
    %1095 = vmatmul.mubr.f32.gmra.mxu0 %v799
    %v1096 = vpop.f32.mrf.mxu0
    %v1097 = vadd.f32 %v837, %v1096
    %v1098 = vpop.f32.mrf.mxu0
    %v1099 = vadd.f32 %v841, %v1098
    %1100 = vdwg.mxu0
    %1101 = vst [vmem:[#allocation17] sm:$0xff] %v911
    %1102 = vst [vmem:[#allocation17 + $0x8] sm:$0xff] %v913
    %1103 = vst [vmem:[#allocation17 + $0x10] sm:$0xff] %v917
    %1104 = vst [vmem:[#allocation17 + $0x18] sm:$0xff] %v919
    %1105 = vst [vmem:[#allocation17 + $0x20] sm:$0xff] %v923
    %1106 = vst [vmem:[#allocation17 + $0x28] sm:$0xff] %v925
    %1107 = vst [vmem:[#allocation17 + $0x30] sm:$0xff] %v929
    %1108 = vst [vmem:[#allocation17 + $0x38] sm:$0xff] %v931
    %1109 = vst [vmem:[#allocation17 + $0x40] sm:$0xff] %v935
    %1110 = vst [vmem:[#allocation17 + $0x48] sm:$0xff] %v937
    %1111 = vst [vmem:[#allocation17 + $0x50] sm:$0xff] %v941
    %1112 = vst [vmem:[#allocation17 + $0x58] sm:$0xff] %v943
    %1113 = vst [vmem:[#allocation17 + $0x60] sm:$0xff] %v947
    %1114 = vst [vmem:[#allocation17 + $0x68] sm:$0xff] %v949
    %1115 = vst [vmem:[#allocation17 + $0x70] sm:$0xff] %v953
    %1116 = vst [vmem:[#allocation17 + $0x78] sm:$0xff] %v955
    %1117 = vst [vmem:[#allocation17 + $0x80] sm:$0xff] %v959
    %1118 = vst [vmem:[#allocation17 + $0x88] sm:$0xff] %v961
    %1119 = vst [vmem:[#allocation17 + $0x90] sm:$0xff] %v965
    %1120 = vst [vmem:[#allocation17 + $0x98] sm:$0xff] %v967
    %1121 = vst [vmem:[#allocation17 + $0xa0] sm:$0xff] %v971
    %1122 = vst [vmem:[#allocation17 + $0xa8] sm:$0xff] %v973
    %1123 = vst [vmem:[#allocation17 + $0xb0] sm:$0xff] %v977
    %1124 = vst [vmem:[#allocation17 + $0xb8] sm:$0xff] %v979
    %1125 = vst [vmem:[#allocation17 + $0xc0] sm:$0xff] %v983
    %1126 = vst [vmem:[#allocation17 + $0xc8] sm:$0xff] %v985
    %1127 = vst [vmem:[#allocation17 + $0xd0] sm:$0xff] %v989
    %1128 = vst [vmem:[#allocation17 + $0xd8] sm:$0xff] %v991
    %1129 = vst [vmem:[#allocation17 + $0xe0] sm:$0xff] %v995
    %1130 = vst [vmem:[#allocation17 + $0xe8] sm:$0xff] %v997
    %1131 = vst [vmem:[#allocation17 + $0xf0] sm:$0xff] %v1001
    %1132 = vst [vmem:[#allocation17 + $0xf8] sm:$0xff] %v1003
    %1133 = vst [vmem:[#allocation17 + $0x100] sm:$0xff] %v1007
    %1134 = vst [vmem:[#allocation17 + $0x108] sm:$0xff] %v1009
    %1135 = vst [vmem:[#allocation17 + $0x110] sm:$0xff] %v1013
    %1136 = vst [vmem:[#allocation17 + $0x118] sm:$0xff] %v1015
    %1137 = vst [vmem:[#allocation17 + $0x120] sm:$0xff] %v1019
    %1138 = vst [vmem:[#allocation17 + $0x128] sm:$0xff] %v1021
    %1139 = vst [vmem:[#allocation17 + $0x130] sm:$0xff] %v1025
    %1140 = vst [vmem:[#allocation17 + $0x138] sm:$0xff] %v1027
    %1141 = vst [vmem:[#allocation17 + $0x140] sm:$0xff] %v1031
    %1142 = vst [vmem:[#allocation17 + $0x148] sm:$0xff] %v1033
    %1143 = vst [vmem:[#allocation17 + $0x150] sm:$0xff] %v1037
    %1144 = vst [vmem:[#allocation17 + $0x158] sm:$0xff] %v1039
    %1145 = vst [vmem:[#allocation17 + $0x160] sm:$0xff] %v1043
    %1146 = vst [vmem:[#allocation17 + $0x168] sm:$0xff] %v1045
    %1147 = vst [vmem:[#allocation17 + $0x170] sm:$0xff] %v1049
    %1148 = vst [vmem:[#allocation17 + $0x178] sm:$0xff] %v1051
    %1149 = vst [vmem:[#allocation17 + $0x180] sm:$0xff] %v1055
    %1150 = vst [vmem:[#allocation17 + $0x188] sm:$0xff] %v1057
    %1151 = vst [vmem:[#allocation17 + $0x190] sm:$0xff] %v1061
    %1152 = vst [vmem:[#allocation17 + $0x198] sm:$0xff] %v1063
    %1153 = vst [vmem:[#allocation17 + $0x1a0] sm:$0xff] %v1067
    %1154 = vst [vmem:[#allocation17 + $0x1a8] sm:$0xff] %v1069
    %1155 = vst [vmem:[#allocation17 + $0x1b0] sm:$0xff] %v1073
    %1156 = vst [vmem:[#allocation17 + $0x1b8] sm:$0xff] %v1075
    %1157 = vst [vmem:[#allocation17 + $0x1c0] sm:$0xff] %v1079
    %1158 = vst [vmem:[#allocation17 + $0x1c8] sm:$0xff] %v1081
    %1159 = vst [vmem:[#allocation17 + $0x1d0] sm:$0xff] %v1085
    %1160 = vst [vmem:[#allocation17 + $0x1d8] sm:$0xff] %v1087
    %1161 = vst [vmem:[#allocation17 + $0x1e0] sm:$0xff] %v1091
    %1162 = vst [vmem:[#allocation17 + $0x1e8] sm:$0xff] %v1093
    %1163 = vst [vmem:[#allocation17 + $0x1f0] sm:$0xff] %v1097
    %1164 = vst [vmem:[#allocation17 + $0x1f8] sm:$0xff] %v1099
    %v1165 = vld [vmem:[#allocation17] sm:$0xff]
    %v1166 = vld [vmem:[#allocation17 + $0x10] sm:$0xff]
    %v1167 = vld [vmem:[#allocation17 + $0x20] sm:$0xff]
    %v1168 = vld [vmem:[#allocation17 + $0x30] sm:$0xff]
    %v1169 = vld [vmem:[#allocation17 + $0x40] sm:$0xff]
    %v1170 = vld [vmem:[#allocation17 + $0x50] sm:$0xff]
    %v1171 = vld [vmem:[#allocation17 + $0x60] sm:$0xff]
    %v1172 = vld [vmem:[#allocation17 + $0x70] sm:$0xff]
    %v1173 = vld [vmem:[#allocation17 + $0x80] sm:$0xff]
    %v1174 = vld [vmem:[#allocation17 + $0x90] sm:$0xff]
    %v1175 = vld [vmem:[#allocation17 + $0xa0] sm:$0xff]
    %v1176 = vld [vmem:[#allocation17 + $0xb0] sm:$0xff]
    %v1177 = vld [vmem:[#allocation17 + $0xc0] sm:$0xff]
    %v1178 = vld [vmem:[#allocation17 + $0xd0] sm:$0xff]
    %v1179 = vld [vmem:[#allocation17 + $0xe0] sm:$0xff]
    %v1180 = vld [vmem:[#allocation17 + $0xf0] sm:$0xff]
    %v1181 = vld [vmem:[#allocation17 + $0x100] sm:$0xff]
    %v1182 = vld [vmem:[#allocation17 + $0x110] sm:$0xff]
    %v1183 = vld [vmem:[#allocation17 + $0x120] sm:$0xff]
    %v1184 = vld [vmem:[#allocation17 + $0x130] sm:$0xff]
    %v1185 = vld [vmem:[#allocation17 + $0x140] sm:$0xff]
    %v1186 = vld [vmem:[#allocation17 + $0x150] sm:$0xff]
    %v1187 = vld [vmem:[#allocation17 + $0x160] sm:$0xff]
    %v1188 = vld [vmem:[#allocation17 + $0x170] sm:$0xff]
    %v1189 = vld [vmem:[#allocation17 + $0x180] sm:$0xff]
    %v1190 = vld [vmem:[#allocation17 + $0x190] sm:$0xff]
    %v1191 = vld [vmem:[#allocation17 + $0x1a0] sm:$0xff]
    %v1192 = vld [vmem:[#allocation17 + $0x1b0] sm:$0xff]
    %v1193 = vld [vmem:[#allocation17 + $0x1c0] sm:$0xff]
    %v1194 = vld [vmem:[#allocation17 + $0x1d0] sm:$0xff]
    %v1195 = vld [vmem:[#allocation17 + $0x1e0] sm:$0xff]
    %v1196 = vld [vmem:[#allocation17 + $0x1f0] sm:$0xff]
    %v1197 = vld [vmem:[#allocation17 + $0x8] sm:$0xff]
    %v1198 = vld [vmem:[#allocation17 + $0x18] sm:$0xff]
    %v1199 = vld [vmem:[#allocation17 + $0x28] sm:$0xff]
    %v1200 = vld [vmem:[#allocation17 + $0x38] sm:$0xff]
    %v1201 = vld [vmem:[#allocation17 + $0x48] sm:$0xff]
    %v1202 = vld [vmem:[#allocation17 + $0x58] sm:$0xff]
    %v1203 = vld [vmem:[#allocation17 + $0x68] sm:$0xff]
    %v1204 = vld [vmem:[#allocation17 + $0x78] sm:$0xff]
    %v1205 = vld [vmem:[#allocation17 + $0x88] sm:$0xff]
    %v1206 = vld [vmem:[#allocation17 + $0x98] sm:$0xff]
    %v1207 = vld [vmem:[#allocation17 + $0xa8] sm:$0xff]
    %v1208 = vld [vmem:[#allocation17 + $0xb8] sm:$0xff]
    %v1209 = vld [vmem:[#allocation17 + $0xc8] sm:$0xff]
    %v1210 = vld [vmem:[#allocation17 + $0xd8] sm:$0xff]
    %v1211 = vld [vmem:[#allocation17 + $0xe8] sm:$0xff]
    %v1212 = vld [vmem:[#allocation17 + $0xf8] sm:$0xff]
    %v1213 = vld [vmem:[#allocation17 + $0x108] sm:$0xff]
    %v1214 = vld [vmem:[#allocation17 + $0x118] sm:$0xff]
    %v1215 = vld [vmem:[#allocation17 + $0x128] sm:$0xff]
    %v1216 = vld [vmem:[#allocation17 + $0x138] sm:$0xff]
    %v1217 = vld [vmem:[#allocation17 + $0x148] sm:$0xff]
    %v1218 = vld [vmem:[#allocation17 + $0x158] sm:$0xff]
    %v1219 = vld [vmem:[#allocation17 + $0x168] sm:$0xff]
    %v1220 = vld [vmem:[#allocation17 + $0x178] sm:$0xff]
    %v1221 = vld [vmem:[#allocation17 + $0x188] sm:$0xff]
    %v1222 = vld [vmem:[#allocation17 + $0x198] sm:$0xff]
    %v1223 = vld [vmem:[#allocation17 + $0x1a8] sm:$0xff]
    %v1224 = vld [vmem:[#allocation17 + $0x1b8] sm:$0xff]
    %v1225 = vld [vmem:[#allocation17 + $0x1c8] sm:$0xff]
    %v1226 = vld [vmem:[#allocation17 + $0x1d8] sm:$0xff]
    %v1227 = vld [vmem:[#allocation17 + $0x1e8] sm:$0xff]
    %v1228 = vld [vmem:[#allocation17 + $0x1f8] sm:$0xff]
    %v1229 = vld [vmem:[#allocation5] sm:$0xff]
    %v1230 = vld [vmem:[#allocation5 + $0x8] sm:$0xff]
    %v1231 = vld [vmem:[#allocation5 + $0x10] sm:$0xff]
    %v1232 = vld [vmem:[#allocation5 + $0x18] sm:$0xff]
    %v1233 = vld [vmem:[#allocation5 + $0x20] sm:$0xff]
    %v1234 = vld [vmem:[#allocation5 + $0x28] sm:$0xff]
    %v1235 = vld [vmem:[#allocation5 + $0x30] sm:$0xff]
    %v1236 = vld [vmem:[#allocation5 + $0x38] sm:$0xff]
    %v1237 = vld [vmem:[#allocation5 + $0x40] sm:$0xff]
    %v1238 = vld [vmem:[#allocation5 + $0x48] sm:$0xff]
    %v1239 = vld [vmem:[#allocation5 + $0x50] sm:$0xff]
    %v1240 = vld [vmem:[#allocation5 + $0x58] sm:$0xff]
    %v1241 = vld [vmem:[#allocation5 + $0x60] sm:$0xff]
    %v1242 = vld [vmem:[#allocation5 + $0x68] sm:$0xff]
    %v1243 = vld [vmem:[#allocation5 + $0x70] sm:$0xff]
    %v1244 = vld [vmem:[#allocation5 + $0x78] sm:$0xff]
    %v1245 = vld [vmem:[#allocation5 + $0x80] sm:$0xff]
    %v1246 = vld [vmem:[#allocation5 + $0x88] sm:$0xff]
    %v1247 = vld [vmem:[#allocation5 + $0x90] sm:$0xff]
    %v1248 = vld [vmem:[#allocation5 + $0x98] sm:$0xff]
    %v1249 = vld [vmem:[#allocation5 + $0xa0] sm:$0xff]
    %v1250 = vld [vmem:[#allocation5 + $0xa8] sm:$0xff]
    %v1251 = vld [vmem:[#allocation5 + $0xb0] sm:$0xff]
    %v1252 = vld [vmem:[#allocation5 + $0xb8] sm:$0xff]
    %v1253 = vld [vmem:[#allocation5 + $0xc0] sm:$0xff]
    %v1254 = vld [vmem:[#allocation5 + $0xc8] sm:$0xff]
    %v1255 = vld [vmem:[#allocation5 + $0xd0] sm:$0xff]
    %v1256 = vld [vmem:[#allocation5 + $0xd8] sm:$0xff]
    %v1257 = vld [vmem:[#allocation5 + $0xe0] sm:$0xff]
    %v1258 = vld [vmem:[#allocation5 + $0xe8] sm:$0xff]
    %v1259 = vld [vmem:[#allocation5 + $0xf0] sm:$0xff]
    %v1260 = vld [vmem:[#allocation5 + $0xf8] sm:$0xff]
    %v1261 = vmul.f32 %v1197, 0.5
    %v1262 = vmul.f32 %v1198, 0.5
    %v1263 = vmul.f32 %v1199, 0.5
    %v1264 = vmul.f32 %v1200, 0.5
    %v1265 = vmul.f32 %v1201, 0.5
    %v1266 = vmul.f32 %v1202, 0.5
    %v1267 = vmul.f32 %v1203, 0.5
    %v1268 = vmul.f32 %v1204, 0.5
    %v1269 = vmul.f32 %v1205, 0.5
    %v1270 = vmul.f32 %v1206, 0.5
    %v1271 = vmul.f32 %v1207, 0.5
    %v1272 = vmul.f32 %v1208, 0.5
    %v1273 = vmul.f32 %v1209, 0.5
    %v1274 = vmul.f32 %v1210, 0.5
    %v1275 = vmul.f32 %v1211, 0.5
    %v1276 = vmul.f32 %v1212, 0.5
    %v1277 = vmul.f32 %v1213, 0.5
    %v1278 = vmul.f32 %v1214, 0.5
    %v1279 = vmul.f32 %v1215, 0.5
    %v1280 = vmul.f32 %v1216, 0.5
    %v1281 = vmul.f32 %v1217, 0.5
    %v1282 = vmul.f32 %v1218, 0.5
    %v1283 = vmul.f32 %v1219, 0.5
    %v1284 = vmul.f32 %v1220, 0.5
    %v1285 = vmul.f32 %v1221, 0.5
    %v1286 = vmul.f32 %v1222, 0.5
    %v1287 = vmul.f32 %v1223, 0.5
    %v1288 = vmul.f32 %v1224, 0.5
    %v1289 = vmul.f32 %v1225, 0.5
    %v1290 = vmul.f32 %v1226, 0.5
    %v1291 = vmul.f32 %v1227, 0.5
    %v1292 = vmul.f32 %v1228, 0.5
    %v1293 = vmul.f32 %v1261, 1.442695
    %v1294 = vpow.pop %v1293
    %v1295 = vmul.f32 %v1262, 1.442695
    %v1296 = vpow.pop %v1295
    %v1297 = vmul.f32 %v1263, 1.442695
    %v1298 = vpow.pop %v1297
    %v1299 = vmul.f32 %v1264, 1.442695
    %v1300 = vpow.pop %v1299
    %v1301 = vmul.f32 %v1265, 1.442695
    %v1302 = vpow.pop %v1301
    %v1303 = vmul.f32 %v1266, 1.442695
    %v1304 = vpow.pop %v1303
    %v1305 = vmul.f32 %v1267, 1.442695
    %v1306 = vpow.pop %v1305
    %v1307 = vmul.f32 %v1268, 1.442695
    %v1308 = vpow.pop %v1307
    %v1309 = vmul.f32 %v1269, 1.442695
    %v1310 = vpow.pop %v1309
    %v1311 = vmul.f32 %v1270, 1.442695
    %v1312 = vpow.pop %v1311
    %v1313 = vmul.f32 %v1271, 1.442695
    %v1314 = vpow.pop %v1313
    %v1315 = vmul.f32 %v1272, 1.442695
    %v1316 = vpow.pop %v1315
    %v1317 = vmul.f32 %v1273, 1.442695
    %v1318 = vpow.pop %v1317
    %v1319 = vmul.f32 %v1274, 1.442695
    %v1320 = vpow.pop %v1319
    %v1321 = vmul.f32 %v1275, 1.442695
    %v1322 = vpow.pop %v1321
    %v1323 = vmul.f32 %v1276, 1.442695
    %v1324 = vpow.pop %v1323
    %v1325 = vmul.f32 %v1277, 1.442695
    %v1326 = vpow.pop %v1325
    %v1327 = vmul.f32 %v1278, 1.442695
    %v1328 = vpow.pop %v1327
    %v1329 = vmul.f32 %v1279, 1.442695
    %v1330 = vpow.pop %v1329
    %v1331 = vmul.f32 %v1280, 1.442695
    %v1332 = vpow.pop %v1331
    %v1333 = vmul.f32 %v1281, 1.442695
    %v1334 = vpow.pop %v1333
    %v1335 = vmul.f32 %v1282, 1.442695
    %v1336 = vpow.pop %v1335
    %v1337 = vmul.f32 %v1283, 1.442695
    %v1338 = vpow.pop %v1337
    %v1339 = vmul.f32 %v1284, 1.442695
    %v1340 = vpow.pop %v1339
    %v1341 = vmul.f32 %v1285, 1.442695
    %v1342 = vpow.pop %v1341
    %v1343 = vmul.f32 %v1286, 1.442695
    %v1344 = vpow.pop %v1343
    %v1345 = vmul.f32 %v1287, 1.442695
    %v1346 = vpow.pop %v1345
    %v1347 = vmul.f32 %v1288, 1.442695
    %v1348 = vpow.pop %v1347
    %v1349 = vmul.f32 %v1289, 1.442695
    %v1350 = vpow.pop %v1349
    %v1351 = vmul.f32 %v1290, 1.442695
    %v1352 = vpow.pop %v1351
    %v1353 = vmul.f32 %v1291, 1.442695
    %v1354 = vpow.pop %v1353
    %v1355 = vmul.f32 %v1292, 1.442695
    %v1356 = vpow.pop %v1355
    %v1357 = vmul.f32 %v1229, %v1294
    %v1358 = vmul.f32 %v1230, %v1296
    %v1359 = vmul.f32 %v1231, %v1298
    %v1360 = vmul.f32 %v1232, %v1300
    %v1361 = vmul.f32 %v1233, %v1302
    %v1362 = vmul.f32 %v1234, %v1304
    %v1363 = vmul.f32 %v1235, %v1306
    %v1364 = vmul.f32 %v1236, %v1308
    %v1365 = vmul.f32 %v1237, %v1310
    %v1366 = vmul.f32 %v1238, %v1312
    %v1367 = vmul.f32 %v1239, %v1314
    %v1368 = vmul.f32 %v1240, %v1316
    %v1369 = vmul.f32 %v1241, %v1318
    %v1370 = vmul.f32 %v1242, %v1320
    %v1371 = vmul.f32 %v1243, %v1322
    %v1372 = vmul.f32 %v1244, %v1324
    %v1373 = vmul.f32 %v1245, %v1326
    %v1374 = vmul.f32 %v1246, %v1328
    %v1375 = vmul.f32 %v1247, %v1330
    %v1376 = vmul.f32 %v1248, %v1332
    %v1377 = vmul.f32 %v1249, %v1334
    %v1378 = vmul.f32 %v1250, %v1336
    %v1379 = vmul.f32 %v1251, %v1338
    %v1380 = vmul.f32 %v1252, %v1340
    %v1381 = vmul.f32 %v1253, %v1342
    %v1382 = vmul.f32 %v1254, %v1344
    %v1383 = vmul.f32 %v1255, %v1346
    %v1384 = vmul.f32 %v1256, %v1348
    %v1385 = vmul.f32 %v1257, %v1350
    %v1386 = vmul.f32 %v1258, %v1352
    %v1387 = vmul.f32 %v1259, %v1354
    %v1388 = vmul.f32 %v1260, %v1356
    %v1389 = vadd.f32 %v1357, %v1165
    %v1390 = vadd.f32 %v1358, %v1166
    %v1391 = vadd.f32 %v1359, %v1167
    %v1392 = vadd.f32 %v1360, %v1168
    %v1393 = vadd.f32 %v1361, %v1169
    %v1394 = vadd.f32 %v1362, %v1170
    %v1395 = vadd.f32 %v1363, %v1171
    %v1396 = vadd.f32 %v1364, %v1172
    %v1397 = vadd.f32 %v1365, %v1173
    %v1398 = vadd.f32 %v1366, %v1174
    %v1399 = vadd.f32 %v1367, %v1175
    %v1400 = vadd.f32 %v1368, %v1176
    %v1401 = vadd.f32 %v1369, %v1177
    %v1402 = vadd.f32 %v1370, %v1178
    %v1403 = vadd.f32 %v1371, %v1179
    %v1404 = vadd.f32 %v1372, %v1180
    %v1405 = vadd.f32 %v1373, %v1181
    %v1406 = vadd.f32 %v1374, %v1182
    %v1407 = vadd.f32 %v1375, %v1183
    %v1408 = vadd.f32 %v1376, %v1184
    %v1409 = vadd.f32 %v1377, %v1185
    %v1410 = vadd.f32 %v1378, %v1186
    %v1411 = vadd.f32 %v1379, %v1187
    %v1412 = vadd.f32 %v1380, %v1188
    %v1413 = vadd.f32 %v1381, %v1189
    %v1414 = vadd.f32 %v1382, %v1190
    %v1415 = vadd.f32 %v1383, %v1191
    %v1416 = vadd.f32 %v1384, %v1192
    %v1417 = vadd.f32 %v1385, %v1193
    %v1418 = vadd.f32 %v1386, %v1194
    %v1419 = vadd.f32 %v1387, %v1195
    %v1420 = vadd.f32 %v1388, %v1196
    %v1421 = vld [vmem:[#allocation11] sm:$0xff]
    %v1422 = vld [vmem:[#allocation11 + $0x8] sm:$0xff]
    %v1423 = vld [vmem:[#allocation11 + $0x10] sm:$0xff]
    %v1424 = vld [vmem:[#allocation11 + $0x18] sm:$0xff]
    %v1425 = vld [vmem:[#allocation11 + $0x20] sm:$0xff]
    %v1426 = vld [vmem:[#allocation11 + $0x28] sm:$0xff]
    %v1427 = vld [vmem:[#allocation11 + $0x30] sm:$0xff]
    %v1428 = vld [vmem:[#allocation11 + $0x38] sm:$0xff]
    %v1429 = vld [vmem:[#allocation11 + $0x40] sm:$0xff]
    %v1430 = vld [vmem:[#allocation11 + $0x48] sm:$0xff]
    %v1431 = vld [vmem:[#allocation11 + $0x50] sm:$0xff]
    %v1432 = vld [vmem:[#allocation11 + $0x58] sm:$0xff]
    %v1433 = vld [vmem:[#allocation11 + $0x60] sm:$0xff]
    %v1434 = vld [vmem:[#allocation11 + $0x68] sm:$0xff]
    %v1435 = vld [vmem:[#allocation11 + $0x70] sm:$0xff]
    %v1436 = vld [vmem:[#allocation11 + $0x78] sm:$0xff]
    %v1437 = vld [vmem:[%s9] sm:$0x1]
    %v1439 = vlaneseq
    %v1440 = vshrl.u32 %v1439, 7
    %v1441 = vsub.s32 0, %v1440
    %v1442 = vrot.slane %v1437, %v1441
    %1444 = vmatprep.subr.mxu0 0.0
    %1445 = vmatpush1.msra.mxu0 %v1436
    %1446 = vmatprep.subr.mxu0 0.0
    %1447 = vmatpush1.msra.mxu0 %v1435
    %1448 = vmatprep.subr.mxu0 0.0
    %1449 = vmatpush1.msra.mxu0 %v1434
    %1450 = vmatprep.subr.mxu0 0.0
    %1451 = vmatpush1.msra.mxu0 %v1433
    %1452 = vmatprep.subr.mxu0 0.0
    %1453 = vmatpush1.msra.mxu0 %v1432
    %1454 = vmatprep.subr.mxu0 0.0
    %1455 = vmatpush1.msra.mxu0 %v1431
    %1456 = vmatprep.subr.mxu0 0.0
    %1457 = vmatpush1.msra.mxu0 %v1430
    %1458 = vmatprep.subr.mxu0 0.0
    %1459 = vmatpush1.msra.mxu0 %v1429
    %1460 = vmatprep.subr.mxu0 0.0
    %1461 = vmatpush1.msra.mxu0 %v1428
    %1462 = vmatprep.subr.mxu0 0.0
    %1463 = vmatpush1.msra.mxu0 %v1427
    %1464 = vmatprep.subr.mxu0 0.0
    %1465 = vmatpush1.msra.mxu0 %v1426
    %1466 = vmatprep.subr.mxu0 0.0
    %1467 = vmatpush1.msra.mxu0 %v1425
    %1468 = vmatprep.subr.mxu0 0.0
    %1469 = vmatpush1.msra.mxu0 %v1424
    %1470 = vmatprep.subr.mxu0 0.0
    %1471 = vmatpush1.msra.mxu0 %v1423
    %1472 = vmatprep.subr.mxu0 0.0
    %1473 = vmatpush1.msra.mxu0 %v1422
    %1474 = vmatprep.subr.mxu0 0.0
    %1475 = vmatpush1.msra.mxu0 %v1421
    %1476 = vmatprep.subr.mxu0 0.0
    %1477 = vmatpush2.msra.mxu0 0.0
    %1478 = vmatprep.subr.mxu0 0.0
    %1479 = vmatpush2.msra.mxu0 0.0
    %1480 = vmatprep.subr.mxu0 0.0
    %1481 = vmatpush2.msra.mxu0 0.0
    %1482 = vmatprep.subr.mxu0 0.0
    %1483 = vmatpush2.msra.mxu0 0.0
    %1484 = vmatprep.subr.mxu0 0.0
    %1485 = vmatpush2.msra.mxu0 0.0
    %1486 = vmatprep.subr.mxu0 0.0
    %1487 = vmatpush2.msra.mxu0 0.0
    %1488 = vmatprep.subr.mxu0 0.0
    %1489 = vmatpush2.msra.mxu0 0.0
    %1490 = vmatprep.subr.mxu0 0.0
    %1491 = vmatpush2.msra.mxu0 0.0
    %1492 = vmatprep.subr.mxu0 0.0
    %1493 = vmatpush2.msra.mxu0 0.0
    %1494 = vmatprep.subr.mxu0 0.0
    %1495 = vmatpush2.msra.mxu0 0.0
    %1496 = vmatprep.subr.mxu0 0.0
    %1497 = vmatpush2.msra.mxu0 0.0
    %1498 = vmatprep.subr.mxu0 0.0
    %1499 = vmatpush2.msra.mxu0 0.0
    %1500 = vmatprep.subr.mxu0 0.0
    %1501 = vmatpush2.msra.mxu0 0.0
    %1502 = vmatprep.subr.mxu0 0.0
    %1503 = vmatpush2.msra.mxu0 0.0
    %1504 = vmatprep.subr.mxu0 0.0
    %1505 = vmatpush2.msra.mxu0 0.0
    %1506 = vmatprep.subr.mxu0 0.0
    %1507 = vmatpush2.msra.mxu0 0.0
    %1508 = vmatprep.mubr.f32.mxu0 0.0
    %1509 = vmatmul.mubr.f32.gmra.mxu0 %v1389
    %v1510 = vpop.f32.mrf.mxu0
    %v1511 = vadd.f32 %v1442, %v1510
    %v1512 = vpop.f32.mrf.mxu0
    %1513 = vmatprep.mubr.f32.mxu0 0.0
    %1514 = vmatmul.mubr.f32.gmra.mxu0 %v1390
    %v1515 = vpop.f32.mrf.mxu0
    %v1516 = vadd.f32 %v1442, %v1515
    %v1517 = vpop.f32.mrf.mxu0
    %1518 = vmatprep.mubr.f32.mxu0 0.0
    %1519 = vmatmul.mubr.f32.gmra.mxu0 %v1391
    %v1520 = vpop.f32.mrf.mxu0
    %v1521 = vadd.f32 %v1442, %v1520
    %v1522 = vpop.f32.mrf.mxu0
    %1523 = vmatprep.mubr.f32.mxu0 0.0
    %1524 = vmatmul.mubr.f32.gmra.mxu0 %v1392
    %v1525 = vpop.f32.mrf.mxu0
    %v1526 = vadd.f32 %v1442, %v1525
    %v1527 = vpop.f32.mrf.mxu0
    %1528 = vmatprep.mubr.f32.mxu0 0.0
    %1529 = vmatmul.mubr.f32.gmra.mxu0 %v1393
    %v1530 = vpop.f32.mrf.mxu0
    %v1531 = vadd.f32 %v1442, %v1530
    %v1532 = vpop.f32.mrf.mxu0
    %1533 = vmatprep.mubr.f32.mxu0 0.0
    %1534 = vmatmul.mubr.f32.gmra.mxu0 %v1394
    %v1535 = vpop.f32.mrf.mxu0
    %v1536 = vadd.f32 %v1442, %v1535
    %v1537 = vpop.f32.mrf.mxu0
    %1538 = vmatprep.mubr.f32.mxu0 0.0
    %1539 = vmatmul.mubr.f32.gmra.mxu0 %v1395
    %v1540 = vpop.f32.mrf.mxu0
    %v1541 = vadd.f32 %v1442, %v1540
    %v1542 = vpop.f32.mrf.mxu0
    %1543 = vmatprep.mubr.f32.mxu0 0.0
    %1544 = vmatmul.mubr.f32.gmra.mxu0 %v1396
    %v1545 = vpop.f32.mrf.mxu0
    %v1546 = vadd.f32 %v1442, %v1545
    %v1547 = vpop.f32.mrf.mxu0
    %1548 = vmatprep.mubr.f32.mxu0 0.0
    %1549 = vmatmul.mubr.f32.gmra.mxu0 %v1397
    %v1550 = vpop.f32.mrf.mxu0
    %v1551 = vadd.f32 %v1442, %v1550
    %v1552 = vpop.f32.mrf.mxu0
    %1553 = vmatprep.mubr.f32.mxu0 0.0
    %1554 = vmatmul.mubr.f32.gmra.mxu0 %v1398
    %v1555 = vpop.f32.mrf.mxu0
    %v1556 = vadd.f32 %v1442, %v1555
    %v1557 = vpop.f32.mrf.mxu0
    %1558 = vmatprep.mubr.f32.mxu0 0.0
    %1559 = vmatmul.mubr.f32.gmra.mxu0 %v1399
    %v1560 = vpop.f32.mrf.mxu0
    %v1561 = vadd.f32 %v1442, %v1560
    %v1562 = vpop.f32.mrf.mxu0
    %1563 = vmatprep.mubr.f32.mxu0 0.0
    %1564 = vmatmul.mubr.f32.gmra.mxu0 %v1400
    %v1565 = vpop.f32.mrf.mxu0
    %v1566 = vadd.f32 %v1442, %v1565
    %v1567 = vpop.f32.mrf.mxu0
    %1568 = vmatprep.mubr.f32.mxu0 0.0
    %1569 = vmatmul.mubr.f32.gmra.mxu0 %v1401
    %v1570 = vpop.f32.mrf.mxu0
    %v1571 = vadd.f32 %v1442, %v1570
    %v1572 = vpop.f32.mrf.mxu0
    %1573 = vmatprep.mubr.f32.mxu0 0.0
    %1574 = vmatmul.mubr.f32.gmra.mxu0 %v1402
    %v1575 = vpop.f32.mrf.mxu0
    %v1576 = vadd.f32 %v1442, %v1575
    %v1577 = vpop.f32.mrf.mxu0
    %1578 = vmatprep.mubr.f32.mxu0 0.0
    %1579 = vmatmul.mubr.f32.gmra.mxu0 %v1403
    %v1580 = vpop.f32.mrf.mxu0
    %v1581 = vadd.f32 %v1442, %v1580
    %v1582 = vpop.f32.mrf.mxu0
    %1583 = vmatprep.mubr.f32.mxu0 0.0
    %1584 = vmatmul.mubr.f32.gmra.mxu0 %v1404
    %v1585 = vpop.f32.mrf.mxu0
    %v1586 = vadd.f32 %v1442, %v1585
    %v1587 = vpop.f32.mrf.mxu0
    %1588 = vmatprep.mubr.f32.mxu0 0.0
    %1589 = vmatmul.mubr.f32.gmra.mxu0 %v1405
    %v1590 = vpop.f32.mrf.mxu0
    %v1591 = vadd.f32 %v1442, %v1590
    %v1592 = vpop.f32.mrf.mxu0
    %1593 = vmatprep.mubr.f32.mxu0 0.0
    %1594 = vmatmul.mubr.f32.gmra.mxu0 %v1406
    %v1595 = vpop.f32.mrf.mxu0
    %v1596 = vadd.f32 %v1442, %v1595
    %v1597 = vpop.f32.mrf.mxu0
    %1598 = vmatprep.mubr.f32.mxu0 0.0
    %1599 = vmatmul.mubr.f32.gmra.mxu0 %v1407
    %v1600 = vpop.f32.mrf.mxu0
    %v1601 = vadd.f32 %v1442, %v1600
    %v1602 = vpop.f32.mrf.mxu0
    %1603 = vmatprep.mubr.f32.mxu0 0.0
    %1604 = vmatmul.mubr.f32.gmra.mxu0 %v1408
    %v1605 = vpop.f32.mrf.mxu0
    %v1606 = vadd.f32 %v1442, %v1605
    %v1607 = vpop.f32.mrf.mxu0
    %1608 = vmatprep.mubr.f32.mxu0 0.0
    %1609 = vmatmul.mubr.f32.gmra.mxu0 %v1409
    %v1610 = vpop.f32.mrf.mxu0
    %v1611 = vadd.f32 %v1442, %v1610
    %v1612 = vpop.f32.mrf.mxu0
    %1613 = vmatprep.mubr.f32.mxu0 0.0
    %1614 = vmatmul.mubr.f32.gmra.mxu0 %v1410
    %v1615 = vpop.f32.mrf.mxu0
    %v1616 = vadd.f32 %v1442, %v1615
    %v1617 = vpop.f32.mrf.mxu0
    %1618 = vmatprep.mubr.f32.mxu0 0.0
    %1619 = vmatmul.mubr.f32.gmra.mxu0 %v1411
    %v1620 = vpop.f32.mrf.mxu0
    %v1621 = vadd.f32 %v1442, %v1620
    %v1622 = vpop.f32.mrf.mxu0
    %1623 = vmatprep.mubr.f32.mxu0 0.0
    %1624 = vmatmul.mubr.f32.gmra.mxu0 %v1412
    %v1625 = vpop.f32.mrf.mxu0
    %v1626 = vadd.f32 %v1442, %v1625
    %v1627 = vpop.f32.mrf.mxu0
    %1628 = vmatprep.mubr.f32.mxu0 0.0
    %1629 = vmatmul.mubr.f32.gmra.mxu0 %v1413
    %v1630 = vpop.f32.mrf.mxu0
    %v1631 = vadd.f32 %v1442, %v1630
    %v1632 = vpop.f32.mrf.mxu0
    %1633 = vmatprep.mubr.f32.mxu0 0.0
    %1634 = vmatmul.mubr.f32.gmra.mxu0 %v1414
    %v1635 = vpop.f32.mrf.mxu0
    %v1636 = vadd.f32 %v1442, %v1635
    %v1637 = vpop.f32.mrf.mxu0
    %1638 = vmatprep.mubr.f32.mxu0 0.0
    %1639 = vmatmul.mubr.f32.gmra.mxu0 %v1415
    %v1640 = vpop.f32.mrf.mxu0
    %v1641 = vadd.f32 %v1442, %v1640
    %v1642 = vpop.f32.mrf.mxu0
    %1643 = vmatprep.mubr.f32.mxu0 0.0
    %1644 = vmatmul.mubr.f32.gmra.mxu0 %v1416
    %v1645 = vpop.f32.mrf.mxu0
    %v1646 = vadd.f32 %v1442, %v1645
    %v1647 = vpop.f32.mrf.mxu0
    %1648 = vmatprep.mubr.f32.mxu0 0.0
    %1649 = vmatmul.mubr.f32.gmra.mxu0 %v1417
    %v1650 = vpop.f32.mrf.mxu0
    %v1651 = vadd.f32 %v1442, %v1650
    %v1652 = vpop.f32.mrf.mxu0
    %1653 = vmatprep.mubr.f32.mxu0 0.0
    %1654 = vmatmul.mubr.f32.gmra.mxu0 %v1418
    %v1655 = vpop.f32.mrf.mxu0
    %v1656 = vadd.f32 %v1442, %v1655
    %v1657 = vpop.f32.mrf.mxu0
    %1658 = vmatprep.mubr.f32.mxu0 0.0
    %1659 = vmatmul.mubr.f32.gmra.mxu0 %v1419
    %v1660 = vpop.f32.mrf.mxu0
    %v1661 = vadd.f32 %v1442, %v1660
    %v1662 = vpop.f32.mrf.mxu0
    %1663 = vmatprep.mubr.f32.mxu0 0.0
    %1664 = vmatmul.mubr.f32.gmra.mxu0 %v1420
    %v1665 = vpop.f32.mrf.mxu0
    %v1666 = vadd.f32 %v1442, %v1665
    %v1667 = vpop.f32.mrf.mxu0
    %1668 = vdwg.mxu0
    %v1669 = vmax.f32 %v1511, 0.0
    %v1670 = vmax.f32 %v1516, 0.0
    %v1671 = vmax.f32 %v1521, 0.0
    %v1672 = vmax.f32 %v1526, 0.0
    %v1673 = vmax.f32 %v1531, 0.0
    %v1674 = vmax.f32 %v1536, 0.0
    %v1675 = vmax.f32 %v1541, 0.0
    %v1676 = vmax.f32 %v1546, 0.0
    %v1677 = vmax.f32 %v1551, 0.0
    %v1678 = vmax.f32 %v1556, 0.0
    %v1679 = vmax.f32 %v1561, 0.0
    %v1680 = vmax.f32 %v1566, 0.0
    %v1681 = vmax.f32 %v1571, 0.0
    %v1682 = vmax.f32 %v1576, 0.0
    %v1683 = vmax.f32 %v1581, 0.0
    %v1684 = vmax.f32 %v1586, 0.0
    %v1685 = vmax.f32 %v1591, 0.0
    %v1686 = vmax.f32 %v1596, 0.0
    %v1687 = vmax.f32 %v1601, 0.0
    %v1688 = vmax.f32 %v1606, 0.0
    %v1689 = vmax.f32 %v1611, 0.0
    %v1690 = vmax.f32 %v1616, 0.0
    %v1691 = vmax.f32 %v1621, 0.0
    %v1692 = vmax.f32 %v1626, 0.0
    %v1693 = vmax.f32 %v1631, 0.0
    %v1694 = vmax.f32 %v1636, 0.0
    %v1695 = vmax.f32 %v1641, 0.0
    %v1696 = vmax.f32 %v1646, 0.0
    %v1697 = vmax.f32 %v1651, 0.0
    %v1698 = vmax.f32 %v1656, 0.0
    %v1699 = vmax.f32 %v1661, 0.0
    %v1700 = vmax.f32 %v1666, 0.0
    %v1701 = vld [vmem:[#allocation13] sm:$0xff]
    %v1702 = vld [vmem:[#allocation13 + $0x8] sm:$0xff]
    %v1703 = vld [vmem:[#allocation13 + $0x10] sm:$0xff]
    %v1704 = vld [vmem:[#allocation13 + $0x18] sm:$0xff]
    %v1705 = vld [vmem:[#allocation13 + $0x20] sm:$0xff]
    %v1706 = vld [vmem:[#allocation13 + $0x28] sm:$0xff]
    %v1707 = vld [vmem:[#allocation13 + $0x30] sm:$0xff]
    %v1708 = vld [vmem:[#allocation13 + $0x38] sm:$0xff]
    %v1709 = vld [vmem:[#allocation13 + $0x40] sm:$0xff]
    %v1710 = vld [vmem:[#allocation13 + $0x48] sm:$0xff]
    %v1711 = vld [vmem:[#allocation13 + $0x50] sm:$0xff]
    %v1712 = vld [vmem:[#allocation13 + $0x58] sm:$0xff]
    %v1713 = vld [vmem:[#allocation13 + $0x60] sm:$0xff]
    %v1714 = vld [vmem:[#allocation13 + $0x68] sm:$0xff]
    %v1715 = vld [vmem:[#allocation13 + $0x70] sm:$0xff]
    %v1716 = vld [vmem:[#allocation13 + $0x78] sm:$0xff]
    %v1717 = vld [vmem:[%s11] sm:$0x1]
    %v1719 = vlaneseq
    %v1720 = vshrl.u32 %v1719, 7
    %v1721 = vsub.s32 0, %v1720
    %v1722 = vrot.slane %v1717, %v1721
    %1724 = vmatprep.subr.mxu0 0.0
    %1725 = vmatpush1.msra.mxu0 %v1716
    %1726 = vmatprep.subr.mxu0 0.0
    %1727 = vmatpush1.msra.mxu0 %v1715
    %1728 = vmatprep.subr.mxu0 0.0
    %1729 = vmatpush1.msra.mxu0 %v1714
    %1730 = vmatprep.subr.mxu0 0.0
    %1731 = vmatpush1.msra.mxu0 %v1713
    %1732 = vmatprep.subr.mxu0 0.0
    %1733 = vmatpush1.msra.mxu0 %v1712
    %1734 = vmatprep.subr.mxu0 0.0
    %1735 = vmatpush1.msra.mxu0 %v1711
    %1736 = vmatprep.subr.mxu0 0.0
    %1737 = vmatpush1.msra.mxu0 %v1710
    %1738 = vmatprep.subr.mxu0 0.0
    %1739 = vmatpush1.msra.mxu0 %v1709
    %1740 = vmatprep.subr.mxu0 0.0
    %1741 = vmatpush1.msra.mxu0 %v1708
    %1742 = vmatprep.subr.mxu0 0.0
    %1743 = vmatpush1.msra.mxu0 %v1707
    %1744 = vmatprep.subr.mxu0 0.0
    %1745 = vmatpush1.msra.mxu0 %v1706
    %1746 = vmatprep.subr.mxu0 0.0
    %1747 = vmatpush1.msra.mxu0 %v1705
    %1748 = vmatprep.subr.mxu0 0.0
    %1749 = vmatpush1.msra.mxu0 %v1704
    %1750 = vmatprep.subr.mxu0 0.0
    %1751 = vmatpush1.msra.mxu0 %v1703
    %1752 = vmatprep.subr.mxu0 0.0
    %1753 = vmatpush1.msra.mxu0 %v1702
    %1754 = vmatprep.subr.mxu0 0.0
    %1755 = vmatpush1.msra.mxu0 %v1701
    %1756 = vmatprep.subr.mxu0 0.0
    %1757 = vmatpush2.msra.mxu0 0.0
    %1758 = vmatprep.subr.mxu0 0.0
    %1759 = vmatpush2.msra.mxu0 0.0
    %1760 = vmatprep.subr.mxu0 0.0
    %1761 = vmatpush2.msra.mxu0 0.0
    %1762 = vmatprep.subr.mxu0 0.0
    %1763 = vmatpush2.msra.mxu0 0.0
    %1764 = vmatprep.subr.mxu0 0.0
    %1765 = vmatpush2.msra.mxu0 0.0
    %1766 = vmatprep.subr.mxu0 0.0
    %1767 = vmatpush2.msra.mxu0 0.0
    %1768 = vmatprep.subr.mxu0 0.0
    %1769 = vmatpush2.msra.mxu0 0.0
    %1770 = vmatprep.subr.mxu0 0.0
    %1771 = vmatpush2.msra.mxu0 0.0
    %1772 = vmatprep.subr.mxu0 0.0
    %1773 = vmatpush2.msra.mxu0 0.0
    %1774 = vmatprep.subr.mxu0 0.0
    %1775 = vmatpush2.msra.mxu0 0.0
    %1776 = vmatprep.subr.mxu0 0.0
    %1777 = vmatpush2.msra.mxu0 0.0
    %1778 = vmatprep.subr.mxu0 0.0
    %1779 = vmatpush2.msra.mxu0 0.0
    %1780 = vmatprep.subr.mxu0 0.0
    %1781 = vmatpush2.msra.mxu0 0.0
    %1782 = vmatprep.subr.mxu0 0.0
    %1783 = vmatpush2.msra.mxu0 0.0
    %1784 = vmatprep.subr.mxu0 0.0
    %1785 = vmatpush2.msra.mxu0 0.0
    %1786 = vmatprep.subr.mxu0 0.0
    %1787 = vmatpush2.msra.mxu0 0.0
    %1788 = vmatprep.mubr.f32.mxu0 0.0
    %1789 = vmatmul.mubr.f32.gmra.mxu0 %v1669
    %v1790 = vpop.f32.mrf.mxu0
    %v1791 = vadd.f32 %v1722, %v1790
    %v1792 = vpop.f32.mrf.mxu0
    %1793 = vmatprep.mubr.f32.mxu0 0.0
    %1794 = vmatmul.mubr.f32.gmra.mxu0 %v1670
    %v1795 = vpop.f32.mrf.mxu0
    %v1796 = vadd.f32 %v1722, %v1795
    %v1797 = vpop.f32.mrf.mxu0
    %1798 = vmatprep.mubr.f32.mxu0 0.0
    %1799 = vmatmul.mubr.f32.gmra.mxu0 %v1671
    %v1800 = vpop.f32.mrf.mxu0
    %v1801 = vadd.f32 %v1722, %v1800
    %v1802 = vpop.f32.mrf.mxu0
    %1803 = vmatprep.mubr.f32.mxu0 0.0
    %1804 = vmatmul.mubr.f32.gmra.mxu0 %v1672
    %v1805 = vpop.f32.mrf.mxu0
    %v1806 = vadd.f32 %v1722, %v1805
    %v1807 = vpop.f32.mrf.mxu0
    %1808 = vmatprep.mubr.f32.mxu0 0.0
    %1809 = vmatmul.mubr.f32.gmra.mxu0 %v1673
    %v1810 = vpop.f32.mrf.mxu0
    %v1811 = vadd.f32 %v1722, %v1810
    %v1812 = vpop.f32.mrf.mxu0
    %1813 = vmatprep.mubr.f32.mxu0 0.0
    %1814 = vmatmul.mubr.f32.gmra.mxu0 %v1674
    %v1815 = vpop.f32.mrf.mxu0
    %v1816 = vadd.f32 %v1722, %v1815
    %v1817 = vpop.f32.mrf.mxu0
    %1818 = vmatprep.mubr.f32.mxu0 0.0
    %1819 = vmatmul.mubr.f32.gmra.mxu0 %v1675
    %v1820 = vpop.f32.mrf.mxu0
    %v1821 = vadd.f32 %v1722, %v1820
    %v1822 = vpop.f32.mrf.mxu0
    %1823 = vmatprep.mubr.f32.mxu0 0.0
    %1824 = vmatmul.mubr.f32.gmra.mxu0 %v1676
    %v1825 = vpop.f32.mrf.mxu0
    %v1826 = vadd.f32 %v1722, %v1825
    %v1827 = vpop.f32.mrf.mxu0
    %1828 = vmatprep.mubr.f32.mxu0 0.0
    %1829 = vmatmul.mubr.f32.gmra.mxu0 %v1677
    %v1830 = vpop.f32.mrf.mxu0
    %v1831 = vadd.f32 %v1722, %v1830
    %v1832 = vpop.f32.mrf.mxu0
    %1833 = vmatprep.mubr.f32.mxu0 0.0
    %1834 = vmatmul.mubr.f32.gmra.mxu0 %v1678
    %v1835 = vpop.f32.mrf.mxu0
    %v1836 = vadd.f32 %v1722, %v1835
    %v1837 = vpop.f32.mrf.mxu0
    %1838 = vmatprep.mubr.f32.mxu0 0.0
    %1839 = vmatmul.mubr.f32.gmra.mxu0 %v1679
    %v1840 = vpop.f32.mrf.mxu0
    %v1841 = vadd.f32 %v1722, %v1840
    %v1842 = vpop.f32.mrf.mxu0
    %1843 = vmatprep.mubr.f32.mxu0 0.0
    %1844 = vmatmul.mubr.f32.gmra.mxu0 %v1680
    %v1845 = vpop.f32.mrf.mxu0
    %v1846 = vadd.f32 %v1722, %v1845
    %v1847 = vpop.f32.mrf.mxu0
    %1848 = vmatprep.mubr.f32.mxu0 0.0
    %1849 = vmatmul.mubr.f32.gmra.mxu0 %v1681
    %v1850 = vpop.f32.mrf.mxu0
    %v1851 = vadd.f32 %v1722, %v1850
    %v1852 = vpop.f32.mrf.mxu0
    %1853 = vmatprep.mubr.f32.mxu0 0.0
    %1854 = vmatmul.mubr.f32.gmra.mxu0 %v1682
    %v1855 = vpop.f32.mrf.mxu0
    %v1856 = vadd.f32 %v1722, %v1855
    %v1857 = vpop.f32.mrf.mxu0
    %1858 = vmatprep.mubr.f32.mxu0 0.0
    %1859 = vmatmul.mubr.f32.gmra.mxu0 %v1683
    %v1860 = vpop.f32.mrf.mxu0
    %v1861 = vadd.f32 %v1722, %v1860
    %v1862 = vpop.f32.mrf.mxu0
    %1863 = vmatprep.mubr.f32.mxu0 0.0
    %1864 = vmatmul.mubr.f32.gmra.mxu0 %v1684
    %v1865 = vpop.f32.mrf.mxu0
    %v1866 = vadd.f32 %v1722, %v1865
    %v1867 = vpop.f32.mrf.mxu0
    %1868 = vmatprep.mubr.f32.mxu0 0.0
    %1869 = vmatmul.mubr.f32.gmra.mxu0 %v1685
    %v1870 = vpop.f32.mrf.mxu0
    %v1871 = vadd.f32 %v1722, %v1870
    %v1872 = vpop.f32.mrf.mxu0
    %1873 = vmatprep.mubr.f32.mxu0 0.0
    %1874 = vmatmul.mubr.f32.gmra.mxu0 %v1686
    %v1875 = vpop.f32.mrf.mxu0
    %v1876 = vadd.f32 %v1722, %v1875
    %v1877 = vpop.f32.mrf.mxu0
    %1878 = vmatprep.mubr.f32.mxu0 0.0
    %1879 = vmatmul.mubr.f32.gmra.mxu0 %v1687
    %v1880 = vpop.f32.mrf.mxu0
    %v1881 = vadd.f32 %v1722, %v1880
    %v1882 = vpop.f32.mrf.mxu0
    %1883 = vmatprep.mubr.f32.mxu0 0.0
    %1884 = vmatmul.mubr.f32.gmra.mxu0 %v1688
    %v1885 = vpop.f32.mrf.mxu0
    %v1886 = vadd.f32 %v1722, %v1885
    %v1887 = vpop.f32.mrf.mxu0
    %1888 = vmatprep.mubr.f32.mxu0 0.0
    %1889 = vmatmul.mubr.f32.gmra.mxu0 %v1689
    %v1890 = vpop.f32.mrf.mxu0
    %v1891 = vadd.f32 %v1722, %v1890
    %v1892 = vpop.f32.mrf.mxu0
    %1893 = vmatprep.mubr.f32.mxu0 0.0
    %1894 = vmatmul.mubr.f32.gmra.mxu0 %v1690
    %v1895 = vpop.f32.mrf.mxu0
    %v1896 = vadd.f32 %v1722, %v1895
    %v1897 = vpop.f32.mrf.mxu0
    %1898 = vmatprep.mubr.f32.mxu0 0.0
    %1899 = vmatmul.mubr.f32.gmra.mxu0 %v1691
    %v1900 = vpop.f32.mrf.mxu0
    %v1901 = vadd.f32 %v1722, %v1900
    %v1902 = vpop.f32.mrf.mxu0
    %1903 = vmatprep.mubr.f32.mxu0 0.0
    %1904 = vmatmul.mubr.f32.gmra.mxu0 %v1692
    %v1905 = vpop.f32.mrf.mxu0
    %v1906 = vadd.f32 %v1722, %v1905
    %v1907 = vpop.f32.mrf.mxu0
    %1908 = vmatprep.mubr.f32.mxu0 0.0
    %1909 = vmatmul.mubr.f32.gmra.mxu0 %v1693
    %v1910 = vpop.f32.mrf.mxu0
    %v1911 = vadd.f32 %v1722, %v1910
    %v1912 = vpop.f32.mrf.mxu0
    %1913 = vmatprep.mubr.f32.mxu0 0.0
    %1914 = vmatmul.mubr.f32.gmra.mxu0 %v1694
    %v1915 = vpop.f32.mrf.mxu0
    %v1916 = vadd.f32 %v1722, %v1915
    %v1917 = vpop.f32.mrf.mxu0
    %1918 = vmatprep.mubr.f32.mxu0 0.0
    %1919 = vmatmul.mubr.f32.gmra.mxu0 %v1695
    %v1920 = vpop.f32.mrf.mxu0
    %v1921 = vadd.f32 %v1722, %v1920
    %v1922 = vpop.f32.mrf.mxu0
    %1923 = vmatprep.mubr.f32.mxu0 0.0
    %1924 = vmatmul.mubr.f32.gmra.mxu0 %v1696
    %v1925 = vpop.f32.mrf.mxu0
    %v1926 = vadd.f32 %v1722, %v1925
    %v1927 = vpop.f32.mrf.mxu0
    %1928 = vmatprep.mubr.f32.mxu0 0.0
    %1929 = vmatmul.mubr.f32.gmra.mxu0 %v1697
    %v1930 = vpop.f32.mrf.mxu0
    %v1931 = vadd.f32 %v1722, %v1930
    %v1932 = vpop.f32.mrf.mxu0
    %1933 = vmatprep.mubr.f32.mxu0 0.0
    %1934 = vmatmul.mubr.f32.gmra.mxu0 %v1698
    %v1935 = vpop.f32.mrf.mxu0
    %v1936 = vadd.f32 %v1722, %v1935
    %v1937 = vpop.f32.mrf.mxu0
    %1938 = vmatprep.mubr.f32.mxu0 0.0
    %1939 = vmatmul.mubr.f32.gmra.mxu0 %v1699
    %v1940 = vpop.f32.mrf.mxu0
    %v1941 = vadd.f32 %v1722, %v1940
    %v1942 = vpop.f32.mrf.mxu0
    %1943 = vmatprep.mubr.f32.mxu0 0.0
    %1944 = vmatmul.mubr.f32.gmra.mxu0 %v1700
    %v1945 = vpop.f32.mrf.mxu0
    %v1946 = vadd.f32 %v1722, %v1945
    %v1947 = vpop.f32.mrf.mxu0
    %1948 = vdwg.mxu0
    %v1949 = vmax.f32 %v1791, 0.0
    %v1950 = vmax.f32 %v1796, 0.0
    %v1951 = vmax.f32 %v1801, 0.0
    %v1952 = vmax.f32 %v1806, 0.0
    %v1953 = vmax.f32 %v1811, 0.0
    %v1954 = vmax.f32 %v1816, 0.0
    %v1955 = vmax.f32 %v1821, 0.0
    %v1956 = vmax.f32 %v1826, 0.0
    %v1957 = vmax.f32 %v1831, 0.0
    %v1958 = vmax.f32 %v1836, 0.0
    %v1959 = vmax.f32 %v1841, 0.0
    %v1960 = vmax.f32 %v1846, 0.0
    %v1961 = vmax.f32 %v1851, 0.0
    %v1962 = vmax.f32 %v1856, 0.0
    %v1963 = vmax.f32 %v1861, 0.0
    %v1964 = vmax.f32 %v1866, 0.0
    %v1965 = vmax.f32 %v1871, 0.0
    %v1966 = vmax.f32 %v1876, 0.0
    %v1967 = vmax.f32 %v1881, 0.0
    %v1968 = vmax.f32 %v1886, 0.0
    %v1969 = vmax.f32 %v1891, 0.0
    %v1970 = vmax.f32 %v1896, 0.0
    %v1971 = vmax.f32 %v1901, 0.0
    %v1972 = vmax.f32 %v1906, 0.0
    %v1973 = vmax.f32 %v1911, 0.0
    %v1974 = vmax.f32 %v1916, 0.0
    %v1975 = vmax.f32 %v1921, 0.0
    %v1976 = vmax.f32 %v1926, 0.0
    %v1977 = vmax.f32 %v1931, 0.0
    %v1978 = vmax.f32 %v1936, 0.0
    %v1979 = vmax.f32 %v1941, 0.0
    %v1980 = vmax.f32 %v1946, 0.0
    %v1981 = vld [vmem:[#allocation14] sm:$0xff]
    %v1982 = vld [vmem:[#allocation14 + $0x8] sm:$0xff]
    %v1983 = vld [vmem:[#allocation14 + $0x10] sm:$0xff]
    %v1984 = vld [vmem:[#allocation14 + $0x18] sm:$0xff]
    %v1985 = vld [vmem:[#allocation14 + $0x20] sm:$0xff]
    %v1986 = vld [vmem:[#allocation14 + $0x28] sm:$0xff]
    %v1987 = vld [vmem:[#allocation14 + $0x30] sm:$0xff]
    %v1988 = vld [vmem:[#allocation14 + $0x38] sm:$0xff]
    %v1989 = vld [vmem:[#allocation14 + $0x40] sm:$0xff]
    %v1990 = vld [vmem:[#allocation14 + $0x48] sm:$0xff]
    %v1991 = vld [vmem:[#allocation14 + $0x50] sm:$0xff]
    %v1992 = vld [vmem:[#allocation14 + $0x58] sm:$0xff]
    %v1993 = vld [vmem:[#allocation14 + $0x60] sm:$0xff]
    %v1994 = vld [vmem:[#allocation14 + $0x68] sm:$0xff]
    %v1995 = vld [vmem:[#allocation14 + $0x70] sm:$0xff]
    %v1996 = vld [vmem:[#allocation14 + $0x78] sm:$0xff]
    %v1997 = vld [vmem:[#allocation14 + $0x80] sm:$0xff]
    %v1998 = vld [vmem:[#allocation14 + $0x88] sm:$0xff]
    %v1999 = vld [vmem:[#allocation14 + $0x90] sm:$0xff]
    %v2000 = vld [vmem:[#allocation14 + $0x98] sm:$0xff]
    %v2001 = vld [vmem:[#allocation14 + $0xa0] sm:$0xff]
    %v2002 = vld [vmem:[#allocation14 + $0xa8] sm:$0xff]
    %v2003 = vld [vmem:[#allocation14 + $0xb0] sm:$0xff]
    %v2004 = vld [vmem:[#allocation14 + $0xb8] sm:$0xff]
    %v2005 = vld [vmem:[#allocation14 + $0xc0] sm:$0xff]
    %v2006 = vld [vmem:[#allocation14 + $0xc8] sm:$0xff]
    %v2007 = vld [vmem:[#allocation14 + $0xd0] sm:$0xff]
    %v2008 = vld [vmem:[#allocation14 + $0xd8] sm:$0xff]
    %v2009 = vld [vmem:[#allocation14 + $0xe0] sm:$0xff]
    %v2010 = vld [vmem:[#allocation14 + $0xe8] sm:$0xff]
    %v2011 = vld [vmem:[#allocation14 + $0xf0] sm:$0xff]
    %v2012 = vld [vmem:[#allocation14 + $0xf8] sm:$0xff]
    %v2013 = vld [vmem:[%s13] sm:$0x3]
    %v2015 = vlaneseq
    %v2016 = vshrl.u32 %v2015, 7
    %v2017 = vsub.s32 0, %v2016
    %v2018 = vrot.slane %v2013, %v2017
    %v2019 = vlaneseq
    %v2020 = vshrl.u32 %v2019, 7
    %v2021 = vsub.s32 1, %v2020
    %v2022 = vrot.slane %v2013, %v2021
    %2025 = vmatprep.subr.mxu0 %v2012
    %2026 = vmatpush1.msra.mxu0 %v2011
    %2027 = vmatprep.subr.mxu0 %v2010
    %2028 = vmatpush1.msra.mxu0 %v2009
    %2029 = vmatprep.subr.mxu0 %v2008
    %2030 = vmatpush1.msra.mxu0 %v2007
    %2031 = vmatprep.subr.mxu0 %v2006
    %2032 = vmatpush1.msra.mxu0 %v2005
    %2033 = vmatprep.subr.mxu0 %v2004
    %2034 = vmatpush1.msra.mxu0 %v2003
    %2035 = vmatprep.subr.mxu0 %v2002
    %2036 = vmatpush1.msra.mxu0 %v2001
    %2037 = vmatprep.subr.mxu0 %v2000
    %2038 = vmatpush1.msra.mxu0 %v1999
    %2039 = vmatprep.subr.mxu0 %v1998
    %2040 = vmatpush1.msra.mxu0 %v1997
    %2041 = vmatprep.subr.mxu0 %v1996
    %2042 = vmatpush1.msra.mxu0 %v1995
    %2043 = vmatprep.subr.mxu0 %v1994
    %2044 = vmatpush1.msra.mxu0 %v1993
    %2045 = vmatprep.subr.mxu0 %v1992
    %2046 = vmatpush1.msra.mxu0 %v1991
    %2047 = vmatprep.subr.mxu0 %v1990
    %2048 = vmatpush1.msra.mxu0 %v1989
    %2049 = vmatprep.subr.mxu0 %v1988
    %2050 = vmatpush1.msra.mxu0 %v1987
    %2051 = vmatprep.subr.mxu0 %v1986
    %2052 = vmatpush1.msra.mxu0 %v1985
    %2053 = vmatprep.subr.mxu0 %v1984
    %2054 = vmatpush1.msra.mxu0 %v1983
    %2055 = vmatprep.subr.mxu0 %v1982
    %2056 = vmatpush1.msra.mxu0 %v1981
    %2057 = vmatprep.subr.mxu0 0.0
    %2058 = vmatpush2.msra.mxu0 0.0
    %2059 = vmatprep.subr.mxu0 0.0
    %2060 = vmatpush2.msra.mxu0 0.0
    %2061 = vmatprep.subr.mxu0 0.0
    %2062 = vmatpush2.msra.mxu0 0.0
    %2063 = vmatprep.subr.mxu0 0.0
    %2064 = vmatpush2.msra.mxu0 0.0
    %2065 = vmatprep.subr.mxu0 0.0
    %2066 = vmatpush2.msra.mxu0 0.0
    %2067 = vmatprep.subr.mxu0 0.0
    %2068 = vmatpush2.msra.mxu0 0.0
    %2069 = vmatprep.subr.mxu0 0.0
    %2070 = vmatpush2.msra.mxu0 0.0
    %2071 = vmatprep.subr.mxu0 0.0
    %2072 = vmatpush2.msra.mxu0 0.0
    %2073 = vmatprep.subr.mxu0 0.0
    %2074 = vmatpush2.msra.mxu0 0.0
    %2075 = vmatprep.subr.mxu0 0.0
    %2076 = vmatpush2.msra.mxu0 0.0
    %2077 = vmatprep.subr.mxu0 0.0
    %2078 = vmatpush2.msra.mxu0 0.0
    %2079 = vmatprep.subr.mxu0 0.0
    %2080 = vmatpush2.msra.mxu0 0.0
    %2081 = vmatprep.subr.mxu0 0.0
    %2082 = vmatpush2.msra.mxu0 0.0
    %2083 = vmatprep.subr.mxu0 0.0
    %2084 = vmatpush2.msra.mxu0 0.0
    %2085 = vmatprep.subr.mxu0 0.0
    %2086 = vmatpush2.msra.mxu0 0.0
    %2087 = vmatprep.subr.mxu0 0.0
    %2088 = vmatpush2.msra.mxu0 0.0
    %2089 = vmatprep.mubr.f32.mxu0 0.0
    %2090 = vmatmul.mubr.f32.gmra.mxu0 %v1949
    %v2091 = vpop.f32.mrf.mxu0
    %v2092 = vadd.f32 %v2018, %v2091
    %v2093 = vpop.f32.mrf.mxu0
    %v2094 = vadd.f32 %v2022, %v2093
    %2095 = vmatprep.mubr.f32.mxu0 0.0
    %2096 = vmatmul.mubr.f32.gmra.mxu0 %v1950
    %v2097 = vpop.f32.mrf.mxu0
    %v2098 = vadd.f32 %v2018, %v2097
    %v2099 = vpop.f32.mrf.mxu0
    %v2100 = vadd.f32 %v2022, %v2099
    %2101 = vmatprep.mubr.f32.mxu0 0.0
    %2102 = vmatmul.mubr.f32.gmra.mxu0 %v1951
    %v2103 = vpop.f32.mrf.mxu0
    %v2104 = vadd.f32 %v2018, %v2103
    %v2105 = vpop.f32.mrf.mxu0
    %v2106 = vadd.f32 %v2022, %v2105
    %2107 = vmatprep.mubr.f32.mxu0 0.0
    %2108 = vmatmul.mubr.f32.gmra.mxu0 %v1952
    %v2109 = vpop.f32.mrf.mxu0
    %v2110 = vadd.f32 %v2018, %v2109
    %v2111 = vpop.f32.mrf.mxu0
    %v2112 = vadd.f32 %v2022, %v2111
    %2113 = vmatprep.mubr.f32.mxu0 0.0
    %2114 = vmatmul.mubr.f32.gmra.mxu0 %v1953
    %v2115 = vpop.f32.mrf.mxu0
    %v2116 = vadd.f32 %v2018, %v2115
    %v2117 = vpop.f32.mrf.mxu0
    %v2118 = vadd.f32 %v2022, %v2117
    %2119 = vmatprep.mubr.f32.mxu0 0.0
    %2120 = vmatmul.mubr.f32.gmra.mxu0 %v1954
    %v2121 = vpop.f32.mrf.mxu0
    %v2122 = vadd.f32 %v2018, %v2121
    %v2123 = vpop.f32.mrf.mxu0
    %v2124 = vadd.f32 %v2022, %v2123
    %2125 = vmatprep.mubr.f32.mxu0 0.0
    %2126 = vmatmul.mubr.f32.gmra.mxu0 %v1955
    %v2127 = vpop.f32.mrf.mxu0
    %v2128 = vadd.f32 %v2018, %v2127
    %v2129 = vpop.f32.mrf.mxu0
    %v2130 = vadd.f32 %v2022, %v2129
    %2131 = vmatprep.mubr.f32.mxu0 0.0
    %2132 = vmatmul.mubr.f32.gmra.mxu0 %v1956
    %v2133 = vpop.f32.mrf.mxu0
    %v2134 = vadd.f32 %v2018, %v2133
    %v2135 = vpop.f32.mrf.mxu0
    %v2136 = vadd.f32 %v2022, %v2135
    %2137 = vmatprep.mubr.f32.mxu0 0.0
    %2138 = vmatmul.mubr.f32.gmra.mxu0 %v1957
    %v2139 = vpop.f32.mrf.mxu0
    %v2140 = vadd.f32 %v2018, %v2139
    %v2141 = vpop.f32.mrf.mxu0
    %v2142 = vadd.f32 %v2022, %v2141
    %2143 = vmatprep.mubr.f32.mxu0 0.0
    %2144 = vmatmul.mubr.f32.gmra.mxu0 %v1958
    %v2145 = vpop.f32.mrf.mxu0
    %v2146 = vadd.f32 %v2018, %v2145
    %v2147 = vpop.f32.mrf.mxu0
    %v2148 = vadd.f32 %v2022, %v2147
    %2149 = vmatprep.mubr.f32.mxu0 0.0
    %2150 = vmatmul.mubr.f32.gmra.mxu0 %v1959
    %v2151 = vpop.f32.mrf.mxu0
    %v2152 = vadd.f32 %v2018, %v2151
    %v2153 = vpop.f32.mrf.mxu0
    %v2154 = vadd.f32 %v2022, %v2153
    %2155 = vmatprep.mubr.f32.mxu0 0.0
    %2156 = vmatmul.mubr.f32.gmra.mxu0 %v1960
    %v2157 = vpop.f32.mrf.mxu0
    %v2158 = vadd.f32 %v2018, %v2157
    %v2159 = vpop.f32.mrf.mxu0
    %v2160 = vadd.f32 %v2022, %v2159
    %2161 = vmatprep.mubr.f32.mxu0 0.0
    %2162 = vmatmul.mubr.f32.gmra.mxu0 %v1961
    %v2163 = vpop.f32.mrf.mxu0
    %v2164 = vadd.f32 %v2018, %v2163
    %v2165 = vpop.f32.mrf.mxu0
    %v2166 = vadd.f32 %v2022, %v2165
    %2167 = vmatprep.mubr.f32.mxu0 0.0
    %2168 = vmatmul.mubr.f32.gmra.mxu0 %v1962
    %v2169 = vpop.f32.mrf.mxu0
    %v2170 = vadd.f32 %v2018, %v2169
    %v2171 = vpop.f32.mrf.mxu0
    %v2172 = vadd.f32 %v2022, %v2171
    %2173 = vmatprep.mubr.f32.mxu0 0.0
    %2174 = vmatmul.mubr.f32.gmra.mxu0 %v1963
    %v2175 = vpop.f32.mrf.mxu0
    %v2176 = vadd.f32 %v2018, %v2175
    %v2177 = vpop.f32.mrf.mxu0
    %v2178 = vadd.f32 %v2022, %v2177
    %2179 = vmatprep.mubr.f32.mxu0 0.0
    %2180 = vmatmul.mubr.f32.gmra.mxu0 %v1964
    %v2181 = vpop.f32.mrf.mxu0
    %v2182 = vadd.f32 %v2018, %v2181
    %v2183 = vpop.f32.mrf.mxu0
    %v2184 = vadd.f32 %v2022, %v2183
    %2185 = vmatprep.mubr.f32.mxu0 0.0
    %2186 = vmatmul.mubr.f32.gmra.mxu0 %v1965
    %v2187 = vpop.f32.mrf.mxu0
    %v2188 = vadd.f32 %v2018, %v2187
    %v2189 = vpop.f32.mrf.mxu0
    %v2190 = vadd.f32 %v2022, %v2189
    %2191 = vmatprep.mubr.f32.mxu0 0.0
    %2192 = vmatmul.mubr.f32.gmra.mxu0 %v1966
    %v2193 = vpop.f32.mrf.mxu0
    %v2194 = vadd.f32 %v2018, %v2193
    %v2195 = vpop.f32.mrf.mxu0
    %v2196 = vadd.f32 %v2022, %v2195
    %2197 = vmatprep.mubr.f32.mxu0 0.0
    %2198 = vmatmul.mubr.f32.gmra.mxu0 %v1967
    %v2199 = vpop.f32.mrf.mxu0
    %v2200 = vadd.f32 %v2018, %v2199
    %v2201 = vpop.f32.mrf.mxu0
    %v2202 = vadd.f32 %v2022, %v2201
    %2203 = vmatprep.mubr.f32.mxu0 0.0
    %2204 = vmatmul.mubr.f32.gmra.mxu0 %v1968
    %v2205 = vpop.f32.mrf.mxu0
    %v2206 = vadd.f32 %v2018, %v2205
    %v2207 = vpop.f32.mrf.mxu0
    %v2208 = vadd.f32 %v2022, %v2207
    %2209 = vmatprep.mubr.f32.mxu0 0.0
    %2210 = vmatmul.mubr.f32.gmra.mxu0 %v1969
    %v2211 = vpop.f32.mrf.mxu0
    %v2212 = vadd.f32 %v2018, %v2211
    %v2213 = vpop.f32.mrf.mxu0
    %v2214 = vadd.f32 %v2022, %v2213
    %2215 = vmatprep.mubr.f32.mxu0 0.0
    %2216 = vmatmul.mubr.f32.gmra.mxu0 %v1970
    %v2217 = vpop.f32.mrf.mxu0
    %v2218 = vadd.f32 %v2018, %v2217
    %v2219 = vpop.f32.mrf.mxu0
    %v2220 = vadd.f32 %v2022, %v2219
    %2221 = vmatprep.mubr.f32.mxu0 0.0
    %2222 = vmatmul.mubr.f32.gmra.mxu0 %v1971
    %v2223 = vpop.f32.mrf.mxu0
    %v2224 = vadd.f32 %v2018, %v2223
    %v2225 = vpop.f32.mrf.mxu0
    %v2226 = vadd.f32 %v2022, %v2225
    %2227 = vmatprep.mubr.f32.mxu0 0.0
    %2228 = vmatmul.mubr.f32.gmra.mxu0 %v1972
    %v2229 = vpop.f32.mrf.mxu0
    %v2230 = vadd.f32 %v2018, %v2229
    %v2231 = vpop.f32.mrf.mxu0
    %v2232 = vadd.f32 %v2022, %v2231
    %2233 = vmatprep.mubr.f32.mxu0 0.0
    %2234 = vmatmul.mubr.f32.gmra.mxu0 %v1973
    %v2235 = vpop.f32.mrf.mxu0
    %v2236 = vadd.f32 %v2018, %v2235
    %v2237 = vpop.f32.mrf.mxu0
    %v2238 = vadd.f32 %v2022, %v2237
    %2239 = vmatprep.mubr.f32.mxu0 0.0
    %2240 = vmatmul.mubr.f32.gmra.mxu0 %v1974
    %v2241 = vpop.f32.mrf.mxu0
    %v2242 = vadd.f32 %v2018, %v2241
    %v2243 = vpop.f32.mrf.mxu0
    %v2244 = vadd.f32 %v2022, %v2243
    %2245 = vmatprep.mubr.f32.mxu0 0.0
    %2246 = vmatmul.mubr.f32.gmra.mxu0 %v1975
    %v2247 = vpop.f32.mrf.mxu0
    %v2248 = vadd.f32 %v2018, %v2247
    %v2249 = vpop.f32.mrf.mxu0
    %v2250 = vadd.f32 %v2022, %v2249
    %2251 = vmatprep.mubr.f32.mxu0 0.0
    %2252 = vmatmul.mubr.f32.gmra.mxu0 %v1976
    %v2253 = vpop.f32.mrf.mxu0
    %v2254 = vadd.f32 %v2018, %v2253
    %v2255 = vpop.f32.mrf.mxu0
    %v2256 = vadd.f32 %v2022, %v2255
    %2257 = vmatprep.mubr.f32.mxu0 0.0
    %2258 = vmatmul.mubr.f32.gmra.mxu0 %v1977
    %v2259 = vpop.f32.mrf.mxu0
    %v2260 = vadd.f32 %v2018, %v2259
    %v2261 = vpop.f32.mrf.mxu0
    %v2262 = vadd.f32 %v2022, %v2261
    %2263 = vmatprep.mubr.f32.mxu0 0.0
    %2264 = vmatmul.mubr.f32.gmra.mxu0 %v1978
    %v2265 = vpop.f32.mrf.mxu0
    %v2266 = vadd.f32 %v2018, %v2265
    %v2267 = vpop.f32.mrf.mxu0
    %v2268 = vadd.f32 %v2022, %v2267
    %2269 = vmatprep.mubr.f32.mxu0 0.0
    %2270 = vmatmul.mubr.f32.gmra.mxu0 %v1979
    %v2271 = vpop.f32.mrf.mxu0
    %v2272 = vadd.f32 %v2018, %v2271
    %v2273 = vpop.f32.mrf.mxu0
    %v2274 = vadd.f32 %v2022, %v2273
    %2275 = vmatprep.mubr.f32.mxu0 0.0
    %2276 = vmatmul.mubr.f32.gmra.mxu0 %v1980
    %v2277 = vpop.f32.mrf.mxu0
    %v2278 = vadd.f32 %v2018, %v2277
    %v2279 = vpop.f32.mrf.mxu0
    %v2280 = vadd.f32 %v2022, %v2279
    %2281 = vdwg.mxu0
    %v2282 = vxor.u32 %v2092, 2147483648
    %v2283 = vxor.u32 %v2094, 2147483648
    %v2284 = vxor.u32 %v2098, 2147483648
    %v2285 = vxor.u32 %v2100, 2147483648
    %v2286 = vxor.u32 %v2104, 2147483648
    %v2287 = vxor.u32 %v2106, 2147483648
    %v2288 = vxor.u32 %v2110, 2147483648
    %v2289 = vxor.u32 %v2112, 2147483648
    %v2290 = vxor.u32 %v2116, 2147483648
    %v2291 = vxor.u32 %v2118, 2147483648
    %v2292 = vxor.u32 %v2122, 2147483648
    %v2293 = vxor.u32 %v2124, 2147483648
    %v2294 = vxor.u32 %v2128, 2147483648
    %v2295 = vxor.u32 %v2130, 2147483648
    %v2296 = vxor.u32 %v2134, 2147483648
    %v2297 = vxor.u32 %v2136, 2147483648
    %v2298 = vxor.u32 %v2140, 2147483648
    %v2299 = vxor.u32 %v2142, 2147483648
    %v2300 = vxor.u32 %v2146, 2147483648
    %v2301 = vxor.u32 %v2148, 2147483648
    %v2302 = vxor.u32 %v2152, 2147483648
    %v2303 = vxor.u32 %v2154, 2147483648
    %v2304 = vxor.u32 %v2158, 2147483648
    %v2305 = vxor.u32 %v2160, 2147483648
    %v2306 = vxor.u32 %v2164, 2147483648
    %v2307 = vxor.u32 %v2166, 2147483648
    %v2308 = vxor.u32 %v2170, 2147483648
    %v2309 = vxor.u32 %v2172, 2147483648
    %v2310 = vxor.u32 %v2176, 2147483648
    %v2311 = vxor.u32 %v2178, 2147483648
    %v2312 = vxor.u32 %v2182, 2147483648
    %v2313 = vxor.u32 %v2184, 2147483648
    %v2314 = vxor.u32 %v2188, 2147483648
    %v2315 = vxor.u32 %v2190, 2147483648
    %v2316 = vxor.u32 %v2194, 2147483648
    %v2317 = vxor.u32 %v2196, 2147483648
    %v2318 = vxor.u32 %v2200, 2147483648
    %v2319 = vxor.u32 %v2202, 2147483648
    %v2320 = vxor.u32 %v2206, 2147483648
    %v2321 = vxor.u32 %v2208, 2147483648
    %v2322 = vxor.u32 %v2212, 2147483648
    %v2323 = vxor.u32 %v2214, 2147483648
    %v2324 = vxor.u32 %v2218, 2147483648
    %v2325 = vxor.u32 %v2220, 2147483648
    %v2326 = vxor.u32 %v2224, 2147483648
    %v2327 = vxor.u32 %v2226, 2147483648
    %v2328 = vxor.u32 %v2230, 2147483648
    %v2329 = vxor.u32 %v2232, 2147483648
    %v2330 = vxor.u32 %v2236, 2147483648
    %v2331 = vxor.u32 %v2238, 2147483648
    %v2332 = vxor.u32 %v2242, 2147483648
    %v2333 = vxor.u32 %v2244, 2147483648
    %v2334 = vxor.u32 %v2248, 2147483648
    %v2335 = vxor.u32 %v2250, 2147483648
    %v2336 = vxor.u32 %v2254, 2147483648
    %v2337 = vxor.u32 %v2256, 2147483648
    %v2338 = vxor.u32 %v2260, 2147483648
    %v2339 = vxor.u32 %v2262, 2147483648
    %v2340 = vxor.u32 %v2266, 2147483648
    %v2341 = vxor.u32 %v2268, 2147483648
    %v2342 = vxor.u32 %v2272, 2147483648
    %v2343 = vxor.u32 %v2274, 2147483648
    %v2344 = vxor.u32 %v2278, 2147483648
    %v2345 = vxor.u32 %v2280, 2147483648
    %v2346 = vmul.f32 %v2282, 1.442695
    %v2347 = vpow.pop %v2346
    %v2348 = vmul.f32 %v2283, 1.442695
    %v2349 = vpow.pop %v2348
    %v2350 = vmul.f32 %v2284, 1.442695
    %v2351 = vpow.pop %v2350
    %v2352 = vmul.f32 %v2285, 1.442695
    %v2353 = vpow.pop %v2352
    %v2354 = vmul.f32 %v2286, 1.442695
    %v2355 = vpow.pop %v2354
    %v2356 = vmul.f32 %v2287, 1.442695
    %v2357 = vpow.pop %v2356
    %v2358 = vmul.f32 %v2288, 1.442695
    %v2359 = vpow.pop %v2358
    %v2360 = vmul.f32 %v2289, 1.442695
    %v2361 = vpow.pop %v2360
    %v2362 = vmul.f32 %v2290, 1.442695
    %v2363 = vpow.pop %v2362
    %v2364 = vmul.f32 %v2291, 1.442695
    %v2365 = vpow.pop %v2364
    %v2366 = vmul.f32 %v2292, 1.442695
    %v2367 = vpow.pop %v2366
    %v2368 = vmul.f32 %v2293, 1.442695
    %v2369 = vpow.pop %v2368
    %v2370 = vmul.f32 %v2294, 1.442695
    %v2371 = vpow.pop %v2370
    %v2372 = vmul.f32 %v2295, 1.442695
    %v2373 = vpow.pop %v2372
    %v2374 = vmul.f32 %v2296, 1.442695
    %v2375 = vpow.pop %v2374
    %v2376 = vmul.f32 %v2297, 1.442695
    %v2377 = vpow.pop %v2376
    %v2378 = vmul.f32 %v2298, 1.442695
    %v2379 = vpow.pop %v2378
    %v2380 = vmul.f32 %v2299, 1.442695
    %v2381 = vpow.pop %v2380
    %v2382 = vmul.f32 %v2300, 1.442695
    %v2383 = vpow.pop %v2382
    %v2384 = vmul.f32 %v2301, 1.442695
    %v2385 = vpow.pop %v2384
    %v2386 = vmul.f32 %v2302, 1.442695
    %v2387 = vpow.pop %v2386
    %v2388 = vmul.f32 %v2303, 1.442695
    %v2389 = vpow.pop %v2388
    %v2390 = vmul.f32 %v2304, 1.442695
    %v2391 = vpow.pop %v2390
    %v2392 = vmul.f32 %v2305, 1.442695
    %v2393 = vpow.pop %v2392
    %v2394 = vmul.f32 %v2306, 1.442695
    %v2395 = vpow.pop %v2394
    %v2396 = vmul.f32 %v2307, 1.442695
    %v2397 = vpow.pop %v2396
    %v2398 = vmul.f32 %v2308, 1.442695
    %v2399 = vpow.pop %v2398
    %v2400 = vmul.f32 %v2309, 1.442695
    %v2401 = vpow.pop %v2400
    %v2402 = vmul.f32 %v2310, 1.442695
    %v2403 = vpow.pop %v2402
    %v2404 = vmul.f32 %v2311, 1.442695
    %v2405 = vpow.pop %v2404
    %v2406 = vmul.f32 %v2312, 1.442695
    %v2407 = vpow.pop %v2406
    %v2408 = vmul.f32 %v2313, 1.442695
    %v2409 = vpow.pop %v2408
    %v2410 = vmul.f32 %v2314, 1.442695
    %v2411 = vpow.pop %v2410
    %v2412 = vmul.f32 %v2315, 1.442695
    %v2413 = vpow.pop %v2412
    %v2414 = vmul.f32 %v2316, 1.442695
    %v2415 = vpow.pop %v2414
    %v2416 = vmul.f32 %v2317, 1.442695
    %v2417 = vpow.pop %v2416
    %v2418 = vmul.f32 %v2318, 1.442695
    %v2419 = vpow.pop %v2418
    %v2420 = vmul.f32 %v2319, 1.442695
    %v2421 = vpow.pop %v2420
    %v2422 = vmul.f32 %v2320, 1.442695
    %v2423 = vpow.pop %v2422
    %v2424 = vmul.f32 %v2321, 1.442695
    %v2425 = vpow.pop %v2424
    %v2426 = vmul.f32 %v2322, 1.442695
    %v2427 = vpow.pop %v2426
    %v2428 = vmul.f32 %v2323, 1.442695
    %v2429 = vpow.pop %v2428
    %v2430 = vmul.f32 %v2324, 1.442695
    %v2431 = vpow.pop %v2430
    %v2432 = vmul.f32 %v2325, 1.442695
    %v2433 = vpow.pop %v2432
    %v2434 = vmul.f32 %v2326, 1.442695
    %v2435 = vpow.pop %v2434
    %v2436 = vmul.f32 %v2327, 1.442695
    %v2437 = vpow.pop %v2436
    %v2438 = vmul.f32 %v2328, 1.442695
    %v2439 = vpow.pop %v2438
    %v2440 = vmul.f32 %v2329, 1.442695
    %v2441 = vpow.pop %v2440
    %v2442 = vmul.f32 %v2330, 1.442695
    %v2443 = vpow.pop %v2442
    %v2444 = vmul.f32 %v2331, 1.442695
    %v2445 = vpow.pop %v2444
    %v2446 = vmul.f32 %v2332, 1.442695
    %v2447 = vpow.pop %v2446
    %v2448 = vmul.f32 %v2333, 1.442695
    %v2449 = vpow.pop %v2448
    %v2450 = vmul.f32 %v2334, 1.442695
    %v2451 = vpow.pop %v2450
    %v2452 = vmul.f32 %v2335, 1.442695
    %v2453 = vpow.pop %v2452
    %v2454 = vmul.f32 %v2336, 1.442695
    %v2455 = vpow.pop %v2454
    %v2456 = vmul.f32 %v2337, 1.442695
    %v2457 = vpow.pop %v2456
    %v2458 = vmul.f32 %v2338, 1.442695
    %v2459 = vpow.pop %v2458
    %v2460 = vmul.f32 %v2339, 1.442695
    %v2461 = vpow.pop %v2460
    %v2462 = vmul.f32 %v2340, 1.442695
    %v2463 = vpow.pop %v2462
    %v2464 = vmul.f32 %v2341, 1.442695
    %v2465 = vpow.pop %v2464
    %v2466 = vmul.f32 %v2342, 1.442695
    %v2467 = vpow.pop %v2466
    %v2468 = vmul.f32 %v2343, 1.442695
    %v2469 = vpow.pop %v2468
    %v2470 = vmul.f32 %v2344, 1.442695
    %v2471 = vpow.pop %v2470
    %v2472 = vmul.f32 %v2345, 1.442695
    %v2473 = vpow.pop %v2472
    %v2474 = vadd.f32 %v2347, 1.0
    %v2475 = vadd.f32 %v2349, 1.0
    %v2476 = vadd.f32 %v2351, 1.0
    %v2477 = vadd.f32 %v2353, 1.0
    %v2478 = vadd.f32 %v2355, 1.0
    %v2479 = vadd.f32 %v2357, 1.0
    %v2480 = vadd.f32 %v2359, 1.0
    %v2481 = vadd.f32 %v2361, 1.0
    %v2482 = vadd.f32 %v2363, 1.0
    %v2483 = vadd.f32 %v2365, 1.0
    %v2484 = vadd.f32 %v2367, 1.0
    %v2485 = vadd.f32 %v2369, 1.0
    %v2486 = vadd.f32 %v2371, 1.0
    %v2487 = vadd.f32 %v2373, 1.0
    %v2488 = vadd.f32 %v2375, 1.0
    %v2489 = vadd.f32 %v2377, 1.0
    %v2490 = vadd.f32 %v2379, 1.0
    %v2491 = vadd.f32 %v2381, 1.0
    %v2492 = vadd.f32 %v2383, 1.0
    %v2493 = vadd.f32 %v2385, 1.0
    %v2494 = vadd.f32 %v2387, 1.0
    %v2495 = vadd.f32 %v2389, 1.0
    %v2496 = vadd.f32 %v2391, 1.0
    %v2497 = vadd.f32 %v2393, 1.0
    %v2498 = vadd.f32 %v2395, 1.0
    %v2499 = vadd.f32 %v2397, 1.0
    %v2500 = vadd.f32 %v2399, 1.0
    %v2501 = vadd.f32 %v2401, 1.0
    %v2502 = vadd.f32 %v2403, 1.0
    %v2503 = vadd.f32 %v2405, 1.0
    %v2504 = vadd.f32 %v2407, 1.0
    %v2505 = vadd.f32 %v2409, 1.0
    %v2506 = vadd.f32 %v2411, 1.0
    %v2507 = vadd.f32 %v2413, 1.0
    %v2508 = vadd.f32 %v2415, 1.0
    %v2509 = vadd.f32 %v2417, 1.0
    %v2510 = vadd.f32 %v2419, 1.0
    %v2511 = vadd.f32 %v2421, 1.0
    %v2512 = vadd.f32 %v2423, 1.0
    %v2513 = vadd.f32 %v2425, 1.0
    %v2514 = vadd.f32 %v2427, 1.0
    %v2515 = vadd.f32 %v2429, 1.0
    %v2516 = vadd.f32 %v2431, 1.0
    %v2517 = vadd.f32 %v2433, 1.0
    %v2518 = vadd.f32 %v2435, 1.0
    %v2519 = vadd.f32 %v2437, 1.0
    %v2520 = vadd.f32 %v2439, 1.0
    %v2521 = vadd.f32 %v2441, 1.0
    %v2522 = vadd.f32 %v2443, 1.0
    %v2523 = vadd.f32 %v2445, 1.0
    %v2524 = vadd.f32 %v2447, 1.0
    %v2525 = vadd.f32 %v2449, 1.0
    %v2526 = vadd.f32 %v2451, 1.0
    %v2527 = vadd.f32 %v2453, 1.0
    %v2528 = vadd.f32 %v2455, 1.0
    %v2529 = vadd.f32 %v2457, 1.0
    %v2530 = vadd.f32 %v2459, 1.0
    %v2531 = vadd.f32 %v2461, 1.0
    %v2532 = vadd.f32 %v2463, 1.0
    %v2533 = vadd.f32 %v2465, 1.0
    %v2534 = vadd.f32 %v2467, 1.0
    %v2535 = vadd.f32 %v2469, 1.0
    %v2536 = vadd.f32 %v2471, 1.0
    %v2537 = vadd.f32 %v2473, 1.0
    %v2538 = vrcp.pop %v2474
    %v2539 = vmul.f32 1.0, %v2538
    %v2540 = vrcp.pop %v2475
    %v2541 = vmul.f32 1.0, %v2540
    %v2542 = vrcp.pop %v2476
    %v2543 = vmul.f32 1.0, %v2542
    %v2544 = vrcp.pop %v2477
    %v2545 = vmul.f32 1.0, %v2544
    %v2546 = vrcp.pop %v2478
    %v2547 = vmul.f32 1.0, %v2546
    %v2548 = vrcp.pop %v2479
    %v2549 = vmul.f32 1.0, %v2548
    %v2550 = vrcp.pop %v2480
    %v2551 = vmul.f32 1.0, %v2550
    %v2552 = vrcp.pop %v2481
    %v2553 = vmul.f32 1.0, %v2552
    %v2554 = vrcp.pop %v2482
    %v2555 = vmul.f32 1.0, %v2554
    %v2556 = vrcp.pop %v2483
    %v2557 = vmul.f32 1.0, %v2556
    %v2558 = vrcp.pop %v2484
    %v2559 = vmul.f32 1.0, %v2558
    %v2560 = vrcp.pop %v2485
    %v2561 = vmul.f32 1.0, %v2560
    %v2562 = vrcp.pop %v2486
    %v2563 = vmul.f32 1.0, %v2562
    %v2564 = vrcp.pop %v2487
    %v2565 = vmul.f32 1.0, %v2564
    %v2566 = vrcp.pop %v2488
    %v2567 = vmul.f32 1.0, %v2566
    %v2568 = vrcp.pop %v2489
    %v2569 = vmul.f32 1.0, %v2568
    %v2570 = vrcp.pop %v2490
    %v2571 = vmul.f32 1.0, %v2570
    %v2572 = vrcp.pop %v2491
    %v2573 = vmul.f32 1.0, %v2572
    %v2574 = vrcp.pop %v2492
    %v2575 = vmul.f32 1.0, %v2574
    %v2576 = vrcp.pop %v2493
    %v2577 = vmul.f32 1.0, %v2576
    %v2578 = vrcp.pop %v2494
    %v2579 = vmul.f32 1.0, %v2578
    %v2580 = vrcp.pop %v2495
    %v2581 = vmul.f32 1.0, %v2580
    %v2582 = vrcp.pop %v2496
    %v2583 = vmul.f32 1.0, %v2582
    %v2584 = vrcp.pop %v2497
    %v2585 = vmul.f32 1.0, %v2584
    %v2586 = vrcp.pop %v2498
    %v2587 = vmul.f32 1.0, %v2586
    %v2588 = vrcp.pop %v2499
    %v2589 = vmul.f32 1.0, %v2588
    %v2590 = vrcp.pop %v2500
    %v2591 = vmul.f32 1.0, %v2590
    %v2592 = vrcp.pop %v2501
    %v2593 = vmul.f32 1.0, %v2592
    %v2594 = vrcp.pop %v2502
    %v2595 = vmul.f32 1.0, %v2594
    %v2596 = vrcp.pop %v2503
    %v2597 = vmul.f32 1.0, %v2596
    %v2598 = vrcp.pop %v2504
    %v2599 = vmul.f32 1.0, %v2598
    %v2600 = vrcp.pop %v2505
    %v2601 = vmul.f32 1.0, %v2600
    %v2602 = vrcp.pop %v2506
    %v2603 = vmul.f32 1.0, %v2602
    %v2604 = vrcp.pop %v2507
    %v2605 = vmul.f32 1.0, %v2604
    %v2606 = vrcp.pop %v2508
    %v2607 = vmul.f32 1.0, %v2606
    %v2608 = vrcp.pop %v2509
    %v2609 = vmul.f32 1.0, %v2608
    %v2610 = vrcp.pop %v2510
    %v2611 = vmul.f32 1.0, %v2610
    %v2612 = vrcp.pop %v2511
    %v2613 = vmul.f32 1.0, %v2612
    %v2614 = vrcp.pop %v2512
    %v2615 = vmul.f32 1.0, %v2614
    %v2616 = vrcp.pop %v2513
    %v2617 = vmul.f32 1.0, %v2616
    %v2618 = vrcp.pop %v2514
    %v2619 = vmul.f32 1.0, %v2618
    %v2620 = vrcp.pop %v2515
    %v2621 = vmul.f32 1.0, %v2620
    %v2622 = vrcp.pop %v2516
    %v2623 = vmul.f32 1.0, %v2622
    %v2624 = vrcp.pop %v2517
    %v2625 = vmul.f32 1.0, %v2624
    %v2626 = vrcp.pop %v2518
    %v2627 = vmul.f32 1.0, %v2626
    %v2628 = vrcp.pop %v2519
    %v2629 = vmul.f32 1.0, %v2628
    %v2630 = vrcp.pop %v2520
    %v2631 = vmul.f32 1.0, %v2630
    %v2632 = vrcp.pop %v2521
    %v2633 = vmul.f32 1.0, %v2632
    %v2634 = vrcp.pop %v2522
    %v2635 = vmul.f32 1.0, %v2634
    %v2636 = vrcp.pop %v2523
    %v2637 = vmul.f32 1.0, %v2636
    %v2638 = vrcp.pop %v2524
    %v2639 = vmul.f32 1.0, %v2638
    %v2640 = vrcp.pop %v2525
    %v2641 = vmul.f32 1.0, %v2640
    %v2642 = vrcp.pop %v2526
    %v2643 = vmul.f32 1.0, %v2642
    %v2644 = vrcp.pop %v2527
    %v2645 = vmul.f32 1.0, %v2644
    %v2646 = vrcp.pop %v2528
    %v2647 = vmul.f32 1.0, %v2646
    %v2648 = vrcp.pop %v2529
    %v2649 = vmul.f32 1.0, %v2648
    %v2650 = vrcp.pop %v2530
    %v2651 = vmul.f32 1.0, %v2650
    %v2652 = vrcp.pop %v2531
    %v2653 = vmul.f32 1.0, %v2652
    %v2654 = vrcp.pop %v2532
    %v2655 = vmul.f32 1.0, %v2654
    %v2656 = vrcp.pop %v2533
    %v2657 = vmul.f32 1.0, %v2656
    %v2658 = vrcp.pop %v2534
    %v2659 = vmul.f32 1.0, %v2658
    %v2660 = vrcp.pop %v2535
    %v2661 = vmul.f32 1.0, %v2660
    %v2662 = vrcp.pop %v2536
    %v2663 = vmul.f32 1.0, %v2662
    %v2664 = vrcp.pop %v2537
    %v2665 = vmul.f32 1.0, %v2664
    %2666 = vst [vmem:[#allocation16] sm:$0xff] %v2539
    %2667 = vst [vmem:[#allocation16 + $0x8] sm:$0xff] %v2541
    %2668 = vst [vmem:[#allocation16 + $0x10] sm:$0xff] %v2543
    %2669 = vst [vmem:[#allocation16 + $0x18] sm:$0xff] %v2545
    %2670 = vst [vmem:[#allocation16 + $0x20] sm:$0xff] %v2547
    %2671 = vst [vmem:[#allocation16 + $0x28] sm:$0xff] %v2549
    %2672 = vst [vmem:[#allocation16 + $0x30] sm:$0xff] %v2551
    %2673 = vst [vmem:[#allocation16 + $0x38] sm:$0xff] %v2553
    %2674 = vst [vmem:[#allocation16 + $0x40] sm:$0xff] %v2555
    %2675 = vst [vmem:[#allocation16 + $0x48] sm:$0xff] %v2557
    %2676 = vst [vmem:[#allocation16 + $0x50] sm:$0xff] %v2559
    %2677 = vst [vmem:[#allocation16 + $0x58] sm:$0xff] %v2561
    %2678 = vst [vmem:[#allocation16 + $0x60] sm:$0xff] %v2563
    %2679 = vst [vmem:[#allocation16 + $0x68] sm:$0xff] %v2565
    %2680 = vst [vmem:[#allocation16 + $0x70] sm:$0xff] %v2567
    %2681 = vst [vmem:[#allocation16 + $0x78] sm:$0xff] %v2569
    %2682 = vst [vmem:[#allocation16 + $0x80] sm:$0xff] %v2571
    %2683 = vst [vmem:[#allocation16 + $0x88] sm:$0xff] %v2573
    %2684 = vst [vmem:[#allocation16 + $0x90] sm:$0xff] %v2575
    %2685 = vst [vmem:[#allocation16 + $0x98] sm:$0xff] %v2577
    %2686 = vst [vmem:[#allocation16 + $0xa0] sm:$0xff] %v2579
    %2687 = vst [vmem:[#allocation16 + $0xa8] sm:$0xff] %v2581
    %2688 = vst [vmem:[#allocation16 + $0xb0] sm:$0xff] %v2583
    %2689 = vst [vmem:[#allocation16 + $0xb8] sm:$0xff] %v2585
    %2690 = vst [vmem:[#allocation16 + $0xc0] sm:$0xff] %v2587
    %2691 = vst [vmem:[#allocation16 + $0xc8] sm:$0xff] %v2589
    %2692 = vst [vmem:[#allocation16 + $0xd0] sm:$0xff] %v2591
    %2693 = vst [vmem:[#allocation16 + $0xd8] sm:$0xff] %v2593
    %2694 = vst [vmem:[#allocation16 + $0xe0] sm:$0xff] %v2595
    %2695 = vst [vmem:[#allocation16 + $0xe8] sm:$0xff] %v2597
    %2696 = vst [vmem:[#allocation16 + $0xf0] sm:$0xff] %v2599
    %2697 = vst [vmem:[#allocation16 + $0xf8] sm:$0xff] %v2601
    %2698 = vst [vmem:[#allocation16 + $0x100] sm:$0xff] %v2603
    %2699 = vst [vmem:[#allocation16 + $0x108] sm:$0xff] %v2605
    %2700 = vst [vmem:[#allocation16 + $0x110] sm:$0xff] %v2607
    %2701 = vst [vmem:[#allocation16 + $0x118] sm:$0xff] %v2609
    %2702 = vst [vmem:[#allocation16 + $0x120] sm:$0xff] %v2611
    %2703 = vst [vmem:[#allocation16 + $0x128] sm:$0xff] %v2613
    %2704 = vst [vmem:[#allocation16 + $0x130] sm:$0xff] %v2615
    %2705 = vst [vmem:[#allocation16 + $0x138] sm:$0xff] %v2617
    %2706 = vst [vmem:[#allocation16 + $0x140] sm:$0xff] %v2619
    %2707 = vst [vmem:[#allocation16 + $0x148] sm:$0xff] %v2621
    %2708 = vst [vmem:[#allocation16 + $0x150] sm:$0xff] %v2623
    %2709 = vst [vmem:[#allocation16 + $0x158] sm:$0xff] %v2625
    %2710 = vst [vmem:[#allocation16 + $0x160] sm:$0xff] %v2627
    %2711 = vst [vmem:[#allocation16 + $0x168] sm:$0xff] %v2629
    %2712 = vst [vmem:[#allocation16 + $0x170] sm:$0xff] %v2631
    %2713 = vst [vmem:[#allocation16 + $0x178] sm:$0xff] %v2633
    %2714 = vst [vmem:[#allocation16 + $0x180] sm:$0xff] %v2635
    %2715 = vst [vmem:[#allocation16 + $0x188] sm:$0xff] %v2637
    %2716 = vst [vmem:[#allocation16 + $0x190] sm:$0xff] %v2639
    %2717 = vst [vmem:[#allocation16 + $0x198] sm:$0xff] %v2641
    %2718 = vst [vmem:[#allocation16 + $0x1a0] sm:$0xff] %v2643
    %2719 = vst [vmem:[#allocation16 + $0x1a8] sm:$0xff] %v2645
    %2720 = vst [vmem:[#allocation16 + $0x1b0] sm:$0xff] %v2647
    %2721 = vst [vmem:[#allocation16 + $0x1b8] sm:$0xff] %v2649
    %2722 = vst [vmem:[#allocation16 + $0x1c0] sm:$0xff] %v2651
    %2723 = vst [vmem:[#allocation16 + $0x1c8] sm:$0xff] %v2653
    %2724 = vst [vmem:[#allocation16 + $0x1d0] sm:$0xff] %v2655
    %2725 = vst [vmem:[#allocation16 + $0x1d8] sm:$0xff] %v2657
    %2726 = vst [vmem:[#allocation16 + $0x1e0] sm:$0xff] %v2659
    %2727 = vst [vmem:[#allocation16 + $0x1e8] sm:$0xff] %v2661
    %2728 = vst [vmem:[#allocation16 + $0x1f0] sm:$0xff] %v2663
    %2729 = vst [vmem:[#allocation16 + $0x1f8] sm:$0xff] %v2665
    // Predicated region
    $region90: #{tpu_custom_call.1} parent=1 // pred_check
      _
    $region91: #{tpu_custom_call.1} parent=1 // pred_check_branch
      %2731 = sbr.rel (0) target = $region93
    $region92: #{tpu_custom_call.1} parent=1 // pred_region
      %s2733 = ssub.s32 8192, 8192
      %2734 = vsyncadd [#allocation4], %s2733
      %s2735 = sshll.u32 [#allocation16], 4
      %s2736 = int_to_ptr.vmem [resolvable:$true] %s2735
      %2741 = dma.vmem_to_hbm [thread:$0]  %s2736, 8192, %s14, [#allocation4], 256, 256, 16
    $region93: #{tpu_custom_call.1} parent=1 // pred_fallthru
      _
    // Predicated region
    $region94: #{tpu_custom_call.1} parent=1 // pred_check
      _
    $region95: #{tpu_custom_call.1} parent=1 // pred_check_branch
      %2743 = sbr.rel (0) target = $region97
    $region96: #{tpu_custom_call.1} parent=1 // pred_region
      %s2745 = ssub.s32 8192, 8192
      %2746 = vsyncadd [#allocation18], %s2745
      %s2747 = sshll.u32 [#allocation17], 4
      %s2748 = int_to_ptr.vmem [resolvable:$true] %s2747
      %2753 = dma.vmem_to_hbm [thread:$0]  %s2748, 8192, %s15, [#allocation18], 256, 256, 16
    $region97: #{tpu_custom_call.1} parent=1 // pred_fallthru
      _
    // Predicated region
    $region98: #{tpu_custom_call.1} parent=1 // pred_check
      _
    $region99: #{tpu_custom_call.1} parent=1 // pred_check_branch
      %2755 = sbr.rel (0) target = $region101
    $region100: #{tpu_custom_call.1} parent=1 // pred_region
      %2756 = dma.done [#allocation4], 8192
    $region101: #{tpu_custom_call.1} parent=1 // pred_fallthru
      _
    // Predicated region
    $region102: #{tpu_custom_call.1} parent=1 // pred_check
      _
    $region103: #{tpu_custom_call.1} parent=1 // pred_check_branch
      %2758 = sbr.rel (0) target = $region105
    $region104: #{tpu_custom_call.1} parent=1 // pred_region
      %2759 = dma.done [#allocation18], 8192
    $region105: #{tpu_custom_call.1} parent=1 // pred_fallthru
      _
    %2760 = vsyncpa [#allocation3], 1
    %2761 = vsyncpa [#allocation6], 1
    %2762 = vsyncpa [#allocation9], 1
    %2763 = vsyncpa [#allocation12], 1
    %2764 = vsyncpa [#allocation15], 1
    %2765 = vsyncpa [#allocation4], 1
    %2766 = vsyncpa [#allocation18], 1

</llo_original>
